<compile_context>
chip_gen: v7x
topology: tpu7x:2x2x1
jax: 0.10.0
libtpu: 0.0.40
codegen_flags: <defaults>
</compile_context>

<pallas_src>
import jax
import jax.numpy as jnp
from jax import lax
from jax.experimental import pallas as pl
from jax.experimental.pallas import tpu as pltpu


def _round_up(v, mult):
    return -(-int(v) // mult) * mult


def _device_kind() -> str:
    try:
        return jax.devices()[0].device_kind.lower()
    except Exception:
        return ""


def _default_gram_dtype():
    kind = _device_kind()
    # v5e: 197 TF/s MXU vs ~0.82 TB/s HBM -> a multi-pass f32 gram goes
    # MXU-bound; keep bf16 operands (f32 accumulation).  v6e/v7x: full-f32 gram
    # fits inside the HBM-bound slack, so take the accuracy for free.
    if ("v5 lite" in kind) or ("v5e" in kind) or ("v5litepod" in kind):
        return jnp.bfloat16
    return jnp.float32


def _default_core_splits() -> int:
    # v7x has 2 TensorCores per chip; give each core its own partial gram.
    return 2 if "v7" in _device_kind() else 1


def _make_vamp_u_kernel(true_n: int, m: int, gram_dtype, precision):
    inv_n = float(1.0 / true_n)

    def kernel(chi_t_ref, chi_tau_ref, ut_ref,    # inputs
               g_ref, mu_ref,                     # outputs
               z_sc):                             # VMEM scratch
        k = pl.program_id(1)                      # n-tile index within this split

        @pl.when(k == 0)
        def _init():
            g_ref[...] = jnp.zeros_like(g_ref)

        chi_t = chi_t_ref[...]        # (tile_n, M) f32
        chi_tau = chi_tau_ref[...]    # (tile_n, M) f32
        u_row = ut_ref[...]           # (1, M)     f32   (normalized activation)

        # chi_tau @ u_t on the VPU (broadcast-mul + lane reduce): keeps MXU free.
        ctu = jnp.sum(chi_tau * u_row, axis=1, keepdims=True)   # (tile_n, 1)
        gamma = chi_tau * ctu                                   # (tile_n, M)

        # mu_t streamed per tile; wrapper rescales by 1/d with d = sum(mu_t).
        mu_ref[...] = ctu * inv_n

        # Packed gram: one (tile_n, 3M).T @ (tile_n, 3M) MXU matmul per tile.
        z_sc[:, 0:m] = chi_t.astype(gram_dtype)
        z_sc[:, m:2 * m] = chi_tau.astype(gram_dtype)
        z_sc[:, 2 * m:3 * m] = gamma.astype(gram_dtype)
        z = z_sc[...]
        acc = lax.dot_general(z, z, (((0,), (0,)), ((), ())),
                              preferred_element_type=jnp.float32,
                              precision=precision)
        g_ref[...] += acc[None]       # (1, 3M, 3M) resident accumulator

    return kernel


def vamp_u_forward(chi_t, chi_tau, u_kernel, *, weight_transformation=jnp.exp,
                   tile_n=None, num_core_splits=None, gram_dtype=None):
    """chi_t, chi_tau: (n, M) float32; u_kernel: (M,) float32.
    Returns [u, mu, Sigma, v, C_00, C_01, C_11] (same semantics as torch vamp_u)."""
    n, m = chi_tau.shape
    assert chi_t.shape == (n, m) and u_kernel.shape == (m,)

    if num_core_splits is None:
        num_core_splits = _default_core_splits()
    if gram_dtype is None:
        gram_dtype = _default_gram_dtype()
    precision = lax.Precision.HIGHEST if gram_dtype == jnp.float32 else None

    # Tiling: single grid step for small n, cap at 4096 rows per tile otherwise.
    per_split = -(-n // num_core_splits)
    per_split8 = _round_up(per_split, 8)
    if tile_n is None:
        tile_n = min(per_split8, 4096)
    tile_n = min(max(8, _round_up(tile_n, 8)), per_split8)
    kpc = -(-per_split // tile_n)                  # n-tiles per core split
    n_pad = num_core_splits * kpc * tile_n

    chi_t = chi_t.astype(jnp.float32)
    chi_tau = chi_tau.astype(jnp.float32)
    pad = n_pad - n
    if pad:
        # zero rows contribute nothing to the grams, column sums or mu_t sum
        chi_t = jnp.pad(chi_t, ((0, pad), (0, 0)))
        chi_tau = jnp.pad(chi_tau, ((0, pad), (0, 0)))

    # Data-independent normalized activation row.  u = u_t / d with
    # d = u_t . chi_mean deferred to the wrapper (equal to sum(mu_t)).
    w = weight_transformation(u_kernel.astype(jnp.float32))
    u_t = (w / jnp.sum(w)).reshape(1, m)

    gm = 3 * m
    out_shapes = (
        jax.ShapeDtypeStruct((num_core_splits, gm, gm), jnp.float32),  # partial grams
        jax.ShapeDtypeStruct((n_pad, 1), jnp.float32),                 # mu_t column
    )
    grid_spec = pltpu.PrefetchScalarGridSpec(
        num_scalar_prefetch=0,
        grid=(num_core_splits, kpc),
        in_specs=[
            pl.BlockSpec((tile_n, m), lambda c, k: (c * kpc + k, 0)),  # chi_t
            pl.BlockSpec((tile_n, m), lambda c, k: (c * kpc + k, 0)),  # chi_tau
            pl.BlockSpec((1, m), lambda c, k: (0, 0)),                 # u_t (resident)
        ],
        out_specs=(
            pl.BlockSpec((1, gm, gm), lambda c, k: (c, 0, 0)),         # per-split gram
            pl.BlockSpec((tile_n, 1), lambda c, k: (c * kpc + k, 0)),  # mu_t stream
        ),
        scratch_shapes=[pltpu.VMEM((tile_n, gm), gram_dtype)],         # packed Z tile
    )
    cost = pl.CostEstimate(
        flops=2 * n_pad * gm * gm + 6 * n_pad * m,
        transcendentals=0,
        bytes_accessed=4 * (2 * n_pad * m + n_pad + num_core_splits * gm * gm + m),
    )
    g_parts, mu_col = pl.pallas_call(
        _make_vamp_u_kernel(n, m, gram_dtype, precision),
        out_shape=out_shapes,
        grid_spec=grid_spec,
        compiler_params=pltpu.CompilerParams(
            dimension_semantics=("parallel", "arbitrary"),
            vmem_limit_bytes=48 * 1024 * 1024,
        ),
        cost_estimate=cost,
    )(chi_t, chi_tau, u_t)

    # --- cheap wrapper-side finalization (all O(M^2) or O(n) on tiny arrays) ---
    g = jnp.sum(g_parts, axis=0)        # reduce TensorCore partial grams
    mu_t = mu_col[:n, 0]
    d = jnp.sum(mu_col)                 # = u_t . chi_mean  (padded rows are zero)
    inv_n = 1.0 / n
    inv_d = 1.0 / d

    u = u_t[0] * inv_d
    mu = mu_t * inv_d
    c00 = g[0:m, 0:m] * inv_n
    ctt = g[m:2 * m, m:2 * m] * inv_n                       # chi_tau.T @ chi_tau / n
    sigma = g[m:2 * m, 2 * m:3 * m] * (inv_n * inv_d)       # chi_tau.T @ gamma / n
    c01 = g[0:m, 2 * m:3 * m] * (inv_n * inv_d)
    c11 = g[2 * m:3 * m, 2 * m:3 * m] * (inv_n * inv_d * inv_d)
    v = ctt @ u
    return [u, mu, sigma, v, c00, c01, c11]


def vamp_u_forward_packed(x, u_kernel, **kwargs):
    """Module-compatible entry point: x is (n, M, 2) with [...,0]=chi_t, [...,1]=chi_tau.
    NOTE: the stride-2 de-interleave below costs one extra XLA pass over x;
    prefer vamp_u_forward(chi_t, chi_tau, u_kernel) when the operands are
    already separate (see TODO at top of file)."""
    chi_t = x[..., 0]
    chi_tau = x[..., 1]
    return vamp_u_forward(chi_t, chi_tau, u_kernel, **kwargs)


if __name__ == "__main__":
    n, M = 1000, 32
    key = jax.random.PRNGKey(0)
    x = jax.random.uniform(key, (n, M, 2), dtype=jnp.float32)

    # Deterministic parameter init, same as nn.Parameter(torch.ones(M) / M)
    u_kernel = jnp.ones((M,), jnp.float32) / M

    fwd = jax.jit(vamp_u_forward_packed)
    outs = jax.block_until_ready(fwd(x, u_kernel))

    # Plain-JAX reference (same math as the PyTorch forward).
    chi_t, chi_tau = x[..., 0], x[..., 1]
    chi_mean = chi_tau.mean(0)
    corr_tau = chi_tau.T @ chi_tau / n
    ku = jnp.exp(u_kernel)
    u_ref = ku / (ku * chi_mean).sum()
    v_ref = corr_tau @ u_ref
    mu_ref = chi_tau @ u_ref / n
    sigma_ref = (chi_tau * mu_ref[:, None]).T @ chi_tau
    gamma = chi_tau * (chi_tau @ u_ref)[:, None]
    refs = [u_ref, mu_ref, sigma_ref, v_ref,
            chi_t.T @ chi_t / n, chi_t.T @ gamma / n, gamma.T @ gamma / n]
    names = ["u", "mu", "Sigma", "v", "C_00", "C_01", "C_11"]
    for name, o, r in zip(names, outs, refs):
        assert o.shape == r.shape, (name, o.shape, r.shape)
        assert jnp.allclose(o, r, rtol=2e-2, atol=2e-2), name

    print("KERNEL_OK")
</pallas_src>

<mosaic_0001>
module attributes {stable_mosaic.version = 11 : i64} {
  func.func @kernel(%arg0: i32, %arg1: i32, %arg2: memref<1000x32xf32, #tpu.memory_space<vmem>>, %arg3: memref<1000x32xf32, #tpu.memory_space<vmem>>, %arg4: memref<1x32xf32, #tpu.memory_space<vmem>>, %arg5: memref<1x96x96xf32, #tpu.memory_space<vmem>>, %arg6: memref<1000x1xf32, #tpu.memory_space<vmem>>, %arg7: memref<1000x96xf32, #tpu.memory_space<vmem>>) attributes {dimension_semantics = [#tpu.dimension_semantics<parallel>, #tpu.dimension_semantics<arbitrary>], iteration_bounds = array<i64: 1, 1>, scalar_prefetch = 0 : i64, scratch_operands = 1 : i64, tpu.core_type = #tpu.core_type<tc>, window_params = [{transform_indices = @transform_0, window_bounds = array<i64: 1000, 32>}, {transform_indices = @transform_1, window_bounds = array<i64: 1000, 32>}, {pipeline_mode = #tpu.pipeline_mode<synchronous>, transform_indices = @transform_2, window_bounds = array<i64: 1, 32>}, {transform_indices = @transform_3, window_bounds = array<i64: 1, 96, 96>}, {transform_indices = @transform_4, window_bounds = array<i64: 1000, 1>}]} {
    %c0_i32 = arith.constant 0 : i32
    %0 = arith.cmpi eq, %arg1, %c0_i32 : i32
    %1 = arith.extui %0 : i1 to i32
    %c0_i32_0 = arith.constant 0 : i32
    %2 = arith.cmpi ne, %1, %c0_i32_0 : i32
    scf.if %2 {
      %cst_22 = arith.constant 0.000000e+00 : f32
      %24 = vector.broadcast %cst_22 : f32 to vector<1x96x96xf32>
      %c0_23 = arith.constant 0 : index
      %c0_24 = arith.constant 0 : index
      %c0_25 = arith.constant 0 : index
      %25 = vector.load %arg5[%c0_23, %c0_24, %c0_25] : memref<1x96x96xf32, #tpu.memory_space<vmem>>, vector<1x96x96xf32>
      tpu.vector_store %arg5[%c0_23, %c0_24, %c0_25], %24 {strides = array<i32>} : memref<1x96x96xf32, #tpu.memory_space<vmem>>, vector<1x96x96xf32>,
    } else {
    }
    %c0 = arith.constant 0 : index
    %c0_1 = arith.constant 0 : index
    %3 = vector.load %arg2[%c0, %c0_1] : memref<1000x32xf32, #tpu.memory_space<vmem>>, vector<1000x32xf32>
    %c0_2 = arith.constant 0 : index
    %c0_3 = arith.constant 0 : index
    %4 = vector.load %arg3[%c0_2, %c0_3] : memref<1000x32xf32, #tpu.memory_space<vmem>>, vector<1000x32xf32>
    %c0_4 = arith.constant 0 : index
    %c0_5 = arith.constant 0 : index
    %5 = vector.load %arg4[%c0_4, %c0_5] : memref<1x32xf32, #tpu.memory_space<vmem>>, vector<1x32xf32>
    %6 = vector.broadcast %5 : vector<1x32xf32> to vector<1000x32xf32>
    %7 = arith.mulf %4, %6 : vector<1000x32xf32>
    %cst = arith.constant dense<0.000000e+00> : vector<1000xf32>
    %8 = vector.multi_reduction <add>, %7, %cst [1] : vector<1000x32xf32> to vector<1000xf32>
    %9 = vector.shape_cast %8 : vector<1000xf32> to vector<1000x1xf32>
    %10 = vector.broadcast %9 : vector<1000x1xf32> to vector<1000x32xf32>
    %11 = arith.mulf %4, %10 : vector<1000x32xf32>
    %cst_6 = arith.constant 1.000000e-03 : f32
    %12 = vector.broadcast %cst_6 : f32 to vector<1000x1xf32>
    %13 = arith.mulf %9, %12 : vector<1000x1xf32>
    %c0_7 = arith.constant 0 : index
    %c0_8 = arith.constant 0 : index
    %14 = vector.load %arg6[%c0_7, %c0_8] : memref<1000x1xf32, #tpu.memory_space<vmem>>, vector<1000x1xf32>
    tpu.vector_store %arg6[%c0_7, %c0_8], %13 {strides = array<i32>} : memref<1000x1xf32, #tpu.memory_space<vmem>>, vector<1000x1xf32>,
    %c0_9 = arith.constant 0 : index
    %c0_10 = arith.constant 0 : index
    %15 = vector.load %arg7[%c0_9, %c0_10] : memref<1000x96xf32, #tpu.memory_space<vmem>>, vector<1000x32xf32>
    tpu.vector_store %arg7[%c0_9, %c0_10], %3 {strides = array<i32>} : memref<1000x96xf32, #tpu.memory_space<vmem>>, vector<1000x32xf32>,
    %c0_11 = arith.constant 0 : index
    %c32 = arith.constant 32 : index
    %16 = vector.load %arg7[%c0_11, %c32] : memref<1000x96xf32, #tpu.memory_space<vmem>>, vector<1000x32xf32>
    tpu.vector_store %arg7[%c0_11, %c32], %4 {strides = array<i32>} : memref<1000x96xf32, #tpu.memory_space<vmem>>, vector<1000x32xf32>,
    %c0_12 = arith.constant 0 : index
    %c64 = arith.constant 64 : index
    %17 = vector.load %arg7[%c0_12, %c64] : memref<1000x96xf32, #tpu.memory_space<vmem>>, vector<1000x32xf32>
    tpu.vector_store %arg7[%c0_12, %c64], %11 {strides = array<i32>} : memref<1000x96xf32, #tpu.memory_space<vmem>>, vector<1000x32xf32>,
    %c0_13 = arith.constant 0 : index
    %c0_14 = arith.constant 0 : index
    %18 = vector.load %arg7[%c0_13, %c0_14] : memref<1000x96xf32, #tpu.memory_space<vmem>>, vector<1000x96xf32>
    %cst_15 = arith.constant dense<0.000000e+00> : vector<96x96xf32>
    %19 = tpu.matmul %18, %18, %cst_15 {dimension_numbers = #tpu.dot_dimension_numbers<[0], [0], [1], [1], [0, 1, 1, 1], [], []>, precision = #tpu.contract_precision<fp32>} : vector<1000x96xf32>, vector<1000x96xf32>, vector<96x96xf32> -> vector<96x96xf32>
    %c0_16 = arith.constant 0 : index
    %c0_17 = arith.constant 0 : index
    %c0_18 = arith.constant 0 : index
    %20 = vector.load %arg5[%c0_16, %c0_17, %c0_18] : memref<1x96x96xf32, #tpu.memory_space<vmem>>, vector<1x96x96xf32>
    %21 = vector.shape_cast %19 : vector<96x96xf32> to vector<1x96x96xf32>
    %22 = arith.addf %20, %21 : vector<1x96x96xf32>
    %c0_19 = arith.constant 0 : index
    %c0_20 = arith.constant 0 : index
    %c0_21 = arith.constant 0 : index
    %23 = vector.load %arg5[%c0_19, %c0_20, %c0_21] : memref<1x96x96xf32, #tpu.memory_space<vmem>>, vector<1x96x96xf32>
    tpu.vector_store %arg5[%c0_19, %c0_20, %c0_21], %22 {strides = array<i32>} : memref<1x96x96xf32, #tpu.memory_space<vmem>>, vector<1x96x96xf32>,
    return
  }
  func.func @transform_0(%arg0: i32, %arg1: i32) -> (i32, i32) {
    %c1_i32 = arith.constant 1 : i32
    %0 = arith.muli %arg0, %c1_i32 : i32
    %1 = arith.addi %0, %arg1 : i32
    %c0_i32 = arith.constant 0 : i32
    %c0_i32_0 = arith.constant 0 : i32
    return %1, %c0_i32 : i32, i32
  }
  func.func @transform_1(%arg0: i32, %arg1: i32) -> (i32, i32) {
    %c1_i32 = arith.constant 1 : i32
    %0 = arith.muli %arg0, %c1_i32 : i32
    %1 = arith.addi %0, %arg1 : i32
    %c0_i32 = arith.constant 0 : i32
    %c0_i32_0 = arith.constant 0 : i32
    return %1, %c0_i32 : i32, i32
  }
  func.func @transform_2(%arg0: i32, %arg1: i32) -> (i32, i32) {
    %c0_i32 = arith.constant 0 : i32
    %c0_i32_0 = arith.constant 0 : i32
    %c0_i32_1 = arith.constant 0 : i32
    return %c0_i32, %c0_i32_0 : i32, i32
  }
  func.func @transform_3(%arg0: i32, %arg1: i32) -> (i32, i32, i32) {
    %c0_i32 = arith.constant 0 : i32
    %c0_i32_0 = arith.constant 0 : i32
    %c0_i32_1 = arith.constant 0 : i32
    return %arg0, %c0_i32, %c0_i32_0 : i32, i32, i32
  }
  func.func @transform_4(%arg0: i32, %arg1: i32) -> (i32, i32) {
    %c1_i32 = arith.constant 1 : i32
    %0 = arith.muli %arg0, %c1_i32 : i32
    %1 = arith.addi %0, %arg1 : i32
    %c0_i32 = arith.constant 0 : i32
    %c0_i32_0 = arith.constant 0 : i32
    return %1, %c0_i32 : i32, i32
  }
}

</mosaic_0001>

<llo_original>
// kernel: vamp_u_forward_packed.1
$region0: #{vamp_u_forward_packed.1}
  #allocation0 [shape = 'u32[]', space=smem, size = 0x4, offset = 0x4, fixed_abs, tag = 'smem constant byte address 0x4 - core index']
  #allocation1 [shape = 'u32[144,128]{1,0:T(1,128)}', space=vmem, size = 0x12000, scoped, tag = 'internal scratch']
  #allocation2 [shape = 'f32[1000,96]{1,0:T(8,128)}', space=vmem, size = 0x7d000, scoped, tag = 'scratch operand']
  %s0 = inlined_call_operand.vmem [shape: f32[1000,32], index: 0, kind: input, shape index: {}]
  %s1 = inlined_call_operand.vmem [shape: f32[1000,32], index: 1, kind: input, shape index: {}]
  %s2 = inlined_call_operand.vmem [shape: f32[1,32], index: 2, kind: input, shape index: {}]
  %s3 = inlined_call_operand.vmem [shape: f32[1,96,96], index: 3, kind: output, shape index: {0}]
  %s4 = inlined_call_operand.vmem [shape: f32[1000,1], index: 4, kind: output, shape index: {1}]
  %5 = xla_tuple %s3, %s4
  %s6 = sld [smem:[#allocation0]]
  $region34: #{vamp_u_forward_packed.1} parent=0
    _
  %s8 = ssub.s32 1, %s6
  %s9 = scalar_select 0, %s8, %s6
  // Predicated region
  $region2: #{vamp_u_forward_packed.1} parent=0 // pred_check
    _
  $region3: #{vamp_u_forward_packed.1} parent=0 // pred_check_branch
    %11 = sbr.rel (0) target = $region5
  $region4: #{vamp_u_forward_packed.1} parent=0 // pred_region
    %s12 = sadd.s32 0, 0
    %s13 = smul.u32 125, %s12
    %p14 = scmp.lt.s32.totalorder %s13, 124
    %s15 = scalar_select %p14, %s13, 124
    %s16 = smul.addr %s15, 8
    %s17 = scalar_lea.vmem %s0, %s16
    %s18 = sadd.s32 0, 0
    %s19 = smul.u32 125, %s18
  $region5: #{vamp_u_forward_packed.1} parent=0 // pred_fallthru
    _
  // Predicated region
  $region6: #{vamp_u_forward_packed.1} parent=0 // pred_check
    _
  $region7: #{vamp_u_forward_packed.1} parent=0 // pred_check_branch
    %21 = sbr.rel (0) target = $region9
  $region8: #{vamp_u_forward_packed.1} parent=0 // pred_region
    %s22 = sadd.s32 0, 0
    %s23 = smul.u32 125, %s22
    %p24 = scmp.lt.s32.totalorder %s23, 124
    %s25 = scalar_select %p24, %s23, 124
    %s26 = smul.addr %s25, 8
    %s27 = scalar_lea.vmem %s1, %s26
    %s28 = sadd.s32 0, 0
    %s29 = smul.u32 125, %s28
  $region9: #{vamp_u_forward_packed.1} parent=0 // pred_fallthru
    _
  // Predicated region
  $region10: #{vamp_u_forward_packed.1} parent=0 // pred_check
    _
  $region11: #{vamp_u_forward_packed.1} parent=0 // pred_check_branch
    %31 = sbr.rel (0) target = $region13
  $region12: #{vamp_u_forward_packed.1} parent=0 // pred_region
    _
  $region13: #{vamp_u_forward_packed.1} parent=0 // pred_fallthru
    _
  %s32 = sadd.s32 0, 0
  %s33 = smul.u32 125, %s32
  %p34 = scmp.lt.s32.totalorder %s33, 124
  %s35 = scalar_select %p34, %s33, 124
  %s36 = smul.addr %s35, 8
  %s37 = scalar_lea.vmem %s0, %s36
  %s38 = sadd.s32 0, 0
  %s39 = smul.u32 125, %s38
  %p40 = scmp.lt.s32.totalorder %s39, 124
  %s41 = scalar_select %p40, %s39, 124
  %s42 = smul.addr %s41, 8
  %s43 = scalar_lea.vmem %s1, %s42
  %s44 = sadd.s32 0, 0
  %s45 = smul.u32 125, %s44
  %p46 = scmp.lt.s32.totalorder %s45, 124
  %s47 = scalar_select %p46, %s45, 124
  %s48 = smul.addr %s47, 8
  %s49 = scalar_lea.vmem %s4, %s48
  %s50 = sadd.s32 0, 0
  %s51 = smul.u32 125, %s50
  %p52 = scmp.lt.s32.totalorder %s51, 124
  %s53 = scalar_select %p52, %s51, 124
  %s54 = smul.addr %s53, 8
  %s55 = scalar_lea.vmem %s0, %s54
  %s56 = sadd.s32 0, 0
  %s57 = smul.u32 125, %s56
  %s58 = sadd.s32 0, 0
  %s59 = smul.u32 125, %s58
  %p60 = scmp.lt.s32.totalorder %s59, 124
  %s61 = scalar_select %p60, %s59, 124
  %s62 = smul.addr %s61, 8
  %s63 = scalar_lea.vmem %s1, %s62
  %s64 = sadd.s32 0, 0
  %s65 = smul.u32 125, %s64
  %s66 = sadd.s32 0, 0
  %s67 = smul.u32 125, %s66
  %p68 = scmp.lt.s32.totalorder %s67, 124
  %s69 = scalar_select %p68, %s67, 124
  %s70 = smul.addr %s69, 8
  %s71 = scalar_lea.vmem %s4, %s70
  %s72 = sadd.s32 0, 0
  %s73 = smul.u32 125, %s72
  %p74 = scmp.eq.s32.totalorder 0, 0
  // Predicated region
  $region14: #{vamp_u_forward_packed.1} parent=0 // pred_check
    %p75 = pneg %p74
  $region15: #{vamp_u_forward_packed.1} parent=0 // pred_check_branch
    %77 = sbr.rel (%p75) target = $region17
  $region16: #{vamp_u_forward_packed.1} parent=0 // pred_region
    %vm78 = vcmask 785408
    %79 = vst.msk [vmem:[%s3] sm:$0xff] %vm78, 0.0
    %80 = vst.msk [vmem:[%s3 + $0x8] sm:$0xff] %vm78, 0.0
    %81 = vst.msk [vmem:[%s3 + $0x10] sm:$0xff] %vm78, 0.0
    %82 = vst.msk [vmem:[%s3 + $0x18] sm:$0xff] %vm78, 0.0
    %83 = vst.msk [vmem:[%s3 + $0x20] sm:$0xff] %vm78, 0.0
    %84 = vst.msk [vmem:[%s3 + $0x28] sm:$0xff] %vm78, 0.0
    %85 = vst.msk [vmem:[%s3 + $0x30] sm:$0xff] %vm78, 0.0
    %86 = vst.msk [vmem:[%s3 + $0x38] sm:$0xff] %vm78, 0.0
    %87 = vst.msk [vmem:[%s3 + $0x40] sm:$0xff] %vm78, 0.0
    %88 = vst.msk [vmem:[%s3 + $0x48] sm:$0xff] %vm78, 0.0
    %89 = vst.msk [vmem:[%s3 + $0x50] sm:$0xff] %vm78, 0.0
    %90 = vst.msk [vmem:[%s3 + $0x58] sm:$0xff] %vm78, 0.0
  $region17: #{vamp_u_forward_packed.1} parent=0 // pred_fallthru
    _
  %v91 = vld [vmem:[%s55] sm:$0xff]
  %v92 = vld [vmem:[%s55 + $0x8] sm:$0xff]
  %v93 = vld [vmem:[%s55 + $0x10] sm:$0xff]
  %v94 = vld [vmem:[%s55 + $0x18] sm:$0xff]
  %v95 = vld [vmem:[%s55 + $0x20] sm:$0xff]
  %v96 = vld [vmem:[%s55 + $0x28] sm:$0xff]
  %v97 = vld [vmem:[%s55 + $0x30] sm:$0xff]
  %v98 = vld [vmem:[%s55 + $0x38] sm:$0xff]
  %v99 = vld [vmem:[%s55 + $0x40] sm:$0xff]
  %v100 = vld [vmem:[%s55 + $0x48] sm:$0xff]
  %v101 = vld [vmem:[%s55 + $0x50] sm:$0xff]
  %v102 = vld [vmem:[%s55 + $0x58] sm:$0xff]
  %v103 = vld [vmem:[%s55 + $0x60] sm:$0xff]
  %v104 = vld [vmem:[%s55 + $0x68] sm:$0xff]
  %v105 = vld [vmem:[%s55 + $0x70] sm:$0xff]
  %v106 = vld [vmem:[%s55 + $0x78] sm:$0xff]
  %v107 = vld [vmem:[%s55 + $0x80] sm:$0xff]
  %v108 = vld [vmem:[%s55 + $0x88] sm:$0xff]
  %v109 = vld [vmem:[%s55 + $0x90] sm:$0xff]
  %v110 = vld [vmem:[%s55 + $0x98] sm:$0xff]
  %v111 = vld [vmem:[%s55 + $0xa0] sm:$0xff]
  %v112 = vld [vmem:[%s55 + $0xa8] sm:$0xff]
  %v113 = vld [vmem:[%s55 + $0xb0] sm:$0xff]
  %v114 = vld [vmem:[%s55 + $0xb8] sm:$0xff]
  %v115 = vld [vmem:[%s55 + $0xc0] sm:$0xff]
  %v116 = vld [vmem:[%s55 + $0xc8] sm:$0xff]
  %v117 = vld [vmem:[%s55 + $0xd0] sm:$0xff]
  %v118 = vld [vmem:[%s55 + $0xd8] sm:$0xff]
  %v119 = vld [vmem:[%s55 + $0xe0] sm:$0xff]
  %v120 = vld [vmem:[%s55 + $0xe8] sm:$0xff]
  %v121 = vld [vmem:[%s55 + $0xf0] sm:$0xff]
  %v122 = vld [vmem:[%s55 + $0xf8] sm:$0xff]
  %v123 = vld [vmem:[%s55 + $0x100] sm:$0xff]
  %v124 = vld [vmem:[%s55 + $0x108] sm:$0xff]
  %v125 = vld [vmem:[%s55 + $0x110] sm:$0xff]
  %v126 = vld [vmem:[%s55 + $0x118] sm:$0xff]
  %v127 = vld [vmem:[%s55 + $0x120] sm:$0xff]
  %v128 = vld [vmem:[%s55 + $0x128] sm:$0xff]
  %v129 = vld [vmem:[%s55 + $0x130] sm:$0xff]
  %v130 = vld [vmem:[%s55 + $0x138] sm:$0xff]
  %v131 = vld [vmem:[%s55 + $0x140] sm:$0xff]
  %v132 = vld [vmem:[%s55 + $0x148] sm:$0xff]
  %v133 = vld [vmem:[%s55 + $0x150] sm:$0xff]
  %v134 = vld [vmem:[%s55 + $0x158] sm:$0xff]
  %v135 = vld [vmem:[%s55 + $0x160] sm:$0xff]
  %v136 = vld [vmem:[%s55 + $0x168] sm:$0xff]
  %v137 = vld [vmem:[%s55 + $0x170] sm:$0xff]
  %v138 = vld [vmem:[%s55 + $0x178] sm:$0xff]
  %v139 = vld [vmem:[%s55 + $0x180] sm:$0xff]
  %v140 = vld [vmem:[%s55 + $0x188] sm:$0xff]
  %v141 = vld [vmem:[%s55 + $0x190] sm:$0xff]
  %v142 = vld [vmem:[%s55 + $0x198] sm:$0xff]
  %v143 = vld [vmem:[%s55 + $0x1a0] sm:$0xff]
  %v144 = vld [vmem:[%s55 + $0x1a8] sm:$0xff]
  %v145 = vld [vmem:[%s55 + $0x1b0] sm:$0xff]
  %v146 = vld [vmem:[%s55 + $0x1b8] sm:$0xff]
  %v147 = vld [vmem:[%s55 + $0x1c0] sm:$0xff]
  %v148 = vld [vmem:[%s55 + $0x1c8] sm:$0xff]
  %v149 = vld [vmem:[%s55 + $0x1d0] sm:$0xff]
  %v150 = vld [vmem:[%s55 + $0x1d8] sm:$0xff]
  %v151 = vld [vmem:[%s55 + $0x1e0] sm:$0xff]
  %v152 = vld [vmem:[%s55 + $0x1e8] sm:$0xff]
  %v153 = vld [vmem:[%s55 + $0x1f0] sm:$0xff]
  %v154 = vld [vmem:[%s55 + $0x1f8] sm:$0xff]
  %v155 = vld [vmem:[%s55 + $0x200] sm:$0xff]
  %v156 = vld [vmem:[%s55 + $0x208] sm:$0xff]
  %v157 = vld [vmem:[%s55 + $0x210] sm:$0xff]
  %v158 = vld [vmem:[%s55 + $0x218] sm:$0xff]
  %v159 = vld [vmem:[%s55 + $0x220] sm:$0xff]
  %v160 = vld [vmem:[%s55 + $0x228] sm:$0xff]
  %v161 = vld [vmem:[%s55 + $0x230] sm:$0xff]
  %v162 = vld [vmem:[%s55 + $0x238] sm:$0xff]
  %v163 = vld [vmem:[%s55 + $0x240] sm:$0xff]
  %v164 = vld [vmem:[%s55 + $0x248] sm:$0xff]
  %v165 = vld [vmem:[%s55 + $0x250] sm:$0xff]
  %v166 = vld [vmem:[%s55 + $0x258] sm:$0xff]
  %v167 = vld [vmem:[%s55 + $0x260] sm:$0xff]
  %v168 = vld [vmem:[%s55 + $0x268] sm:$0xff]
  %v169 = vld [vmem:[%s55 + $0x270] sm:$0xff]
  %v170 = vld [vmem:[%s55 + $0x278] sm:$0xff]
  %v171 = vld [vmem:[%s55 + $0x280] sm:$0xff]
  %v172 = vld [vmem:[%s55 + $0x288] sm:$0xff]
  %v173 = vld [vmem:[%s55 + $0x290] sm:$0xff]
  %v174 = vld [vmem:[%s55 + $0x298] sm:$0xff]
  %v175 = vld [vmem:[%s55 + $0x2a0] sm:$0xff]
  %v176 = vld [vmem:[%s55 + $0x2a8] sm:$0xff]
  %v177 = vld [vmem:[%s55 + $0x2b0] sm:$0xff]
  %v178 = vld [vmem:[%s55 + $0x2b8] sm:$0xff]
  %v179 = vld [vmem:[%s55 + $0x2c0] sm:$0xff]
  %v180 = vld [vmem:[%s55 + $0x2c8] sm:$0xff]
  %v181 = vld [vmem:[%s55 + $0x2d0] sm:$0xff]
  %v182 = vld [vmem:[%s55 + $0x2d8] sm:$0xff]
  %v183 = vld [vmem:[%s55 + $0x2e0] sm:$0xff]
  %v184 = vld [vmem:[%s55 + $0x2e8] sm:$0xff]
  %v185 = vld [vmem:[%s55 + $0x2f0] sm:$0xff]
  %v186 = vld [vmem:[%s55 + $0x2f8] sm:$0xff]
  %v187 = vld [vmem:[%s55 + $0x300] sm:$0xff]
  %v188 = vld [vmem:[%s55 + $0x308] sm:$0xff]
  %v189 = vld [vmem:[%s55 + $0x310] sm:$0xff]
  %v190 = vld [vmem:[%s55 + $0x318] sm:$0xff]
  %v191 = vld [vmem:[%s55 + $0x320] sm:$0xff]
  %v192 = vld [vmem:[%s55 + $0x328] sm:$0xff]
  %v193 = vld [vmem:[%s55 + $0x330] sm:$0xff]
  %v194 = vld [vmem:[%s55 + $0x338] sm:$0xff]
  %v195 = vld [vmem:[%s55 + $0x340] sm:$0xff]
  %v196 = vld [vmem:[%s55 + $0x348] sm:$0xff]
  %v197 = vld [vmem:[%s55 + $0x350] sm:$0xff]
  %v198 = vld [vmem:[%s55 + $0x358] sm:$0xff]
  %v199 = vld [vmem:[%s55 + $0x360] sm:$0xff]
  %v200 = vld [vmem:[%s55 + $0x368] sm:$0xff]
  %v201 = vld [vmem:[%s55 + $0x370] sm:$0xff]
  %v202 = vld [vmem:[%s55 + $0x378] sm:$0xff]
  %v203 = vld [vmem:[%s55 + $0x380] sm:$0xff]
  %v204 = vld [vmem:[%s55 + $0x388] sm:$0xff]
  %v205 = vld [vmem:[%s55 + $0x390] sm:$0xff]
  %v206 = vld [vmem:[%s55 + $0x398] sm:$0xff]
  %v207 = vld [vmem:[%s55 + $0x3a0] sm:$0xff]
  %v208 = vld [vmem:[%s55 + $0x3a8] sm:$0xff]
  %v209 = vld [vmem:[%s55 + $0x3b0] sm:$0xff]
  %v210 = vld [vmem:[%s55 + $0x3b8] sm:$0xff]
  %v211 = vld [vmem:[%s55 + $0x3c0] sm:$0xff]
  %v212 = vld [vmem:[%s55 + $0x3c8] sm:$0xff]
  %v213 = vld [vmem:[%s55 + $0x3d0] sm:$0xff]
  %v214 = vld [vmem:[%s55 + $0x3d8] sm:$0xff]
  %v215 = vld [vmem:[%s55 + $0x3e0] sm:$0xff]
  %v216 = vld [vmem:[%s63] sm:$0xff]
  %v217 = vld [vmem:[%s63 + $0x8] sm:$0xff]
  %v218 = vld [vmem:[%s63 + $0x10] sm:$0xff]
  %v219 = vld [vmem:[%s63 + $0x18] sm:$0xff]
  %v220 = vld [vmem:[%s63 + $0x20] sm:$0xff]
  %v221 = vld [vmem:[%s63 + $0x28] sm:$0xff]
  %v222 = vld [vmem:[%s63 + $0x30] sm:$0xff]
  %v223 = vld [vmem:[%s63 + $0x38] sm:$0xff]
  %v224 = vld [vmem:[%s63 + $0x40] sm:$0xff]
  %v225 = vld [vmem:[%s63 + $0x48] sm:$0xff]
  %v226 = vld [vmem:[%s63 + $0x50] sm:$0xff]
  %v227 = vld [vmem:[%s63 + $0x58] sm:$0xff]
  %v228 = vld [vmem:[%s63 + $0x60] sm:$0xff]
  %v229 = vld [vmem:[%s63 + $0x68] sm:$0xff]
  %v230 = vld [vmem:[%s63 + $0x70] sm:$0xff]
  %v231 = vld [vmem:[%s63 + $0x78] sm:$0xff]
  %v232 = vld [vmem:[%s63 + $0x80] sm:$0xff]
  %v233 = vld [vmem:[%s63 + $0x88] sm:$0xff]
  %v234 = vld [vmem:[%s63 + $0x90] sm:$0xff]
  %v235 = vld [vmem:[%s63 + $0x98] sm:$0xff]
  %v236 = vld [vmem:[%s63 + $0xa0] sm:$0xff]
  %v237 = vld [vmem:[%s63 + $0xa8] sm:$0xff]
  %v238 = vld [vmem:[%s63 + $0xb0] sm:$0xff]
  %v239 = vld [vmem:[%s63 + $0xb8] sm:$0xff]
  %v240 = vld [vmem:[%s63 + $0xc0] sm:$0xff]
  %v241 = vld [vmem:[%s63 + $0xc8] sm:$0xff]
  %v242 = vld [vmem:[%s63 + $0xd0] sm:$0xff]
  %v243 = vld [vmem:[%s63 + $0xd8] sm:$0xff]
  %v244 = vld [vmem:[%s63 + $0xe0] sm:$0xff]
  %v245 = vld [vmem:[%s63 + $0xe8] sm:$0xff]
  %v246 = vld [vmem:[%s63 + $0xf0] sm:$0xff]
  %v247 = vld [vmem:[%s63 + $0xf8] sm:$0xff]
  %v248 = vld [vmem:[%s63 + $0x100] sm:$0xff]
  %v249 = vld [vmem:[%s63 + $0x108] sm:$0xff]
  %v250 = vld [vmem:[%s63 + $0x110] sm:$0xff]
  %v251 = vld [vmem:[%s63 + $0x118] sm:$0xff]
  %v252 = vld [vmem:[%s63 + $0x120] sm:$0xff]
  %v253 = vld [vmem:[%s63 + $0x128] sm:$0xff]
  %v254 = vld [vmem:[%s63 + $0x130] sm:$0xff]
  %v255 = vld [vmem:[%s63 + $0x138] sm:$0xff]
  %v256 = vld [vmem:[%s63 + $0x140] sm:$0xff]
  %v257 = vld [vmem:[%s63 + $0x148] sm:$0xff]
  %v258 = vld [vmem:[%s63 + $0x150] sm:$0xff]
  %v259 = vld [vmem:[%s63 + $0x158] sm:$0xff]
  %v260 = vld [vmem:[%s63 + $0x160] sm:$0xff]
  %v261 = vld [vmem:[%s63 + $0x168] sm:$0xff]
  %v262 = vld [vmem:[%s63 + $0x170] sm:$0xff]
  %v263 = vld [vmem:[%s63 + $0x178] sm:$0xff]
  %v264 = vld [vmem:[%s63 + $0x180] sm:$0xff]
  %v265 = vld [vmem:[%s63 + $0x188] sm:$0xff]
  %v266 = vld [vmem:[%s63 + $0x190] sm:$0xff]
  %v267 = vld [vmem:[%s63 + $0x198] sm:$0xff]
  %v268 = vld [vmem:[%s63 + $0x1a0] sm:$0xff]
  %v269 = vld [vmem:[%s63 + $0x1a8] sm:$0xff]
  %v270 = vld [vmem:[%s63 + $0x1b0] sm:$0xff]
  %v271 = vld [vmem:[%s63 + $0x1b8] sm:$0xff]
  %v272 = vld [vmem:[%s63 + $0x1c0] sm:$0xff]
  %v273 = vld [vmem:[%s63 + $0x1c8] sm:$0xff]
  %v274 = vld [vmem:[%s63 + $0x1d0] sm:$0xff]
  %v275 = vld [vmem:[%s63 + $0x1d8] sm:$0xff]
  %v276 = vld [vmem:[%s63 + $0x1e0] sm:$0xff]
  %v277 = vld [vmem:[%s63 + $0x1e8] sm:$0xff]
  %v278 = vld [vmem:[%s63 + $0x1f0] sm:$0xff]
  %v279 = vld [vmem:[%s63 + $0x1f8] sm:$0xff]
  %v280 = vld [vmem:[%s63 + $0x200] sm:$0xff]
  %v281 = vld [vmem:[%s63 + $0x208] sm:$0xff]
  %v282 = vld [vmem:[%s63 + $0x210] sm:$0xff]
  %v283 = vld [vmem:[%s63 + $0x218] sm:$0xff]
  %v284 = vld [vmem:[%s63 + $0x220] sm:$0xff]
  %v285 = vld [vmem:[%s63 + $0x228] sm:$0xff]
  %v286 = vld [vmem:[%s63 + $0x230] sm:$0xff]
  %v287 = vld [vmem:[%s63 + $0x238] sm:$0xff]
  %v288 = vld [vmem:[%s63 + $0x240] sm:$0xff]
  %v289 = vld [vmem:[%s63 + $0x248] sm:$0xff]
  %v290 = vld [vmem:[%s63 + $0x250] sm:$0xff]
  %v291 = vld [vmem:[%s63 + $0x258] sm:$0xff]
  %v292 = vld [vmem:[%s63 + $0x260] sm:$0xff]
  %v293 = vld [vmem:[%s63 + $0x268] sm:$0xff]
  %v294 = vld [vmem:[%s63 + $0x270] sm:$0xff]
  %v295 = vld [vmem:[%s63 + $0x278] sm:$0xff]
  %v296 = vld [vmem:[%s63 + $0x280] sm:$0xff]
  %v297 = vld [vmem:[%s63 + $0x288] sm:$0xff]
  %v298 = vld [vmem:[%s63 + $0x290] sm:$0xff]
  %v299 = vld [vmem:[%s63 + $0x298] sm:$0xff]
  %v300 = vld [vmem:[%s63 + $0x2a0] sm:$0xff]
  %v301 = vld [vmem:[%s63 + $0x2a8] sm:$0xff]
  %v302 = vld [vmem:[%s63 + $0x2b0] sm:$0xff]
  %v303 = vld [vmem:[%s63 + $0x2b8] sm:$0xff]
  %v304 = vld [vmem:[%s63 + $0x2c0] sm:$0xff]
  %v305 = vld [vmem:[%s63 + $0x2c8] sm:$0xff]
  %v306 = vld [vmem:[%s63 + $0x2d0] sm:$0xff]
  %v307 = vld [vmem:[%s63 + $0x2d8] sm:$0xff]
  %v308 = vld [vmem:[%s63 + $0x2e0] sm:$0xff]
  %v309 = vld [vmem:[%s63 + $0x2e8] sm:$0xff]
  %v310 = vld [vmem:[%s63 + $0x2f0] sm:$0xff]
  %v311 = vld [vmem:[%s63 + $0x2f8] sm:$0xff]
  %v312 = vld [vmem:[%s63 + $0x300] sm:$0xff]
  %v313 = vld [vmem:[%s63 + $0x308] sm:$0xff]
  %v314 = vld [vmem:[%s63 + $0x310] sm:$0xff]
  %v315 = vld [vmem:[%s63 + $0x318] sm:$0xff]
  %v316 = vld [vmem:[%s63 + $0x320] sm:$0xff]
  %v317 = vld [vmem:[%s63 + $0x328] sm:$0xff]
  %v318 = vld [vmem:[%s63 + $0x330] sm:$0xff]
  %v319 = vld [vmem:[%s63 + $0x338] sm:$0xff]
  %v320 = vld [vmem:[%s63 + $0x340] sm:$0xff]
  %v321 = vld [vmem:[%s63 + $0x348] sm:$0xff]
  %v322 = vld [vmem:[%s63 + $0x350] sm:$0xff]
  %v323 = vld [vmem:[%s63 + $0x358] sm:$0xff]
  %v324 = vld [vmem:[%s63 + $0x360] sm:$0xff]
  %v325 = vld [vmem:[%s63 + $0x368] sm:$0xff]
  %v326 = vld [vmem:[%s63 + $0x370] sm:$0xff]
  %v327 = vld [vmem:[%s63 + $0x378] sm:$0xff]
  %v328 = vld [vmem:[%s63 + $0x380] sm:$0xff]
  %v329 = vld [vmem:[%s63 + $0x388] sm:$0xff]
  %v330 = vld [vmem:[%s63 + $0x390] sm:$0xff]
  %v331 = vld [vmem:[%s63 + $0x398] sm:$0xff]
  %v332 = vld [vmem:[%s63 + $0x3a0] sm:$0xff]
  %v333 = vld [vmem:[%s63 + $0x3a8] sm:$0xff]
  %v334 = vld [vmem:[%s63 + $0x3b0] sm:$0xff]
  %v335 = vld [vmem:[%s63 + $0x3b8] sm:$0xff]
  %v336 = vld [vmem:[%s63 + $0x3c0] sm:$0xff]
  %v337 = vld [vmem:[%s63 + $0x3c8] sm:$0xff]
  %v338 = vld [vmem:[%s63 + $0x3d0] sm:$0xff]
  %v339 = vld [vmem:[%s63 + $0x3d8] sm:$0xff]
  %v340 = vld [vmem:[%s63 + $0x3e0] sm:$0xff]
  %v341 = vld [vmem:[%s2] sm:$0x1]
  %v343 = vlaneseq
  %v344 = vshrl.u32 %v343, 7
  %v345 = vsub.s32 0, %v344
  %v346 = vrot.slane %v341, %v345
  %v348 = vmul.f32 %v216, %v346
  %v349 = vmul.f32 %v217, %v346
  %v350 = vmul.f32 %v218, %v346
  %v351 = vmul.f32 %v219, %v346
  %v352 = vmul.f32 %v220, %v346
  %v353 = vmul.f32 %v221, %v346
  %v354 = vmul.f32 %v222, %v346
  %v355 = vmul.f32 %v223, %v346
  %v356 = vmul.f32 %v224, %v346
  %v357 = vmul.f32 %v225, %v346
  %v358 = vmul.f32 %v226, %v346
  %v359 = vmul.f32 %v227, %v346
  %v360 = vmul.f32 %v228, %v346
  %v361 = vmul.f32 %v229, %v346
  %v362 = vmul.f32 %v230, %v346
  %v363 = vmul.f32 %v231, %v346
  %v364 = vmul.f32 %v232, %v346
  %v365 = vmul.f32 %v233, %v346
  %v366 = vmul.f32 %v234, %v346
  %v367 = vmul.f32 %v235, %v346
  %v368 = vmul.f32 %v236, %v346
  %v369 = vmul.f32 %v237, %v346
  %v370 = vmul.f32 %v238, %v346
  %v371 = vmul.f32 %v239, %v346
  %v372 = vmul.f32 %v240, %v346
  %v373 = vmul.f32 %v241, %v346
  %v374 = vmul.f32 %v242, %v346
  %v375 = vmul.f32 %v243, %v346
  %v376 = vmul.f32 %v244, %v346
  %v377 = vmul.f32 %v245, %v346
  %v378 = vmul.f32 %v246, %v346
  %v379 = vmul.f32 %v247, %v346
  %v380 = vmul.f32 %v248, %v346
  %v381 = vmul.f32 %v249, %v346
  %v382 = vmul.f32 %v250, %v346
  %v383 = vmul.f32 %v251, %v346
  %v384 = vmul.f32 %v252, %v346
  %v385 = vmul.f32 %v253, %v346
  %v386 = vmul.f32 %v254, %v346
  %v387 = vmul.f32 %v255, %v346
  %v388 = vmul.f32 %v256, %v346
  %v389 = vmul.f32 %v257, %v346
  %v390 = vmul.f32 %v258, %v346
  %v391 = vmul.f32 %v259, %v346
  %v392 = vmul.f32 %v260, %v346
  %v393 = vmul.f32 %v261, %v346
  %v394 = vmul.f32 %v262, %v346
  %v395 = vmul.f32 %v263, %v346
  %v396 = vmul.f32 %v264, %v346
  %v397 = vmul.f32 %v265, %v346
  %v398 = vmul.f32 %v266, %v346
  %v399 = vmul.f32 %v267, %v346
  %v400 = vmul.f32 %v268, %v346
  %v401 = vmul.f32 %v269, %v346
  %v402 = vmul.f32 %v270, %v346
  %v403 = vmul.f32 %v271, %v346
  %v404 = vmul.f32 %v272, %v346
  %v405 = vmul.f32 %v273, %v346
  %v406 = vmul.f32 %v274, %v346
  %v407 = vmul.f32 %v275, %v346
  %v408 = vmul.f32 %v276, %v346
  %v409 = vmul.f32 %v277, %v346
  %v410 = vmul.f32 %v278, %v346
  %v411 = vmul.f32 %v279, %v346
  %v412 = vmul.f32 %v280, %v346
  %v413 = vmul.f32 %v281, %v346
  %v414 = vmul.f32 %v282, %v346
  %v415 = vmul.f32 %v283, %v346
  %v416 = vmul.f32 %v284, %v346
  %v417 = vmul.f32 %v285, %v346
  %v418 = vmul.f32 %v286, %v346
  %v419 = vmul.f32 %v287, %v346
  %v420 = vmul.f32 %v288, %v346
  %v421 = vmul.f32 %v289, %v346
  %v422 = vmul.f32 %v290, %v346
  %v423 = vmul.f32 %v291, %v346
  %v424 = vmul.f32 %v292, %v346
  %v425 = vmul.f32 %v293, %v346
  %v426 = vmul.f32 %v294, %v346
  %v427 = vmul.f32 %v295, %v346
  %v428 = vmul.f32 %v296, %v346
  %v429 = vmul.f32 %v297, %v346
  %v430 = vmul.f32 %v298, %v346
  %v431 = vmul.f32 %v299, %v346
  %v432 = vmul.f32 %v300, %v346
  %v433 = vmul.f32 %v301, %v346
  %v434 = vmul.f32 %v302, %v346
  %v435 = vmul.f32 %v303, %v346
  %v436 = vmul.f32 %v304, %v346
  %v437 = vmul.f32 %v305, %v346
  %v438 = vmul.f32 %v306, %v346
  %v439 = vmul.f32 %v307, %v346
  %v440 = vmul.f32 %v308, %v346
  %v441 = vmul.f32 %v309, %v346
  %v442 = vmul.f32 %v310, %v346
  %v443 = vmul.f32 %v311, %v346
  %v444 = vmul.f32 %v312, %v346
  %v445 = vmul.f32 %v313, %v346
  %v446 = vmul.f32 %v314, %v346
  %v447 = vmul.f32 %v315, %v346
  %v448 = vmul.f32 %v316, %v346
  %v449 = vmul.f32 %v317, %v346
  %v450 = vmul.f32 %v318, %v346
  %v451 = vmul.f32 %v319, %v346
  %v452 = vmul.f32 %v320, %v346
  %v453 = vmul.f32 %v321, %v346
  %v454 = vmul.f32 %v322, %v346
  %v455 = vmul.f32 %v323, %v346
  %v456 = vmul.f32 %v324, %v346
  %v457 = vmul.f32 %v325, %v346
  %v458 = vmul.f32 %v326, %v346
  %v459 = vmul.f32 %v327, %v346
  %v460 = vmul.f32 %v328, %v346
  %v461 = vmul.f32 %v329, %v346
  %v462 = vmul.f32 %v330, %v346
  %v463 = vmul.f32 %v331, %v346
  %v464 = vmul.f32 %v332, %v346
  %v465 = vmul.f32 %v333, %v346
  %v466 = vmul.f32 %v334, %v346
  %v467 = vmul.f32 %v335, %v346
  %v468 = vmul.f32 %v336, %v346
  %v469 = vmul.f32 %v337, %v346
  %v470 = vmul.f32 %v338, %v346
  %v471 = vmul.f32 %v339, %v346
  %v472 = vmul.f32 %v340, %v346
  %vm473 = vcmask 261120
  %v474 = vsel %vm473, %v348, 0.0
  %475 = vadd.xlane.f32.xlu0 %v474
  %v476 = vpop.xlane.xlu0 %475
  %v477 = vsel %vm473, %v349, 0.0
  %478 = vadd.xlane.f32.xlu0 %v477
  %v479 = vpop.xlane.xlu0 %478
  %v480 = vsel %vm473, %v350, 0.0
  %481 = vadd.xlane.f32.xlu0 %v480
  %v482 = vpop.xlane.xlu0 %481
  %v483 = vsel %vm473, %v351, 0.0
  %484 = vadd.xlane.f32.xlu0 %v483
  %v485 = vpop.xlane.xlu0 %484
  %v486 = vsel %vm473, %v352, 0.0
  %487 = vadd.xlane.f32.xlu0 %v486
  %v488 = vpop.xlane.xlu0 %487
  %v489 = vsel %vm473, %v353, 0.0
  %490 = vadd.xlane.f32.xlu0 %v489
  %v491 = vpop.xlane.xlu0 %490
  %v492 = vsel %vm473, %v354, 0.0
  %493 = vadd.xlane.f32.xlu0 %v492
  %v494 = vpop.xlane.xlu0 %493
  %v495 = vsel %vm473, %v355, 0.0
  %496 = vadd.xlane.f32.xlu0 %v495
  %v497 = vpop.xlane.xlu0 %496
  %v498 = vsel %vm473, %v356, 0.0
  %499 = vadd.xlane.f32.xlu0 %v498
  %v500 = vpop.xlane.xlu0 %499
  %v501 = vsel %vm473, %v357, 0.0
  %502 = vadd.xlane.f32.xlu0 %v501
  %v503 = vpop.xlane.xlu0 %502
  %v504 = vsel %vm473, %v358, 0.0
  %505 = vadd.xlane.f32.xlu0 %v504
  %v506 = vpop.xlane.xlu0 %505
  %v507 = vsel %vm473, %v359, 0.0
  %508 = vadd.xlane.f32.xlu0 %v507
  %v509 = vpop.xlane.xlu0 %508
  %v510 = vsel %vm473, %v360, 0.0
  %511 = vadd.xlane.f32.xlu0 %v510
  %v512 = vpop.xlane.xlu0 %511
  %v513 = vsel %vm473, %v361, 0.0
  %514 = vadd.xlane.f32.xlu0 %v513
  %v515 = vpop.xlane.xlu0 %514
  %v516 = vsel %vm473, %v362, 0.0
  %517 = vadd.xlane.f32.xlu0 %v516
  %v518 = vpop.xlane.xlu0 %517
  %v519 = vsel %vm473, %v363, 0.0
  %520 = vadd.xlane.f32.xlu0 %v519
  %v521 = vpop.xlane.xlu0 %520
  %v522 = vsel %vm473, %v364, 0.0
  %523 = vadd.xlane.f32.xlu0 %v522
  %v524 = vpop.xlane.xlu0 %523
  %v525 = vsel %vm473, %v365, 0.0
  %526 = vadd.xlane.f32.xlu0 %v525
  %v527 = vpop.xlane.xlu0 %526
  %v528 = vsel %vm473, %v366, 0.0
  %529 = vadd.xlane.f32.xlu0 %v528
  %v530 = vpop.xlane.xlu0 %529
  %v531 = vsel %vm473, %v367, 0.0
  %532 = vadd.xlane.f32.xlu0 %v531
  %v533 = vpop.xlane.xlu0 %532
  %v534 = vsel %vm473, %v368, 0.0
  %535 = vadd.xlane.f32.xlu0 %v534
  %v536 = vpop.xlane.xlu0 %535
  %v537 = vsel %vm473, %v369, 0.0
  %538 = vadd.xlane.f32.xlu0 %v537
  %v539 = vpop.xlane.xlu0 %538
  %v540 = vsel %vm473, %v370, 0.0
  %541 = vadd.xlane.f32.xlu0 %v540
  %v542 = vpop.xlane.xlu0 %541
  %v543 = vsel %vm473, %v371, 0.0
  %544 = vadd.xlane.f32.xlu0 %v543
  %v545 = vpop.xlane.xlu0 %544
  %v546 = vsel %vm473, %v372, 0.0
  %547 = vadd.xlane.f32.xlu0 %v546
  %v548 = vpop.xlane.xlu0 %547
  %v549 = vsel %vm473, %v373, 0.0
  %550 = vadd.xlane.f32.xlu0 %v549
  %v551 = vpop.xlane.xlu0 %550
  %v552 = vsel %vm473, %v374, 0.0
  %553 = vadd.xlane.f32.xlu0 %v552
  %v554 = vpop.xlane.xlu0 %553
  %v555 = vsel %vm473, %v375, 0.0
  %556 = vadd.xlane.f32.xlu0 %v555
  %v557 = vpop.xlane.xlu0 %556
  %v558 = vsel %vm473, %v376, 0.0
  %559 = vadd.xlane.f32.xlu0 %v558
  %v560 = vpop.xlane.xlu0 %559
  %v561 = vsel %vm473, %v377, 0.0
  %562 = vadd.xlane.f32.xlu0 %v561
  %v563 = vpop.xlane.xlu0 %562
  %v564 = vsel %vm473, %v378, 0.0
  %565 = vadd.xlane.f32.xlu0 %v564
  %v566 = vpop.xlane.xlu0 %565
  %v567 = vsel %vm473, %v379, 0.0
  %568 = vadd.xlane.f32.xlu0 %v567
  %v569 = vpop.xlane.xlu0 %568
  %v570 = vsel %vm473, %v380, 0.0
  %571 = vadd.xlane.f32.xlu0 %v570
  %v572 = vpop.xlane.xlu0 %571
  %v573 = vsel %vm473, %v381, 0.0
  %574 = vadd.xlane.f32.xlu0 %v573
  %v575 = vpop.xlane.xlu0 %574
  %v576 = vsel %vm473, %v382, 0.0
  %577 = vadd.xlane.f32.xlu0 %v576
  %v578 = vpop.xlane.xlu0 %577
  %v579 = vsel %vm473, %v383, 0.0
  %580 = vadd.xlane.f32.xlu0 %v579
  %v581 = vpop.xlane.xlu0 %580
  %v582 = vsel %vm473, %v384, 0.0
  %583 = vadd.xlane.f32.xlu0 %v582
  %v584 = vpop.xlane.xlu0 %583
  %v585 = vsel %vm473, %v385, 0.0
  %586 = vadd.xlane.f32.xlu0 %v585
  %v587 = vpop.xlane.xlu0 %586
  %v588 = vsel %vm473, %v386, 0.0
  %589 = vadd.xlane.f32.xlu0 %v588
  %v590 = vpop.xlane.xlu0 %589
  %v591 = vsel %vm473, %v387, 0.0
  %592 = vadd.xlane.f32.xlu0 %v591
  %v593 = vpop.xlane.xlu0 %592
  %v594 = vsel %vm473, %v388, 0.0
  %595 = vadd.xlane.f32.xlu0 %v594
  %v596 = vpop.xlane.xlu0 %595
  %v597 = vsel %vm473, %v389, 0.0
  %598 = vadd.xlane.f32.xlu0 %v597
  %v599 = vpop.xlane.xlu0 %598
  %v600 = vsel %vm473, %v390, 0.0
  %601 = vadd.xlane.f32.xlu0 %v600
  %v602 = vpop.xlane.xlu0 %601
  %v603 = vsel %vm473, %v391, 0.0
  %604 = vadd.xlane.f32.xlu0 %v603
  %v605 = vpop.xlane.xlu0 %604
  %v606 = vsel %vm473, %v392, 0.0
  %607 = vadd.xlane.f32.xlu0 %v606
  %v608 = vpop.xlane.xlu0 %607
  %v609 = vsel %vm473, %v393, 0.0
  %610 = vadd.xlane.f32.xlu0 %v609
  %v611 = vpop.xlane.xlu0 %610
  %v612 = vsel %vm473, %v394, 0.0
  %613 = vadd.xlane.f32.xlu0 %v612
  %v614 = vpop.xlane.xlu0 %613
  %v615 = vsel %vm473, %v395, 0.0
  %616 = vadd.xlane.f32.xlu0 %v615
  %v617 = vpop.xlane.xlu0 %616
  %v618 = vsel %vm473, %v396, 0.0
  %619 = vadd.xlane.f32.xlu0 %v618
  %v620 = vpop.xlane.xlu0 %619
  %v621 = vsel %vm473, %v397, 0.0
  %622 = vadd.xlane.f32.xlu0 %v621
  %v623 = vpop.xlane.xlu0 %622
  %v624 = vsel %vm473, %v398, 0.0
  %625 = vadd.xlane.f32.xlu0 %v624
  %v626 = vpop.xlane.xlu0 %625
  %v627 = vsel %vm473, %v399, 0.0
  %628 = vadd.xlane.f32.xlu0 %v627
  %v629 = vpop.xlane.xlu0 %628
  %v630 = vsel %vm473, %v400, 0.0
  %631 = vadd.xlane.f32.xlu0 %v630
  %v632 = vpop.xlane.xlu0 %631
  %v633 = vsel %vm473, %v401, 0.0
  %634 = vadd.xlane.f32.xlu0 %v633
  %v635 = vpop.xlane.xlu0 %634
  %v636 = vsel %vm473, %v402, 0.0
  %637 = vadd.xlane.f32.xlu0 %v636
  %v638 = vpop.xlane.xlu0 %637
  %v639 = vsel %vm473, %v403, 0.0
  %640 = vadd.xlane.f32.xlu0 %v639
  %v641 = vpop.xlane.xlu0 %640
  %v642 = vsel %vm473, %v404, 0.0
  %643 = vadd.xlane.f32.xlu0 %v642
  %v644 = vpop.xlane.xlu0 %643
  %v645 = vsel %vm473, %v405, 0.0
  %646 = vadd.xlane.f32.xlu0 %v645
  %v647 = vpop.xlane.xlu0 %646
  %v648 = vsel %vm473, %v406, 0.0
  %649 = vadd.xlane.f32.xlu0 %v648
  %v650 = vpop.xlane.xlu0 %649
  %v651 = vsel %vm473, %v407, 0.0
  %652 = vadd.xlane.f32.xlu0 %v651
  %v653 = vpop.xlane.xlu0 %652
  %v654 = vsel %vm473, %v408, 0.0
  %655 = vadd.xlane.f32.xlu0 %v654
  %v656 = vpop.xlane.xlu0 %655
  %v657 = vsel %vm473, %v409, 0.0
  %658 = vadd.xlane.f32.xlu0 %v657
  %v659 = vpop.xlane.xlu0 %658
  %v660 = vsel %vm473, %v410, 0.0
  %661 = vadd.xlane.f32.xlu0 %v660
  %v662 = vpop.xlane.xlu0 %661
  %v663 = vsel %vm473, %v411, 0.0
  %664 = vadd.xlane.f32.xlu0 %v663
  %v665 = vpop.xlane.xlu0 %664
  %v666 = vsel %vm473, %v412, 0.0
  %667 = vadd.xlane.f32.xlu0 %v666
  %v668 = vpop.xlane.xlu0 %667
  %v669 = vsel %vm473, %v413, 0.0
  %670 = vadd.xlane.f32.xlu0 %v669
  %v671 = vpop.xlane.xlu0 %670
  %v672 = vsel %vm473, %v414, 0.0
  %673 = vadd.xlane.f32.xlu0 %v672
  %v674 = vpop.xlane.xlu0 %673
  %v675 = vsel %vm473, %v415, 0.0
  %676 = vadd.xlane.f32.xlu0 %v675
  %v677 = vpop.xlane.xlu0 %676
  %v678 = vsel %vm473, %v416, 0.0
  %679 = vadd.xlane.f32.xlu0 %v678
  %v680 = vpop.xlane.xlu0 %679
  %v681 = vsel %vm473, %v417, 0.0
  %682 = vadd.xlane.f32.xlu0 %v681
  %v683 = vpop.xlane.xlu0 %682
  %v684 = vsel %vm473, %v418, 0.0
  %685 = vadd.xlane.f32.xlu0 %v684
  %v686 = vpop.xlane.xlu0 %685
  %v687 = vsel %vm473, %v419, 0.0
  %688 = vadd.xlane.f32.xlu0 %v687
  %v689 = vpop.xlane.xlu0 %688
  %v690 = vsel %vm473, %v420, 0.0
  %691 = vadd.xlane.f32.xlu0 %v690
  %v692 = vpop.xlane.xlu0 %691
  %v693 = vsel %vm473, %v421, 0.0
  %694 = vadd.xlane.f32.xlu0 %v693
  %v695 = vpop.xlane.xlu0 %694
  %v696 = vsel %vm473, %v422, 0.0
  %697 = vadd.xlane.f32.xlu0 %v696
  %v698 = vpop.xlane.xlu0 %697
  %v699 = vsel %vm473, %v423, 0.0
  %700 = vadd.xlane.f32.xlu0 %v699
  %v701 = vpop.xlane.xlu0 %700
  %v702 = vsel %vm473, %v424, 0.0
  %703 = vadd.xlane.f32.xlu0 %v702
  %v704 = vpop.xlane.xlu0 %703
  %v705 = vsel %vm473, %v425, 0.0
  %706 = vadd.xlane.f32.xlu0 %v705
  %v707 = vpop.xlane.xlu0 %706
  %v708 = vsel %vm473, %v426, 0.0
  %709 = vadd.xlane.f32.xlu0 %v708
  %v710 = vpop.xlane.xlu0 %709
  %v711 = vsel %vm473, %v427, 0.0
  %712 = vadd.xlane.f32.xlu0 %v711
  %v713 = vpop.xlane.xlu0 %712
  %v714 = vsel %vm473, %v428, 0.0
  %715 = vadd.xlane.f32.xlu0 %v714
  %v716 = vpop.xlane.xlu0 %715
  %v717 = vsel %vm473, %v429, 0.0
  %718 = vadd.xlane.f32.xlu0 %v717
  %v719 = vpop.xlane.xlu0 %718
  %v720 = vsel %vm473, %v430, 0.0
  %721 = vadd.xlane.f32.xlu0 %v720
  %v722 = vpop.xlane.xlu0 %721
  %v723 = vsel %vm473, %v431, 0.0
  %724 = vadd.xlane.f32.xlu0 %v723
  %v725 = vpop.xlane.xlu0 %724
  %v726 = vsel %vm473, %v432, 0.0
  %727 = vadd.xlane.f32.xlu0 %v726
  %v728 = vpop.xlane.xlu0 %727
  %v729 = vsel %vm473, %v433, 0.0
  %730 = vadd.xlane.f32.xlu0 %v729
  %v731 = vpop.xlane.xlu0 %730
  %v732 = vsel %vm473, %v434, 0.0
  %733 = vadd.xlane.f32.xlu0 %v732
  %v734 = vpop.xlane.xlu0 %733
  %v735 = vsel %vm473, %v435, 0.0
  %736 = vadd.xlane.f32.xlu0 %v735
  %v737 = vpop.xlane.xlu0 %736
  %v738 = vsel %vm473, %v436, 0.0
  %739 = vadd.xlane.f32.xlu0 %v738
  %v740 = vpop.xlane.xlu0 %739
  %v741 = vsel %vm473, %v437, 0.0
  %742 = vadd.xlane.f32.xlu0 %v741
  %v743 = vpop.xlane.xlu0 %742
  %v744 = vsel %vm473, %v438, 0.0
  %745 = vadd.xlane.f32.xlu0 %v744
  %v746 = vpop.xlane.xlu0 %745
  %v747 = vsel %vm473, %v439, 0.0
  %748 = vadd.xlane.f32.xlu0 %v747
  %v749 = vpop.xlane.xlu0 %748
  %v750 = vsel %vm473, %v440, 0.0
  %751 = vadd.xlane.f32.xlu0 %v750
  %v752 = vpop.xlane.xlu0 %751
  %v753 = vsel %vm473, %v441, 0.0
  %754 = vadd.xlane.f32.xlu0 %v753
  %v755 = vpop.xlane.xlu0 %754
  %v756 = vsel %vm473, %v442, 0.0
  %757 = vadd.xlane.f32.xlu0 %v756
  %v758 = vpop.xlane.xlu0 %757
  %v759 = vsel %vm473, %v443, 0.0
  %760 = vadd.xlane.f32.xlu0 %v759
  %v761 = vpop.xlane.xlu0 %760
  %v762 = vsel %vm473, %v444, 0.0
  %763 = vadd.xlane.f32.xlu0 %v762
  %v764 = vpop.xlane.xlu0 %763
  %v765 = vsel %vm473, %v445, 0.0
  %766 = vadd.xlane.f32.xlu0 %v765
  %v767 = vpop.xlane.xlu0 %766
  %v768 = vsel %vm473, %v446, 0.0
  %769 = vadd.xlane.f32.xlu0 %v768
  %v770 = vpop.xlane.xlu0 %769
  %v771 = vsel %vm473, %v447, 0.0
  %772 = vadd.xlane.f32.xlu0 %v771
  %v773 = vpop.xlane.xlu0 %772
  %v774 = vsel %vm473, %v448, 0.0
  %775 = vadd.xlane.f32.xlu0 %v774
  %v776 = vpop.xlane.xlu0 %775
  %v777 = vsel %vm473, %v449, 0.0
  %778 = vadd.xlane.f32.xlu0 %v777
  %v779 = vpop.xlane.xlu0 %778
  %v780 = vsel %vm473, %v450, 0.0
  %781 = vadd.xlane.f32.xlu0 %v780
  %v782 = vpop.xlane.xlu0 %781
  %v783 = vsel %vm473, %v451, 0.0
  %784 = vadd.xlane.f32.xlu0 %v783
  %v785 = vpop.xlane.xlu0 %784
  %v786 = vsel %vm473, %v452, 0.0
  %787 = vadd.xlane.f32.xlu0 %v786
  %v788 = vpop.xlane.xlu0 %787
  %v789 = vsel %vm473, %v453, 0.0
  %790 = vadd.xlane.f32.xlu0 %v789
  %v791 = vpop.xlane.xlu0 %790
  %v792 = vsel %vm473, %v454, 0.0
  %793 = vadd.xlane.f32.xlu0 %v792
  %v794 = vpop.xlane.xlu0 %793
  %v795 = vsel %vm473, %v455, 0.0
  %796 = vadd.xlane.f32.xlu0 %v795
  %v797 = vpop.xlane.xlu0 %796
  %v798 = vsel %vm473, %v456, 0.0
  %799 = vadd.xlane.f32.xlu0 %v798
  %v800 = vpop.xlane.xlu0 %799
  %v801 = vsel %vm473, %v457, 0.0
  %802 = vadd.xlane.f32.xlu0 %v801
  %v803 = vpop.xlane.xlu0 %802
  %v804 = vsel %vm473, %v458, 0.0
  %805 = vadd.xlane.f32.xlu0 %v804
  %v806 = vpop.xlane.xlu0 %805
  %v807 = vsel %vm473, %v459, 0.0
  %808 = vadd.xlane.f32.xlu0 %v807
  %v809 = vpop.xlane.xlu0 %808
  %v810 = vsel %vm473, %v460, 0.0
  %811 = vadd.xlane.f32.xlu0 %v810
  %v812 = vpop.xlane.xlu0 %811
  %v813 = vsel %vm473, %v461, 0.0
  %814 = vadd.xlane.f32.xlu0 %v813
  %v815 = vpop.xlane.xlu0 %814
  %v816 = vsel %vm473, %v462, 0.0
  %817 = vadd.xlane.f32.xlu0 %v816
  %v818 = vpop.xlane.xlu0 %817
  %v819 = vsel %vm473, %v463, 0.0
  %820 = vadd.xlane.f32.xlu0 %v819
  %v821 = vpop.xlane.xlu0 %820
  %v822 = vsel %vm473, %v464, 0.0
  %823 = vadd.xlane.f32.xlu0 %v822
  %v824 = vpop.xlane.xlu0 %823
  %v825 = vsel %vm473, %v465, 0.0
  %826 = vadd.xlane.f32.xlu0 %v825
  %v827 = vpop.xlane.xlu0 %826
  %v828 = vsel %vm473, %v466, 0.0
  %829 = vadd.xlane.f32.xlu0 %v828
  %v830 = vpop.xlane.xlu0 %829
  %v831 = vsel %vm473, %v467, 0.0
  %832 = vadd.xlane.f32.xlu0 %v831
  %v833 = vpop.xlane.xlu0 %832
  %v834 = vsel %vm473, %v468, 0.0
  %835 = vadd.xlane.f32.xlu0 %v834
  %v836 = vpop.xlane.xlu0 %835
  %v837 = vsel %vm473, %v469, 0.0
  %838 = vadd.xlane.f32.xlu0 %v837
  %v839 = vpop.xlane.xlu0 %838
  %v840 = vsel %vm473, %v470, 0.0
  %841 = vadd.xlane.f32.xlu0 %v840
  %v842 = vpop.xlane.xlu0 %841
  %v843 = vsel %vm473, %v471, 0.0
  %844 = vadd.xlane.f32.xlu0 %v843
  %v845 = vpop.xlane.xlu0 %844
  %v846 = vsel %vm473, %v472, 0.0
  %847 = vadd.xlane.f32.xlu0 %v846
  %v848 = vpop.xlane.xlu0 %847
  %v849 = vmul.f32 %v216, %v476
  %v850 = vmul.f32 %v217, %v479
  %v851 = vmul.f32 %v218, %v482
  %v852 = vmul.f32 %v219, %v485
  %v853 = vmul.f32 %v220, %v488
  %v854 = vmul.f32 %v221, %v491
  %v855 = vmul.f32 %v222, %v494
  %v856 = vmul.f32 %v223, %v497
  %v857 = vmul.f32 %v224, %v500
  %v858 = vmul.f32 %v225, %v503
  %v859 = vmul.f32 %v226, %v506
  %v860 = vmul.f32 %v227, %v509
  %v861 = vmul.f32 %v228, %v512
  %v862 = vmul.f32 %v229, %v515
  %v863 = vmul.f32 %v230, %v518
  %v864 = vmul.f32 %v231, %v521
  %v865 = vmul.f32 %v232, %v524
  %v866 = vmul.f32 %v233, %v527
  %v867 = vmul.f32 %v234, %v530
  %v868 = vmul.f32 %v235, %v533
  %v869 = vmul.f32 %v236, %v536
  %v870 = vmul.f32 %v237, %v539
  %v871 = vmul.f32 %v238, %v542
  %v872 = vmul.f32 %v239, %v545
  %v873 = vmul.f32 %v240, %v548
  %v874 = vmul.f32 %v241, %v551
  %v875 = vmul.f32 %v242, %v554
  %v876 = vmul.f32 %v243, %v557
  %v877 = vmul.f32 %v244, %v560
  %v878 = vmul.f32 %v245, %v563
  %v879 = vmul.f32 %v246, %v566
  %v880 = vmul.f32 %v247, %v569
  %v881 = vmul.f32 %v248, %v572
  %v882 = vmul.f32 %v249, %v575
  %v883 = vmul.f32 %v250, %v578
  %v884 = vmul.f32 %v251, %v581
  %v885 = vmul.f32 %v252, %v584
  %v886 = vmul.f32 %v253, %v587
  %v887 = vmul.f32 %v254, %v590
  %v888 = vmul.f32 %v255, %v593
  %v889 = vmul.f32 %v256, %v596
  %v890 = vmul.f32 %v257, %v599
  %v891 = vmul.f32 %v258, %v602
  %v892 = vmul.f32 %v259, %v605
  %v893 = vmul.f32 %v260, %v608
  %v894 = vmul.f32 %v261, %v611
  %v895 = vmul.f32 %v262, %v614
  %v896 = vmul.f32 %v263, %v617
  %v897 = vmul.f32 %v264, %v620
  %v898 = vmul.f32 %v265, %v623
  %v899 = vmul.f32 %v266, %v626
  %v900 = vmul.f32 %v267, %v629
  %v901 = vmul.f32 %v268, %v632
  %v902 = vmul.f32 %v269, %v635
  %v903 = vmul.f32 %v270, %v638
  %v904 = vmul.f32 %v271, %v641
  %v905 = vmul.f32 %v272, %v644
  %v906 = vmul.f32 %v273, %v647
  %v907 = vmul.f32 %v274, %v650
  %v908 = vmul.f32 %v275, %v653
  %v909 = vmul.f32 %v276, %v656
  %v910 = vmul.f32 %v277, %v659
  %v911 = vmul.f32 %v278, %v662
  %v912 = vmul.f32 %v279, %v665
  %v913 = vmul.f32 %v280, %v668
  %v914 = vmul.f32 %v281, %v671
  %v915 = vmul.f32 %v282, %v674
  %v916 = vmul.f32 %v283, %v677
  %v917 = vmul.f32 %v284, %v680
  %v918 = vmul.f32 %v285, %v683
  %v919 = vmul.f32 %v286, %v686
  %v920 = vmul.f32 %v287, %v689
  %v921 = vmul.f32 %v288, %v692
  %v922 = vmul.f32 %v289, %v695
  %v923 = vmul.f32 %v290, %v698
  %v924 = vmul.f32 %v291, %v701
  %v925 = vmul.f32 %v292, %v704
  %v926 = vmul.f32 %v293, %v707
  %v927 = vmul.f32 %v294, %v710
  %v928 = vmul.f32 %v295, %v713
  %v929 = vmul.f32 %v296, %v716
  %v930 = vmul.f32 %v297, %v719
  %v931 = vmul.f32 %v298, %v722
  %v932 = vmul.f32 %v299, %v725
  %v933 = vmul.f32 %v300, %v728
  %v934 = vmul.f32 %v301, %v731
  %v935 = vmul.f32 %v302, %v734
  %v936 = vmul.f32 %v303, %v737
  %v937 = vmul.f32 %v304, %v740
  %v938 = vmul.f32 %v305, %v743
  %v939 = vmul.f32 %v306, %v746
  %v940 = vmul.f32 %v307, %v749
  %v941 = vmul.f32 %v308, %v752
  %v942 = vmul.f32 %v309, %v755
  %v943 = vmul.f32 %v310, %v758
  %v944 = vmul.f32 %v311, %v761
  %v945 = vmul.f32 %v312, %v764
  %v946 = vmul.f32 %v313, %v767
  %v947 = vmul.f32 %v314, %v770
  %v948 = vmul.f32 %v315, %v773
  %v949 = vmul.f32 %v316, %v776
  %v950 = vmul.f32 %v317, %v779
  %v951 = vmul.f32 %v318, %v782
  %v952 = vmul.f32 %v319, %v785
  %v953 = vmul.f32 %v320, %v788
  %v954 = vmul.f32 %v321, %v791
  %v955 = vmul.f32 %v322, %v794
  %v956 = vmul.f32 %v323, %v797
  %v957 = vmul.f32 %v324, %v800
  %v958 = vmul.f32 %v325, %v803
  %v959 = vmul.f32 %v326, %v806
  %v960 = vmul.f32 %v327, %v809
  %v961 = vmul.f32 %v328, %v812
  %v962 = vmul.f32 %v329, %v815
  %v963 = vmul.f32 %v330, %v818
  %v964 = vmul.f32 %v331, %v821
  %v965 = vmul.f32 %v332, %v824
  %v966 = vmul.f32 %v333, %v827
  %v967 = vmul.f32 %v334, %v830
  %v968 = vmul.f32 %v335, %v833
  %v969 = vmul.f32 %v336, %v836
  %v970 = vmul.f32 %v337, %v839
  %v971 = vmul.f32 %v338, %v842
  %v972 = vmul.f32 %v339, %v845
  %v973 = vmul.f32 %v340, %v848
  %v974 = vmul.f32 %v476, 0.001
  %v975 = vmul.f32 %v479, 0.001
  %v976 = vmul.f32 %v482, 0.001
  %v977 = vmul.f32 %v485, 0.001
  %v978 = vmul.f32 %v488, 0.001
  %v979 = vmul.f32 %v491, 0.001
  %v980 = vmul.f32 %v494, 0.001
  %v981 = vmul.f32 %v497, 0.001
  %v982 = vmul.f32 %v500, 0.001
  %v983 = vmul.f32 %v503, 0.001
  %v984 = vmul.f32 %v506, 0.001
  %v985 = vmul.f32 %v509, 0.001
  %v986 = vmul.f32 %v512, 0.001
  %v987 = vmul.f32 %v515, 0.001
  %v988 = vmul.f32 %v518, 0.001
  %v989 = vmul.f32 %v521, 0.001
  %v990 = vmul.f32 %v524, 0.001
  %v991 = vmul.f32 %v527, 0.001
  %v992 = vmul.f32 %v530, 0.001
  %v993 = vmul.f32 %v533, 0.001
  %v994 = vmul.f32 %v536, 0.001
  %v995 = vmul.f32 %v539, 0.001
  %v996 = vmul.f32 %v542, 0.001
  %v997 = vmul.f32 %v545, 0.001
  %v998 = vmul.f32 %v548, 0.001
  %v999 = vmul.f32 %v551, 0.001
  %v1000 = vmul.f32 %v554, 0.001
  %v1001 = vmul.f32 %v557, 0.001
  %v1002 = vmul.f32 %v560, 0.001
  %v1003 = vmul.f32 %v563, 0.001
  %v1004 = vmul.f32 %v566, 0.001
  %v1005 = vmul.f32 %v569, 0.001
  %v1006 = vmul.f32 %v572, 0.001
  %v1007 = vmul.f32 %v575, 0.001
  %v1008 = vmul.f32 %v578, 0.001
  %v1009 = vmul.f32 %v581, 0.001
  %v1010 = vmul.f32 %v584, 0.001
  %v1011 = vmul.f32 %v587, 0.001
  %v1012 = vmul.f32 %v590, 0.001
  %v1013 = vmul.f32 %v593, 0.001
  %v1014 = vmul.f32 %v596, 0.001
  %v1015 = vmul.f32 %v599, 0.001
  %v1016 = vmul.f32 %v602, 0.001
  %v1017 = vmul.f32 %v605, 0.001
  %v1018 = vmul.f32 %v608, 0.001
  %v1019 = vmul.f32 %v611, 0.001
  %v1020 = vmul.f32 %v614, 0.001
  %v1021 = vmul.f32 %v617, 0.001
  %v1022 = vmul.f32 %v620, 0.001
  %v1023 = vmul.f32 %v623, 0.001
  %v1024 = vmul.f32 %v626, 0.001
  %v1025 = vmul.f32 %v629, 0.001
  %v1026 = vmul.f32 %v632, 0.001
  %v1027 = vmul.f32 %v635, 0.001
  %v1028 = vmul.f32 %v638, 0.001
  %v1029 = vmul.f32 %v641, 0.001
  %v1030 = vmul.f32 %v644, 0.001
  %v1031 = vmul.f32 %v647, 0.001
  %v1032 = vmul.f32 %v650, 0.001
  %v1033 = vmul.f32 %v653, 0.001
  %v1034 = vmul.f32 %v656, 0.001
  %v1035 = vmul.f32 %v659, 0.001
  %v1036 = vmul.f32 %v662, 0.001
  %v1037 = vmul.f32 %v665, 0.001
  %v1038 = vmul.f32 %v668, 0.001
  %v1039 = vmul.f32 %v671, 0.001
  %v1040 = vmul.f32 %v674, 0.001
  %v1041 = vmul.f32 %v677, 0.001
  %v1042 = vmul.f32 %v680, 0.001
  %v1043 = vmul.f32 %v683, 0.001
  %v1044 = vmul.f32 %v686, 0.001
  %v1045 = vmul.f32 %v689, 0.001
  %v1046 = vmul.f32 %v692, 0.001
  %v1047 = vmul.f32 %v695, 0.001
  %v1048 = vmul.f32 %v698, 0.001
  %v1049 = vmul.f32 %v701, 0.001
  %v1050 = vmul.f32 %v704, 0.001
  %v1051 = vmul.f32 %v707, 0.001
  %v1052 = vmul.f32 %v710, 0.001
  %v1053 = vmul.f32 %v713, 0.001
  %v1054 = vmul.f32 %v716, 0.001
  %v1055 = vmul.f32 %v719, 0.001
  %v1056 = vmul.f32 %v722, 0.001
  %v1057 = vmul.f32 %v725, 0.001
  %v1058 = vmul.f32 %v728, 0.001
  %v1059 = vmul.f32 %v731, 0.001
  %v1060 = vmul.f32 %v734, 0.001
  %v1061 = vmul.f32 %v737, 0.001
  %v1062 = vmul.f32 %v740, 0.001
  %v1063 = vmul.f32 %v743, 0.001
  %v1064 = vmul.f32 %v746, 0.001
  %v1065 = vmul.f32 %v749, 0.001
  %v1066 = vmul.f32 %v752, 0.001
  %v1067 = vmul.f32 %v755, 0.001
  %v1068 = vmul.f32 %v758, 0.001
  %v1069 = vmul.f32 %v761, 0.001
  %v1070 = vmul.f32 %v764, 0.001
  %v1071 = vmul.f32 %v767, 0.001
  %v1072 = vmul.f32 %v770, 0.001
  %v1073 = vmul.f32 %v773, 0.001
  %v1074 = vmul.f32 %v776, 0.001
  %v1075 = vmul.f32 %v779, 0.001
  %v1076 = vmul.f32 %v782, 0.001
  %v1077 = vmul.f32 %v785, 0.001
  %v1078 = vmul.f32 %v788, 0.001
  %v1079 = vmul.f32 %v791, 0.001
  %v1080 = vmul.f32 %v794, 0.001
  %v1081 = vmul.f32 %v797, 0.001
  %v1082 = vmul.f32 %v800, 0.001
  %v1083 = vmul.f32 %v803, 0.001
  %v1084 = vmul.f32 %v806, 0.001
  %v1085 = vmul.f32 %v809, 0.001
  %v1086 = vmul.f32 %v812, 0.001
  %v1087 = vmul.f32 %v815, 0.001
  %v1088 = vmul.f32 %v818, 0.001
  %v1089 = vmul.f32 %v821, 0.001
  %v1090 = vmul.f32 %v824, 0.001
  %v1091 = vmul.f32 %v827, 0.001
  %v1092 = vmul.f32 %v830, 0.001
  %v1093 = vmul.f32 %v833, 0.001
  %v1094 = vmul.f32 %v836, 0.001
  %v1095 = vmul.f32 %v839, 0.001
  %v1096 = vmul.f32 %v842, 0.001
  %v1097 = vmul.f32 %v845, 0.001
  %v1098 = vmul.f32 %v848, 0.001
  %vm1099 = vcmask 7168
  %1100 = vst.msk [vmem:[%s71] sm:$0xff] %vm1099, %v974
  %1101 = vst.msk [vmem:[%s71 + $0x8] sm:$0xff] %vm1099, %v975
  %1102 = vst.msk [vmem:[%s71 + $0x10] sm:$0xff] %vm1099, %v976
  %1103 = vst.msk [vmem:[%s71 + $0x18] sm:$0xff] %vm1099, %v977
  %1104 = vst.msk [vmem:[%s71 + $0x20] sm:$0xff] %vm1099, %v978
  %1105 = vst.msk [vmem:[%s71 + $0x28] sm:$0xff] %vm1099, %v979
  %1106 = vst.msk [vmem:[%s71 + $0x30] sm:$0xff] %vm1099, %v980
  %1107 = vst.msk [vmem:[%s71 + $0x38] sm:$0xff] %vm1099, %v981
  %1108 = vst.msk [vmem:[%s71 + $0x40] sm:$0xff] %vm1099, %v982
  %1109 = vst.msk [vmem:[%s71 + $0x48] sm:$0xff] %vm1099, %v983
  %1110 = vst.msk [vmem:[%s71 + $0x50] sm:$0xff] %vm1099, %v984
  %1111 = vst.msk [vmem:[%s71 + $0x58] sm:$0xff] %vm1099, %v985
  %1112 = vst.msk [vmem:[%s71 + $0x60] sm:$0xff] %vm1099, %v986
  %1113 = vst.msk [vmem:[%s71 + $0x68] sm:$0xff] %vm1099, %v987
  %1114 = vst.msk [vmem:[%s71 + $0x70] sm:$0xff] %vm1099, %v988
  %1115 = vst.msk [vmem:[%s71 + $0x78] sm:$0xff] %vm1099, %v989
  %1116 = vst.msk [vmem:[%s71 + $0x80] sm:$0xff] %vm1099, %v990
  %1117 = vst.msk [vmem:[%s71 + $0x88] sm:$0xff] %vm1099, %v991
  %1118 = vst.msk [vmem:[%s71 + $0x90] sm:$0xff] %vm1099, %v992
  %1119 = vst.msk [vmem:[%s71 + $0x98] sm:$0xff] %vm1099, %v993
  %1120 = vst.msk [vmem:[%s71 + $0xa0] sm:$0xff] %vm1099, %v994
  %1121 = vst.msk [vmem:[%s71 + $0xa8] sm:$0xff] %vm1099, %v995
  %1122 = vst.msk [vmem:[%s71 + $0xb0] sm:$0xff] %vm1099, %v996
  %1123 = vst.msk [vmem:[%s71 + $0xb8] sm:$0xff] %vm1099, %v997
  %1124 = vst.msk [vmem:[%s71 + $0xc0] sm:$0xff] %vm1099, %v998
  %1125 = vst.msk [vmem:[%s71 + $0xc8] sm:$0xff] %vm1099, %v999
  %1126 = vst.msk [vmem:[%s71 + $0xd0] sm:$0xff] %vm1099, %v1000
  %1127 = vst.msk [vmem:[%s71 + $0xd8] sm:$0xff] %vm1099, %v1001
  %1128 = vst.msk [vmem:[%s71 + $0xe0] sm:$0xff] %vm1099, %v1002
  %1129 = vst.msk [vmem:[%s71 + $0xe8] sm:$0xff] %vm1099, %v1003
  %1130 = vst.msk [vmem:[%s71 + $0xf0] sm:$0xff] %vm1099, %v1004
  %1131 = vst.msk [vmem:[%s71 + $0xf8] sm:$0xff] %vm1099, %v1005
  %1132 = vst.msk [vmem:[%s71 + $0x100] sm:$0xff] %vm1099, %v1006
  %1133 = vst.msk [vmem:[%s71 + $0x108] sm:$0xff] %vm1099, %v1007
  %1134 = vst.msk [vmem:[%s71 + $0x110] sm:$0xff] %vm1099, %v1008
  %1135 = vst.msk [vmem:[%s71 + $0x118] sm:$0xff] %vm1099, %v1009
  %1136 = vst.msk [vmem:[%s71 + $0x120] sm:$0xff] %vm1099, %v1010
  %1137 = vst.msk [vmem:[%s71 + $0x128] sm:$0xff] %vm1099, %v1011
  %1138 = vst.msk [vmem:[%s71 + $0x130] sm:$0xff] %vm1099, %v1012
  %1139 = vst.msk [vmem:[%s71 + $0x138] sm:$0xff] %vm1099, %v1013
  %1140 = vst.msk [vmem:[%s71 + $0x140] sm:$0xff] %vm1099, %v1014
  %1141 = vst.msk [vmem:[%s71 + $0x148] sm:$0xff] %vm1099, %v1015
  %1142 = vst.msk [vmem:[%s71 + $0x150] sm:$0xff] %vm1099, %v1016
  %1143 = vst.msk [vmem:[%s71 + $0x158] sm:$0xff] %vm1099, %v1017
  %1144 = vst.msk [vmem:[%s71 + $0x160] sm:$0xff] %vm1099, %v1018
  %1145 = vst.msk [vmem:[%s71 + $0x168] sm:$0xff] %vm1099, %v1019
  %1146 = vst.msk [vmem:[%s71 + $0x170] sm:$0xff] %vm1099, %v1020
  %1147 = vst.msk [vmem:[%s71 + $0x178] sm:$0xff] %vm1099, %v1021
  %1148 = vst.msk [vmem:[%s71 + $0x180] sm:$0xff] %vm1099, %v1022
  %1149 = vst.msk [vmem:[%s71 + $0x188] sm:$0xff] %vm1099, %v1023
  %1150 = vst.msk [vmem:[%s71 + $0x190] sm:$0xff] %vm1099, %v1024
  %1151 = vst.msk [vmem:[%s71 + $0x198] sm:$0xff] %vm1099, %v1025
  %1152 = vst.msk [vmem:[%s71 + $0x1a0] sm:$0xff] %vm1099, %v1026
  %1153 = vst.msk [vmem:[%s71 + $0x1a8] sm:$0xff] %vm1099, %v1027
  %1154 = vst.msk [vmem:[%s71 + $0x1b0] sm:$0xff] %vm1099, %v1028
  %1155 = vst.msk [vmem:[%s71 + $0x1b8] sm:$0xff] %vm1099, %v1029
  %1156 = vst.msk [vmem:[%s71 + $0x1c0] sm:$0xff] %vm1099, %v1030
  %1157 = vst.msk [vmem:[%s71 + $0x1c8] sm:$0xff] %vm1099, %v1031
  %1158 = vst.msk [vmem:[%s71 + $0x1d0] sm:$0xff] %vm1099, %v1032
  %1159 = vst.msk [vmem:[%s71 + $0x1d8] sm:$0xff] %vm1099, %v1033
  %1160 = vst.msk [vmem:[%s71 + $0x1e0] sm:$0xff] %vm1099, %v1034
  %1161 = vst.msk [vmem:[%s71 + $0x1e8] sm:$0xff] %vm1099, %v1035
  %1162 = vst.msk [vmem:[%s71 + $0x1f0] sm:$0xff] %vm1099, %v1036
  %1163 = vst.msk [vmem:[%s71 + $0x1f8] sm:$0xff] %vm1099, %v1037
  %1164 = vst.msk [vmem:[%s71 + $0x200] sm:$0xff] %vm1099, %v1038
  %1165 = vst.msk [vmem:[%s71 + $0x208] sm:$0xff] %vm1099, %v1039
  %1166 = vst.msk [vmem:[%s71 + $0x210] sm:$0xff] %vm1099, %v1040
  %1167 = vst.msk [vmem:[%s71 + $0x218] sm:$0xff] %vm1099, %v1041
  %1168 = vst.msk [vmem:[%s71 + $0x220] sm:$0xff] %vm1099, %v1042
  %1169 = vst.msk [vmem:[%s71 + $0x228] sm:$0xff] %vm1099, %v1043
  %1170 = vst.msk [vmem:[%s71 + $0x230] sm:$0xff] %vm1099, %v1044
  %1171 = vst.msk [vmem:[%s71 + $0x238] sm:$0xff] %vm1099, %v1045
  %1172 = vst.msk [vmem:[%s71 + $0x240] sm:$0xff] %vm1099, %v1046
  %1173 = vst.msk [vmem:[%s71 + $0x248] sm:$0xff] %vm1099, %v1047
  %1174 = vst.msk [vmem:[%s71 + $0x250] sm:$0xff] %vm1099, %v1048
  %1175 = vst.msk [vmem:[%s71 + $0x258] sm:$0xff] %vm1099, %v1049
  %1176 = vst.msk [vmem:[%s71 + $0x260] sm:$0xff] %vm1099, %v1050
  %1177 = vst.msk [vmem:[%s71 + $0x268] sm:$0xff] %vm1099, %v1051
  %1178 = vst.msk [vmem:[%s71 + $0x270] sm:$0xff] %vm1099, %v1052
  %1179 = vst.msk [vmem:[%s71 + $0x278] sm:$0xff] %vm1099, %v1053
  %1180 = vst.msk [vmem:[%s71 + $0x280] sm:$0xff] %vm1099, %v1054
  %1181 = vst.msk [vmem:[%s71 + $0x288] sm:$0xff] %vm1099, %v1055
  %1182 = vst.msk [vmem:[%s71 + $0x290] sm:$0xff] %vm1099, %v1056
  %1183 = vst.msk [vmem:[%s71 + $0x298] sm:$0xff] %vm1099, %v1057
  %1184 = vst.msk [vmem:[%s71 + $0x2a0] sm:$0xff] %vm1099, %v1058
  %1185 = vst.msk [vmem:[%s71 + $0x2a8] sm:$0xff] %vm1099, %v1059
  %1186 = vst.msk [vmem:[%s71 + $0x2b0] sm:$0xff] %vm1099, %v1060
  %1187 = vst.msk [vmem:[%s71 + $0x2b8] sm:$0xff] %vm1099, %v1061
  %1188 = vst.msk [vmem:[%s71 + $0x2c0] sm:$0xff] %vm1099, %v1062
  %1189 = vst.msk [vmem:[%s71 + $0x2c8] sm:$0xff] %vm1099, %v1063
  %1190 = vst.msk [vmem:[%s71 + $0x2d0] sm:$0xff] %vm1099, %v1064
  %1191 = vst.msk [vmem:[%s71 + $0x2d8] sm:$0xff] %vm1099, %v1065
  %1192 = vst.msk [vmem:[%s71 + $0x2e0] sm:$0xff] %vm1099, %v1066
  %1193 = vst.msk [vmem:[%s71 + $0x2e8] sm:$0xff] %vm1099, %v1067
  %1194 = vst.msk [vmem:[%s71 + $0x2f0] sm:$0xff] %vm1099, %v1068
  %1195 = vst.msk [vmem:[%s71 + $0x2f8] sm:$0xff] %vm1099, %v1069
  %1196 = vst.msk [vmem:[%s71 + $0x300] sm:$0xff] %vm1099, %v1070
  %1197 = vst.msk [vmem:[%s71 + $0x308] sm:$0xff] %vm1099, %v1071
  %1198 = vst.msk [vmem:[%s71 + $0x310] sm:$0xff] %vm1099, %v1072
  %1199 = vst.msk [vmem:[%s71 + $0x318] sm:$0xff] %vm1099, %v1073
  %1200 = vst.msk [vmem:[%s71 + $0x320] sm:$0xff] %vm1099, %v1074
  %1201 = vst.msk [vmem:[%s71 + $0x328] sm:$0xff] %vm1099, %v1075
  %1202 = vst.msk [vmem:[%s71 + $0x330] sm:$0xff] %vm1099, %v1076
  %1203 = vst.msk [vmem:[%s71 + $0x338] sm:$0xff] %vm1099, %v1077
  %1204 = vst.msk [vmem:[%s71 + $0x340] sm:$0xff] %vm1099, %v1078
  %1205 = vst.msk [vmem:[%s71 + $0x348] sm:$0xff] %vm1099, %v1079
  %1206 = vst.msk [vmem:[%s71 + $0x350] sm:$0xff] %vm1099, %v1080
  %1207 = vst.msk [vmem:[%s71 + $0x358] sm:$0xff] %vm1099, %v1081
  %1208 = vst.msk [vmem:[%s71 + $0x360] sm:$0xff] %vm1099, %v1082
  %1209 = vst.msk [vmem:[%s71 + $0x368] sm:$0xff] %vm1099, %v1083
  %1210 = vst.msk [vmem:[%s71 + $0x370] sm:$0xff] %vm1099, %v1084
  %1211 = vst.msk [vmem:[%s71 + $0x378] sm:$0xff] %vm1099, %v1085
  %1212 = vst.msk [vmem:[%s71 + $0x380] sm:$0xff] %vm1099, %v1086
  %1213 = vst.msk [vmem:[%s71 + $0x388] sm:$0xff] %vm1099, %v1087
  %1214 = vst.msk [vmem:[%s71 + $0x390] sm:$0xff] %vm1099, %v1088
  %1215 = vst.msk [vmem:[%s71 + $0x398] sm:$0xff] %vm1099, %v1089
  %1216 = vst.msk [vmem:[%s71 + $0x3a0] sm:$0xff] %vm1099, %v1090
  %1217 = vst.msk [vmem:[%s71 + $0x3a8] sm:$0xff] %vm1099, %v1091
  %1218 = vst.msk [vmem:[%s71 + $0x3b0] sm:$0xff] %vm1099, %v1092
  %1219 = vst.msk [vmem:[%s71 + $0x3b8] sm:$0xff] %vm1099, %v1093
  %1220 = vst.msk [vmem:[%s71 + $0x3c0] sm:$0xff] %vm1099, %v1094
  %1221 = vst.msk [vmem:[%s71 + $0x3c8] sm:$0xff] %vm1099, %v1095
  %1222 = vst.msk [vmem:[%s71 + $0x3d0] sm:$0xff] %vm1099, %v1096
  %1223 = vst.msk [vmem:[%s71 + $0x3d8] sm:$0xff] %vm1099, %v1097
  %1224 = vst.msk [vmem:[%s71 + $0x3e0] sm:$0xff] %vm1099, %v1098
  %1225 = vst.msk [vmem:[#allocation2] sm:$0xff] %vm473, %v91
  %1226 = vst.msk [vmem:[#allocation2 + $0x8] sm:$0xff] %vm473, %v92
  %1227 = vst.msk [vmem:[#allocation2 + $0x10] sm:$0xff] %vm473, %v93
  %1228 = vst.msk [vmem:[#allocation2 + $0x18] sm:$0xff] %vm473, %v94
  %1229 = vst.msk [vmem:[#allocation2 + $0x20] sm:$0xff] %vm473, %v95
  %1230 = vst.msk [vmem:[#allocation2 + $0x28] sm:$0xff] %vm473, %v96
  %1231 = vst.msk [vmem:[#allocation2 + $0x30] sm:$0xff] %vm473, %v97
  %1232 = vst.msk [vmem:[#allocation2 + $0x38] sm:$0xff] %vm473, %v98
  %1233 = vst.msk [vmem:[#allocation2 + $0x40] sm:$0xff] %vm473, %v99
  %1234 = vst.msk [vmem:[#allocation2 + $0x48] sm:$0xff] %vm473, %v100
  %1235 = vst.msk [vmem:[#allocation2 + $0x50] sm:$0xff] %vm473, %v101
  %1236 = vst.msk [vmem:[#allocation2 + $0x58] sm:$0xff] %vm473, %v102
  %1237 = vst.msk [vmem:[#allocation2 + $0x60] sm:$0xff] %vm473, %v103
  %1238 = vst.msk [vmem:[#allocation2 + $0x68] sm:$0xff] %vm473, %v104
  %1239 = vst.msk [vmem:[#allocation2 + $0x70] sm:$0xff] %vm473, %v105
  %1240 = vst.msk [vmem:[#allocation2 + $0x78] sm:$0xff] %vm473, %v106
  %1241 = vst.msk [vmem:[#allocation2 + $0x80] sm:$0xff] %vm473, %v107
  %1242 = vst.msk [vmem:[#allocation2 + $0x88] sm:$0xff] %vm473, %v108
  %1243 = vst.msk [vmem:[#allocation2 + $0x90] sm:$0xff] %vm473, %v109
  %1244 = vst.msk [vmem:[#allocation2 + $0x98] sm:$0xff] %vm473, %v110
  %1245 = vst.msk [vmem:[#allocation2 + $0xa0] sm:$0xff] %vm473, %v111
  %1246 = vst.msk [vmem:[#allocation2 + $0xa8] sm:$0xff] %vm473, %v112
  %1247 = vst.msk [vmem:[#allocation2 + $0xb0] sm:$0xff] %vm473, %v113
  %1248 = vst.msk [vmem:[#allocation2 + $0xb8] sm:$0xff] %vm473, %v114
  %1249 = vst.msk [vmem:[#allocation2 + $0xc0] sm:$0xff] %vm473, %v115
  %1250 = vst.msk [vmem:[#allocation2 + $0xc8] sm:$0xff] %vm473, %v116
  %1251 = vst.msk [vmem:[#allocation2 + $0xd0] sm:$0xff] %vm473, %v117
  %1252 = vst.msk [vmem:[#allocation2 + $0xd8] sm:$0xff] %vm473, %v118
  %1253 = vst.msk [vmem:[#allocation2 + $0xe0] sm:$0xff] %vm473, %v119
  %1254 = vst.msk [vmem:[#allocation2 + $0xe8] sm:$0xff] %vm473, %v120
  %1255 = vst.msk [vmem:[#allocation2 + $0xf0] sm:$0xff] %vm473, %v121
  %1256 = vst.msk [vmem:[#allocation2 + $0xf8] sm:$0xff] %vm473, %v122
  %1257 = vst.msk [vmem:[#allocation2 + $0x100] sm:$0xff] %vm473, %v123
  %1258 = vst.msk [vmem:[#allocation2 + $0x108] sm:$0xff] %vm473, %v124
  %1259 = vst.msk [vmem:[#allocation2 + $0x110] sm:$0xff] %vm473, %v125
  %1260 = vst.msk [vmem:[#allocation2 + $0x118] sm:$0xff] %vm473, %v126
  %1261 = vst.msk [vmem:[#allocation2 + $0x120] sm:$0xff] %vm473, %v127
  %1262 = vst.msk [vmem:[#allocation2 + $0x128] sm:$0xff] %vm473, %v128
  %1263 = vst.msk [vmem:[#allocation2 + $0x130] sm:$0xff] %vm473, %v129
  %1264 = vst.msk [vmem:[#allocation2 + $0x138] sm:$0xff] %vm473, %v130
  %1265 = vst.msk [vmem:[#allocation2 + $0x140] sm:$0xff] %vm473, %v131
  %1266 = vst.msk [vmem:[#allocation2 + $0x148] sm:$0xff] %vm473, %v132
  %1267 = vst.msk [vmem:[#allocation2 + $0x150] sm:$0xff] %vm473, %v133
  %1268 = vst.msk [vmem:[#allocation2 + $0x158] sm:$0xff] %vm473, %v134
  %1269 = vst.msk [vmem:[#allocation2 + $0x160] sm:$0xff] %vm473, %v135
  %1270 = vst.msk [vmem:[#allocation2 + $0x168] sm:$0xff] %vm473, %v136
  %1271 = vst.msk [vmem:[#allocation2 + $0x170] sm:$0xff] %vm473, %v137
  %1272 = vst.msk [vmem:[#allocation2 + $0x178] sm:$0xff] %vm473, %v138
  %1273 = vst.msk [vmem:[#allocation2 + $0x180] sm:$0xff] %vm473, %v139
  %1274 = vst.msk [vmem:[#allocation2 + $0x188] sm:$0xff] %vm473, %v140
  %1275 = vst.msk [vmem:[#allocation2 + $0x190] sm:$0xff] %vm473, %v141
  %1276 = vst.msk [vmem:[#allocation2 + $0x198] sm:$0xff] %vm473, %v142
  %1277 = vst.msk [vmem:[#allocation2 + $0x1a0] sm:$0xff] %vm473, %v143
  %1278 = vst.msk [vmem:[#allocation2 + $0x1a8] sm:$0xff] %vm473, %v144
  %1279 = vst.msk [vmem:[#allocation2 + $0x1b0] sm:$0xff] %vm473, %v145
  %1280 = vst.msk [vmem:[#allocation2 + $0x1b8] sm:$0xff] %vm473, %v146
  %1281 = vst.msk [vmem:[#allocation2 + $0x1c0] sm:$0xff] %vm473, %v147
  %1282 = vst.msk [vmem:[#allocation2 + $0x1c8] sm:$0xff] %vm473, %v148
  %1283 = vst.msk [vmem:[#allocation2 + $0x1d0] sm:$0xff] %vm473, %v149
  %1284 = vst.msk [vmem:[#allocation2 + $0x1d8] sm:$0xff] %vm473, %v150
  %1285 = vst.msk [vmem:[#allocation2 + $0x1e0] sm:$0xff] %vm473, %v151
  %1286 = vst.msk [vmem:[#allocation2 + $0x1e8] sm:$0xff] %vm473, %v152
  %1287 = vst.msk [vmem:[#allocation2 + $0x1f0] sm:$0xff] %vm473, %v153
  %1288 = vst.msk [vmem:[#allocation2 + $0x1f8] sm:$0xff] %vm473, %v154
  %1289 = vst.msk [vmem:[#allocation2 + $0x200] sm:$0xff] %vm473, %v155
  %1290 = vst.msk [vmem:[#allocation2 + $0x208] sm:$0xff] %vm473, %v156
  %1291 = vst.msk [vmem:[#allocation2 + $0x210] sm:$0xff] %vm473, %v157
  %1292 = vst.msk [vmem:[#allocation2 + $0x218] sm:$0xff] %vm473, %v158
  %1293 = vst.msk [vmem:[#allocation2 + $0x220] sm:$0xff] %vm473, %v159
  %1294 = vst.msk [vmem:[#allocation2 + $0x228] sm:$0xff] %vm473, %v160
  %1295 = vst.msk [vmem:[#allocation2 + $0x230] sm:$0xff] %vm473, %v161
  %1296 = vst.msk [vmem:[#allocation2 + $0x238] sm:$0xff] %vm473, %v162
  %1297 = vst.msk [vmem:[#allocation2 + $0x240] sm:$0xff] %vm473, %v163
  %1298 = vst.msk [vmem:[#allocation2 + $0x248] sm:$0xff] %vm473, %v164
  %1299 = vst.msk [vmem:[#allocation2 + $0x250] sm:$0xff] %vm473, %v165
  %1300 = vst.msk [vmem:[#allocation2 + $0x258] sm:$0xff] %vm473, %v166
  %1301 = vst.msk [vmem:[#allocation2 + $0x260] sm:$0xff] %vm473, %v167
  %1302 = vst.msk [vmem:[#allocation2 + $0x268] sm:$0xff] %vm473, %v168
  %1303 = vst.msk [vmem:[#allocation2 + $0x270] sm:$0xff] %vm473, %v169
  %1304 = vst.msk [vmem:[#allocation2 + $0x278] sm:$0xff] %vm473, %v170
  %1305 = vst.msk [vmem:[#allocation2 + $0x280] sm:$0xff] %vm473, %v171
  %1306 = vst.msk [vmem:[#allocation2 + $0x288] sm:$0xff] %vm473, %v172
  %1307 = vst.msk [vmem:[#allocation2 + $0x290] sm:$0xff] %vm473, %v173
  %1308 = vst.msk [vmem:[#allocation2 + $0x298] sm:$0xff] %vm473, %v174
  %1309 = vst.msk [vmem:[#allocation2 + $0x2a0] sm:$0xff] %vm473, %v175
  %1310 = vst.msk [vmem:[#allocation2 + $0x2a8] sm:$0xff] %vm473, %v176
  %1311 = vst.msk [vmem:[#allocation2 + $0x2b0] sm:$0xff] %vm473, %v177
  %1312 = vst.msk [vmem:[#allocation2 + $0x2b8] sm:$0xff] %vm473, %v178
  %1313 = vst.msk [vmem:[#allocation2 + $0x2c0] sm:$0xff] %vm473, %v179
  %1314 = vst.msk [vmem:[#allocation2 + $0x2c8] sm:$0xff] %vm473, %v180
  %1315 = vst.msk [vmem:[#allocation2 + $0x2d0] sm:$0xff] %vm473, %v181
  %1316 = vst.msk [vmem:[#allocation2 + $0x2d8] sm:$0xff] %vm473, %v182
  %1317 = vst.msk [vmem:[#allocation2 + $0x2e0] sm:$0xff] %vm473, %v183
  %1318 = vst.msk [vmem:[#allocation2 + $0x2e8] sm:$0xff] %vm473, %v184
  %1319 = vst.msk [vmem:[#allocation2 + $0x2f0] sm:$0xff] %vm473, %v185
  %1320 = vst.msk [vmem:[#allocation2 + $0x2f8] sm:$0xff] %vm473, %v186
  %1321 = vst.msk [vmem:[#allocation2 + $0x300] sm:$0xff] %vm473, %v187
  %1322 = vst.msk [vmem:[#allocation2 + $0x308] sm:$0xff] %vm473, %v188
  %1323 = vst.msk [vmem:[#allocation2 + $0x310] sm:$0xff] %vm473, %v189
  %1324 = vst.msk [vmem:[#allocation2 + $0x318] sm:$0xff] %vm473, %v190
  %1325 = vst.msk [vmem:[#allocation2 + $0x320] sm:$0xff] %vm473, %v191
  %1326 = vst.msk [vmem:[#allocation2 + $0x328] sm:$0xff] %vm473, %v192
  %1327 = vst.msk [vmem:[#allocation2 + $0x330] sm:$0xff] %vm473, %v193
  %1328 = vst.msk [vmem:[#allocation2 + $0x338] sm:$0xff] %vm473, %v194
  %1329 = vst.msk [vmem:[#allocation2 + $0x340] sm:$0xff] %vm473, %v195
  %1330 = vst.msk [vmem:[#allocation2 + $0x348] sm:$0xff] %vm473, %v196
  %1331 = vst.msk [vmem:[#allocation2 + $0x350] sm:$0xff] %vm473, %v197
  %1332 = vst.msk [vmem:[#allocation2 + $0x358] sm:$0xff] %vm473, %v198
  %1333 = vst.msk [vmem:[#allocation2 + $0x360] sm:$0xff] %vm473, %v199
  %1334 = vst.msk [vmem:[#allocation2 + $0x368] sm:$0xff] %vm473, %v200
  %1335 = vst.msk [vmem:[#allocation2 + $0x370] sm:$0xff] %vm473, %v201
  %1336 = vst.msk [vmem:[#allocation2 + $0x378] sm:$0xff] %vm473, %v202
  %1337 = vst.msk [vmem:[#allocation2 + $0x380] sm:$0xff] %vm473, %v203
  %1338 = vst.msk [vmem:[#allocation2 + $0x388] sm:$0xff] %vm473, %v204
  %1339 = vst.msk [vmem:[#allocation2 + $0x390] sm:$0xff] %vm473, %v205
  %1340 = vst.msk [vmem:[#allocation2 + $0x398] sm:$0xff] %vm473, %v206
  %1341 = vst.msk [vmem:[#allocation2 + $0x3a0] sm:$0xff] %vm473, %v207
  %1342 = vst.msk [vmem:[#allocation2 + $0x3a8] sm:$0xff] %vm473, %v208
  %1343 = vst.msk [vmem:[#allocation2 + $0x3b0] sm:$0xff] %vm473, %v209
  %1344 = vst.msk [vmem:[#allocation2 + $0x3b8] sm:$0xff] %vm473, %v210
  %1345 = vst.msk [vmem:[#allocation2 + $0x3c0] sm:$0xff] %vm473, %v211
  %1346 = vst.msk [vmem:[#allocation2 + $0x3c8] sm:$0xff] %vm473, %v212
  %1347 = vst.msk [vmem:[#allocation2 + $0x3d0] sm:$0xff] %vm473, %v213
  %1348 = vst.msk [vmem:[#allocation2 + $0x3d8] sm:$0xff] %vm473, %v214
  %1349 = vst.msk [vmem:[#allocation2 + $0x3e0] sm:$0xff] %vm473, %v215
  %1475 = vrot.lane.b32.xlu0 %v216, 32
  %v1476 = vpop.permute.xlu0 %1475
  %1477 = vrot.lane.b32.xlu0 %v217, 32
  %v1478 = vpop.permute.xlu0 %1477
  %1479 = vrot.lane.b32.xlu0 %v218, 32
  %v1480 = vpop.permute.xlu0 %1479
  %1481 = vrot.lane.b32.xlu0 %v219, 32
  %v1482 = vpop.permute.xlu0 %1481
  %1483 = vrot.lane.b32.xlu0 %v220, 32
  %v1484 = vpop.permute.xlu0 %1483
  %1485 = vrot.lane.b32.xlu0 %v221, 32
  %v1486 = vpop.permute.xlu0 %1485
  %1487 = vrot.lane.b32.xlu0 %v222, 32
  %v1488 = vpop.permute.xlu0 %1487
  %1489 = vrot.lane.b32.xlu0 %v223, 32
  %v1490 = vpop.permute.xlu0 %1489
  %1491 = vrot.lane.b32.xlu0 %v224, 32
  %v1492 = vpop.permute.xlu0 %1491
  %1493 = vrot.lane.b32.xlu0 %v225, 32
  %v1494 = vpop.permute.xlu0 %1493
  %1495 = vrot.lane.b32.xlu0 %v226, 32
  %v1496 = vpop.permute.xlu0 %1495
  %1497 = vrot.lane.b32.xlu0 %v227, 32
  %v1498 = vpop.permute.xlu0 %1497
  %1499 = vrot.lane.b32.xlu0 %v228, 32
  %v1500 = vpop.permute.xlu0 %1499
  %1501 = vrot.lane.b32.xlu0 %v229, 32
  %v1502 = vpop.permute.xlu0 %1501
  %1503 = vrot.lane.b32.xlu0 %v230, 32
  %v1504 = vpop.permute.xlu0 %1503
  %1505 = vrot.lane.b32.xlu0 %v231, 32
  %v1506 = vpop.permute.xlu0 %1505
  %1507 = vrot.lane.b32.xlu0 %v232, 32
  %v1508 = vpop.permute.xlu0 %1507
  %1509 = vrot.lane.b32.xlu0 %v233, 32
  %v1510 = vpop.permute.xlu0 %1509
  %1511 = vrot.lane.b32.xlu0 %v234, 32
  %v1512 = vpop.permute.xlu0 %1511
  %1513 = vrot.lane.b32.xlu0 %v235, 32
  %v1514 = vpop.permute.xlu0 %1513
  %1515 = vrot.lane.b32.xlu0 %v236, 32
  %v1516 = vpop.permute.xlu0 %1515
  %1517 = vrot.lane.b32.xlu0 %v237, 32
  %v1518 = vpop.permute.xlu0 %1517
  %1519 = vrot.lane.b32.xlu0 %v238, 32
  %v1520 = vpop.permute.xlu0 %1519
  %1521 = vrot.lane.b32.xlu0 %v239, 32
  %v1522 = vpop.permute.xlu0 %1521
  %1523 = vrot.lane.b32.xlu0 %v240, 32
  %v1524 = vpop.permute.xlu0 %1523
  %1525 = vrot.lane.b32.xlu0 %v241, 32
  %v1526 = vpop.permute.xlu0 %1525
  %1527 = vrot.lane.b32.xlu0 %v242, 32
  %v1528 = vpop.permute.xlu0 %1527
  %1529 = vrot.lane.b32.xlu0 %v243, 32
  %v1530 = vpop.permute.xlu0 %1529
  %1531 = vrot.lane.b32.xlu0 %v244, 32
  %v1532 = vpop.permute.xlu0 %1531
  %1533 = vrot.lane.b32.xlu0 %v245, 32
  %v1534 = vpop.permute.xlu0 %1533
  %1535 = vrot.lane.b32.xlu0 %v246, 32
  %v1536 = vpop.permute.xlu0 %1535
  %1537 = vrot.lane.b32.xlu0 %v247, 32
  %v1538 = vpop.permute.xlu0 %1537
  %1539 = vrot.lane.b32.xlu0 %v248, 32
  %v1540 = vpop.permute.xlu0 %1539
  %1541 = vrot.lane.b32.xlu0 %v249, 32
  %v1542 = vpop.permute.xlu0 %1541
  %1543 = vrot.lane.b32.xlu0 %v250, 32
  %v1544 = vpop.permute.xlu0 %1543
  %1545 = vrot.lane.b32.xlu0 %v251, 32
  %v1546 = vpop.permute.xlu0 %1545
  %1547 = vrot.lane.b32.xlu0 %v252, 32
  %v1548 = vpop.permute.xlu0 %1547
  %1549 = vrot.lane.b32.xlu0 %v253, 32
  %v1550 = vpop.permute.xlu0 %1549
  %1551 = vrot.lane.b32.xlu0 %v254, 32
  %v1552 = vpop.permute.xlu0 %1551
  %1553 = vrot.lane.b32.xlu0 %v255, 32
  %v1554 = vpop.permute.xlu0 %1553
  %1555 = vrot.lane.b32.xlu0 %v256, 32
  %v1556 = vpop.permute.xlu0 %1555
  %1557 = vrot.lane.b32.xlu0 %v257, 32
  %v1558 = vpop.permute.xlu0 %1557
  %1559 = vrot.lane.b32.xlu0 %v258, 32
  %v1560 = vpop.permute.xlu0 %1559
  %1561 = vrot.lane.b32.xlu0 %v259, 32
  %v1562 = vpop.permute.xlu0 %1561
  %1563 = vrot.lane.b32.xlu0 %v260, 32
  %v1564 = vpop.permute.xlu0 %1563
  %1565 = vrot.lane.b32.xlu0 %v261, 32
  %v1566 = vpop.permute.xlu0 %1565
  %1567 = vrot.lane.b32.xlu0 %v262, 32
  %v1568 = vpop.permute.xlu0 %1567
  %1569 = vrot.lane.b32.xlu0 %v263, 32
  %v1570 = vpop.permute.xlu0 %1569
  %1571 = vrot.lane.b32.xlu0 %v264, 32
  %v1572 = vpop.permute.xlu0 %1571
  %1573 = vrot.lane.b32.xlu0 %v265, 32
  %v1574 = vpop.permute.xlu0 %1573
  %1575 = vrot.lane.b32.xlu0 %v266, 32
  %v1576 = vpop.permute.xlu0 %1575
  %1577 = vrot.lane.b32.xlu0 %v267, 32
  %v1578 = vpop.permute.xlu0 %1577
  %1579 = vrot.lane.b32.xlu0 %v268, 32
  %v1580 = vpop.permute.xlu0 %1579
  %1581 = vrot.lane.b32.xlu0 %v269, 32
  %v1582 = vpop.permute.xlu0 %1581
  %1583 = vrot.lane.b32.xlu0 %v270, 32
  %v1584 = vpop.permute.xlu0 %1583
  %1585 = vrot.lane.b32.xlu0 %v271, 32
  %v1586 = vpop.permute.xlu0 %1585
  %1587 = vrot.lane.b32.xlu0 %v272, 32
  %v1588 = vpop.permute.xlu0 %1587
  %1589 = vrot.lane.b32.xlu0 %v273, 32
  %v1590 = vpop.permute.xlu0 %1589
  %1591 = vrot.lane.b32.xlu0 %v274, 32
  %v1592 = vpop.permute.xlu0 %1591
  %1593 = vrot.lane.b32.xlu0 %v275, 32
  %v1594 = vpop.permute.xlu0 %1593
  %1595 = vrot.lane.b32.xlu0 %v276, 32
  %v1596 = vpop.permute.xlu0 %1595
  %1597 = vrot.lane.b32.xlu0 %v277, 32
  %v1598 = vpop.permute.xlu0 %1597
  %1599 = vrot.lane.b32.xlu0 %v278, 32
  %v1600 = vpop.permute.xlu0 %1599
  %1601 = vrot.lane.b32.xlu0 %v279, 32
  %v1602 = vpop.permute.xlu0 %1601
  %1603 = vrot.lane.b32.xlu0 %v280, 32
  %v1604 = vpop.permute.xlu0 %1603
  %1605 = vrot.lane.b32.xlu0 %v281, 32
  %v1606 = vpop.permute.xlu0 %1605
  %1607 = vrot.lane.b32.xlu0 %v282, 32
  %v1608 = vpop.permute.xlu0 %1607
  %1609 = vrot.lane.b32.xlu0 %v283, 32
  %v1610 = vpop.permute.xlu0 %1609
  %1611 = vrot.lane.b32.xlu0 %v284, 32
  %v1612 = vpop.permute.xlu0 %1611
  %1613 = vrot.lane.b32.xlu0 %v285, 32
  %v1614 = vpop.permute.xlu0 %1613
  %1615 = vrot.lane.b32.xlu0 %v286, 32
  %v1616 = vpop.permute.xlu0 %1615
  %1617 = vrot.lane.b32.xlu0 %v287, 32
  %v1618 = vpop.permute.xlu0 %1617
  %1619 = vrot.lane.b32.xlu0 %v288, 32
  %v1620 = vpop.permute.xlu0 %1619
  %1621 = vrot.lane.b32.xlu0 %v289, 32
  %v1622 = vpop.permute.xlu0 %1621
  %1623 = vrot.lane.b32.xlu0 %v290, 32
  %v1624 = vpop.permute.xlu0 %1623
  %1625 = vrot.lane.b32.xlu0 %v291, 32
  %v1626 = vpop.permute.xlu0 %1625
  %1627 = vrot.lane.b32.xlu0 %v292, 32
  %v1628 = vpop.permute.xlu0 %1627
  %1629 = vrot.lane.b32.xlu0 %v293, 32
  %v1630 = vpop.permute.xlu0 %1629
  %1631 = vrot.lane.b32.xlu0 %v294, 32
  %v1632 = vpop.permute.xlu0 %1631
  %1633 = vrot.lane.b32.xlu0 %v295, 32
  %v1634 = vpop.permute.xlu0 %1633
  %1635 = vrot.lane.b32.xlu0 %v296, 32
  %v1636 = vpop.permute.xlu0 %1635
  %1637 = vrot.lane.b32.xlu0 %v297, 32
  %v1638 = vpop.permute.xlu0 %1637
  %1639 = vrot.lane.b32.xlu0 %v298, 32
  %v1640 = vpop.permute.xlu0 %1639
  %1641 = vrot.lane.b32.xlu0 %v299, 32
  %v1642 = vpop.permute.xlu0 %1641
  %1643 = vrot.lane.b32.xlu0 %v300, 32
  %v1644 = vpop.permute.xlu0 %1643
  %1645 = vrot.lane.b32.xlu0 %v301, 32
  %v1646 = vpop.permute.xlu0 %1645
  %1647 = vrot.lane.b32.xlu0 %v302, 32
  %v1648 = vpop.permute.xlu0 %1647
  %1649 = vrot.lane.b32.xlu0 %v303, 32
  %v1650 = vpop.permute.xlu0 %1649
  %1651 = vrot.lane.b32.xlu0 %v304, 32
  %v1652 = vpop.permute.xlu0 %1651
  %1653 = vrot.lane.b32.xlu0 %v305, 32
  %v1654 = vpop.permute.xlu0 %1653
  %1655 = vrot.lane.b32.xlu0 %v306, 32
  %v1656 = vpop.permute.xlu0 %1655
  %1657 = vrot.lane.b32.xlu0 %v307, 32
  %v1658 = vpop.permute.xlu0 %1657
  %1659 = vrot.lane.b32.xlu0 %v308, 32
  %v1660 = vpop.permute.xlu0 %1659
  %1661 = vrot.lane.b32.xlu0 %v309, 32
  %v1662 = vpop.permute.xlu0 %1661
  %1663 = vrot.lane.b32.xlu0 %v310, 32
  %v1664 = vpop.permute.xlu0 %1663
  %1665 = vrot.lane.b32.xlu0 %v311, 32
  %v1666 = vpop.permute.xlu0 %1665
  %1667 = vrot.lane.b32.xlu0 %v312, 32
  %v1668 = vpop.permute.xlu0 %1667
  %1669 = vrot.lane.b32.xlu0 %v313, 32
  %v1670 = vpop.permute.xlu0 %1669
  %1671 = vrot.lane.b32.xlu0 %v314, 32
  %v1672 = vpop.permute.xlu0 %1671
  %1673 = vrot.lane.b32.xlu0 %v315, 32
  %v1674 = vpop.permute.xlu0 %1673
  %1675 = vrot.lane.b32.xlu0 %v316, 32
  %v1676 = vpop.permute.xlu0 %1675
  %1677 = vrot.lane.b32.xlu0 %v317, 32
  %v1678 = vpop.permute.xlu0 %1677
  %1679 = vrot.lane.b32.xlu0 %v318, 32
  %v1680 = vpop.permute.xlu0 %1679
  %1681 = vrot.lane.b32.xlu0 %v319, 32
  %v1682 = vpop.permute.xlu0 %1681
  %1683 = vrot.lane.b32.xlu0 %v320, 32
  %v1684 = vpop.permute.xlu0 %1683
  %1685 = vrot.lane.b32.xlu0 %v321, 32
  %v1686 = vpop.permute.xlu0 %1685
  %1687 = vrot.lane.b32.xlu0 %v322, 32
  %v1688 = vpop.permute.xlu0 %1687
  %1689 = vrot.lane.b32.xlu0 %v323, 32
  %v1690 = vpop.permute.xlu0 %1689
  %1691 = vrot.lane.b32.xlu0 %v324, 32
  %v1692 = vpop.permute.xlu0 %1691
  %1693 = vrot.lane.b32.xlu0 %v325, 32
  %v1694 = vpop.permute.xlu0 %1693
  %1695 = vrot.lane.b32.xlu0 %v326, 32
  %v1696 = vpop.permute.xlu0 %1695
  %1697 = vrot.lane.b32.xlu0 %v327, 32
  %v1698 = vpop.permute.xlu0 %1697
  %1699 = vrot.lane.b32.xlu0 %v328, 32
  %v1700 = vpop.permute.xlu0 %1699
  %1701 = vrot.lane.b32.xlu0 %v329, 32
  %v1702 = vpop.permute.xlu0 %1701
  %1703 = vrot.lane.b32.xlu0 %v330, 32
  %v1704 = vpop.permute.xlu0 %1703
  %1705 = vrot.lane.b32.xlu0 %v331, 32
  %v1706 = vpop.permute.xlu0 %1705
  %1707 = vrot.lane.b32.xlu0 %v332, 32
  %v1708 = vpop.permute.xlu0 %1707
  %1709 = vrot.lane.b32.xlu0 %v333, 32
  %v1710 = vpop.permute.xlu0 %1709
  %1711 = vrot.lane.b32.xlu0 %v334, 32
  %v1712 = vpop.permute.xlu0 %1711
  %1713 = vrot.lane.b32.xlu0 %v335, 32
  %v1714 = vpop.permute.xlu0 %1713
  %1715 = vrot.lane.b32.xlu0 %v336, 32
  %v1716 = vpop.permute.xlu0 %1715
  %1717 = vrot.lane.b32.xlu0 %v337, 32
  %v1718 = vpop.permute.xlu0 %1717
  %1719 = vrot.lane.b32.xlu0 %v338, 32
  %v1720 = vpop.permute.xlu0 %1719
  %1721 = vrot.lane.b32.xlu0 %v339, 32
  %v1722 = vpop.permute.xlu0 %1721
  %1723 = vrot.lane.b32.xlu0 %v340, 32
  %v1724 = vpop.permute.xlu0 %1723
  %vm1850 = vcmask 523520
  %1851 = vst.msk [vmem:[#allocation2] sm:$0xff] %vm1850, %v1476
  %1852 = vst.msk [vmem:[#allocation2 + $0x8] sm:$0xff] %vm1850, %v1478
  %1853 = vst.msk [vmem:[#allocation2 + $0x10] sm:$0xff] %vm1850, %v1480
  %1854 = vst.msk [vmem:[#allocation2 + $0x18] sm:$0xff] %vm1850, %v1482
  %1855 = vst.msk [vmem:[#allocation2 + $0x20] sm:$0xff] %vm1850, %v1484
  %1856 = vst.msk [vmem:[#allocation2 + $0x28] sm:$0xff] %vm1850, %v1486
  %1857 = vst.msk [vmem:[#allocation2 + $0x30] sm:$0xff] %vm1850, %v1488
  %1858 = vst.msk [vmem:[#allocation2 + $0x38] sm:$0xff] %vm1850, %v1490
  %1859 = vst.msk [vmem:[#allocation2 + $0x40] sm:$0xff] %vm1850, %v1492
  %1860 = vst.msk [vmem:[#allocation2 + $0x48] sm:$0xff] %vm1850, %v1494
  %1861 = vst.msk [vmem:[#allocation2 + $0x50] sm:$0xff] %vm1850, %v1496
  %1862 = vst.msk [vmem:[#allocation2 + $0x58] sm:$0xff] %vm1850, %v1498
  %1863 = vst.msk [vmem:[#allocation2 + $0x60] sm:$0xff] %vm1850, %v1500
  %1864 = vst.msk [vmem:[#allocation2 + $0x68] sm:$0xff] %vm1850, %v1502
  %1865 = vst.msk [vmem:[#allocation2 + $0x70] sm:$0xff] %vm1850, %v1504
  %1866 = vst.msk [vmem:[#allocation2 + $0x78] sm:$0xff] %vm1850, %v1506
  %1867 = vst.msk [vmem:[#allocation2 + $0x80] sm:$0xff] %vm1850, %v1508
  %1868 = vst.msk [vmem:[#allocation2 + $0x88] sm:$0xff] %vm1850, %v1510
  %1869 = vst.msk [vmem:[#allocation2 + $0x90] sm:$0xff] %vm1850, %v1512
  %1870 = vst.msk [vmem:[#allocation2 + $0x98] sm:$0xff] %vm1850, %v1514
  %1871 = vst.msk [vmem:[#allocation2 + $0xa0] sm:$0xff] %vm1850, %v1516
  %1872 = vst.msk [vmem:[#allocation2 + $0xa8] sm:$0xff] %vm1850, %v1518
  %1873 = vst.msk [vmem:[#allocation2 + $0xb0] sm:$0xff] %vm1850, %v1520
  %1874 = vst.msk [vmem:[#allocation2 + $0xb8] sm:$0xff] %vm1850, %v1522
  %1875 = vst.msk [vmem:[#allocation2 + $0xc0] sm:$0xff] %vm1850, %v1524
  %1876 = vst.msk [vmem:[#allocation2 + $0xc8] sm:$0xff] %vm1850, %v1526
  %1877 = vst.msk [vmem:[#allocation2 + $0xd0] sm:$0xff] %vm1850, %v1528
  %1878 = vst.msk [vmem:[#allocation2 + $0xd8] sm:$0xff] %vm1850, %v1530
  %1879 = vst.msk [vmem:[#allocation2 + $0xe0] sm:$0xff] %vm1850, %v1532
  %1880 = vst.msk [vmem:[#allocation2 + $0xe8] sm:$0xff] %vm1850, %v1534
  %1881 = vst.msk [vmem:[#allocation2 + $0xf0] sm:$0xff] %vm1850, %v1536
  %1882 = vst.msk [vmem:[#allocation2 + $0xf8] sm:$0xff] %vm1850, %v1538
  %1883 = vst.msk [vmem:[#allocation2 + $0x100] sm:$0xff] %vm1850, %v1540
  %1884 = vst.msk [vmem:[#allocation2 + $0x108] sm:$0xff] %vm1850, %v1542
  %1885 = vst.msk [vmem:[#allocation2 + $0x110] sm:$0xff] %vm1850, %v1544
  %1886 = vst.msk [vmem:[#allocation2 + $0x118] sm:$0xff] %vm1850, %v1546
  %1887 = vst.msk [vmem:[#allocation2 + $0x120] sm:$0xff] %vm1850, %v1548
  %1888 = vst.msk [vmem:[#allocation2 + $0x128] sm:$0xff] %vm1850, %v1550
  %1889 = vst.msk [vmem:[#allocation2 + $0x130] sm:$0xff] %vm1850, %v1552
  %1890 = vst.msk [vmem:[#allocation2 + $0x138] sm:$0xff] %vm1850, %v1554
  %1891 = vst.msk [vmem:[#allocation2 + $0x140] sm:$0xff] %vm1850, %v1556
  %1892 = vst.msk [vmem:[#allocation2 + $0x148] sm:$0xff] %vm1850, %v1558
  %1893 = vst.msk [vmem:[#allocation2 + $0x150] sm:$0xff] %vm1850, %v1560
  %1894 = vst.msk [vmem:[#allocation2 + $0x158] sm:$0xff] %vm1850, %v1562
  %1895 = vst.msk [vmem:[#allocation2 + $0x160] sm:$0xff] %vm1850, %v1564
  %1896 = vst.msk [vmem:[#allocation2 + $0x168] sm:$0xff] %vm1850, %v1566
  %1897 = vst.msk [vmem:[#allocation2 + $0x170] sm:$0xff] %vm1850, %v1568
  %1898 = vst.msk [vmem:[#allocation2 + $0x178] sm:$0xff] %vm1850, %v1570
  %1899 = vst.msk [vmem:[#allocation2 + $0x180] sm:$0xff] %vm1850, %v1572
  %1900 = vst.msk [vmem:[#allocation2 + $0x188] sm:$0xff] %vm1850, %v1574
  %1901 = vst.msk [vmem:[#allocation2 + $0x190] sm:$0xff] %vm1850, %v1576
  %1902 = vst.msk [vmem:[#allocation2 + $0x198] sm:$0xff] %vm1850, %v1578
  %1903 = vst.msk [vmem:[#allocation2 + $0x1a0] sm:$0xff] %vm1850, %v1580
  %1904 = vst.msk [vmem:[#allocation2 + $0x1a8] sm:$0xff] %vm1850, %v1582
  %1905 = vst.msk [vmem:[#allocation2 + $0x1b0] sm:$0xff] %vm1850, %v1584
  %1906 = vst.msk [vmem:[#allocation2 + $0x1b8] sm:$0xff] %vm1850, %v1586
  %1907 = vst.msk [vmem:[#allocation2 + $0x1c0] sm:$0xff] %vm1850, %v1588
  %1908 = vst.msk [vmem:[#allocation2 + $0x1c8] sm:$0xff] %vm1850, %v1590
  %1909 = vst.msk [vmem:[#allocation2 + $0x1d0] sm:$0xff] %vm1850, %v1592
  %1910 = vst.msk [vmem:[#allocation2 + $0x1d8] sm:$0xff] %vm1850, %v1594
  %1911 = vst.msk [vmem:[#allocation2 + $0x1e0] sm:$0xff] %vm1850, %v1596
  %1912 = vst.msk [vmem:[#allocation2 + $0x1e8] sm:$0xff] %vm1850, %v1598
  %1913 = vst.msk [vmem:[#allocation2 + $0x1f0] sm:$0xff] %vm1850, %v1600
  %1914 = vst.msk [vmem:[#allocation2 + $0x1f8] sm:$0xff] %vm1850, %v1602
  %1915 = vst.msk [vmem:[#allocation2 + $0x200] sm:$0xff] %vm1850, %v1604
  %1916 = vst.msk [vmem:[#allocation2 + $0x208] sm:$0xff] %vm1850, %v1606
  %1917 = vst.msk [vmem:[#allocation2 + $0x210] sm:$0xff] %vm1850, %v1608
  %1918 = vst.msk [vmem:[#allocation2 + $0x218] sm:$0xff] %vm1850, %v1610
  %1919 = vst.msk [vmem:[#allocation2 + $0x220] sm:$0xff] %vm1850, %v1612
  %1920 = vst.msk [vmem:[#allocation2 + $0x228] sm:$0xff] %vm1850, %v1614
  %1921 = vst.msk [vmem:[#allocation2 + $0x230] sm:$0xff] %vm1850, %v1616
  %1922 = vst.msk [vmem:[#allocation2 + $0x238] sm:$0xff] %vm1850, %v1618
  %1923 = vst.msk [vmem:[#allocation2 + $0x240] sm:$0xff] %vm1850, %v1620
  %1924 = vst.msk [vmem:[#allocation2 + $0x248] sm:$0xff] %vm1850, %v1622
  %1925 = vst.msk [vmem:[#allocation2 + $0x250] sm:$0xff] %vm1850, %v1624
  %1926 = vst.msk [vmem:[#allocation2 + $0x258] sm:$0xff] %vm1850, %v1626
  %1927 = vst.msk [vmem:[#allocation2 + $0x260] sm:$0xff] %vm1850, %v1628
  %1928 = vst.msk [vmem:[#allocation2 + $0x268] sm:$0xff] %vm1850, %v1630
  %1929 = vst.msk [vmem:[#allocation2 + $0x270] sm:$0xff] %vm1850, %v1632
  %1930 = vst.msk [vmem:[#allocation2 + $0x278] sm:$0xff] %vm1850, %v1634
  %1931 = vst.msk [vmem:[#allocation2 + $0x280] sm:$0xff] %vm1850, %v1636
  %1932 = vst.msk [vmem:[#allocation2 + $0x288] sm:$0xff] %vm1850, %v1638
  %1933 = vst.msk [vmem:[#allocation2 + $0x290] sm:$0xff] %vm1850, %v1640
  %1934 = vst.msk [vmem:[#allocation2 + $0x298] sm:$0xff] %vm1850, %v1642
  %1935 = vst.msk [vmem:[#allocation2 + $0x2a0] sm:$0xff] %vm1850, %v1644
  %1936 = vst.msk [vmem:[#allocation2 + $0x2a8] sm:$0xff] %vm1850, %v1646
  %1937 = vst.msk [vmem:[#allocation2 + $0x2b0] sm:$0xff] %vm1850, %v1648
  %1938 = vst.msk [vmem:[#allocation2 + $0x2b8] sm:$0xff] %vm1850, %v1650
  %1939 = vst.msk [vmem:[#allocation2 + $0x2c0] sm:$0xff] %vm1850, %v1652
  %1940 = vst.msk [vmem:[#allocation2 + $0x2c8] sm:$0xff] %vm1850, %v1654
  %1941 = vst.msk [vmem:[#allocation2 + $0x2d0] sm:$0xff] %vm1850, %v1656
  %1942 = vst.msk [vmem:[#allocation2 + $0x2d8] sm:$0xff] %vm1850, %v1658
  %1943 = vst.msk [vmem:[#allocation2 + $0x2e0] sm:$0xff] %vm1850, %v1660
  %1944 = vst.msk [vmem:[#allocation2 + $0x2e8] sm:$0xff] %vm1850, %v1662
  %1945 = vst.msk [vmem:[#allocation2 + $0x2f0] sm:$0xff] %vm1850, %v1664
  %1946 = vst.msk [vmem:[#allocation2 + $0x2f8] sm:$0xff] %vm1850, %v1666
  %1947 = vst.msk [vmem:[#allocation2 + $0x300] sm:$0xff] %vm1850, %v1668
  %1948 = vst.msk [vmem:[#allocation2 + $0x308] sm:$0xff] %vm1850, %v1670
  %1949 = vst.msk [vmem:[#allocation2 + $0x310] sm:$0xff] %vm1850, %v1672
  %1950 = vst.msk [vmem:[#allocation2 + $0x318] sm:$0xff] %vm1850, %v1674
  %1951 = vst.msk [vmem:[#allocation2 + $0x320] sm:$0xff] %vm1850, %v1676
  %1952 = vst.msk [vmem:[#allocation2 + $0x328] sm:$0xff] %vm1850, %v1678
  %1953 = vst.msk [vmem:[#allocation2 + $0x330] sm:$0xff] %vm1850, %v1680
  %1954 = vst.msk [vmem:[#allocation2 + $0x338] sm:$0xff] %vm1850, %v1682
  %1955 = vst.msk [vmem:[#allocation2 + $0x340] sm:$0xff] %vm1850, %v1684
  %1956 = vst.msk [vmem:[#allocation2 + $0x348] sm:$0xff] %vm1850, %v1686
  %1957 = vst.msk [vmem:[#allocation2 + $0x350] sm:$0xff] %vm1850, %v1688
  %1958 = vst.msk [vmem:[#allocation2 + $0x358] sm:$0xff] %vm1850, %v1690
  %1959 = vst.msk [vmem:[#allocation2 + $0x360] sm:$0xff] %vm1850, %v1692
  %1960 = vst.msk [vmem:[#allocation2 + $0x368] sm:$0xff] %vm1850, %v1694
  %1961 = vst.msk [vmem:[#allocation2 + $0x370] sm:$0xff] %vm1850, %v1696
  %1962 = vst.msk [vmem:[#allocation2 + $0x378] sm:$0xff] %vm1850, %v1698
  %1963 = vst.msk [vmem:[#allocation2 + $0x380] sm:$0xff] %vm1850, %v1700
  %1964 = vst.msk [vmem:[#allocation2 + $0x388] sm:$0xff] %vm1850, %v1702
  %1965 = vst.msk [vmem:[#allocation2 + $0x390] sm:$0xff] %vm1850, %v1704
  %1966 = vst.msk [vmem:[#allocation2 + $0x398] sm:$0xff] %vm1850, %v1706
  %1967 = vst.msk [vmem:[#allocation2 + $0x3a0] sm:$0xff] %vm1850, %v1708
  %1968 = vst.msk [vmem:[#allocation2 + $0x3a8] sm:$0xff] %vm1850, %v1710
  %1969 = vst.msk [vmem:[#allocation2 + $0x3b0] sm:$0xff] %vm1850, %v1712
  %1970 = vst.msk [vmem:[#allocation2 + $0x3b8] sm:$0xff] %vm1850, %v1714
  %1971 = vst.msk [vmem:[#allocation2 + $0x3c0] sm:$0xff] %vm1850, %v1716
  %1972 = vst.msk [vmem:[#allocation2 + $0x3c8] sm:$0xff] %vm1850, %v1718
  %1973 = vst.msk [vmem:[#allocation2 + $0x3d0] sm:$0xff] %vm1850, %v1720
  %1974 = vst.msk [vmem:[#allocation2 + $0x3d8] sm:$0xff] %vm1850, %v1722
  %1975 = vst.msk [vmem:[#allocation2 + $0x3e0] sm:$0xff] %vm1850, %v1724
  %2101 = vrot.lane.b32.xlu0 %v849, 64
  %v2102 = vpop.permute.xlu0 %2101
  %2103 = vrot.lane.b32.xlu0 %v850, 64
  %v2104 = vpop.permute.xlu0 %2103
  %2105 = vrot.lane.b32.xlu0 %v851, 64
  %v2106 = vpop.permute.xlu0 %2105
  %2107 = vrot.lane.b32.xlu0 %v852, 64
  %v2108 = vpop.permute.xlu0 %2107
  %2109 = vrot.lane.b32.xlu0 %v853, 64
  %v2110 = vpop.permute.xlu0 %2109
  %2111 = vrot.lane.b32.xlu0 %v854, 64
  %v2112 = vpop.permute.xlu0 %2111
  %2113 = vrot.lane.b32.xlu0 %v855, 64
  %v2114 = vpop.permute.xlu0 %2113
  %2115 = vrot.lane.b32.xlu0 %v856, 64
  %v2116 = vpop.permute.xlu0 %2115
  %2117 = vrot.lane.b32.xlu0 %v857, 64
  %v2118 = vpop.permute.xlu0 %2117
  %2119 = vrot.lane.b32.xlu0 %v858, 64
  %v2120 = vpop.permute.xlu0 %2119
  %2121 = vrot.lane.b32.xlu0 %v859, 64
  %v2122 = vpop.permute.xlu0 %2121
  %2123 = vrot.lane.b32.xlu0 %v860, 64
  %v2124 = vpop.permute.xlu0 %2123
  %2125 = vrot.lane.b32.xlu0 %v861, 64
  %v2126 = vpop.permute.xlu0 %2125
  %2127 = vrot.lane.b32.xlu0 %v862, 64
  %v2128 = vpop.permute.xlu0 %2127
  %2129 = vrot.lane.b32.xlu0 %v863, 64
  %v2130 = vpop.permute.xlu0 %2129
  %2131 = vrot.lane.b32.xlu0 %v864, 64
  %v2132 = vpop.permute.xlu0 %2131
  %2133 = vrot.lane.b32.xlu0 %v865, 64
  %v2134 = vpop.permute.xlu0 %2133
  %2135 = vrot.lane.b32.xlu0 %v866, 64
  %v2136 = vpop.permute.xlu0 %2135
  %2137 = vrot.lane.b32.xlu0 %v867, 64
  %v2138 = vpop.permute.xlu0 %2137
  %2139 = vrot.lane.b32.xlu0 %v868, 64
  %v2140 = vpop.permute.xlu0 %2139
  %2141 = vrot.lane.b32.xlu0 %v869, 64
  %v2142 = vpop.permute.xlu0 %2141
  %2143 = vrot.lane.b32.xlu0 %v870, 64
  %v2144 = vpop.permute.xlu0 %2143
  %2145 = vrot.lane.b32.xlu0 %v871, 64
  %v2146 = vpop.permute.xlu0 %2145
  %2147 = vrot.lane.b32.xlu0 %v872, 64
  %v2148 = vpop.permute.xlu0 %2147
  %2149 = vrot.lane.b32.xlu0 %v873, 64
  %v2150 = vpop.permute.xlu0 %2149
  %2151 = vrot.lane.b32.xlu0 %v874, 64
  %v2152 = vpop.permute.xlu0 %2151
  %2153 = vrot.lane.b32.xlu0 %v875, 64
  %v2154 = vpop.permute.xlu0 %2153
  %2155 = vrot.lane.b32.xlu0 %v876, 64
  %v2156 = vpop.permute.xlu0 %2155
  %2157 = vrot.lane.b32.xlu0 %v877, 64
  %v2158 = vpop.permute.xlu0 %2157
  %2159 = vrot.lane.b32.xlu0 %v878, 64
  %v2160 = vpop.permute.xlu0 %2159
  %2161 = vrot.lane.b32.xlu0 %v879, 64
  %v2162 = vpop.permute.xlu0 %2161
  %2163 = vrot.lane.b32.xlu0 %v880, 64
  %v2164 = vpop.permute.xlu0 %2163
  %2165 = vrot.lane.b32.xlu0 %v881, 64
  %v2166 = vpop.permute.xlu0 %2165
  %2167 = vrot.lane.b32.xlu0 %v882, 64
  %v2168 = vpop.permute.xlu0 %2167
  %2169 = vrot.lane.b32.xlu0 %v883, 64
  %v2170 = vpop.permute.xlu0 %2169
  %2171 = vrot.lane.b32.xlu0 %v884, 64
  %v2172 = vpop.permute.xlu0 %2171
  %2173 = vrot.lane.b32.xlu0 %v885, 64
  %v2174 = vpop.permute.xlu0 %2173
  %2175 = vrot.lane.b32.xlu0 %v886, 64
  %v2176 = vpop.permute.xlu0 %2175
  %2177 = vrot.lane.b32.xlu0 %v887, 64
  %v2178 = vpop.permute.xlu0 %2177
  %2179 = vrot.lane.b32.xlu0 %v888, 64
  %v2180 = vpop.permute.xlu0 %2179
  %2181 = vrot.lane.b32.xlu0 %v889, 64
  %v2182 = vpop.permute.xlu0 %2181
  %2183 = vrot.lane.b32.xlu0 %v890, 64
  %v2184 = vpop.permute.xlu0 %2183
  %2185 = vrot.lane.b32.xlu0 %v891, 64
  %v2186 = vpop.permute.xlu0 %2185
  %2187 = vrot.lane.b32.xlu0 %v892, 64
  %v2188 = vpop.permute.xlu0 %2187
  %2189 = vrot.lane.b32.xlu0 %v893, 64
  %v2190 = vpop.permute.xlu0 %2189
  %2191 = vrot.lane.b32.xlu0 %v894, 64
  %v2192 = vpop.permute.xlu0 %2191
  %2193 = vrot.lane.b32.xlu0 %v895, 64
  %v2194 = vpop.permute.xlu0 %2193
  %2195 = vrot.lane.b32.xlu0 %v896, 64
  %v2196 = vpop.permute.xlu0 %2195
  %2197 = vrot.lane.b32.xlu0 %v897, 64
  %v2198 = vpop.permute.xlu0 %2197
  %2199 = vrot.lane.b32.xlu0 %v898, 64
  %v2200 = vpop.permute.xlu0 %2199
  %2201 = vrot.lane.b32.xlu0 %v899, 64
  %v2202 = vpop.permute.xlu0 %2201
  %2203 = vrot.lane.b32.xlu0 %v900, 64
  %v2204 = vpop.permute.xlu0 %2203
  %2205 = vrot.lane.b32.xlu0 %v901, 64
  %v2206 = vpop.permute.xlu0 %2205
  %2207 = vrot.lane.b32.xlu0 %v902, 64
  %v2208 = vpop.permute.xlu0 %2207
  %2209 = vrot.lane.b32.xlu0 %v903, 64
  %v2210 = vpop.permute.xlu0 %2209
  %2211 = vrot.lane.b32.xlu0 %v904, 64
  %v2212 = vpop.permute.xlu0 %2211
  %2213 = vrot.lane.b32.xlu0 %v905, 64
  %v2214 = vpop.permute.xlu0 %2213
  %2215 = vrot.lane.b32.xlu0 %v906, 64
  %v2216 = vpop.permute.xlu0 %2215
  %2217 = vrot.lane.b32.xlu0 %v907, 64
  %v2218 = vpop.permute.xlu0 %2217
  %2219 = vrot.lane.b32.xlu0 %v908, 64
  %v2220 = vpop.permute.xlu0 %2219
  %2221 = vrot.lane.b32.xlu0 %v909, 64
  %v2222 = vpop.permute.xlu0 %2221
  %2223 = vrot.lane.b32.xlu0 %v910, 64
  %v2224 = vpop.permute.xlu0 %2223
  %2225 = vrot.lane.b32.xlu0 %v911, 64
  %v2226 = vpop.permute.xlu0 %2225
  %2227 = vrot.lane.b32.xlu0 %v912, 64
  %v2228 = vpop.permute.xlu0 %2227
  %2229 = vrot.lane.b32.xlu0 %v913, 64
  %v2230 = vpop.permute.xlu0 %2229
  %2231 = vrot.lane.b32.xlu0 %v914, 64
  %v2232 = vpop.permute.xlu0 %2231
  %2233 = vrot.lane.b32.xlu0 %v915, 64
  %v2234 = vpop.permute.xlu0 %2233
  %2235 = vrot.lane.b32.xlu0 %v916, 64
  %v2236 = vpop.permute.xlu0 %2235
  %2237 = vrot.lane.b32.xlu0 %v917, 64
  %v2238 = vpop.permute.xlu0 %2237
  %2239 = vrot.lane.b32.xlu0 %v918, 64
  %v2240 = vpop.permute.xlu0 %2239
  %2241 = vrot.lane.b32.xlu0 %v919, 64
  %v2242 = vpop.permute.xlu0 %2241
  %2243 = vrot.lane.b32.xlu0 %v920, 64
  %v2244 = vpop.permute.xlu0 %2243
  %2245 = vrot.lane.b32.xlu0 %v921, 64
  %v2246 = vpop.permute.xlu0 %2245
  %2247 = vrot.lane.b32.xlu0 %v922, 64
  %v2248 = vpop.permute.xlu0 %2247
  %2249 = vrot.lane.b32.xlu0 %v923, 64
  %v2250 = vpop.permute.xlu0 %2249
  %2251 = vrot.lane.b32.xlu0 %v924, 64
  %v2252 = vpop.permute.xlu0 %2251
  %2253 = vrot.lane.b32.xlu0 %v925, 64
  %v2254 = vpop.permute.xlu0 %2253
  %2255 = vrot.lane.b32.xlu0 %v926, 64
  %v2256 = vpop.permute.xlu0 %2255
  %2257 = vrot.lane.b32.xlu0 %v927, 64
  %v2258 = vpop.permute.xlu0 %2257
  %2259 = vrot.lane.b32.xlu0 %v928, 64
  %v2260 = vpop.permute.xlu0 %2259
  %2261 = vrot.lane.b32.xlu0 %v929, 64
  %v2262 = vpop.permute.xlu0 %2261
  %2263 = vrot.lane.b32.xlu0 %v930, 64
  %v2264 = vpop.permute.xlu0 %2263
  %2265 = vrot.lane.b32.xlu0 %v931, 64
  %v2266 = vpop.permute.xlu0 %2265
  %2267 = vrot.lane.b32.xlu0 %v932, 64
  %v2268 = vpop.permute.xlu0 %2267
  %2269 = vrot.lane.b32.xlu0 %v933, 64
  %v2270 = vpop.permute.xlu0 %2269
  %2271 = vrot.lane.b32.xlu0 %v934, 64
  %v2272 = vpop.permute.xlu0 %2271
  %2273 = vrot.lane.b32.xlu0 %v935, 64
  %v2274 = vpop.permute.xlu0 %2273
  %2275 = vrot.lane.b32.xlu0 %v936, 64
  %v2276 = vpop.permute.xlu0 %2275
  %2277 = vrot.lane.b32.xlu0 %v937, 64
  %v2278 = vpop.permute.xlu0 %2277
  %2279 = vrot.lane.b32.xlu0 %v938, 64
  %v2280 = vpop.permute.xlu0 %2279
  %2281 = vrot.lane.b32.xlu0 %v939, 64
  %v2282 = vpop.permute.xlu0 %2281
  %2283 = vrot.lane.b32.xlu0 %v940, 64
  %v2284 = vpop.permute.xlu0 %2283
  %2285 = vrot.lane.b32.xlu0 %v941, 64
  %v2286 = vpop.permute.xlu0 %2285
  %2287 = vrot.lane.b32.xlu0 %v942, 64
  %v2288 = vpop.permute.xlu0 %2287
  %2289 = vrot.lane.b32.xlu0 %v943, 64
  %v2290 = vpop.permute.xlu0 %2289
  %2291 = vrot.lane.b32.xlu0 %v944, 64
  %v2292 = vpop.permute.xlu0 %2291
  %2293 = vrot.lane.b32.xlu0 %v945, 64
  %v2294 = vpop.permute.xlu0 %2293
  %2295 = vrot.lane.b32.xlu0 %v946, 64
  %v2296 = vpop.permute.xlu0 %2295
  %2297 = vrot.lane.b32.xlu0 %v947, 64
  %v2298 = vpop.permute.xlu0 %2297
  %2299 = vrot.lane.b32.xlu0 %v948, 64
  %v2300 = vpop.permute.xlu0 %2299
  %2301 = vrot.lane.b32.xlu0 %v949, 64
  %v2302 = vpop.permute.xlu0 %2301
  %2303 = vrot.lane.b32.xlu0 %v950, 64
  %v2304 = vpop.permute.xlu0 %2303
  %2305 = vrot.lane.b32.xlu0 %v951, 64
  %v2306 = vpop.permute.xlu0 %2305
  %2307 = vrot.lane.b32.xlu0 %v952, 64
  %v2308 = vpop.permute.xlu0 %2307
  %2309 = vrot.lane.b32.xlu0 %v953, 64
  %v2310 = vpop.permute.xlu0 %2309
  %2311 = vrot.lane.b32.xlu0 %v954, 64
  %v2312 = vpop.permute.xlu0 %2311
  %2313 = vrot.lane.b32.xlu0 %v955, 64
  %v2314 = vpop.permute.xlu0 %2313
  %2315 = vrot.lane.b32.xlu0 %v956, 64
  %v2316 = vpop.permute.xlu0 %2315
  %2317 = vrot.lane.b32.xlu0 %v957, 64
  %v2318 = vpop.permute.xlu0 %2317
  %2319 = vrot.lane.b32.xlu0 %v958, 64
  %v2320 = vpop.permute.xlu0 %2319
  %2321 = vrot.lane.b32.xlu0 %v959, 64
  %v2322 = vpop.permute.xlu0 %2321
  %2323 = vrot.lane.b32.xlu0 %v960, 64
  %v2324 = vpop.permute.xlu0 %2323
  %2325 = vrot.lane.b32.xlu0 %v961, 64
  %v2326 = vpop.permute.xlu0 %2325
  %2327 = vrot.lane.b32.xlu0 %v962, 64
  %v2328 = vpop.permute.xlu0 %2327
  %2329 = vrot.lane.b32.xlu0 %v963, 64
  %v2330 = vpop.permute.xlu0 %2329
  %2331 = vrot.lane.b32.xlu0 %v964, 64
  %v2332 = vpop.permute.xlu0 %2331
  %2333 = vrot.lane.b32.xlu0 %v965, 64
  %v2334 = vpop.permute.xlu0 %2333
  %2335 = vrot.lane.b32.xlu0 %v966, 64
  %v2336 = vpop.permute.xlu0 %2335
  %2337 = vrot.lane.b32.xlu0 %v967, 64
  %v2338 = vpop.permute.xlu0 %2337
  %2339 = vrot.lane.b32.xlu0 %v968, 64
  %v2340 = vpop.permute.xlu0 %2339
  %2341 = vrot.lane.b32.xlu0 %v969, 64
  %v2342 = vpop.permute.xlu0 %2341
  %2343 = vrot.lane.b32.xlu0 %v970, 64
  %v2344 = vpop.permute.xlu0 %2343
  %2345 = vrot.lane.b32.xlu0 %v971, 64
  %v2346 = vpop.permute.xlu0 %2345
  %2347 = vrot.lane.b32.xlu0 %v972, 64
  %v2348 = vpop.permute.xlu0 %2347
  %2349 = vrot.lane.b32.xlu0 %v973, 64
  %v2350 = vpop.permute.xlu0 %2349
  %vm2476 = vcmask 785920
  %2477 = vst.msk [vmem:[#allocation2] sm:$0xff] %vm2476, %v2102
  %2478 = vst.msk [vmem:[#allocation2 + $0x8] sm:$0xff] %vm2476, %v2104
  %2479 = vst.msk [vmem:[#allocation2 + $0x10] sm:$0xff] %vm2476, %v2106
  %2480 = vst.msk [vmem:[#allocation2 + $0x18] sm:$0xff] %vm2476, %v2108
  %2481 = vst.msk [vmem:[#allocation2 + $0x20] sm:$0xff] %vm2476, %v2110
  %2482 = vst.msk [vmem:[#allocation2 + $0x28] sm:$0xff] %vm2476, %v2112
  %2483 = vst.msk [vmem:[#allocation2 + $0x30] sm:$0xff] %vm2476, %v2114
  %2484 = vst.msk [vmem:[#allocation2 + $0x38] sm:$0xff] %vm2476, %v2116
  %2485 = vst.msk [vmem:[#allocation2 + $0x40] sm:$0xff] %vm2476, %v2118
  %2486 = vst.msk [vmem:[#allocation2 + $0x48] sm:$0xff] %vm2476, %v2120
  %2487 = vst.msk [vmem:[#allocation2 + $0x50] sm:$0xff] %vm2476, %v2122
  %2488 = vst.msk [vmem:[#allocation2 + $0x58] sm:$0xff] %vm2476, %v2124
  %2489 = vst.msk [vmem:[#allocation2 + $0x60] sm:$0xff] %vm2476, %v2126
  %2490 = vst.msk [vmem:[#allocation2 + $0x68] sm:$0xff] %vm2476, %v2128
  %2491 = vst.msk [vmem:[#allocation2 + $0x70] sm:$0xff] %vm2476, %v2130
  %2492 = vst.msk [vmem:[#allocation2 + $0x78] sm:$0xff] %vm2476, %v2132
  %2493 = vst.msk [vmem:[#allocation2 + $0x80] sm:$0xff] %vm2476, %v2134
  %2494 = vst.msk [vmem:[#allocation2 + $0x88] sm:$0xff] %vm2476, %v2136
  %2495 = vst.msk [vmem:[#allocation2 + $0x90] sm:$0xff] %vm2476, %v2138
  %2496 = vst.msk [vmem:[#allocation2 + $0x98] sm:$0xff] %vm2476, %v2140
  %2497 = vst.msk [vmem:[#allocation2 + $0xa0] sm:$0xff] %vm2476, %v2142
  %2498 = vst.msk [vmem:[#allocation2 + $0xa8] sm:$0xff] %vm2476, %v2144
  %2499 = vst.msk [vmem:[#allocation2 + $0xb0] sm:$0xff] %vm2476, %v2146
  %2500 = vst.msk [vmem:[#allocation2 + $0xb8] sm:$0xff] %vm2476, %v2148
  %2501 = vst.msk [vmem:[#allocation2 + $0xc0] sm:$0xff] %vm2476, %v2150
  %2502 = vst.msk [vmem:[#allocation2 + $0xc8] sm:$0xff] %vm2476, %v2152
  %2503 = vst.msk [vmem:[#allocation2 + $0xd0] sm:$0xff] %vm2476, %v2154
  %2504 = vst.msk [vmem:[#allocation2 + $0xd8] sm:$0xff] %vm2476, %v2156
  %2505 = vst.msk [vmem:[#allocation2 + $0xe0] sm:$0xff] %vm2476, %v2158
  %2506 = vst.msk [vmem:[#allocation2 + $0xe8] sm:$0xff] %vm2476, %v2160
  %2507 = vst.msk [vmem:[#allocation2 + $0xf0] sm:$0xff] %vm2476, %v2162
  %2508 = vst.msk [vmem:[#allocation2 + $0xf8] sm:$0xff] %vm2476, %v2164
  %2509 = vst.msk [vmem:[#allocation2 + $0x100] sm:$0xff] %vm2476, %v2166
  %2510 = vst.msk [vmem:[#allocation2 + $0x108] sm:$0xff] %vm2476, %v2168
  %2511 = vst.msk [vmem:[#allocation2 + $0x110] sm:$0xff] %vm2476, %v2170
  %2512 = vst.msk [vmem:[#allocation2 + $0x118] sm:$0xff] %vm2476, %v2172
  %2513 = vst.msk [vmem:[#allocation2 + $0x120] sm:$0xff] %vm2476, %v2174
  %2514 = vst.msk [vmem:[#allocation2 + $0x128] sm:$0xff] %vm2476, %v2176
  %2515 = vst.msk [vmem:[#allocation2 + $0x130] sm:$0xff] %vm2476, %v2178
  %2516 = vst.msk [vmem:[#allocation2 + $0x138] sm:$0xff] %vm2476, %v2180
  %2517 = vst.msk [vmem:[#allocation2 + $0x140] sm:$0xff] %vm2476, %v2182
  %2518 = vst.msk [vmem:[#allocation2 + $0x148] sm:$0xff] %vm2476, %v2184
  %2519 = vst.msk [vmem:[#allocation2 + $0x150] sm:$0xff] %vm2476, %v2186
  %2520 = vst.msk [vmem:[#allocation2 + $0x158] sm:$0xff] %vm2476, %v2188
  %2521 = vst.msk [vmem:[#allocation2 + $0x160] sm:$0xff] %vm2476, %v2190
  %2522 = vst.msk [vmem:[#allocation2 + $0x168] sm:$0xff] %vm2476, %v2192
  %2523 = vst.msk [vmem:[#allocation2 + $0x170] sm:$0xff] %vm2476, %v2194
  %2524 = vst.msk [vmem:[#allocation2 + $0x178] sm:$0xff] %vm2476, %v2196
  %2525 = vst.msk [vmem:[#allocation2 + $0x180] sm:$0xff] %vm2476, %v2198
  %2526 = vst.msk [vmem:[#allocation2 + $0x188] sm:$0xff] %vm2476, %v2200
  %2527 = vst.msk [vmem:[#allocation2 + $0x190] sm:$0xff] %vm2476, %v2202
  %2528 = vst.msk [vmem:[#allocation2 + $0x198] sm:$0xff] %vm2476, %v2204
  %2529 = vst.msk [vmem:[#allocation2 + $0x1a0] sm:$0xff] %vm2476, %v2206
  %2530 = vst.msk [vmem:[#allocation2 + $0x1a8] sm:$0xff] %vm2476, %v2208
  %2531 = vst.msk [vmem:[#allocation2 + $0x1b0] sm:$0xff] %vm2476, %v2210
  %2532 = vst.msk [vmem:[#allocation2 + $0x1b8] sm:$0xff] %vm2476, %v2212
  %2533 = vst.msk [vmem:[#allocation2 + $0x1c0] sm:$0xff] %vm2476, %v2214
  %2534 = vst.msk [vmem:[#allocation2 + $0x1c8] sm:$0xff] %vm2476, %v2216
  %2535 = vst.msk [vmem:[#allocation2 + $0x1d0] sm:$0xff] %vm2476, %v2218
  %2536 = vst.msk [vmem:[#allocation2 + $0x1d8] sm:$0xff] %vm2476, %v2220
  %2537 = vst.msk [vmem:[#allocation2 + $0x1e0] sm:$0xff] %vm2476, %v2222
  %2538 = vst.msk [vmem:[#allocation2 + $0x1e8] sm:$0xff] %vm2476, %v2224
  %2539 = vst.msk [vmem:[#allocation2 + $0x1f0] sm:$0xff] %vm2476, %v2226
  %2540 = vst.msk [vmem:[#allocation2 + $0x1f8] sm:$0xff] %vm2476, %v2228
  %2541 = vst.msk [vmem:[#allocation2 + $0x200] sm:$0xff] %vm2476, %v2230
  %2542 = vst.msk [vmem:[#allocation2 + $0x208] sm:$0xff] %vm2476, %v2232
  %2543 = vst.msk [vmem:[#allocation2 + $0x210] sm:$0xff] %vm2476, %v2234
  %2544 = vst.msk [vmem:[#allocation2 + $0x218] sm:$0xff] %vm2476, %v2236
  %2545 = vst.msk [vmem:[#allocation2 + $0x220] sm:$0xff] %vm2476, %v2238
  %2546 = vst.msk [vmem:[#allocation2 + $0x228] sm:$0xff] %vm2476, %v2240
  %2547 = vst.msk [vmem:[#allocation2 + $0x230] sm:$0xff] %vm2476, %v2242
  %2548 = vst.msk [vmem:[#allocation2 + $0x238] sm:$0xff] %vm2476, %v2244
  %2549 = vst.msk [vmem:[#allocation2 + $0x240] sm:$0xff] %vm2476, %v2246
  %2550 = vst.msk [vmem:[#allocation2 + $0x248] sm:$0xff] %vm2476, %v2248
  %2551 = vst.msk [vmem:[#allocation2 + $0x250] sm:$0xff] %vm2476, %v2250
  %2552 = vst.msk [vmem:[#allocation2 + $0x258] sm:$0xff] %vm2476, %v2252
  %2553 = vst.msk [vmem:[#allocation2 + $0x260] sm:$0xff] %vm2476, %v2254
  %2554 = vst.msk [vmem:[#allocation2 + $0x268] sm:$0xff] %vm2476, %v2256
  %2555 = vst.msk [vmem:[#allocation2 + $0x270] sm:$0xff] %vm2476, %v2258
  %2556 = vst.msk [vmem:[#allocation2 + $0x278] sm:$0xff] %vm2476, %v2260
  %2557 = vst.msk [vmem:[#allocation2 + $0x280] sm:$0xff] %vm2476, %v2262
  %2558 = vst.msk [vmem:[#allocation2 + $0x288] sm:$0xff] %vm2476, %v2264
  %2559 = vst.msk [vmem:[#allocation2 + $0x290] sm:$0xff] %vm2476, %v2266
  %2560 = vst.msk [vmem:[#allocation2 + $0x298] sm:$0xff] %vm2476, %v2268
  %2561 = vst.msk [vmem:[#allocation2 + $0x2a0] sm:$0xff] %vm2476, %v2270
  %2562 = vst.msk [vmem:[#allocation2 + $0x2a8] sm:$0xff] %vm2476, %v2272
  %2563 = vst.msk [vmem:[#allocation2 + $0x2b0] sm:$0xff] %vm2476, %v2274
  %2564 = vst.msk [vmem:[#allocation2 + $0x2b8] sm:$0xff] %vm2476, %v2276
  %2565 = vst.msk [vmem:[#allocation2 + $0x2c0] sm:$0xff] %vm2476, %v2278
  %2566 = vst.msk [vmem:[#allocation2 + $0x2c8] sm:$0xff] %vm2476, %v2280
  %2567 = vst.msk [vmem:[#allocation2 + $0x2d0] sm:$0xff] %vm2476, %v2282
  %2568 = vst.msk [vmem:[#allocation2 + $0x2d8] sm:$0xff] %vm2476, %v2284
  %2569 = vst.msk [vmem:[#allocation2 + $0x2e0] sm:$0xff] %vm2476, %v2286
  %2570 = vst.msk [vmem:[#allocation2 + $0x2e8] sm:$0xff] %vm2476, %v2288
  %2571 = vst.msk [vmem:[#allocation2 + $0x2f0] sm:$0xff] %vm2476, %v2290
  %2572 = vst.msk [vmem:[#allocation2 + $0x2f8] sm:$0xff] %vm2476, %v2292
  %2573 = vst.msk [vmem:[#allocation2 + $0x300] sm:$0xff] %vm2476, %v2294
  %2574 = vst.msk [vmem:[#allocation2 + $0x308] sm:$0xff] %vm2476, %v2296
  %2575 = vst.msk [vmem:[#allocation2 + $0x310] sm:$0xff] %vm2476, %v2298
  %2576 = vst.msk [vmem:[#allocation2 + $0x318] sm:$0xff] %vm2476, %v2300
  %2577 = vst.msk [vmem:[#allocation2 + $0x320] sm:$0xff] %vm2476, %v2302
  %2578 = vst.msk [vmem:[#allocation2 + $0x328] sm:$0xff] %vm2476, %v2304
  %2579 = vst.msk [vmem:[#allocation2 + $0x330] sm:$0xff] %vm2476, %v2306
  %2580 = vst.msk [vmem:[#allocation2 + $0x338] sm:$0xff] %vm2476, %v2308
  %2581 = vst.msk [vmem:[#allocation2 + $0x340] sm:$0xff] %vm2476, %v2310
  %2582 = vst.msk [vmem:[#allocation2 + $0x348] sm:$0xff] %vm2476, %v2312
  %2583 = vst.msk [vmem:[#allocation2 + $0x350] sm:$0xff] %vm2476, %v2314
  %2584 = vst.msk [vmem:[#allocation2 + $0x358] sm:$0xff] %vm2476, %v2316
  %2585 = vst.msk [vmem:[#allocation2 + $0x360] sm:$0xff] %vm2476, %v2318
  %2586 = vst.msk [vmem:[#allocation2 + $0x368] sm:$0xff] %vm2476, %v2320
  %2587 = vst.msk [vmem:[#allocation2 + $0x370] sm:$0xff] %vm2476, %v2322
  %2588 = vst.msk [vmem:[#allocation2 + $0x378] sm:$0xff] %vm2476, %v2324
  %2589 = vst.msk [vmem:[#allocation2 + $0x380] sm:$0xff] %vm2476, %v2326
  %2590 = vst.msk [vmem:[#allocation2 + $0x388] sm:$0xff] %vm2476, %v2328
  %2591 = vst.msk [vmem:[#allocation2 + $0x390] sm:$0xff] %vm2476, %v2330
  %2592 = vst.msk [vmem:[#allocation2 + $0x398] sm:$0xff] %vm2476, %v2332
  %2593 = vst.msk [vmem:[#allocation2 + $0x3a0] sm:$0xff] %vm2476, %v2334
  %2594 = vst.msk [vmem:[#allocation2 + $0x3a8] sm:$0xff] %vm2476, %v2336
  %2595 = vst.msk [vmem:[#allocation2 + $0x3b0] sm:$0xff] %vm2476, %v2338
  %2596 = vst.msk [vmem:[#allocation2 + $0x3b8] sm:$0xff] %vm2476, %v2340
  %2597 = vst.msk [vmem:[#allocation2 + $0x3c0] sm:$0xff] %vm2476, %v2342
  %2598 = vst.msk [vmem:[#allocation2 + $0x3c8] sm:$0xff] %vm2476, %v2344
  %2599 = vst.msk [vmem:[#allocation2 + $0x3d0] sm:$0xff] %vm2476, %v2346
  %2600 = vst.msk [vmem:[#allocation2 + $0x3d8] sm:$0xff] %vm2476, %v2348
  %2601 = vst.msk [vmem:[#allocation2 + $0x3e0] sm:$0xff] %vm2476, %v2350
  %v2602 = vld [vmem:[#allocation2] sm:$0xff]
  %v2603 = vld [vmem:[#allocation2 + $0x8] sm:$0xff]
  %v2604 = vld [vmem:[#allocation2 + $0x10] sm:$0xff]
  %v2605 = vld [vmem:[#allocation2 + $0x18] sm:$0xff]
  %v2606 = vld [vmem:[#allocation2 + $0x20] sm:$0xff]
  %v2607 = vld [vmem:[#allocation2 + $0x28] sm:$0xff]
  %v2608 = vld [vmem:[#allocation2 + $0x30] sm:$0xff]
  %v2609 = vld [vmem:[#allocation2 + $0x38] sm:$0xff]
  %v2610 = vld [vmem:[#allocation2 + $0x40] sm:$0xff]
  %v2611 = vld [vmem:[#allocation2 + $0x48] sm:$0xff]
  %v2612 = vld [vmem:[#allocation2 + $0x50] sm:$0xff]
  %v2613 = vld [vmem:[#allocation2 + $0x58] sm:$0xff]
  %v2614 = vld [vmem:[#allocation2 + $0x60] sm:$0xff]
  %v2615 = vld [vmem:[#allocation2 + $0x68] sm:$0xff]
  %v2616 = vld [vmem:[#allocation2 + $0x70] sm:$0xff]
  %v2617 = vld [vmem:[#allocation2 + $0x78] sm:$0xff]
  %v2618 = vld [vmem:[#allocation2 + $0x80] sm:$0xff]
  %v2619 = vld [vmem:[#allocation2 + $0x88] sm:$0xff]
  %v2620 = vld [vmem:[#allocation2 + $0x90] sm:$0xff]
  %v2621 = vld [vmem:[#allocation2 + $0x98] sm:$0xff]
  %v2622 = vld [vmem:[#allocation2 + $0xa0] sm:$0xff]
  %v2623 = vld [vmem:[#allocation2 + $0xa8] sm:$0xff]
  %v2624 = vld [vmem:[#allocation2 + $0xb0] sm:$0xff]
  %v2625 = vld [vmem:[#allocation2 + $0xb8] sm:$0xff]
  %v2626 = vld [vmem:[#allocation2 + $0xc0] sm:$0xff]
  %v2627 = vld [vmem:[#allocation2 + $0xc8] sm:$0xff]
  %v2628 = vld [vmem:[#allocation2 + $0xd0] sm:$0xff]
  %v2629 = vld [vmem:[#allocation2 + $0xd8] sm:$0xff]
  %v2630 = vld [vmem:[#allocation2 + $0xe0] sm:$0xff]
  %v2631 = vld [vmem:[#allocation2 + $0xe8] sm:$0xff]
  %v2632 = vld [vmem:[#allocation2 + $0xf0] sm:$0xff]
  %v2633 = vld [vmem:[#allocation2 + $0xf8] sm:$0xff]
  %v2634 = vld [vmem:[#allocation2 + $0x100] sm:$0xff]
  %v2635 = vld [vmem:[#allocation2 + $0x108] sm:$0xff]
  %v2636 = vld [vmem:[#allocation2 + $0x110] sm:$0xff]
  %v2637 = vld [vmem:[#allocation2 + $0x118] sm:$0xff]
  %v2638 = vld [vmem:[#allocation2 + $0x120] sm:$0xff]
  %v2639 = vld [vmem:[#allocation2 + $0x128] sm:$0xff]
  %v2640 = vld [vmem:[#allocation2 + $0x130] sm:$0xff]
  %v2641 = vld [vmem:[#allocation2 + $0x138] sm:$0xff]
  %v2642 = vld [vmem:[#allocation2 + $0x140] sm:$0xff]
  %v2643 = vld [vmem:[#allocation2 + $0x148] sm:$0xff]
  %v2644 = vld [vmem:[#allocation2 + $0x150] sm:$0xff]
  %v2645 = vld [vmem:[#allocation2 + $0x158] sm:$0xff]
  %v2646 = vld [vmem:[#allocation2 + $0x160] sm:$0xff]
  %v2647 = vld [vmem:[#allocation2 + $0x168] sm:$0xff]
  %v2648 = vld [vmem:[#allocation2 + $0x170] sm:$0xff]
  %v2649 = vld [vmem:[#allocation2 + $0x178] sm:$0xff]
  %v2650 = vld [vmem:[#allocation2 + $0x180] sm:$0xff]
  %v2651 = vld [vmem:[#allocation2 + $0x188] sm:$0xff]
  %v2652 = vld [vmem:[#allocation2 + $0x190] sm:$0xff]
  %v2653 = vld [vmem:[#allocation2 + $0x198] sm:$0xff]
  %v2654 = vld [vmem:[#allocation2 + $0x1a0] sm:$0xff]
  %v2655 = vld [vmem:[#allocation2 + $0x1a8] sm:$0xff]
  %v2656 = vld [vmem:[#allocation2 + $0x1b0] sm:$0xff]
  %v2657 = vld [vmem:[#allocation2 + $0x1b8] sm:$0xff]
  %v2658 = vld [vmem:[#allocation2 + $0x1c0] sm:$0xff]
  %v2659 = vld [vmem:[#allocation2 + $0x1c8] sm:$0xff]
  %v2660 = vld [vmem:[#allocation2 + $0x1d0] sm:$0xff]
  %v2661 = vld [vmem:[#allocation2 + $0x1d8] sm:$0xff]
  %v2662 = vld [vmem:[#allocation2 + $0x1e0] sm:$0xff]
  %v2663 = vld [vmem:[#allocation2 + $0x1e8] sm:$0xff]
  %v2664 = vld [vmem:[#allocation2 + $0x1f0] sm:$0xff]
  %v2665 = vld [vmem:[#allocation2 + $0x1f8] sm:$0xff]
  %v2666 = vld [vmem:[#allocation2 + $0x200] sm:$0xff]
  %v2667 = vld [vmem:[#allocation2 + $0x208] sm:$0xff]
  %v2668 = vld [vmem:[#allocation2 + $0x210] sm:$0xff]
  %v2669 = vld [vmem:[#allocation2 + $0x218] sm:$0xff]
  %v2670 = vld [vmem:[#allocation2 + $0x220] sm:$0xff]
  %v2671 = vld [vmem:[#allocation2 + $0x228] sm:$0xff]
  %v2672 = vld [vmem:[#allocation2 + $0x230] sm:$0xff]
  %v2673 = vld [vmem:[#allocation2 + $0x238] sm:$0xff]
  %v2674 = vld [vmem:[#allocation2 + $0x240] sm:$0xff]
  %v2675 = vld [vmem:[#allocation2 + $0x248] sm:$0xff]
  %v2676 = vld [vmem:[#allocation2 + $0x250] sm:$0xff]
  %v2677 = vld [vmem:[#allocation2 + $0x258] sm:$0xff]
  %v2678 = vld [vmem:[#allocation2 + $0x260] sm:$0xff]
  %v2679 = vld [vmem:[#allocation2 + $0x268] sm:$0xff]
  %v2680 = vld [vmem:[#allocation2 + $0x270] sm:$0xff]
  %v2681 = vld [vmem:[#allocation2 + $0x278] sm:$0xff]
  %v2682 = vld [vmem:[#allocation2 + $0x280] sm:$0xff]
  %v2683 = vld [vmem:[#allocation2 + $0x288] sm:$0xff]
  %v2684 = vld [vmem:[#allocation2 + $0x290] sm:$0xff]
  %v2685 = vld [vmem:[#allocation2 + $0x298] sm:$0xff]
  %v2686 = vld [vmem:[#allocation2 + $0x2a0] sm:$0xff]
  %v2687 = vld [vmem:[#allocation2 + $0x2a8] sm:$0xff]
  %v2688 = vld [vmem:[#allocation2 + $0x2b0] sm:$0xff]
  %v2689 = vld [vmem:[#allocation2 + $0x2b8] sm:$0xff]
  %v2690 = vld [vmem:[#allocation2 + $0x2c0] sm:$0xff]
  %v2691 = vld [vmem:[#allocation2 + $0x2c8] sm:$0xff]
  %v2692 = vld [vmem:[#allocation2 + $0x2d0] sm:$0xff]
  %v2693 = vld [vmem:[#allocation2 + $0x2d8] sm:$0xff]
  %v2694 = vld [vmem:[#allocation2 + $0x2e0] sm:$0xff]
  %v2695 = vld [vmem:[#allocation2 + $0x2e8] sm:$0xff]
  %v2696 = vld [vmem:[#allocation2 + $0x2f0] sm:$0xff]
  %v2697 = vld [vmem:[#allocation2 + $0x2f8] sm:$0xff]
  %v2698 = vld [vmem:[#allocation2 + $0x300] sm:$0xff]
  %v2699 = vld [vmem:[#allocation2 + $0x308] sm:$0xff]
  %v2700 = vld [vmem:[#allocation2 + $0x310] sm:$0xff]
  %v2701 = vld [vmem:[#allocation2 + $0x318] sm:$0xff]
  %v2702 = vld [vmem:[#allocation2 + $0x320] sm:$0xff]
  %v2703 = vld [vmem:[#allocation2 + $0x328] sm:$0xff]
  %v2704 = vld [vmem:[#allocation2 + $0x330] sm:$0xff]
  %v2705 = vld [vmem:[#allocation2 + $0x338] sm:$0xff]
  %v2706 = vld [vmem:[#allocation2 + $0x340] sm:$0xff]
  %v2707 = vld [vmem:[#allocation2 + $0x348] sm:$0xff]
  %v2708 = vld [vmem:[#allocation2 + $0x350] sm:$0xff]
  %v2709 = vld [vmem:[#allocation2 + $0x358] sm:$0xff]
  %v2710 = vld [vmem:[#allocation2 + $0x360] sm:$0xff]
  %v2711 = vld [vmem:[#allocation2 + $0x368] sm:$0xff]
  %v2712 = vld [vmem:[#allocation2 + $0x370] sm:$0xff]
  %v2713 = vld [vmem:[#allocation2 + $0x378] sm:$0xff]
  %v2714 = vld [vmem:[#allocation2 + $0x380] sm:$0xff]
  %v2715 = vld [vmem:[#allocation2 + $0x388] sm:$0xff]
  %v2716 = vld [vmem:[#allocation2 + $0x390] sm:$0xff]
  %v2717 = vld [vmem:[#allocation2 + $0x398] sm:$0xff]
  %v2718 = vld [vmem:[#allocation2 + $0x3a0] sm:$0xff]
  %v2719 = vld [vmem:[#allocation2 + $0x3a8] sm:$0xff]
  %v2720 = vld [vmem:[#allocation2 + $0x3b0] sm:$0xff]
  %v2721 = vld [vmem:[#allocation2 + $0x3b8] sm:$0xff]
  %v2722 = vld [vmem:[#allocation2 + $0x3c0] sm:$0xff]
  %v2723 = vld [vmem:[#allocation2 + $0x3c8] sm:$0xff]
  %v2724 = vld [vmem:[#allocation2 + $0x3d0] sm:$0xff]
  %v2725 = vld [vmem:[#allocation2 + $0x3d8] sm:$0xff]
  %v2726 = vld [vmem:[#allocation2 + $0x3e0] sm:$0xff]
  %2727 = vxpose.xlu0.b32.start [1/16] %v2602, 128
  %2728 = vxpose.xlu0.b32.cont [2/16] %v2603, 128
  %2729 = vxpose.xlu0.b32.cont [3/16] %v2604, 128
  %2730 = vxpose.xlu0.b32.cont [4/16] %v2605, 128
  %2731 = vxpose.xlu0.b32.cont [5/16] %v2606, 128
  %2732 = vxpose.xlu0.b32.cont [6/16] %v2607, 128
  %2733 = vxpose.xlu0.b32.cont [7/16] %v2608, 128
  %2734 = vxpose.xlu0.b32.cont [8/16] %v2609, 128
  %2735 = vxpose.xlu0.b32.cont [9/16] %v2610, 128
  %2736 = vxpose.xlu0.b32.cont [10/16] %v2611, 128
  %2737 = vxpose.xlu0.b32.cont [11/16] %v2612, 128
  %2738 = vxpose.xlu0.b32.cont [12/16] %v2613, 128
  %2739 = vxpose.xlu0.b32.cont [13/16] %v2614, 128
  %2740 = vxpose.xlu0.b32.cont [14/16] %v2615, 128
  %2741 = vxpose.xlu0.b32.cont [15/16] %v2616, 128
  %2742 = vxpose.xlu0.b32.end [16/16] %v2617, 128
  %v2743 = vpop.trf.xlu0
  %v2744 = vpop.trf.xlu0
  %v2745 = vpop.trf.xlu0
  %v2746 = vpop.trf.xlu0
  %v2747 = vpop.trf.xlu0
  %v2748 = vpop.trf.xlu0
  %v2749 = vpop.trf.xlu0
  %v2750 = vpop.trf.xlu0
  %v2751 = vpop.trf.xlu0
  %v2752 = vpop.trf.xlu0
  %v2753 = vpop.trf.xlu0
  %v2754 = vpop.trf.xlu0
  %v2755 = vpop.trf.xlu0
  %v2756 = vpop.trf.xlu0
  %v2757 = vpop.trf.xlu0
  %v2758 = vpop.trf.xlu0
  %2759 = vxpose.xlu0.b32.start [1/16] %v2618, 128
  %2760 = vxpose.xlu0.b32.cont [2/16] %v2619, 128
  %2761 = vxpose.xlu0.b32.cont [3/16] %v2620, 128
  %2762 = vxpose.xlu0.b32.cont [4/16] %v2621, 128
  %2763 = vxpose.xlu0.b32.cont [5/16] %v2622, 128
  %2764 = vxpose.xlu0.b32.cont [6/16] %v2623, 128
  %2765 = vxpose.xlu0.b32.cont [7/16] %v2624, 128
  %2766 = vxpose.xlu0.b32.cont [8/16] %v2625, 128
  %2767 = vxpose.xlu0.b32.cont [9/16] %v2626, 128
  %2768 = vxpose.xlu0.b32.cont [10/16] %v2627, 128
  %2769 = vxpose.xlu0.b32.cont [11/16] %v2628, 128
  %2770 = vxpose.xlu0.b32.cont [12/16] %v2629, 128
  %2771 = vxpose.xlu0.b32.cont [13/16] %v2630, 128
  %2772 = vxpose.xlu0.b32.cont [14/16] %v2631, 128
  %2773 = vxpose.xlu0.b32.cont [15/16] %v2632, 128
  %2774 = vxpose.xlu0.b32.end [16/16] %v2633, 128
  %v2775 = vpop.trf.xlu0
  %v2776 = vpop.trf.xlu0
  %v2777 = vpop.trf.xlu0
  %v2778 = vpop.trf.xlu0
  %v2779 = vpop.trf.xlu0
  %v2780 = vpop.trf.xlu0
  %v2781 = vpop.trf.xlu0
  %v2782 = vpop.trf.xlu0
  %v2783 = vpop.trf.xlu0
  %v2784 = vpop.trf.xlu0
  %v2785 = vpop.trf.xlu0
  %v2786 = vpop.trf.xlu0
  %v2787 = vpop.trf.xlu0
  %v2788 = vpop.trf.xlu0
  %v2789 = vpop.trf.xlu0
  %v2790 = vpop.trf.xlu0
  %2791 = vxpose.xlu0.b32.start [1/16] %v2634, 128
  %2792 = vxpose.xlu0.b32.cont [2/16] %v2635, 128
  %2793 = vxpose.xlu0.b32.cont [3/16] %v2636, 128
  %2794 = vxpose.xlu0.b32.cont [4/16] %v2637, 128
  %2795 = vxpose.xlu0.b32.cont [5/16] %v2638, 128
  %2796 = vxpose.xlu0.b32.cont [6/16] %v2639, 128
  %2797 = vxpose.xlu0.b32.cont [7/16] %v2640, 128
  %2798 = vxpose.xlu0.b32.cont [8/16] %v2641, 128
  %2799 = vxpose.xlu0.b32.cont [9/16] %v2642, 128
  %2800 = vxpose.xlu0.b32.cont [10/16] %v2643, 128
  %2801 = vxpose.xlu0.b32.cont [11/16] %v2644, 128
  %2802 = vxpose.xlu0.b32.cont [12/16] %v2645, 128
  %2803 = vxpose.xlu0.b32.cont [13/16] %v2646, 128
  %2804 = vxpose.xlu0.b32.cont [14/16] %v2647, 128
  %2805 = vxpose.xlu0.b32.cont [15/16] %v2648, 128
  %2806 = vxpose.xlu0.b32.end [16/16] %v2649, 128
  %v2807 = vpop.trf.xlu0
  %v2808 = vpop.trf.xlu0
  %v2809 = vpop.trf.xlu0
  %v2810 = vpop.trf.xlu0
  %v2811 = vpop.trf.xlu0
  %v2812 = vpop.trf.xlu0
  %v2813 = vpop.trf.xlu0
  %v2814 = vpop.trf.xlu0
  %v2815 = vpop.trf.xlu0
  %v2816 = vpop.trf.xlu0
  %v2817 = vpop.trf.xlu0
  %v2818 = vpop.trf.xlu0
  %v2819 = vpop.trf.xlu0
  %v2820 = vpop.trf.xlu0
  %v2821 = vpop.trf.xlu0
  %v2822 = vpop.trf.xlu0
  %2823 = vxpose.xlu0.b32.start [1/16] %v2650, 128
  %2824 = vxpose.xlu0.b32.cont [2/16] %v2651, 128
  %2825 = vxpose.xlu0.b32.cont [3/16] %v2652, 128
  %2826 = vxpose.xlu0.b32.cont [4/16] %v2653, 128
  %2827 = vxpose.xlu0.b32.cont [5/16] %v2654, 128
  %2828 = vxpose.xlu0.b32.cont [6/16] %v2655, 128
  %2829 = vxpose.xlu0.b32.cont [7/16] %v2656, 128
  %2830 = vxpose.xlu0.b32.cont [8/16] %v2657, 128
  %2831 = vxpose.xlu0.b32.cont [9/16] %v2658, 128
  %2832 = vxpose.xlu0.b32.cont [10/16] %v2659, 128
  %2833 = vxpose.xlu0.b32.cont [11/16] %v2660, 128
  %2834 = vxpose.xlu0.b32.cont [12/16] %v2661, 128
  %2835 = vxpose.xlu0.b32.cont [13/16] %v2662, 128
  %2836 = vxpose.xlu0.b32.cont [14/16] %v2663, 128
  %2837 = vxpose.xlu0.b32.cont [15/16] %v2664, 128
  %2838 = vxpose.xlu0.b32.end [16/16] %v2665, 128
  %v2839 = vpop.trf.xlu0
  %v2840 = vpop.trf.xlu0
  %v2841 = vpop.trf.xlu0
  %v2842 = vpop.trf.xlu0
  %v2843 = vpop.trf.xlu0
  %v2844 = vpop.trf.xlu0
  %v2845 = vpop.trf.xlu0
  %v2846 = vpop.trf.xlu0
  %v2847 = vpop.trf.xlu0
  %v2848 = vpop.trf.xlu0
  %v2849 = vpop.trf.xlu0
  %v2850 = vpop.trf.xlu0
  %v2851 = vpop.trf.xlu0
  %v2852 = vpop.trf.xlu0
  %v2853 = vpop.trf.xlu0
  %v2854 = vpop.trf.xlu0
  %2855 = vxpose.xlu0.b32.start [1/16] %v2666, 128
  %2856 = vxpose.xlu0.b32.cont [2/16] %v2667, 128
  %2857 = vxpose.xlu0.b32.cont [3/16] %v2668, 128
  %2858 = vxpose.xlu0.b32.cont [4/16] %v2669, 128
  %2859 = vxpose.xlu0.b32.cont [5/16] %v2670, 128
  %2860 = vxpose.xlu0.b32.cont [6/16] %v2671, 128
  %2861 = vxpose.xlu0.b32.cont [7/16] %v2672, 128
  %2862 = vxpose.xlu0.b32.cont [8/16] %v2673, 128
  %2863 = vxpose.xlu0.b32.cont [9/16] %v2674, 128
  %2864 = vxpose.xlu0.b32.cont [10/16] %v2675, 128
  %2865 = vxpose.xlu0.b32.cont [11/16] %v2676, 128
  %2866 = vxpose.xlu0.b32.cont [12/16] %v2677, 128
  %2867 = vxpose.xlu0.b32.cont [13/16] %v2678, 128
  %2868 = vxpose.xlu0.b32.cont [14/16] %v2679, 128
  %2869 = vxpose.xlu0.b32.cont [15/16] %v2680, 128
  %2870 = vxpose.xlu0.b32.end [16/16] %v2681, 128
  %v2871 = vpop.trf.xlu0
  %v2872 = vpop.trf.xlu0
  %v2873 = vpop.trf.xlu0
  %v2874 = vpop.trf.xlu0
  %v2875 = vpop.trf.xlu0
  %v2876 = vpop.trf.xlu0
  %v2877 = vpop.trf.xlu0
  %v2878 = vpop.trf.xlu0
  %v2879 = vpop.trf.xlu0
  %v2880 = vpop.trf.xlu0
  %v2881 = vpop.trf.xlu0
  %v2882 = vpop.trf.xlu0
  %v2883 = vpop.trf.xlu0
  %v2884 = vpop.trf.xlu0
  %v2885 = vpop.trf.xlu0
  %v2886 = vpop.trf.xlu0
  %2887 = vxpose.xlu0.b32.start [1/16] %v2682, 128
  %2888 = vxpose.xlu0.b32.cont [2/16] %v2683, 128
  %2889 = vxpose.xlu0.b32.cont [3/16] %v2684, 128
  %2890 = vxpose.xlu0.b32.cont [4/16] %v2685, 128
  %2891 = vxpose.xlu0.b32.cont [5/16] %v2686, 128
  %2892 = vxpose.xlu0.b32.cont [6/16] %v2687, 128
  %2893 = vxpose.xlu0.b32.cont [7/16] %v2688, 128
  %2894 = vxpose.xlu0.b32.cont [8/16] %v2689, 128
  %2895 = vxpose.xlu0.b32.cont [9/16] %v2690, 128
  %2896 = vxpose.xlu0.b32.cont [10/16] %v2691, 128
  %2897 = vxpose.xlu0.b32.cont [11/16] %v2692, 128
  %2898 = vxpose.xlu0.b32.cont [12/16] %v2693, 128
  %2899 = vxpose.xlu0.b32.cont [13/16] %v2694, 128
  %2900 = vxpose.xlu0.b32.cont [14/16] %v2695, 128
  %2901 = vxpose.xlu0.b32.cont [15/16] %v2696, 128
  %2902 = vxpose.xlu0.b32.end [16/16] %v2697, 128
  %v2903 = vpop.trf.xlu0
  %v2904 = vpop.trf.xlu0
  %v2905 = vpop.trf.xlu0
  %v2906 = vpop.trf.xlu0
  %v2907 = vpop.trf.xlu0
  %v2908 = vpop.trf.xlu0
  %v2909 = vpop.trf.xlu0
  %v2910 = vpop.trf.xlu0
  %v2911 = vpop.trf.xlu0
  %v2912 = vpop.trf.xlu0
  %v2913 = vpop.trf.xlu0
  %v2914 = vpop.trf.xlu0
  %v2915 = vpop.trf.xlu0
  %v2916 = vpop.trf.xlu0
  %v2917 = vpop.trf.xlu0
  %v2918 = vpop.trf.xlu0
  %2919 = vxpose.xlu0.b32.start [1/16] %v2698, 128
  %2920 = vxpose.xlu0.b32.cont [2/16] %v2699, 128
  %2921 = vxpose.xlu0.b32.cont [3/16] %v2700, 128
  %2922 = vxpose.xlu0.b32.cont [4/16] %v2701, 128
  %2923 = vxpose.xlu0.b32.cont [5/16] %v2702, 128
  %2924 = vxpose.xlu0.b32.cont [6/16] %v2703, 128
  %2925 = vxpose.xlu0.b32.cont [7/16] %v2704, 128
  %2926 = vxpose.xlu0.b32.cont [8/16] %v2705, 128
  %2927 = vxpose.xlu0.b32.cont [9/16] %v2706, 128
  %2928 = vxpose.xlu0.b32.cont [10/16] %v2707, 128
  %2929 = vxpose.xlu0.b32.cont [11/16] %v2708, 128
  %2930 = vxpose.xlu0.b32.cont [12/16] %v2709, 128
  %2931 = vxpose.xlu0.b32.cont [13/16] %v2710, 128
  %2932 = vxpose.xlu0.b32.cont [14/16] %v2711, 128
  %2933 = vxpose.xlu0.b32.cont [15/16] %v2712, 128
  %2934 = vxpose.xlu0.b32.end [16/16] %v2713, 128
  %v2935 = vpop.trf.xlu0
  %v2936 = vpop.trf.xlu0
  %v2937 = vpop.trf.xlu0
  %v2938 = vpop.trf.xlu0
  %v2939 = vpop.trf.xlu0
  %v2940 = vpop.trf.xlu0
  %v2941 = vpop.trf.xlu0
  %v2942 = vpop.trf.xlu0
  %v2943 = vpop.trf.xlu0
  %v2944 = vpop.trf.xlu0
  %v2945 = vpop.trf.xlu0
  %v2946 = vpop.trf.xlu0
  %v2947 = vpop.trf.xlu0
  %v2948 = vpop.trf.xlu0
  %v2949 = vpop.trf.xlu0
  %v2950 = vpop.trf.xlu0
  %2951 = vxpose.xlu0.b32.start [1/16] %v2714, 128
  %2952 = vxpose.xlu0.b32.cont [2/16] %v2715, 128
  %2953 = vxpose.xlu0.b32.cont [3/16] %v2716, 128
  %2954 = vxpose.xlu0.b32.cont [4/16] %v2717, 128
  %2955 = vxpose.xlu0.b32.cont [5/16] %v2718, 128
  %2956 = vxpose.xlu0.b32.cont [6/16] %v2719, 128
  %2957 = vxpose.xlu0.b32.cont [7/16] %v2720, 128
  %2958 = vxpose.xlu0.b32.cont [8/16] %v2721, 128
  %2959 = vxpose.xlu0.b32.cont [9/16] %v2722, 128
  %2960 = vxpose.xlu0.b32.cont [10/16] %v2723, 128
  %2961 = vxpose.xlu0.b32.cont [11/16] %v2724, 128
  %2962 = vxpose.xlu0.b32.cont [12/16] %v2725, 128
  %2963 = vxpose.xlu0.b32.cont [13/16] %v2726, 128
  %2964 = vxpose.xlu0.b32.cont [14/16] 0.0, 128
  %2965 = vxpose.xlu0.b32.cont [15/16] 0.0, 128
  %2966 = vxpose.xlu0.b32.end [16/16] 0.0, 128
  %v2967 = vpop.trf.xlu0
  %v2968 = vpop.trf.xlu0
  %v2969 = vpop.trf.xlu0
  %v2970 = vpop.trf.xlu0
  %v2971 = vpop.trf.xlu0
  %v2972 = vpop.trf.xlu0
  %v2973 = vpop.trf.xlu0
  %v2974 = vpop.trf.xlu0
  %v2975 = vpop.trf.xlu0
  %v2976 = vpop.trf.xlu0
  %v2977 = vpop.trf.xlu0
  %v2978 = vpop.trf.xlu0
  %v2979 = vpop.trf.xlu0
  %v2980 = vpop.trf.xlu0
  %v2981 = vpop.trf.xlu0
  %v2982 = vpop.trf.xlu0
  %vm2983 = vcmask 850944
  %v2985 = vsel %vm2983, %v2967, 0
  %v2988 = vsel %vm2983, %v2968, 0
  %v2991 = vsel %vm2983, %v2969, 0
  %v2994 = vsel %vm2983, %v2970, 0
  %v2997 = vsel %vm2983, %v2971, 0
  %v3000 = vsel %vm2983, %v2972, 0
  %v3003 = vsel %vm2983, %v2973, 0
  %v3006 = vsel %vm2983, %v2974, 0
  %v3009 = vsel %vm2983, %v2975, 0
  %v3012 = vsel %vm2983, %v2976, 0
  %v3015 = vsel %vm2983, %v2977, 0
  %v3018 = vsel %vm2983, %v2978, 0
  %3020 = vmatprep.subr.mxu0 0.0
  %v3021 = vand.u32 %v2602, 4294901760
  %3022 = vmatpush1.msra.mxu0 %v3021
  %3023 = vmatprep.subr.mxu0 0.0
  %v3024 = vand.u32 %v2603, 4294901760
  %3025 = vmatpush1.msra.mxu0 %v3024
  %3026 = vmatprep.subr.mxu0 0.0
  %v3027 = vand.u32 %v2604, 4294901760
  %3028 = vmatpush1.msra.mxu0 %v3027
  %3029 = vmatprep.subr.mxu0 0.0
  %v3030 = vand.u32 %v2605, 4294901760
  %3031 = vmatpush1.msra.mxu0 %v3030
  %3032 = vmatprep.subr.mxu0 0.0
  %v3033 = vand.u32 %v2606, 4294901760
  %3034 = vmatpush1.msra.mxu0 %v3033
  %3035 = vmatprep.subr.mxu0 0.0
  %v3036 = vand.u32 %v2607, 4294901760
  %3037 = vmatpush1.msra.mxu0 %v3036
  %3038 = vmatprep.subr.mxu0 0.0
  %v3039 = vand.u32 %v2608, 4294901760
  %3040 = vmatpush1.msra.mxu0 %v3039
  %3041 = vmatprep.subr.mxu0 0.0
  %v3042 = vand.u32 %v2609, 4294901760
  %3043 = vmatpush1.msra.mxu0 %v3042
  %3044 = vmatprep.subr.mxu0 0.0
  %v3045 = vand.u32 %v2610, 4294901760
  %3046 = vmatpush1.msra.mxu0 %v3045
  %3047 = vmatprep.subr.mxu0 0.0
  %v3048 = vand.u32 %v2611, 4294901760
  %3049 = vmatpush1.msra.mxu0 %v3048
  %3050 = vmatprep.subr.mxu0 0.0
  %v3051 = vand.u32 %v2612, 4294901760
  %3052 = vmatpush1.msra.mxu0 %v3051
  %3053 = vmatprep.subr.mxu0 0.0
  %v3054 = vand.u32 %v2613, 4294901760
  %3055 = vmatpush1.msra.mxu0 %v3054
  %3056 = vmatprep.subr.mxu0 0.0
  %v3057 = vand.u32 %v2614, 4294901760
  %3058 = vmatpush1.msra.mxu0 %v3057
  %3059 = vmatprep.subr.mxu0 0.0
  %v3060 = vand.u32 %v2615, 4294901760
  %3061 = vmatpush1.msra.mxu0 %v3060
  %3062 = vmatprep.subr.mxu0 0.0
  %v3063 = vand.u32 %v2616, 4294901760
  %3064 = vmatpush1.msra.mxu0 %v3063
  %3065 = vmatprep.subr.mxu0 0.0
  %v3066 = vand.u32 %v2617, 4294901760
  %3067 = vmatpush1.msra.mxu0 %v3066
  %3068 = vmatprep.subr.mxu0 0.0
  %v3069 = vand.u32 %v2618, 4294901760
  %3070 = vmatpush1.msra.mxu0 %v3069
  %3071 = vmatprep.subr.mxu0 0.0
  %v3072 = vand.u32 %v2619, 4294901760
  %3073 = vmatpush1.msra.mxu0 %v3072
  %3074 = vmatprep.subr.mxu0 0.0
  %v3075 = vand.u32 %v2620, 4294901760
  %3076 = vmatpush1.msra.mxu0 %v3075
  %3077 = vmatprep.subr.mxu0 0.0
  %v3078 = vand.u32 %v2621, 4294901760
  %3079 = vmatpush1.msra.mxu0 %v3078
  %3080 = vmatprep.subr.mxu0 0.0
  %v3081 = vand.u32 %v2622, 4294901760
  %3082 = vmatpush1.msra.mxu0 %v3081
  %3083 = vmatprep.subr.mxu0 0.0
  %v3084 = vand.u32 %v2623, 4294901760
  %3085 = vmatpush1.msra.mxu0 %v3084
  %3086 = vmatprep.subr.mxu0 0.0
  %v3087 = vand.u32 %v2624, 4294901760
  %3088 = vmatpush1.msra.mxu0 %v3087
  %3089 = vmatprep.subr.mxu0 0.0
  %v3090 = vand.u32 %v2625, 4294901760
  %3091 = vmatpush1.msra.mxu0 %v3090
  %3092 = vmatprep.subr.mxu0 0.0
  %v3093 = vand.u32 %v2626, 4294901760
  %3094 = vmatpush1.msra.mxu0 %v3093
  %3095 = vmatprep.subr.mxu0 0.0
  %v3096 = vand.u32 %v2627, 4294901760
  %3097 = vmatpush1.msra.mxu0 %v3096
  %3098 = vmatprep.subr.mxu0 0.0
  %v3099 = vand.u32 %v2628, 4294901760
  %3100 = vmatpush1.msra.mxu0 %v3099
  %3101 = vmatprep.subr.mxu0 0.0
  %v3102 = vand.u32 %v2629, 4294901760
  %3103 = vmatpush1.msra.mxu0 %v3102
  %3104 = vmatprep.subr.mxu0 0.0
  %v3105 = vand.u32 %v2630, 4294901760
  %3106 = vmatpush1.msra.mxu0 %v3105
  %3107 = vmatprep.subr.mxu0 0.0
  %v3108 = vand.u32 %v2631, 4294901760
  %3109 = vmatpush1.msra.mxu0 %v3108
  %3110 = vmatprep.subr.mxu0 0.0
  %v3111 = vand.u32 %v2632, 4294901760
  %3112 = vmatpush1.msra.mxu0 %v3111
  %3113 = vmatprep.subr.mxu0 0.0
  %v3114 = vand.u32 %v2633, 4294901760
  %3115 = vmatpush1.msra.mxu0 %v3114
  %v3116 = vand.u32 %v2775, 4294901760
  %v3117 = vsub.f32 %v2775, %v3116
  %v3118 = vand.u32 %v3117, 4294901760
  %v3119 = vsub.f32 %v3117, %v3118
  %v3120 = vand.u32 %v3119, 4294901760
  %3121 = vmatprep.mubr.f32.mxu0 %v3120
  %v3122 = vand.u32 %v2743, 4294901760
  %v3123 = vsub.f32 %v2743, %v3122
  %v3124 = vand.u32 %v3123, 4294901760
  %v3125 = vsub.f32 %v3123, %v3124
  %v3126 = vand.u32 %v3125, 4294901760
  %3127 = vmatmul.mubr.f32.gmra.mrb[0].mxu0 %v3126
  %v3128 = vpop.f32.mrb[0].mxu0
  %v3129 = vadd.f32 0.0, %v3128
  %v3130 = vpop.f32.mrb[0].mxu0
  %v3131 = vand.u32 %v2776, 4294901760
  %v3132 = vsub.f32 %v2776, %v3131
  %v3133 = vand.u32 %v3132, 4294901760
  %v3134 = vsub.f32 %v3132, %v3133
  %v3135 = vand.u32 %v3134, 4294901760
  %3136 = vmatprep.mubr.f32.mxu0 %v3135
  %v3137 = vand.u32 %v2744, 4294901760
  %v3138 = vsub.f32 %v2744, %v3137
  %v3139 = vand.u32 %v3138, 4294901760
  %v3140 = vsub.f32 %v3138, %v3139
  %v3141 = vand.u32 %v3140, 4294901760
  %3142 = vmatmul.mubr.f32.gmra.mrb[0].mxu0 %v3141
  %v3143 = vpop.f32.mrb[0].mxu0
  %v3144 = vadd.f32 0.0, %v3143
  %v3145 = vpop.f32.mrb[0].mxu0
  %v3146 = vand.u32 %v2777, 4294901760
  %v3147 = vsub.f32 %v2777, %v3146
  %v3148 = vand.u32 %v3147, 4294901760
  %v3149 = vsub.f32 %v3147, %v3148
  %v3150 = vand.u32 %v3149, 4294901760
  %3151 = vmatprep.mubr.f32.mxu0 %v3150
  %v3152 = vand.u32 %v2745, 4294901760
  %v3153 = vsub.f32 %v2745, %v3152
  %v3154 = vand.u32 %v3153, 4294901760
  %v3155 = vsub.f32 %v3153, %v3154
  %v3156 = vand.u32 %v3155, 4294901760
  %3157 = vmatmul.mubr.f32.gmra.mrb[0].mxu0 %v3156
  %v3158 = vpop.f32.mrb[0].mxu0
  %v3159 = vadd.f32 0.0, %v3158
  %v3160 = vpop.f32.mrb[0].mxu0
  %v3161 = vand.u32 %v2778, 4294901760
  %v3162 = vsub.f32 %v2778, %v3161
  %v3163 = vand.u32 %v3162, 4294901760
  %v3164 = vsub.f32 %v3162, %v3163
  %v3165 = vand.u32 %v3164, 4294901760
  %3166 = vmatprep.mubr.f32.mxu0 %v3165
  %v3167 = vand.u32 %v2746, 4294901760
  %v3168 = vsub.f32 %v2746, %v3167
  %v3169 = vand.u32 %v3168, 4294901760
  %v3170 = vsub.f32 %v3168, %v3169
  %v3171 = vand.u32 %v3170, 4294901760
  %3172 = vmatmul.mubr.f32.gmra.mrb[0].mxu0 %v3171
  %v3173 = vpop.f32.mrb[0].mxu0
  %v3174 = vadd.f32 0.0, %v3173
  %v3175 = vpop.f32.mrb[0].mxu0
  %v3176 = vand.u32 %v2779, 4294901760
  %v3177 = vsub.f32 %v2779, %v3176
  %v3178 = vand.u32 %v3177, 4294901760
  %v3179 = vsub.f32 %v3177, %v3178
  %v3180 = vand.u32 %v3179, 4294901760
  %3181 = vmatprep.mubr.f32.mxu0 %v3180
  %v3182 = vand.u32 %v2747, 4294901760
  %v3183 = vsub.f32 %v2747, %v3182
  %v3184 = vand.u32 %v3183, 4294901760
  %v3185 = vsub.f32 %v3183, %v3184
  %v3186 = vand.u32 %v3185, 4294901760
  %3187 = vmatmul.mubr.f32.gmra.mrb[0].mxu0 %v3186
  %v3188 = vpop.f32.mrb[0].mxu0
  %v3189 = vadd.f32 0.0, %v3188
  %v3190 = vpop.f32.mrb[0].mxu0
  %v3191 = vand.u32 %v2780, 4294901760
  %v3192 = vsub.f32 %v2780, %v3191
  %v3193 = vand.u32 %v3192, 4294901760
  %v3194 = vsub.f32 %v3192, %v3193
  %v3195 = vand.u32 %v3194, 4294901760
  %3196 = vmatprep.mubr.f32.mxu0 %v3195
  %v3197 = vand.u32 %v2748, 4294901760
  %v3198 = vsub.f32 %v2748, %v3197
  %v3199 = vand.u32 %v3198, 4294901760
  %v3200 = vsub.f32 %v3198, %v3199
  %v3201 = vand.u32 %v3200, 4294901760
  %3202 = vmatmul.mubr.f32.gmra.mrb[0].mxu0 %v3201
  %v3203 = vpop.f32.mrb[0].mxu0
  %v3204 = vadd.f32 0.0, %v3203
  %v3205 = vpop.f32.mrb[0].mxu0
  %v3206 = vand.u32 %v2781, 4294901760
  %v3207 = vsub.f32 %v2781, %v3206
  %v3208 = vand.u32 %v3207, 4294901760
  %v3209 = vsub.f32 %v3207, %v3208
  %v3210 = vand.u32 %v3209, 4294901760
  %3211 = vmatprep.mubr.f32.mxu0 %v3210
  %v3212 = vand.u32 %v2749, 4294901760
  %v3213 = vsub.f32 %v2749, %v3212
  %v3214 = vand.u32 %v3213, 4294901760
  %v3215 = vsub.f32 %v3213, %v3214
  %v3216 = vand.u32 %v3215, 4294901760
  %3217 = vmatmul.mubr.f32.gmra.mrb[0].mxu0 %v3216
  %v3218 = vpop.f32.mrb[0].mxu0
  %v3219 = vadd.f32 0.0, %v3218
  %v3220 = vpop.f32.mrb[0].mxu0
  %v3221 = vand.u32 %v2782, 4294901760
  %v3222 = vsub.f32 %v2782, %v3221
  %v3223 = vand.u32 %v3222, 4294901760
  %v3224 = vsub.f32 %v3222, %v3223
  %v3225 = vand.u32 %v3224, 4294901760
  %3226 = vmatprep.mubr.f32.mxu0 %v3225
  %v3227 = vand.u32 %v2750, 4294901760
  %v3228 = vsub.f32 %v2750, %v3227
  %v3229 = vand.u32 %v3228, 4294901760
  %v3230 = vsub.f32 %v3228, %v3229
  %v3231 = vand.u32 %v3230, 4294901760
  %3232 = vmatmul.mubr.f32.gmra.mrb[0].mxu0 %v3231
  %v3233 = vpop.f32.mrb[0].mxu0
  %v3234 = vadd.f32 0.0, %v3233
  %v3235 = vpop.f32.mrb[0].mxu0
  %v3236 = vand.u32 %v2783, 4294901760
  %v3237 = vsub.f32 %v2783, %v3236
  %v3238 = vand.u32 %v3237, 4294901760
  %v3239 = vsub.f32 %v3237, %v3238
  %v3240 = vand.u32 %v3239, 4294901760
  %3241 = vmatprep.mubr.f32.mxu0 %v3240
  %v3242 = vand.u32 %v2751, 4294901760
  %v3243 = vsub.f32 %v2751, %v3242
  %v3244 = vand.u32 %v3243, 4294901760
  %v3245 = vsub.f32 %v3243, %v3244
  %v3246 = vand.u32 %v3245, 4294901760
  %3247 = vmatmul.mubr.f32.gmra.mrb[0].mxu0 %v3246
  %v3248 = vpop.f32.mrb[0].mxu0
  %v3249 = vadd.f32 0.0, %v3248
  %v3250 = vpop.f32.mrb[0].mxu0
  %v3251 = vand.u32 %v2784, 4294901760
  %v3252 = vsub.f32 %v2784, %v3251
  %v3253 = vand.u32 %v3252, 4294901760
  %v3254 = vsub.f32 %v3252, %v3253
  %v3255 = vand.u32 %v3254, 4294901760
  %3256 = vmatprep.mubr.f32.mxu0 %v3255
  %v3257 = vand.u32 %v2752, 4294901760
  %v3258 = vsub.f32 %v2752, %v3257
  %v3259 = vand.u32 %v3258, 4294901760
  %v3260 = vsub.f32 %v3258, %v3259
  %v3261 = vand.u32 %v3260, 4294901760
  %3262 = vmatmul.mubr.f32.gmra.mrb[0].mxu0 %v3261
  %v3263 = vpop.f32.mrb[0].mxu0
  %v3264 = vadd.f32 0.0, %v3263
  %v3265 = vpop.f32.mrb[0].mxu0
  %v3266 = vand.u32 %v2785, 4294901760
  %v3267 = vsub.f32 %v2785, %v3266
  %v3268 = vand.u32 %v3267, 4294901760
  %v3269 = vsub.f32 %v3267, %v3268
  %v3270 = vand.u32 %v3269, 4294901760
  %3271 = vmatprep.mubr.f32.mxu0 %v3270
  %v3272 = vand.u32 %v2753, 4294901760
  %v3273 = vsub.f32 %v2753, %v3272
  %v3274 = vand.u32 %v3273, 4294901760
  %v3275 = vsub.f32 %v3273, %v3274
  %v3276 = vand.u32 %v3275, 4294901760
  %3277 = vmatmul.mubr.f32.gmra.mrb[0].mxu0 %v3276
  %v3278 = vpop.f32.mrb[0].mxu0
  %v3279 = vadd.f32 0.0, %v3278
  %v3280 = vpop.f32.mrb[0].mxu0
  %v3281 = vand.u32 %v2786, 4294901760
  %v3282 = vsub.f32 %v2786, %v3281
  %v3283 = vand.u32 %v3282, 4294901760
  %v3284 = vsub.f32 %v3282, %v3283
  %v3285 = vand.u32 %v3284, 4294901760
  %3286 = vmatprep.mubr.f32.mxu0 %v3285
  %v3287 = vand.u32 %v2754, 4294901760
  %v3288 = vsub.f32 %v2754, %v3287
  %v3289 = vand.u32 %v3288, 4294901760
  %v3290 = vsub.f32 %v3288, %v3289
  %v3291 = vand.u32 %v3290, 4294901760
  %3292 = vmatmul.mubr.f32.gmra.mrb[0].mxu0 %v3291
  %v3293 = vpop.f32.mrb[0].mxu0
  %v3294 = vadd.f32 0.0, %v3293
  %v3295 = vpop.f32.mrb[0].mxu0
  %3296 = vdwg.mxu0
  %3297 = vmatprep.subr.mxu0 0.0
  %v3298 = vand.u32 %v2602, 4294901760
  %v3299 = vsub.f32 %v2602, %v3298
  %v3300 = vand.u32 %v3299, 4294901760
  %v3301 = vsub.f32 %v3299, %v3300
  %v3302 = vand.u32 %v3301, 4294901760
  %3303 = vmatpush1.msra.mxu0 %v3302
  %3304 = vmatprep.subr.mxu0 0.0
  %v3305 = vand.u32 %v2603, 4294901760
  %v3306 = vsub.f32 %v2603, %v3305
  %v3307 = vand.u32 %v3306, 4294901760
  %v3308 = vsub.f32 %v3306, %v3307
  %v3309 = vand.u32 %v3308, 4294901760
  %3310 = vmatpush1.msra.mxu0 %v3309
  %3311 = vmatprep.subr.mxu0 0.0
  %v3312 = vand.u32 %v2604, 4294901760
  %v3313 = vsub.f32 %v2604, %v3312
  %v3314 = vand.u32 %v3313, 4294901760
  %v3315 = vsub.f32 %v3313, %v3314
  %v3316 = vand.u32 %v3315, 4294901760
  %3317 = vmatpush1.msra.mxu0 %v3316
  %3318 = vmatprep.subr.mxu0 0.0
  %v3319 = vand.u32 %v2605, 4294901760
  %v3320 = vsub.f32 %v2605, %v3319
  %v3321 = vand.u32 %v3320, 4294901760
  %v3322 = vsub.f32 %v3320, %v3321
  %v3323 = vand.u32 %v3322, 4294901760
  %3324 = vmatpush1.msra.mxu0 %v3323
  %3325 = vmatprep.subr.mxu0 0.0
  %v3326 = vand.u32 %v2606, 4294901760
  %v3327 = vsub.f32 %v2606, %v3326
  %v3328 = vand.u32 %v3327, 4294901760
  %v3329 = vsub.f32 %v3327, %v3328
  %v3330 = vand.u32 %v3329, 4294901760
  %3331 = vmatpush1.msra.mxu0 %v3330
  %3332 = vmatprep.subr.mxu0 0.0
  %v3333 = vand.u32 %v2607, 4294901760
  %v3334 = vsub.f32 %v2607, %v3333
  %v3335 = vand.u32 %v3334, 4294901760
  %v3336 = vsub.f32 %v3334, %v3335
  %v3337 = vand.u32 %v3336, 4294901760
  %3338 = vmatpush1.msra.mxu0 %v3337
  %3339 = vmatprep.subr.mxu0 0.0
  %v3340 = vand.u32 %v2608, 4294901760
  %v3341 = vsub.f32 %v2608, %v3340
  %v3342 = vand.u32 %v3341, 4294901760
  %v3343 = vsub.f32 %v3341, %v3342
  %v3344 = vand.u32 %v3343, 4294901760
  %3345 = vmatpush1.msra.mxu0 %v3344
  %3346 = vmatprep.subr.mxu0 0.0
  %v3347 = vand.u32 %v2609, 4294901760
  %v3348 = vsub.f32 %v2609, %v3347
  %v3349 = vand.u32 %v3348, 4294901760
  %v3350 = vsub.f32 %v3348, %v3349
  %v3351 = vand.u32 %v3350, 4294901760
  %3352 = vmatpush1.msra.mxu0 %v3351
  %3353 = vmatprep.subr.mxu0 0.0
  %v3354 = vand.u32 %v2610, 4294901760
  %v3355 = vsub.f32 %v2610, %v3354
  %v3356 = vand.u32 %v3355, 4294901760
  %v3357 = vsub.f32 %v3355, %v3356
  %v3358 = vand.u32 %v3357, 4294901760
  %3359 = vmatpush1.msra.mxu0 %v3358
  %3360 = vmatprep.subr.mxu0 0.0
  %v3361 = vand.u32 %v2611, 4294901760
  %v3362 = vsub.f32 %v2611, %v3361
  %v3363 = vand.u32 %v3362, 4294901760
  %v3364 = vsub.f32 %v3362, %v3363
  %v3365 = vand.u32 %v3364, 4294901760
  %3366 = vmatpush1.msra.mxu0 %v3365
  %3367 = vmatprep.subr.mxu0 0.0
  %v3368 = vand.u32 %v2612, 4294901760
  %v3369 = vsub.f32 %v2612, %v3368
  %v3370 = vand.u32 %v3369, 4294901760
  %v3371 = vsub.f32 %v3369, %v3370
  %v3372 = vand.u32 %v3371, 4294901760
  %3373 = vmatpush1.msra.mxu0 %v3372
  %3374 = vmatprep.subr.mxu0 0.0
  %v3375 = vand.u32 %v2613, 4294901760
  %v3376 = vsub.f32 %v2613, %v3375
  %v3377 = vand.u32 %v3376, 4294901760
  %v3378 = vsub.f32 %v3376, %v3377
  %v3379 = vand.u32 %v3378, 4294901760
  %3380 = vmatpush1.msra.mxu0 %v3379
  %3381 = vmatprep.subr.mxu0 0.0
  %v3382 = vand.u32 %v2614, 4294901760
  %v3383 = vsub.f32 %v2614, %v3382
  %v3384 = vand.u32 %v3383, 4294901760
  %v3385 = vsub.f32 %v3383, %v3384
  %v3386 = vand.u32 %v3385, 4294901760
  %3387 = vmatpush1.msra.mxu0 %v3386
  %3388 = vmatprep.subr.mxu0 0.0
  %v3389 = vand.u32 %v2615, 4294901760
  %v3390 = vsub.f32 %v2615, %v3389
  %v3391 = vand.u32 %v3390, 4294901760
  %v3392 = vsub.f32 %v3390, %v3391
  %v3393 = vand.u32 %v3392, 4294901760
  %3394 = vmatpush1.msra.mxu0 %v3393
  %3395 = vmatprep.subr.mxu0 0.0
  %v3396 = vand.u32 %v2616, 4294901760
  %v3397 = vsub.f32 %v2616, %v3396
  %v3398 = vand.u32 %v3397, 4294901760
  %v3399 = vsub.f32 %v3397, %v3398
  %v3400 = vand.u32 %v3399, 4294901760
  %3401 = vmatpush1.msra.mxu0 %v3400
  %3402 = vmatprep.subr.mxu0 0.0
  %v3403 = vand.u32 %v2617, 4294901760
  %v3404 = vsub.f32 %v2617, %v3403
  %v3405 = vand.u32 %v3404, 4294901760
  %v3406 = vsub.f32 %v3404, %v3405
  %v3407 = vand.u32 %v3406, 4294901760
  %3408 = vmatpush1.msra.mxu0 %v3407
  %3409 = vmatprep.subr.mxu0 0.0
  %v3410 = vand.u32 %v2618, 4294901760
  %v3411 = vsub.f32 %v2618, %v3410
  %v3412 = vand.u32 %v3411, 4294901760
  %v3413 = vsub.f32 %v3411, %v3412
  %v3414 = vand.u32 %v3413, 4294901760
  %3415 = vmatpush1.msra.mxu0 %v3414
  %3416 = vmatprep.subr.mxu0 0.0
  %v3417 = vand.u32 %v2619, 4294901760
  %v3418 = vsub.f32 %v2619, %v3417
  %v3419 = vand.u32 %v3418, 4294901760
  %v3420 = vsub.f32 %v3418, %v3419
  %v3421 = vand.u32 %v3420, 4294901760
  %3422 = vmatpush1.msra.mxu0 %v3421
  %3423 = vmatprep.subr.mxu0 0.0
  %v3424 = vand.u32 %v2620, 4294901760
  %v3425 = vsub.f32 %v2620, %v3424
  %v3426 = vand.u32 %v3425, 4294901760
  %v3427 = vsub.f32 %v3425, %v3426
  %v3428 = vand.u32 %v3427, 4294901760
  %3429 = vmatpush1.msra.mxu0 %v3428
  %3430 = vmatprep.subr.mxu0 0.0
  %v3431 = vand.u32 %v2621, 4294901760
  %v3432 = vsub.f32 %v2621, %v3431
  %v3433 = vand.u32 %v3432, 4294901760
  %v3434 = vsub.f32 %v3432, %v3433
  %v3435 = vand.u32 %v3434, 4294901760
  %3436 = vmatpush1.msra.mxu0 %v3435
  %3437 = vmatprep.subr.mxu0 0.0
  %v3438 = vand.u32 %v2622, 4294901760
  %v3439 = vsub.f32 %v2622, %v3438
  %v3440 = vand.u32 %v3439, 4294901760
  %v3441 = vsub.f32 %v3439, %v3440
  %v3442 = vand.u32 %v3441, 4294901760
  %3443 = vmatpush1.msra.mxu0 %v3442
  %3444 = vmatprep.subr.mxu0 0.0
  %v3445 = vand.u32 %v2623, 4294901760
  %v3446 = vsub.f32 %v2623, %v3445
  %v3447 = vand.u32 %v3446, 4294901760
  %v3448 = vsub.f32 %v3446, %v3447
  %v3449 = vand.u32 %v3448, 4294901760
  %3450 = vmatpush1.msra.mxu0 %v3449
  %3451 = vmatprep.subr.mxu0 0.0
  %v3452 = vand.u32 %v2624, 4294901760
  %v3453 = vsub.f32 %v2624, %v3452
  %v3454 = vand.u32 %v3453, 4294901760
  %v3455 = vsub.f32 %v3453, %v3454
  %v3456 = vand.u32 %v3455, 4294901760
  %3457 = vmatpush1.msra.mxu0 %v3456
  %3458 = vmatprep.subr.mxu0 0.0
  %v3459 = vand.u32 %v2625, 4294901760
  %v3460 = vsub.f32 %v2625, %v3459
  %v3461 = vand.u32 %v3460, 4294901760
  %v3462 = vsub.f32 %v3460, %v3461
  %v3463 = vand.u32 %v3462, 4294901760
  %3464 = vmatpush1.msra.mxu0 %v3463
  %3465 = vmatprep.subr.mxu0 0.0
  %v3466 = vand.u32 %v2626, 4294901760
  %v3467 = vsub.f32 %v2626, %v3466
  %v3468 = vand.u32 %v3467, 4294901760
  %v3469 = vsub.f32 %v3467, %v3468
  %v3470 = vand.u32 %v3469, 4294901760
  %3471 = vmatpush1.msra.mxu0 %v3470
  %3472 = vmatprep.subr.mxu0 0.0
  %v3473 = vand.u32 %v2627, 4294901760
  %v3474 = vsub.f32 %v2627, %v3473
  %v3475 = vand.u32 %v3474, 4294901760
  %v3476 = vsub.f32 %v3474, %v3475
  %v3477 = vand.u32 %v3476, 4294901760
  %3478 = vmatpush1.msra.mxu0 %v3477
  %3479 = vmatprep.subr.mxu0 0.0
  %v3480 = vand.u32 %v2628, 4294901760
  %v3481 = vsub.f32 %v2628, %v3480
  %v3482 = vand.u32 %v3481, 4294901760
  %v3483 = vsub.f32 %v3481, %v3482
  %v3484 = vand.u32 %v3483, 4294901760
  %3485 = vmatpush1.msra.mxu0 %v3484
  %3486 = vmatprep.subr.mxu0 0.0
  %v3487 = vand.u32 %v2629, 4294901760
  %v3488 = vsub.f32 %v2629, %v3487
  %v3489 = vand.u32 %v3488, 4294901760
  %v3490 = vsub.f32 %v3488, %v3489
  %v3491 = vand.u32 %v3490, 4294901760
  %3492 = vmatpush1.msra.mxu0 %v3491
  %3493 = vmatprep.subr.mxu0 0.0
  %v3494 = vand.u32 %v2630, 4294901760
  %v3495 = vsub.f32 %v2630, %v3494
  %v3496 = vand.u32 %v3495, 4294901760
  %v3497 = vsub.f32 %v3495, %v3496
  %v3498 = vand.u32 %v3497, 4294901760
  %3499 = vmatpush1.msra.mxu0 %v3498
  %3500 = vmatprep.subr.mxu0 0.0
  %v3501 = vand.u32 %v2631, 4294901760
  %v3502 = vsub.f32 %v2631, %v3501
  %v3503 = vand.u32 %v3502, 4294901760
  %v3504 = vsub.f32 %v3502, %v3503
  %v3505 = vand.u32 %v3504, 4294901760
  %3506 = vmatpush1.msra.mxu0 %v3505
  %3507 = vmatprep.subr.mxu0 0.0
  %v3508 = vand.u32 %v2632, 4294901760
  %v3509 = vsub.f32 %v2632, %v3508
  %v3510 = vand.u32 %v3509, 4294901760
  %v3511 = vsub.f32 %v3509, %v3510
  %v3512 = vand.u32 %v3511, 4294901760
  %3513 = vmatpush1.msra.mxu0 %v3512
  %3514 = vmatprep.subr.mxu0 0.0
  %v3515 = vand.u32 %v2633, 4294901760
  %v3516 = vsub.f32 %v2633, %v3515
  %v3517 = vand.u32 %v3516, 4294901760
  %v3518 = vsub.f32 %v3516, %v3517
  %v3519 = vand.u32 %v3518, 4294901760
  %3520 = vmatpush1.msra.mxu0 %v3519
  %v3521 = vand.u32 %v2775, 4294901760
  %3522 = vmatprep.mubr.f32.mxu0 %v3521
  %v3523 = vand.u32 %v2743, 4294901760
  %3524 = vmatmul.mubr.f32.gmra.mrb[0].mxu0 %v3523
  %v3525 = vpop.f32.mrb[0].mxu0
  %v3526 = vadd.f32 %v3129, %v3525
  %v3527 = vpop.f32.mrb[0].mxu0
  %v3528 = vand.u32 %v2776, 4294901760
  %3529 = vmatprep.mubr.f32.mxu0 %v3528
  %v3530 = vand.u32 %v2744, 4294901760
  %3531 = vmatmul.mubr.f32.gmra.mrb[0].mxu0 %v3530
  %v3532 = vpop.f32.mrb[0].mxu0
  %v3533 = vadd.f32 %v3144, %v3532
  %v3534 = vpop.f32.mrb[0].mxu0
  %v3535 = vand.u32 %v2777, 4294901760
  %3536 = vmatprep.mubr.f32.mxu0 %v3535
  %v3537 = vand.u32 %v2745, 4294901760
  %3538 = vmatmul.mubr.f32.gmra.mrb[0].mxu0 %v3537
  %v3539 = vpop.f32.mrb[0].mxu0
  %v3540 = vadd.f32 %v3159, %v3539
  %v3541 = vpop.f32.mrb[0].mxu0
  %v3542 = vand.u32 %v2778, 4294901760
  %3543 = vmatprep.mubr.f32.mxu0 %v3542
  %v3544 = vand.u32 %v2746, 4294901760
  %3545 = vmatmul.mubr.f32.gmra.mrb[0].mxu0 %v3544
  %v3546 = vpop.f32.mrb[0].mxu0
  %v3547 = vadd.f32 %v3174, %v3546
  %v3548 = vpop.f32.mrb[0].mxu0
  %v3549 = vand.u32 %v2779, 4294901760
  %3550 = vmatprep.mubr.f32.mxu0 %v3549
  %v3551 = vand.u32 %v2747, 4294901760
  %3552 = vmatmul.mubr.f32.gmra.mrb[0].mxu0 %v3551
  %v3553 = vpop.f32.mrb[0].mxu0
  %v3554 = vadd.f32 %v3189, %v3553
  %v3555 = vpop.f32.mrb[0].mxu0
  %v3556 = vand.u32 %v2780, 4294901760
  %3557 = vmatprep.mubr.f32.mxu0 %v3556
  %v3558 = vand.u32 %v2748, 4294901760
  %3559 = vmatmul.mubr.f32.gmra.mrb[0].mxu0 %v3558
  %v3560 = vpop.f32.mrb[0].mxu0
  %v3561 = vadd.f32 %v3204, %v3560
  %v3562 = vpop.f32.mrb[0].mxu0
  %v3563 = vand.u32 %v2781, 4294901760
  %3564 = vmatprep.mubr.f32.mxu0 %v3563
  %v3565 = vand.u32 %v2749, 4294901760
  %3566 = vmatmul.mubr.f32.gmra.mrb[0].mxu0 %v3565
  %v3567 = vpop.f32.mrb[0].mxu0
  %v3568 = vadd.f32 %v3219, %v3567
  %v3569 = vpop.f32.mrb[0].mxu0
  %v3570 = vand.u32 %v2782, 4294901760
  %3571 = vmatprep.mubr.f32.mxu0 %v3570
  %v3572 = vand.u32 %v2750, 4294901760
  %3573 = vmatmul.mubr.f32.gmra.mrb[0].mxu0 %v3572
  %v3574 = vpop.f32.mrb[0].mxu0
  %v3575 = vadd.f32 %v3234, %v3574
  %v3576 = vpop.f32.mrb[0].mxu0
  %v3577 = vand.u32 %v2783, 4294901760
  %3578 = vmatprep.mubr.f32.mxu0 %v3577
  %v3579 = vand.u32 %v2751, 4294901760
  %3580 = vmatmul.mubr.f32.gmra.mrb[0].mxu0 %v3579
  %v3581 = vpop.f32.mrb[0].mxu0
  %v3582 = vadd.f32 %v3249, %v3581
  %v3583 = vpop.f32.mrb[0].mxu0
  %v3584 = vand.u32 %v2784, 4294901760
  %3585 = vmatprep.mubr.f32.mxu0 %v3584
  %v3586 = vand.u32 %v2752, 4294901760
  %3587 = vmatmul.mubr.f32.gmra.mrb[0].mxu0 %v3586
  %v3588 = vpop.f32.mrb[0].mxu0
  %v3589 = vadd.f32 %v3264, %v3588
  %v3590 = vpop.f32.mrb[0].mxu0
  %v3591 = vand.u32 %v2785, 4294901760
  %3592 = vmatprep.mubr.f32.mxu0 %v3591
  %v3593 = vand.u32 %v2753, 4294901760
  %3594 = vmatmul.mubr.f32.gmra.mrb[0].mxu0 %v3593
  %v3595 = vpop.f32.mrb[0].mxu0
  %v3596 = vadd.f32 %v3279, %v3595
  %v3597 = vpop.f32.mrb[0].mxu0
  %v3598 = vand.u32 %v2786, 4294901760
  %3599 = vmatprep.mubr.f32.mxu0 %v3598
  %v3600 = vand.u32 %v2754, 4294901760
  %3601 = vmatmul.mubr.f32.gmra.mrb[0].mxu0 %v3600
  %v3602 = vpop.f32.mrb[0].mxu0
  %v3603 = vadd.f32 %v3294, %v3602
  %v3604 = vpop.f32.mrb[0].mxu0
  %3605 = vdwg.mxu0
  %3606 = vmatprep.subr.mxu0 0.0
  %v3607 = vand.u32 %v2602, 4294901760
  %v3608 = vsub.f32 %v2602, %v3607
  %3609 = vmatpush1.msra.mxu0 %v3608
  %3610 = vmatprep.subr.mxu0 0.0
  %v3611 = vand.u32 %v2603, 4294901760
  %v3612 = vsub.f32 %v2603, %v3611
  %3613 = vmatpush1.msra.mxu0 %v3612
  %3614 = vmatprep.subr.mxu0 0.0
  %v3615 = vand.u32 %v2604, 4294901760
  %v3616 = vsub.f32 %v2604, %v3615
  %3617 = vmatpush1.msra.mxu0 %v3616
  %3618 = vmatprep.subr.mxu0 0.0
  %v3619 = vand.u32 %v2605, 4294901760
  %v3620 = vsub.f32 %v2605, %v3619
  %3621 = vmatpush1.msra.mxu0 %v3620
  %3622 = vmatprep.subr.mxu0 0.0
  %v3623 = vand.u32 %v2606, 4294901760
  %v3624 = vsub.f32 %v2606, %v3623
  %3625 = vmatpush1.msra.mxu0 %v3624
  %3626 = vmatprep.subr.mxu0 0.0
  %v3627 = vand.u32 %v2607, 4294901760
  %v3628 = vsub.f32 %v2607, %v3627
  %3629 = vmatpush1.msra.mxu0 %v3628
  %3630 = vmatprep.subr.mxu0 0.0
  %v3631 = vand.u32 %v2608, 4294901760
  %v3632 = vsub.f32 %v2608, %v3631
  %3633 = vmatpush1.msra.mxu0 %v3632
  %3634 = vmatprep.subr.mxu0 0.0
  %v3635 = vand.u32 %v2609, 4294901760
  %v3636 = vsub.f32 %v2609, %v3635
  %3637 = vmatpush1.msra.mxu0 %v3636
  %3638 = vmatprep.subr.mxu0 0.0
  %v3639 = vand.u32 %v2610, 4294901760
  %v3640 = vsub.f32 %v2610, %v3639
  %3641 = vmatpush1.msra.mxu0 %v3640
  %3642 = vmatprep.subr.mxu0 0.0
  %v3643 = vand.u32 %v2611, 4294901760
  %v3644 = vsub.f32 %v2611, %v3643
  %3645 = vmatpush1.msra.mxu0 %v3644
  %3646 = vmatprep.subr.mxu0 0.0
  %v3647 = vand.u32 %v2612, 4294901760
  %v3648 = vsub.f32 %v2612, %v3647
  %3649 = vmatpush1.msra.mxu0 %v3648
  %3650 = vmatprep.subr.mxu0 0.0
  %v3651 = vand.u32 %v2613, 4294901760
  %v3652 = vsub.f32 %v2613, %v3651
  %3653 = vmatpush1.msra.mxu0 %v3652
  %3654 = vmatprep.subr.mxu0 0.0
  %v3655 = vand.u32 %v2614, 4294901760
  %v3656 = vsub.f32 %v2614, %v3655
  %3657 = vmatpush1.msra.mxu0 %v3656
  %3658 = vmatprep.subr.mxu0 0.0
  %v3659 = vand.u32 %v2615, 4294901760
  %v3660 = vsub.f32 %v2615, %v3659
  %3661 = vmatpush1.msra.mxu0 %v3660
  %3662 = vmatprep.subr.mxu0 0.0
  %v3663 = vand.u32 %v2616, 4294901760
  %v3664 = vsub.f32 %v2616, %v3663
  %3665 = vmatpush1.msra.mxu0 %v3664
  %3666 = vmatprep.subr.mxu0 0.0
  %v3667 = vand.u32 %v2617, 4294901760
  %v3668 = vsub.f32 %v2617, %v3667
  %3669 = vmatpush1.msra.mxu0 %v3668
  %3670 = vmatprep.subr.mxu0 0.0
  %v3671 = vand.u32 %v2618, 4294901760
  %v3672 = vsub.f32 %v2618, %v3671
  %3673 = vmatpush1.msra.mxu0 %v3672
  %3674 = vmatprep.subr.mxu0 0.0
  %v3675 = vand.u32 %v2619, 4294901760
  %v3676 = vsub.f32 %v2619, %v3675
  %3677 = vmatpush1.msra.mxu0 %v3676
  %3678 = vmatprep.subr.mxu0 0.0
  %v3679 = vand.u32 %v2620, 4294901760
  %v3680 = vsub.f32 %v2620, %v3679
  %3681 = vmatpush1.msra.mxu0 %v3680
  %3682 = vmatprep.subr.mxu0 0.0
  %v3683 = vand.u32 %v2621, 4294901760
  %v3684 = vsub.f32 %v2621, %v3683
  %3685 = vmatpush1.msra.mxu0 %v3684
  %3686 = vmatprep.subr.mxu0 0.0
  %v3687 = vand.u32 %v2622, 4294901760
  %v3688 = vsub.f32 %v2622, %v3687
  %3689 = vmatpush1.msra.mxu0 %v3688
  %3690 = vmatprep.subr.mxu0 0.0
  %v3691 = vand.u32 %v2623, 4294901760
  %v3692 = vsub.f32 %v2623, %v3691
  %3693 = vmatpush1.msra.mxu0 %v3692
  %3694 = vmatprep.subr.mxu0 0.0
  %v3695 = vand.u32 %v2624, 4294901760
  %v3696 = vsub.f32 %v2624, %v3695
  %3697 = vmatpush1.msra.mxu0 %v3696
  %3698 = vmatprep.subr.mxu0 0.0
  %v3699 = vand.u32 %v2625, 4294901760
  %v3700 = vsub.f32 %v2625, %v3699
  %3701 = vmatpush1.msra.mxu0 %v3700
  %3702 = vmatprep.subr.mxu0 0.0
  %v3703 = vand.u32 %v2626, 4294901760
  %v3704 = vsub.f32 %v2626, %v3703
  %3705 = vmatpush1.msra.mxu0 %v3704
  %3706 = vmatprep.subr.mxu0 0.0
  %v3707 = vand.u32 %v2627, 4294901760
  %v3708 = vsub.f32 %v2627, %v3707
  %3709 = vmatpush1.msra.mxu0 %v3708
  %3710 = vmatprep.subr.mxu0 0.0
  %v3711 = vand.u32 %v2628, 4294901760
  %v3712 = vsub.f32 %v2628, %v3711
  %3713 = vmatpush1.msra.mxu0 %v3712
  %3714 = vmatprep.subr.mxu0 0.0
  %v3715 = vand.u32 %v2629, 4294901760
  %v3716 = vsub.f32 %v2629, %v3715
  %3717 = vmatpush1.msra.mxu0 %v3716
  %3718 = vmatprep.subr.mxu0 0.0
  %v3719 = vand.u32 %v2630, 4294901760
  %v3720 = vsub.f32 %v2630, %v3719
  %3721 = vmatpush1.msra.mxu0 %v3720
  %3722 = vmatprep.subr.mxu0 0.0
  %v3723 = vand.u32 %v2631, 4294901760
  %v3724 = vsub.f32 %v2631, %v3723
  %3725 = vmatpush1.msra.mxu0 %v3724
  %3726 = vmatprep.subr.mxu0 0.0
  %v3727 = vand.u32 %v2632, 4294901760
  %v3728 = vsub.f32 %v2632, %v3727
  %3729 = vmatpush1.msra.mxu0 %v3728
  %3730 = vmatprep.subr.mxu0 0.0
  %v3731 = vand.u32 %v2633, 4294901760
  %v3732 = vsub.f32 %v2633, %v3731
  %3733 = vmatpush1.msra.mxu0 %v3732
  %v3734 = vand.u32 %v2775, 4294901760
  %v3735 = vsub.f32 %v2775, %v3734
  %3736 = vmatprep.mubr.f32.mxu0 %v3735
  %v3737 = vand.u32 %v2743, 4294901760
  %v3738 = vsub.f32 %v2743, %v3737
  %3739 = vmatmul.mubr.f32.gmra.mrb[0].mxu0 %v3738
  %v3740 = vpop.f32.mrb[0].mxu0
  %v3741 = vadd.f32 %v3526, %v3740
  %v3742 = vpop.f32.mrb[0].mxu0
  %v3743 = vand.u32 %v2776, 4294901760
  %v3744 = vsub.f32 %v2776, %v3743
  %3745 = vmatprep.mubr.f32.mxu0 %v3744
  %v3746 = vand.u32 %v2744, 4294901760
  %v3747 = vsub.f32 %v2744, %v3746
  %3748 = vmatmul.mubr.f32.gmra.mrb[0].mxu0 %v3747
  %v3749 = vpop.f32.mrb[0].mxu0
  %v3750 = vadd.f32 %v3533, %v3749
  %v3751 = vpop.f32.mrb[0].mxu0
  %v3752 = vand.u32 %v2777, 4294901760
  %v3753 = vsub.f32 %v2777, %v3752
  %3754 = vmatprep.mubr.f32.mxu0 %v3753
  %v3755 = vand.u32 %v2745, 4294901760
  %v3756 = vsub.f32 %v2745, %v3755
  %3757 = vmatmul.mubr.f32.gmra.mrb[0].mxu0 %v3756
  %v3758 = vpop.f32.mrb[0].mxu0
  %v3759 = vadd.f32 %v3540, %v3758
  %v3760 = vpop.f32.mrb[0].mxu0
  %v3761 = vand.u32 %v2778, 4294901760
  %v3762 = vsub.f32 %v2778, %v3761
  %3763 = vmatprep.mubr.f32.mxu0 %v3762
  %v3764 = vand.u32 %v2746, 4294901760
  %v3765 = vsub.f32 %v2746, %v3764
  %3766 = vmatmul.mubr.f32.gmra.mrb[0].mxu0 %v3765
  %v3767 = vpop.f32.mrb[0].mxu0
  %v3768 = vadd.f32 %v3547, %v3767
  %v3769 = vpop.f32.mrb[0].mxu0
  %v3770 = vand.u32 %v2779, 4294901760
  %v3771 = vsub.f32 %v2779, %v3770
  %3772 = vmatprep.mubr.f32.mxu0 %v3771
  %v3773 = vand.u32 %v2747, 4294901760
  %v3774 = vsub.f32 %v2747, %v3773
  %3775 = vmatmul.mubr.f32.gmra.mrb[0].mxu0 %v3774
  %v3776 = vpop.f32.mrb[0].mxu0
  %v3777 = vadd.f32 %v3554, %v3776
  %v3778 = vpop.f32.mrb[0].mxu0
  %v3779 = vand.u32 %v2780, 4294901760
  %v3780 = vsub.f32 %v2780, %v3779
  %3781 = vmatprep.mubr.f32.mxu0 %v3780
  %v3782 = vand.u32 %v2748, 4294901760
  %v3783 = vsub.f32 %v2748, %v3782
  %3784 = vmatmul.mubr.f32.gmra.mrb[0].mxu0 %v3783
  %v3785 = vpop.f32.mrb[0].mxu0
  %v3786 = vadd.f32 %v3561, %v3785
  %v3787 = vpop.f32.mrb[0].mxu0
  %v3788 = vand.u32 %v2781, 4294901760
  %v3789 = vsub.f32 %v2781, %v3788
  %3790 = vmatprep.mubr.f32.mxu0 %v3789
  %v3791 = vand.u32 %v2749, 4294901760
  %v3792 = vsub.f32 %v2749, %v3791
  %3793 = vmatmul.mubr.f32.gmra.mrb[0].mxu0 %v3792
  %v3794 = vpop.f32.mrb[0].mxu0
  %v3795 = vadd.f32 %v3568, %v3794
  %v3796 = vpop.f32.mrb[0].mxu0
  %v3797 = vand.u32 %v2782, 4294901760
  %v3798 = vsub.f32 %v2782, %v3797
  %3799 = vmatprep.mubr.f32.mxu0 %v3798
  %v3800 = vand.u32 %v2750, 4294901760
  %v3801 = vsub.f32 %v2750, %v3800
  %3802 = vmatmul.mubr.f32.gmra.mrb[0].mxu0 %v3801
  %v3803 = vpop.f32.mrb[0].mxu0
  %v3804 = vadd.f32 %v3575, %v3803
  %v3805 = vpop.f32.mrb[0].mxu0
  %v3806 = vand.u32 %v2783, 4294901760
  %v3807 = vsub.f32 %v2783, %v3806
  %3808 = vmatprep.mubr.f32.mxu0 %v3807
  %v3809 = vand.u32 %v2751, 4294901760
  %v3810 = vsub.f32 %v2751, %v3809
  %3811 = vmatmul.mubr.f32.gmra.mrb[0].mxu0 %v3810
  %v3812 = vpop.f32.mrb[0].mxu0
  %v3813 = vadd.f32 %v3582, %v3812
  %v3814 = vpop.f32.mrb[0].mxu0
  %v3815 = vand.u32 %v2784, 4294901760
  %v3816 = vsub.f32 %v2784, %v3815
  %3817 = vmatprep.mubr.f32.mxu0 %v3816
  %v3818 = vand.u32 %v2752, 4294901760
  %v3819 = vsub.f32 %v2752, %v3818
  %3820 = vmatmul.mubr.f32.gmra.mrb[0].mxu0 %v3819
  %v3821 = vpop.f32.mrb[0].mxu0
  %v3822 = vadd.f32 %v3589, %v3821
  %v3823 = vpop.f32.mrb[0].mxu0
  %v3824 = vand.u32 %v2785, 4294901760
  %v3825 = vsub.f32 %v2785, %v3824
  %3826 = vmatprep.mubr.f32.mxu0 %v3825
  %v3827 = vand.u32 %v2753, 4294901760
  %v3828 = vsub.f32 %v2753, %v3827
  %3829 = vmatmul.mubr.f32.gmra.mrb[0].mxu0 %v3828
  %v3830 = vpop.f32.mrb[0].mxu0
  %v3831 = vadd.f32 %v3596, %v3830
  %v3832 = vpop.f32.mrb[0].mxu0
  %v3833 = vand.u32 %v2786, 4294901760
  %v3834 = vsub.f32 %v2786, %v3833
  %3835 = vmatprep.mubr.f32.mxu0 %v3834
  %v3836 = vand.u32 %v2754, 4294901760
  %v3837 = vsub.f32 %v2754, %v3836
  %3838 = vmatmul.mubr.f32.gmra.mrb[0].mxu0 %v3837
  %v3839 = vpop.f32.mrb[0].mxu0
  %v3840 = vadd.f32 %v3603, %v3839
  %v3841 = vpop.f32.mrb[0].mxu0
  %3842 = vdwg.mxu0
  %3843 = vmatprep.subr.mxu0 0.0
  %v3844 = vand.u32 %v2602, 4294901760
  %3845 = vmatpush1.msra.mxu0 %v3844
  %3846 = vmatprep.subr.mxu0 0.0
  %v3847 = vand.u32 %v2603, 4294901760
  %3848 = vmatpush1.msra.mxu0 %v3847
  %3849 = vmatprep.subr.mxu0 0.0
  %v3850 = vand.u32 %v2604, 4294901760
  %3851 = vmatpush1.msra.mxu0 %v3850
  %3852 = vmatprep.subr.mxu0 0.0
  %v3853 = vand.u32 %v2605, 4294901760
  %3854 = vmatpush1.msra.mxu0 %v3853
  %3855 = vmatprep.subr.mxu0 0.0
  %v3856 = vand.u32 %v2606, 4294901760
  %3857 = vmatpush1.msra.mxu0 %v3856
  %3858 = vmatprep.subr.mxu0 0.0
  %v3859 = vand.u32 %v2607, 4294901760
  %3860 = vmatpush1.msra.mxu0 %v3859
  %3861 = vmatprep.subr.mxu0 0.0
  %v3862 = vand.u32 %v2608, 4294901760
  %3863 = vmatpush1.msra.mxu0 %v3862
  %3864 = vmatprep.subr.mxu0 0.0
  %v3865 = vand.u32 %v2609, 4294901760
  %3866 = vmatpush1.msra.mxu0 %v3865
  %3867 = vmatprep.subr.mxu0 0.0
  %v3868 = vand.u32 %v2610, 4294901760
  %3869 = vmatpush1.msra.mxu0 %v3868
  %3870 = vmatprep.subr.mxu0 0.0
  %v3871 = vand.u32 %v2611, 4294901760
  %3872 = vmatpush1.msra.mxu0 %v3871
  %3873 = vmatprep.subr.mxu0 0.0
  %v3874 = vand.u32 %v2612, 4294901760
  %3875 = vmatpush1.msra.mxu0 %v3874
  %3876 = vmatprep.subr.mxu0 0.0
  %v3877 = vand.u32 %v2613, 4294901760
  %3878 = vmatpush1.msra.mxu0 %v3877
  %3879 = vmatprep.subr.mxu0 0.0
  %v3880 = vand.u32 %v2614, 4294901760
  %3881 = vmatpush1.msra.mxu0 %v3880
  %3882 = vmatprep.subr.mxu0 0.0
  %v3883 = vand.u32 %v2615, 4294901760
  %3884 = vmatpush1.msra.mxu0 %v3883
  %3885 = vmatprep.subr.mxu0 0.0
  %v3886 = vand.u32 %v2616, 4294901760
  %3887 = vmatpush1.msra.mxu0 %v3886
  %3888 = vmatprep.subr.mxu0 0.0
  %v3889 = vand.u32 %v2617, 4294901760
  %3890 = vmatpush1.msra.mxu0 %v3889
  %3891 = vmatprep.subr.mxu0 0.0
  %v3892 = vand.u32 %v2618, 4294901760
  %3893 = vmatpush1.msra.mxu0 %v3892
  %3894 = vmatprep.subr.mxu0 0.0
  %v3895 = vand.u32 %v2619, 4294901760
  %3896 = vmatpush1.msra.mxu0 %v3895
  %3897 = vmatprep.subr.mxu0 0.0
  %v3898 = vand.u32 %v2620, 4294901760
  %3899 = vmatpush1.msra.mxu0 %v3898
  %3900 = vmatprep.subr.mxu0 0.0
  %v3901 = vand.u32 %v2621, 4294901760
  %3902 = vmatpush1.msra.mxu0 %v3901
  %3903 = vmatprep.subr.mxu0 0.0
  %v3904 = vand.u32 %v2622, 4294901760
  %3905 = vmatpush1.msra.mxu0 %v3904
  %3906 = vmatprep.subr.mxu0 0.0
  %v3907 = vand.u32 %v2623, 4294901760
  %3908 = vmatpush1.msra.mxu0 %v3907
  %3909 = vmatprep.subr.mxu0 0.0
  %v3910 = vand.u32 %v2624, 4294901760
  %3911 = vmatpush1.msra.mxu0 %v3910
  %3912 = vmatprep.subr.mxu0 0.0
  %v3913 = vand.u32 %v2625, 4294901760
  %3914 = vmatpush1.msra.mxu0 %v3913
  %3915 = vmatprep.subr.mxu0 0.0
  %v3916 = vand.u32 %v2626, 4294901760
  %3917 = vmatpush1.msra.mxu0 %v3916
  %3918 = vmatprep.subr.mxu0 0.0
  %v3919 = vand.u32 %v2627, 4294901760
  %3920 = vmatpush1.msra.mxu0 %v3919
  %3921 = vmatprep.subr.mxu0 0.0
  %v3922 = vand.u32 %v2628, 4294901760
  %3923 = vmatpush1.msra.mxu0 %v3922
  %3924 = vmatprep.subr.mxu0 0.0
  %v3925 = vand.u32 %v2629, 4294901760
  %3926 = vmatpush1.msra.mxu0 %v3925
  %3927 = vmatprep.subr.mxu0 0.0
  %v3928 = vand.u32 %v2630, 4294901760
  %3929 = vmatpush1.msra.mxu0 %v3928
  %3930 = vmatprep.subr.mxu0 0.0
  %v3931 = vand.u32 %v2631, 4294901760
  %3932 = vmatpush1.msra.mxu0 %v3931
  %3933 = vmatprep.subr.mxu0 0.0
  %v3934 = vand.u32 %v2632, 4294901760
  %3935 = vmatpush1.msra.mxu0 %v3934
  %3936 = vmatprep.subr.mxu0 0.0
  %v3937 = vand.u32 %v2633, 4294901760
  %3938 = vmatpush1.msra.mxu0 %v3937
  %v3939 = vand.u32 %v2775, 4294901760
  %v3940 = vsub.f32 %v2775, %v3939
  %v3941 = vand.u32 %v3940, 4294901760
  %3942 = vmatprep.mubr.f32.mxu0 %v3941
  %v3943 = vand.u32 %v2743, 4294901760
  %v3944 = vsub.f32 %v2743, %v3943
  %v3945 = vand.u32 %v3944, 4294901760
  %3946 = vmatmul.mubr.f32.gmra.mrb[0].mxu0 %v3945
  %v3947 = vpop.f32.mrb[0].mxu0
  %v3948 = vadd.f32 %v3741, %v3947
  %v3949 = vpop.f32.mrb[0].mxu0
  %v3950 = vand.u32 %v2776, 4294901760
  %v3951 = vsub.f32 %v2776, %v3950
  %v3952 = vand.u32 %v3951, 4294901760
  %3953 = vmatprep.mubr.f32.mxu0 %v3952
  %v3954 = vand.u32 %v2744, 4294901760
  %v3955 = vsub.f32 %v2744, %v3954
  %v3956 = vand.u32 %v3955, 4294901760
  %3957 = vmatmul.mubr.f32.gmra.mrb[0].mxu0 %v3956
  %v3958 = vpop.f32.mrb[0].mxu0
  %v3959 = vadd.f32 %v3750, %v3958
  %v3960 = vpop.f32.mrb[0].mxu0
  %v3961 = vand.u32 %v2777, 4294901760
  %v3962 = vsub.f32 %v2777, %v3961
  %v3963 = vand.u32 %v3962, 4294901760
  %3964 = vmatprep.mubr.f32.mxu0 %v3963
  %v3965 = vand.u32 %v2745, 4294901760
  %v3966 = vsub.f32 %v2745, %v3965
  %v3967 = vand.u32 %v3966, 4294901760
  %3968 = vmatmul.mubr.f32.gmra.mrb[0].mxu0 %v3967
  %v3969 = vpop.f32.mrb[0].mxu0
  %v3970 = vadd.f32 %v3759, %v3969
  %v3971 = vpop.f32.mrb[0].mxu0
  %v3972 = vand.u32 %v2778, 4294901760
  %v3973 = vsub.f32 %v2778, %v3972
  %v3974 = vand.u32 %v3973, 4294901760
  %3975 = vmatprep.mubr.f32.mxu0 %v3974
  %v3976 = vand.u32 %v2746, 4294901760
  %v3977 = vsub.f32 %v2746, %v3976
  %v3978 = vand.u32 %v3977, 4294901760
  %3979 = vmatmul.mubr.f32.gmra.mrb[0].mxu0 %v3978
  %v3980 = vpop.f32.mrb[0].mxu0
  %v3981 = vadd.f32 %v3768, %v3980
  %v3982 = vpop.f32.mrb[0].mxu0
  %v3983 = vand.u32 %v2779, 4294901760
  %v3984 = vsub.f32 %v2779, %v3983
  %v3985 = vand.u32 %v3984, 4294901760
  %3986 = vmatprep.mubr.f32.mxu0 %v3985
  %v3987 = vand.u32 %v2747, 4294901760
  %v3988 = vsub.f32 %v2747, %v3987
  %v3989 = vand.u32 %v3988, 4294901760
  %3990 = vmatmul.mubr.f32.gmra.mrb[0].mxu0 %v3989
  %v3991 = vpop.f32.mrb[0].mxu0
  %v3992 = vadd.f32 %v3777, %v3991
  %v3993 = vpop.f32.mrb[0].mxu0
  %v3994 = vand.u32 %v2780, 4294901760
  %v3995 = vsub.f32 %v2780, %v3994
  %v3996 = vand.u32 %v3995, 4294901760
  %3997 = vmatprep.mubr.f32.mxu0 %v3996
  %v3998 = vand.u32 %v2748, 4294901760
  %v3999 = vsub.f32 %v2748, %v3998
  %v4000 = vand.u32 %v3999, 4294901760
  %4001 = vmatmul.mubr.f32.gmra.mrb[0].mxu0 %v4000
  %v4002 = vpop.f32.mrb[0].mxu0
  %v4003 = vadd.f32 %v3786, %v4002
  %v4004 = vpop.f32.mrb[0].mxu0
  %v4005 = vand.u32 %v2781, 4294901760
  %v4006 = vsub.f32 %v2781, %v4005
  %v4007 = vand.u32 %v4006, 4294901760
  %4008 = vmatprep.mubr.f32.mxu0 %v4007
  %v4009 = vand.u32 %v2749, 4294901760
  %v4010 = vsub.f32 %v2749, %v4009
  %v4011 = vand.u32 %v4010, 4294901760
  %4012 = vmatmul.mubr.f32.gmra.mrb[0].mxu0 %v4011
  %v4013 = vpop.f32.mrb[0].mxu0
  %v4014 = vadd.f32 %v3795, %v4013
  %v4015 = vpop.f32.mrb[0].mxu0
  %v4016 = vand.u32 %v2782, 4294901760
  %v4017 = vsub.f32 %v2782, %v4016
  %v4018 = vand.u32 %v4017, 4294901760
  %4019 = vmatprep.mubr.f32.mxu0 %v4018
  %v4020 = vand.u32 %v2750, 4294901760
  %v4021 = vsub.f32 %v2750, %v4020
  %v4022 = vand.u32 %v4021, 4294901760
  %4023 = vmatmul.mubr.f32.gmra.mrb[0].mxu0 %v4022
  %v4024 = vpop.f32.mrb[0].mxu0
  %v4025 = vadd.f32 %v3804, %v4024
  %v4026 = vpop.f32.mrb[0].mxu0
  %v4027 = vand.u32 %v2783, 4294901760
  %v4028 = vsub.f32 %v2783, %v4027
  %v4029 = vand.u32 %v4028, 4294901760
  %4030 = vmatprep.mubr.f32.mxu0 %v4029
  %v4031 = vand.u32 %v2751, 4294901760
  %v4032 = vsub.f32 %v2751, %v4031
  %v4033 = vand.u32 %v4032, 4294901760
  %4034 = vmatmul.mubr.f32.gmra.mrb[0].mxu0 %v4033
  %v4035 = vpop.f32.mrb[0].mxu0
  %v4036 = vadd.f32 %v3813, %v4035
  %v4037 = vpop.f32.mrb[0].mxu0
  %v4038 = vand.u32 %v2784, 4294901760
  %v4039 = vsub.f32 %v2784, %v4038
  %v4040 = vand.u32 %v4039, 4294901760
  %4041 = vmatprep.mubr.f32.mxu0 %v4040
  %v4042 = vand.u32 %v2752, 4294901760
  %v4043 = vsub.f32 %v2752, %v4042
  %v4044 = vand.u32 %v4043, 4294901760
  %4045 = vmatmul.mubr.f32.gmra.mrb[0].mxu0 %v4044
  %v4046 = vpop.f32.mrb[0].mxu0
  %v4047 = vadd.f32 %v3822, %v4046
  %v4048 = vpop.f32.mrb[0].mxu0
  %v4049 = vand.u32 %v2785, 4294901760
  %v4050 = vsub.f32 %v2785, %v4049
  %v4051 = vand.u32 %v4050, 4294901760
  %4052 = vmatprep.mubr.f32.mxu0 %v4051
  %v4053 = vand.u32 %v2753, 4294901760
  %v4054 = vsub.f32 %v2753, %v4053
  %v4055 = vand.u32 %v4054, 4294901760
  %4056 = vmatmul.mubr.f32.gmra.mrb[0].mxu0 %v4055
  %v4057 = vpop.f32.mrb[0].mxu0
  %v4058 = vadd.f32 %v3831, %v4057
  %v4059 = vpop.f32.mrb[0].mxu0
  %v4060 = vand.u32 %v2786, 4294901760
  %v4061 = vsub.f32 %v2786, %v4060
  %v4062 = vand.u32 %v4061, 4294901760
  %4063 = vmatprep.mubr.f32.mxu0 %v4062
  %v4064 = vand.u32 %v2754, 4294901760
  %v4065 = vsub.f32 %v2754, %v4064
  %v4066 = vand.u32 %v4065, 4294901760
  %4067 = vmatmul.mubr.f32.gmra.mrb[0].mxu0 %v4066
  %v4068 = vpop.f32.mrb[0].mxu0
  %v4069 = vadd.f32 %v3840, %v4068
  %v4070 = vpop.f32.mrb[0].mxu0
  %4071 = vdwg.mxu0
  %4072 = vmatprep.subr.mxu0 0.0
  %v4073 = vand.u32 %v2602, 4294901760
  %v4074 = vsub.f32 %v2602, %v4073
  %v4075 = vand.u32 %v4074, 4294901760
  %4076 = vmatpush1.msra.mxu0 %v4075
  %4077 = vmatprep.subr.mxu0 0.0
  %v4078 = vand.u32 %v2603, 4294901760
  %v4079 = vsub.f32 %v2603, %v4078
  %v4080 = vand.u32 %v4079, 4294901760
  %4081 = vmatpush1.msra.mxu0 %v4080
  %4082 = vmatprep.subr.mxu0 0.0
  %v4083 = vand.u32 %v2604, 4294901760
  %v4084 = vsub.f32 %v2604, %v4083
  %v4085 = vand.u32 %v4084, 4294901760
  %4086 = vmatpush1.msra.mxu0 %v4085
  %4087 = vmatprep.subr.mxu0 0.0
  %v4088 = vand.u32 %v2605, 4294901760
  %v4089 = vsub.f32 %v2605, %v4088
  %v4090 = vand.u32 %v4089, 4294901760
  %4091 = vmatpush1.msra.mxu0 %v4090
  %4092 = vmatprep.subr.mxu0 0.0
  %v4093 = vand.u32 %v2606, 4294901760
  %v4094 = vsub.f32 %v2606, %v4093
  %v4095 = vand.u32 %v4094, 4294901760
  %4096 = vmatpush1.msra.mxu0 %v4095
  %4097 = vmatprep.subr.mxu0 0.0
  %v4098 = vand.u32 %v2607, 4294901760
  %v4099 = vsub.f32 %v2607, %v4098
  %v4100 = vand.u32 %v4099, 4294901760
  %4101 = vmatpush1.msra.mxu0 %v4100
  %4102 = vmatprep.subr.mxu0 0.0
  %v4103 = vand.u32 %v2608, 4294901760
  %v4104 = vsub.f32 %v2608, %v4103
  %v4105 = vand.u32 %v4104, 4294901760
  %4106 = vmatpush1.msra.mxu0 %v4105
  %4107 = vmatprep.subr.mxu0 0.0
  %v4108 = vand.u32 %v2609, 4294901760
  %v4109 = vsub.f32 %v2609, %v4108
  %v4110 = vand.u32 %v4109, 4294901760
  %4111 = vmatpush1.msra.mxu0 %v4110
  %4112 = vmatprep.subr.mxu0 0.0
  %v4113 = vand.u32 %v2610, 4294901760
  %v4114 = vsub.f32 %v2610, %v4113
  %v4115 = vand.u32 %v4114, 4294901760
  %4116 = vmatpush1.msra.mxu0 %v4115
  %4117 = vmatprep.subr.mxu0 0.0
  %v4118 = vand.u32 %v2611, 4294901760
  %v4119 = vsub.f32 %v2611, %v4118
  %v4120 = vand.u32 %v4119, 4294901760
  %4121 = vmatpush1.msra.mxu0 %v4120
  %4122 = vmatprep.subr.mxu0 0.0
  %v4123 = vand.u32 %v2612, 4294901760
  %v4124 = vsub.f32 %v2612, %v4123
  %v4125 = vand.u32 %v4124, 4294901760
  %4126 = vmatpush1.msra.mxu0 %v4125
  %4127 = vmatprep.subr.mxu0 0.0
  %v4128 = vand.u32 %v2613, 4294901760
  %v4129 = vsub.f32 %v2613, %v4128
  %v4130 = vand.u32 %v4129, 4294901760
  %4131 = vmatpush1.msra.mxu0 %v4130
  %4132 = vmatprep.subr.mxu0 0.0
  %v4133 = vand.u32 %v2614, 4294901760
  %v4134 = vsub.f32 %v2614, %v4133
  %v4135 = vand.u32 %v4134, 4294901760
  %4136 = vmatpush1.msra.mxu0 %v4135
  %4137 = vmatprep.subr.mxu0 0.0
  %v4138 = vand.u32 %v2615, 4294901760
  %v4139 = vsub.f32 %v2615, %v4138
  %v4140 = vand.u32 %v4139, 4294901760
  %4141 = vmatpush1.msra.mxu0 %v4140
  %4142 = vmatprep.subr.mxu0 0.0
  %v4143 = vand.u32 %v2616, 4294901760
  %v4144 = vsub.f32 %v2616, %v4143
  %v4145 = vand.u32 %v4144, 4294901760
  %4146 = vmatpush1.msra.mxu0 %v4145
  %4147 = vmatprep.subr.mxu0 0.0
  %v4148 = vand.u32 %v2617, 4294901760
  %v4149 = vsub.f32 %v2617, %v4148
  %v4150 = vand.u32 %v4149, 4294901760
  %4151 = vmatpush1.msra.mxu0 %v4150
  %4152 = vmatprep.subr.mxu0 0.0
  %v4153 = vand.u32 %v2618, 4294901760
  %v4154 = vsub.f32 %v2618, %v4153
  %v4155 = vand.u32 %v4154, 4294901760
  %4156 = vmatpush1.msra.mxu0 %v4155
  %4157 = vmatprep.subr.mxu0 0.0
  %v4158 = vand.u32 %v2619, 4294901760
  %v4159 = vsub.f32 %v2619, %v4158
  %v4160 = vand.u32 %v4159, 4294901760
  %4161 = vmatpush1.msra.mxu0 %v4160
  %4162 = vmatprep.subr.mxu0 0.0
  %v4163 = vand.u32 %v2620, 4294901760
  %v4164 = vsub.f32 %v2620, %v4163
  %v4165 = vand.u32 %v4164, 4294901760
  %4166 = vmatpush1.msra.mxu0 %v4165
  %4167 = vmatprep.subr.mxu0 0.0
  %v4168 = vand.u32 %v2621, 4294901760
  %v4169 = vsub.f32 %v2621, %v4168
  %v4170 = vand.u32 %v4169, 4294901760
  %4171 = vmatpush1.msra.mxu0 %v4170
  %4172 = vmatprep.subr.mxu0 0.0
  %v4173 = vand.u32 %v2622, 4294901760
  %v4174 = vsub.f32 %v2622, %v4173
  %v4175 = vand.u32 %v4174, 4294901760
  %4176 = vmatpush1.msra.mxu0 %v4175
  %4177 = vmatprep.subr.mxu0 0.0
  %v4178 = vand.u32 %v2623, 4294901760
  %v4179 = vsub.f32 %v2623, %v4178
  %v4180 = vand.u32 %v4179, 4294901760
  %4181 = vmatpush1.msra.mxu0 %v4180
  %4182 = vmatprep.subr.mxu0 0.0
  %v4183 = vand.u32 %v2624, 4294901760
  %v4184 = vsub.f32 %v2624, %v4183
  %v4185 = vand.u32 %v4184, 4294901760
  %4186 = vmatpush1.msra.mxu0 %v4185
  %4187 = vmatprep.subr.mxu0 0.0
  %v4188 = vand.u32 %v2625, 4294901760
  %v4189 = vsub.f32 %v2625, %v4188
  %v4190 = vand.u32 %v4189, 4294901760
  %4191 = vmatpush1.msra.mxu0 %v4190
  %4192 = vmatprep.subr.mxu0 0.0
  %v4193 = vand.u32 %v2626, 4294901760
  %v4194 = vsub.f32 %v2626, %v4193
  %v4195 = vand.u32 %v4194, 4294901760
  %4196 = vmatpush1.msra.mxu0 %v4195
  %4197 = vmatprep.subr.mxu0 0.0
  %v4198 = vand.u32 %v2627, 4294901760
  %v4199 = vsub.f32 %v2627, %v4198
  %v4200 = vand.u32 %v4199, 4294901760
  %4201 = vmatpush1.msra.mxu0 %v4200
  %4202 = vmatprep.subr.mxu0 0.0
  %v4203 = vand.u32 %v2628, 4294901760
  %v4204 = vsub.f32 %v2628, %v4203
  %v4205 = vand.u32 %v4204, 4294901760
  %4206 = vmatpush1.msra.mxu0 %v4205
  %4207 = vmatprep.subr.mxu0 0.0
  %v4208 = vand.u32 %v2629, 4294901760
  %v4209 = vsub.f32 %v2629, %v4208
  %v4210 = vand.u32 %v4209, 4294901760
  %4211 = vmatpush1.msra.mxu0 %v4210
  %4212 = vmatprep.subr.mxu0 0.0
  %v4213 = vand.u32 %v2630, 4294901760
  %v4214 = vsub.f32 %v2630, %v4213
  %v4215 = vand.u32 %v4214, 4294901760
  %4216 = vmatpush1.msra.mxu0 %v4215
  %4217 = vmatprep.subr.mxu0 0.0
  %v4218 = vand.u32 %v2631, 4294901760
  %v4219 = vsub.f32 %v2631, %v4218
  %v4220 = vand.u32 %v4219, 4294901760
  %4221 = vmatpush1.msra.mxu0 %v4220
  %4222 = vmatprep.subr.mxu0 0.0
  %v4223 = vand.u32 %v2632, 4294901760
  %v4224 = vsub.f32 %v2632, %v4223
  %v4225 = vand.u32 %v4224, 4294901760
  %4226 = vmatpush1.msra.mxu0 %v4225
  %4227 = vmatprep.subr.mxu0 0.0
  %v4228 = vand.u32 %v2633, 4294901760
  %v4229 = vsub.f32 %v2633, %v4228
  %v4230 = vand.u32 %v4229, 4294901760
  %4231 = vmatpush1.msra.mxu0 %v4230
  %v4232 = vand.u32 %v2775, 4294901760
  %4233 = vmatprep.mubr.f32.mxu0 %v4232
  %v4234 = vand.u32 %v2743, 4294901760
  %4235 = vmatmul.mubr.f32.gmra.mrb[0].mxu0 %v4234
  %v4236 = vpop.f32.mrb[0].mxu0
  %v4237 = vadd.f32 %v3948, %v4236
  %v4238 = vpop.f32.mrb[0].mxu0
  %v4239 = vand.u32 %v2776, 4294901760
  %4240 = vmatprep.mubr.f32.mxu0 %v4239
  %v4241 = vand.u32 %v2744, 4294901760
  %4242 = vmatmul.mubr.f32.gmra.mrb[0].mxu0 %v4241
  %v4243 = vpop.f32.mrb[0].mxu0
  %v4244 = vadd.f32 %v3959, %v4243
  %v4245 = vpop.f32.mrb[0].mxu0
  %v4246 = vand.u32 %v2777, 4294901760
  %4247 = vmatprep.mubr.f32.mxu0 %v4246
  %v4248 = vand.u32 %v2745, 4294901760
  %4249 = vmatmul.mubr.f32.gmra.mrb[0].mxu0 %v4248
  %v4250 = vpop.f32.mrb[0].mxu0
  %v4251 = vadd.f32 %v3970, %v4250
  %v4252 = vpop.f32.mrb[0].mxu0
  %v4253 = vand.u32 %v2778, 4294901760
  %4254 = vmatprep.mubr.f32.mxu0 %v4253
  %v4255 = vand.u32 %v2746, 4294901760
  %4256 = vmatmul.mubr.f32.gmra.mrb[0].mxu0 %v4255
  %v4257 = vpop.f32.mrb[0].mxu0
  %v4258 = vadd.f32 %v3981, %v4257
  %v4259 = vpop.f32.mrb[0].mxu0
  %v4260 = vand.u32 %v2779, 4294901760
  %4261 = vmatprep.mubr.f32.mxu0 %v4260
  %v4262 = vand.u32 %v2747, 4294901760
  %4263 = vmatmul.mubr.f32.gmra.mrb[0].mxu0 %v4262
  %v4264 = vpop.f32.mrb[0].mxu0
  %v4265 = vadd.f32 %v3992, %v4264
  %v4266 = vpop.f32.mrb[0].mxu0
  %v4267 = vand.u32 %v2780, 4294901760
  %4268 = vmatprep.mubr.f32.mxu0 %v4267
  %v4269 = vand.u32 %v2748, 4294901760
  %4270 = vmatmul.mubr.f32.gmra.mrb[0].mxu0 %v4269
  %v4271 = vpop.f32.mrb[0].mxu0
  %v4272 = vadd.f32 %v4003, %v4271
  %v4273 = vpop.f32.mrb[0].mxu0
  %v4274 = vand.u32 %v2781, 4294901760
  %4275 = vmatprep.mubr.f32.mxu0 %v4274
  %v4276 = vand.u32 %v2749, 4294901760
  %4277 = vmatmul.mubr.f32.gmra.mrb[0].mxu0 %v4276
  %v4278 = vpop.f32.mrb[0].mxu0
  %v4279 = vadd.f32 %v4014, %v4278
  %v4280 = vpop.f32.mrb[0].mxu0
  %v4281 = vand.u32 %v2782, 4294901760
  %4282 = vmatprep.mubr.f32.mxu0 %v4281
  %v4283 = vand.u32 %v2750, 4294901760
  %4284 = vmatmul.mubr.f32.gmra.mrb[0].mxu0 %v4283
  %v4285 = vpop.f32.mrb[0].mxu0
  %v4286 = vadd.f32 %v4025, %v4285
  %v4287 = vpop.f32.mrb[0].mxu0
  %v4288 = vand.u32 %v2783, 4294901760
  %4289 = vmatprep.mubr.f32.mxu0 %v4288
  %v4290 = vand.u32 %v2751, 4294901760
  %4291 = vmatmul.mubr.f32.gmra.mrb[0].mxu0 %v4290
  %v4292 = vpop.f32.mrb[0].mxu0
  %v4293 = vadd.f32 %v4036, %v4292
  %v4294 = vpop.f32.mrb[0].mxu0
  %v4295 = vand.u32 %v2784, 4294901760
  %4296 = vmatprep.mubr.f32.mxu0 %v4295
  %v4297 = vand.u32 %v2752, 4294901760
  %4298 = vmatmul.mubr.f32.gmra.mrb[0].mxu0 %v4297
  %v4299 = vpop.f32.mrb[0].mxu0
  %v4300 = vadd.f32 %v4047, %v4299
  %v4301 = vpop.f32.mrb[0].mxu0
  %v4302 = vand.u32 %v2785, 4294901760
  %4303 = vmatprep.mubr.f32.mxu0 %v4302
  %v4304 = vand.u32 %v2753, 4294901760
  %4305 = vmatmul.mubr.f32.gmra.mrb[0].mxu0 %v4304
  %v4306 = vpop.f32.mrb[0].mxu0
  %v4307 = vadd.f32 %v4058, %v4306
  %v4308 = vpop.f32.mrb[0].mxu0
  %v4309 = vand.u32 %v2786, 4294901760
  %4310 = vmatprep.mubr.f32.mxu0 %v4309
  %v4311 = vand.u32 %v2754, 4294901760
  %4312 = vmatmul.mubr.f32.gmra.mrb[0].mxu0 %v4311
  %v4313 = vpop.f32.mrb[0].mxu0
  %v4314 = vadd.f32 %v4069, %v4313
  %v4315 = vpop.f32.mrb[0].mxu0
  %4316 = vdwg.mxu0
  %4317 = vmatprep.subr.mxu0 0.0
  %v4318 = vand.u32 %v2602, 4294901760
  %4319 = vmatpush1.msra.mxu0 %v4318
  %4320 = vmatprep.subr.mxu0 0.0
  %v4321 = vand.u32 %v2603, 4294901760
  %4322 = vmatpush1.msra.mxu0 %v4321
  %4323 = vmatprep.subr.mxu0 0.0
  %v4324 = vand.u32 %v2604, 4294901760
  %4325 = vmatpush1.msra.mxu0 %v4324
  %4326 = vmatprep.subr.mxu0 0.0
  %v4327 = vand.u32 %v2605, 4294901760
  %4328 = vmatpush1.msra.mxu0 %v4327
  %4329 = vmatprep.subr.mxu0 0.0
  %v4330 = vand.u32 %v2606, 4294901760
  %4331 = vmatpush1.msra.mxu0 %v4330
  %4332 = vmatprep.subr.mxu0 0.0
  %v4333 = vand.u32 %v2607, 4294901760
  %4334 = vmatpush1.msra.mxu0 %v4333
  %4335 = vmatprep.subr.mxu0 0.0
  %v4336 = vand.u32 %v2608, 4294901760
  %4337 = vmatpush1.msra.mxu0 %v4336
  %4338 = vmatprep.subr.mxu0 0.0
  %v4339 = vand.u32 %v2609, 4294901760
  %4340 = vmatpush1.msra.mxu0 %v4339
  %4341 = vmatprep.subr.mxu0 0.0
  %v4342 = vand.u32 %v2610, 4294901760
  %4343 = vmatpush1.msra.mxu0 %v4342
  %4344 = vmatprep.subr.mxu0 0.0
  %v4345 = vand.u32 %v2611, 4294901760
  %4346 = vmatpush1.msra.mxu0 %v4345
  %4347 = vmatprep.subr.mxu0 0.0
  %v4348 = vand.u32 %v2612, 4294901760
  %4349 = vmatpush1.msra.mxu0 %v4348
  %4350 = vmatprep.subr.mxu0 0.0
  %v4351 = vand.u32 %v2613, 4294901760
  %4352 = vmatpush1.msra.mxu0 %v4351
  %4353 = vmatprep.subr.mxu0 0.0
  %v4354 = vand.u32 %v2614, 4294901760
  %4355 = vmatpush1.msra.mxu0 %v4354
  %4356 = vmatprep.subr.mxu0 0.0
  %v4357 = vand.u32 %v2615, 4294901760
  %4358 = vmatpush1.msra.mxu0 %v4357
  %4359 = vmatprep.subr.mxu0 0.0
  %v4360 = vand.u32 %v2616, 4294901760
  %4361 = vmatpush1.msra.mxu0 %v4360
  %4362 = vmatprep.subr.mxu0 0.0
  %v4363 = vand.u32 %v2617, 4294901760
  %4364 = vmatpush1.msra.mxu0 %v4363
  %4365 = vmatprep.subr.mxu0 0.0
  %v4366 = vand.u32 %v2618, 4294901760
  %4367 = vmatpush1.msra.mxu0 %v4366
  %4368 = vmatprep.subr.mxu0 0.0
  %v4369 = vand.u32 %v2619, 4294901760
  %4370 = vmatpush1.msra.mxu0 %v4369
  %4371 = vmatprep.subr.mxu0 0.0
  %v4372 = vand.u32 %v2620, 4294901760
  %4373 = vmatpush1.msra.mxu0 %v4372
  %4374 = vmatprep.subr.mxu0 0.0
  %v4375 = vand.u32 %v2621, 4294901760
  %4376 = vmatpush1.msra.mxu0 %v4375
  %4377 = vmatprep.subr.mxu0 0.0
  %v4378 = vand.u32 %v2622, 4294901760
  %4379 = vmatpush1.msra.mxu0 %v4378
  %4380 = vmatprep.subr.mxu0 0.0
  %v4381 = vand.u32 %v2623, 4294901760
  %4382 = vmatpush1.msra.mxu0 %v4381
  %4383 = vmatprep.subr.mxu0 0.0
  %v4384 = vand.u32 %v2624, 4294901760
  %4385 = vmatpush1.msra.mxu0 %v4384
  %4386 = vmatprep.subr.mxu0 0.0
  %v4387 = vand.u32 %v2625, 4294901760
  %4388 = vmatpush1.msra.mxu0 %v4387
  %4389 = vmatprep.subr.mxu0 0.0
  %v4390 = vand.u32 %v2626, 4294901760
  %4391 = vmatpush1.msra.mxu0 %v4390
  %4392 = vmatprep.subr.mxu0 0.0
  %v4393 = vand.u32 %v2627, 4294901760
  %4394 = vmatpush1.msra.mxu0 %v4393
  %4395 = vmatprep.subr.mxu0 0.0
  %v4396 = vand.u32 %v2628, 4294901760
  %4397 = vmatpush1.msra.mxu0 %v4396
  %4398 = vmatprep.subr.mxu0 0.0
  %v4399 = vand.u32 %v2629, 4294901760
  %4400 = vmatpush1.msra.mxu0 %v4399
  %4401 = vmatprep.subr.mxu0 0.0
  %v4402 = vand.u32 %v2630, 4294901760
  %4403 = vmatpush1.msra.mxu0 %v4402
  %4404 = vmatprep.subr.mxu0 0.0
  %v4405 = vand.u32 %v2631, 4294901760
  %4406 = vmatpush1.msra.mxu0 %v4405
  %4407 = vmatprep.subr.mxu0 0.0
  %v4408 = vand.u32 %v2632, 4294901760
  %4409 = vmatpush1.msra.mxu0 %v4408
  %4410 = vmatprep.subr.mxu0 0.0
  %v4411 = vand.u32 %v2633, 4294901760
  %4412 = vmatpush1.msra.mxu0 %v4411
  %v4413 = vand.u32 %v2775, 4294901760
  %4414 = vmatprep.mubr.f32.mxu0 %v4413
  %v4415 = vand.u32 %v2743, 4294901760
  %4416 = vmatmul.mubr.f32.gmra.mrb[0].mxu0 %v4415
  %v4417 = vpop.f32.mrb[0].mxu0
  %v4418 = vadd.f32 %v4237, %v4417
  %v4419 = vpop.f32.mrb[0].mxu0
  %v4420 = vand.u32 %v2776, 4294901760
  %4421 = vmatprep.mubr.f32.mxu0 %v4420
  %v4422 = vand.u32 %v2744, 4294901760
  %4423 = vmatmul.mubr.f32.gmra.mrb[0].mxu0 %v4422
  %v4424 = vpop.f32.mrb[0].mxu0
  %v4425 = vadd.f32 %v4244, %v4424
  %v4426 = vpop.f32.mrb[0].mxu0
  %v4427 = vand.u32 %v2777, 4294901760
  %4428 = vmatprep.mubr.f32.mxu0 %v4427
  %v4429 = vand.u32 %v2745, 4294901760
  %4430 = vmatmul.mubr.f32.gmra.mrb[0].mxu0 %v4429
  %v4431 = vpop.f32.mrb[0].mxu0
  %v4432 = vadd.f32 %v4251, %v4431
  %v4433 = vpop.f32.mrb[0].mxu0
  %v4434 = vand.u32 %v2778, 4294901760
  %4435 = vmatprep.mubr.f32.mxu0 %v4434
  %v4436 = vand.u32 %v2746, 4294901760
  %4437 = vmatmul.mubr.f32.gmra.mrb[0].mxu0 %v4436
  %v4438 = vpop.f32.mrb[0].mxu0
  %v4439 = vadd.f32 %v4258, %v4438
  %v4440 = vpop.f32.mrb[0].mxu0
  %v4441 = vand.u32 %v2779, 4294901760
  %4442 = vmatprep.mubr.f32.mxu0 %v4441
  %v4443 = vand.u32 %v2747, 4294901760
  %4444 = vmatmul.mubr.f32.gmra.mrb[0].mxu0 %v4443
  %v4445 = vpop.f32.mrb[0].mxu0
  %v4446 = vadd.f32 %v4265, %v4445
  %v4447 = vpop.f32.mrb[0].mxu0
  %v4448 = vand.u32 %v2780, 4294901760
  %4449 = vmatprep.mubr.f32.mxu0 %v4448
  %v4450 = vand.u32 %v2748, 4294901760
  %4451 = vmatmul.mubr.f32.gmra.mrb[0].mxu0 %v4450
  %v4452 = vpop.f32.mrb[0].mxu0
  %v4453 = vadd.f32 %v4272, %v4452
  %v4454 = vpop.f32.mrb[0].mxu0
  %v4455 = vand.u32 %v2781, 4294901760
  %4456 = vmatprep.mubr.f32.mxu0 %v4455
  %v4457 = vand.u32 %v2749, 4294901760
  %4458 = vmatmul.mubr.f32.gmra.mrb[0].mxu0 %v4457
  %v4459 = vpop.f32.mrb[0].mxu0
  %v4460 = vadd.f32 %v4279, %v4459
  %v4461 = vpop.f32.mrb[0].mxu0
  %v4462 = vand.u32 %v2782, 4294901760
  %4463 = vmatprep.mubr.f32.mxu0 %v4462
  %v4464 = vand.u32 %v2750, 4294901760
  %4465 = vmatmul.mubr.f32.gmra.mrb[0].mxu0 %v4464
  %v4466 = vpop.f32.mrb[0].mxu0
  %v4467 = vadd.f32 %v4286, %v4466
  %v4468 = vpop.f32.mrb[0].mxu0
  %v4469 = vand.u32 %v2783, 4294901760
  %4470 = vmatprep.mubr.f32.mxu0 %v4469
  %v4471 = vand.u32 %v2751, 4294901760
  %4472 = vmatmul.mubr.f32.gmra.mrb[0].mxu0 %v4471
  %v4473 = vpop.f32.mrb[0].mxu0
  %v4474 = vadd.f32 %v4293, %v4473
  %v4475 = vpop.f32.mrb[0].mxu0
  %v4476 = vand.u32 %v2784, 4294901760
  %4477 = vmatprep.mubr.f32.mxu0 %v4476
  %v4478 = vand.u32 %v2752, 4294901760
  %4479 = vmatmul.mubr.f32.gmra.mrb[0].mxu0 %v4478
  %v4480 = vpop.f32.mrb[0].mxu0
  %v4481 = vadd.f32 %v4300, %v4480
  %v4482 = vpop.f32.mrb[0].mxu0
  %v4483 = vand.u32 %v2785, 4294901760
  %4484 = vmatprep.mubr.f32.mxu0 %v4483
  %v4485 = vand.u32 %v2753, 4294901760
  %4486 = vmatmul.mubr.f32.gmra.mrb[0].mxu0 %v4485
  %v4487 = vpop.f32.mrb[0].mxu0
  %v4488 = vadd.f32 %v4307, %v4487
  %v4489 = vpop.f32.mrb[0].mxu0
  %v4490 = vand.u32 %v2786, 4294901760
  %4491 = vmatprep.mubr.f32.mxu0 %v4490
  %v4492 = vand.u32 %v2754, 4294901760
  %4493 = vmatmul.mubr.f32.gmra.mrb[0].mxu0 %v4492
  %v4494 = vpop.f32.mrb[0].mxu0
  %v4495 = vadd.f32 %v4314, %v4494
  %v4496 = vpop.f32.mrb[0].mxu0
  %4497 = vdwg.mxu0
  %4498 = vmatprep.subr.mxu0 0.0
  %v4499 = vand.u32 %v2634, 4294901760
  %4500 = vmatpush1.msra.mxu0 %v4499
  %4501 = vmatprep.subr.mxu0 0.0
  %v4502 = vand.u32 %v2635, 4294901760
  %4503 = vmatpush1.msra.mxu0 %v4502
  %4504 = vmatprep.subr.mxu0 0.0
  %v4505 = vand.u32 %v2636, 4294901760
  %4506 = vmatpush1.msra.mxu0 %v4505
  %4507 = vmatprep.subr.mxu0 0.0
  %v4508 = vand.u32 %v2637, 4294901760
  %4509 = vmatpush1.msra.mxu0 %v4508
  %4510 = vmatprep.subr.mxu0 0.0
  %v4511 = vand.u32 %v2638, 4294901760
  %4512 = vmatpush1.msra.mxu0 %v4511
  %4513 = vmatprep.subr.mxu0 0.0
  %v4514 = vand.u32 %v2639, 4294901760
  %4515 = vmatpush1.msra.mxu0 %v4514
  %4516 = vmatprep.subr.mxu0 0.0
  %v4517 = vand.u32 %v2640, 4294901760
  %4518 = vmatpush1.msra.mxu0 %v4517
  %4519 = vmatprep.subr.mxu0 0.0
  %v4520 = vand.u32 %v2641, 4294901760
  %4521 = vmatpush1.msra.mxu0 %v4520
  %4522 = vmatprep.subr.mxu0 0.0
  %v4523 = vand.u32 %v2642, 4294901760
  %4524 = vmatpush1.msra.mxu0 %v4523
  %4525 = vmatprep.subr.mxu0 0.0
  %v4526 = vand.u32 %v2643, 4294901760
  %4527 = vmatpush1.msra.mxu0 %v4526
  %4528 = vmatprep.subr.mxu0 0.0
  %v4529 = vand.u32 %v2644, 4294901760
  %4530 = vmatpush1.msra.mxu0 %v4529
  %4531 = vmatprep.subr.mxu0 0.0
  %v4532 = vand.u32 %v2645, 4294901760
  %4533 = vmatpush1.msra.mxu0 %v4532
  %4534 = vmatprep.subr.mxu0 0.0
  %v4535 = vand.u32 %v2646, 4294901760
  %4536 = vmatpush1.msra.mxu0 %v4535
  %4537 = vmatprep.subr.mxu0 0.0
  %v4538 = vand.u32 %v2647, 4294901760
  %4539 = vmatpush1.msra.mxu0 %v4538
  %4540 = vmatprep.subr.mxu0 0.0
  %v4541 = vand.u32 %v2648, 4294901760
  %4542 = vmatpush1.msra.mxu0 %v4541
  %4543 = vmatprep.subr.mxu0 0.0
  %v4544 = vand.u32 %v2649, 4294901760
  %4545 = vmatpush1.msra.mxu0 %v4544
  %4546 = vmatprep.subr.mxu0 0.0
  %v4547 = vand.u32 %v2650, 4294901760
  %4548 = vmatpush1.msra.mxu0 %v4547
  %4549 = vmatprep.subr.mxu0 0.0
  %v4550 = vand.u32 %v2651, 4294901760
  %4551 = vmatpush1.msra.mxu0 %v4550
  %4552 = vmatprep.subr.mxu0 0.0
  %v4553 = vand.u32 %v2652, 4294901760
  %4554 = vmatpush1.msra.mxu0 %v4553
  %4555 = vmatprep.subr.mxu0 0.0
  %v4556 = vand.u32 %v2653, 4294901760
  %4557 = vmatpush1.msra.mxu0 %v4556
  %4558 = vmatprep.subr.mxu0 0.0
  %v4559 = vand.u32 %v2654, 4294901760
  %4560 = vmatpush1.msra.mxu0 %v4559
  %4561 = vmatprep.subr.mxu0 0.0
  %v4562 = vand.u32 %v2655, 4294901760
  %4563 = vmatpush1.msra.mxu0 %v4562
  %4564 = vmatprep.subr.mxu0 0.0
  %v4565 = vand.u32 %v2656, 4294901760
  %4566 = vmatpush1.msra.mxu0 %v4565
  %4567 = vmatprep.subr.mxu0 0.0
  %v4568 = vand.u32 %v2657, 4294901760
  %4569 = vmatpush1.msra.mxu0 %v4568
  %4570 = vmatprep.subr.mxu0 0.0
  %v4571 = vand.u32 %v2658, 4294901760
  %4572 = vmatpush1.msra.mxu0 %v4571
  %4573 = vmatprep.subr.mxu0 0.0
  %v4574 = vand.u32 %v2659, 4294901760
  %4575 = vmatpush1.msra.mxu0 %v4574
  %4576 = vmatprep.subr.mxu0 0.0
  %v4577 = vand.u32 %v2660, 4294901760
  %4578 = vmatpush1.msra.mxu0 %v4577
  %4579 = vmatprep.subr.mxu0 0.0
  %v4580 = vand.u32 %v2661, 4294901760
  %4581 = vmatpush1.msra.mxu0 %v4580
  %4582 = vmatprep.subr.mxu0 0.0
  %v4583 = vand.u32 %v2662, 4294901760
  %4584 = vmatpush1.msra.mxu0 %v4583
  %4585 = vmatprep.subr.mxu0 0.0
  %v4586 = vand.u32 %v2663, 4294901760
  %4587 = vmatpush1.msra.mxu0 %v4586
  %4588 = vmatprep.subr.mxu0 0.0
  %v4589 = vand.u32 %v2664, 4294901760
  %4590 = vmatpush1.msra.mxu0 %v4589
  %4591 = vmatprep.subr.mxu0 0.0
  %v4592 = vand.u32 %v2665, 4294901760
  %4593 = vmatpush1.msra.mxu0 %v4592
  %v4594 = vand.u32 %v2839, 4294901760
  %v4595 = vsub.f32 %v2839, %v4594
  %v4596 = vand.u32 %v4595, 4294901760
  %v4597 = vsub.f32 %v4595, %v4596
  %v4598 = vand.u32 %v4597, 4294901760
  %4599 = vmatprep.mubr.f32.mxu0 %v4598
  %v4600 = vand.u32 %v2807, 4294901760
  %v4601 = vsub.f32 %v2807, %v4600
  %v4602 = vand.u32 %v4601, 4294901760
  %v4603 = vsub.f32 %v4601, %v4602
  %v4604 = vand.u32 %v4603, 4294901760
  %4605 = vmatmul.mubr.f32.gmra.mrb[0].mxu0 %v4604
  %v4606 = vpop.f32.mrb[0].mxu0
  %v4607 = vadd.f32 %v4418, %v4606
  %v4608 = vpop.f32.mrb[0].mxu0
  %v4609 = vand.u32 %v2840, 4294901760
  %v4610 = vsub.f32 %v2840, %v4609
  %v4611 = vand.u32 %v4610, 4294901760
  %v4612 = vsub.f32 %v4610, %v4611
  %v4613 = vand.u32 %v4612, 4294901760
  %4614 = vmatprep.mubr.f32.mxu0 %v4613
  %v4615 = vand.u32 %v2808, 4294901760
  %v4616 = vsub.f32 %v2808, %v4615
  %v4617 = vand.u32 %v4616, 4294901760
  %v4618 = vsub.f32 %v4616, %v4617
  %v4619 = vand.u32 %v4618, 4294901760
  %4620 = vmatmul.mubr.f32.gmra.mrb[0].mxu0 %v4619
  %v4621 = vpop.f32.mrb[0].mxu0
  %v4622 = vadd.f32 %v4425, %v4621
  %v4623 = vpop.f32.mrb[0].mxu0
  %v4624 = vand.u32 %v2841, 4294901760
  %v4625 = vsub.f32 %v2841, %v4624
  %v4626 = vand.u32 %v4625, 4294901760
  %v4627 = vsub.f32 %v4625, %v4626
  %v4628 = vand.u32 %v4627, 4294901760
  %4629 = vmatprep.mubr.f32.mxu0 %v4628
  %v4630 = vand.u32 %v2809, 4294901760
  %v4631 = vsub.f32 %v2809, %v4630
  %v4632 = vand.u32 %v4631, 4294901760
  %v4633 = vsub.f32 %v4631, %v4632
  %v4634 = vand.u32 %v4633, 4294901760
  %4635 = vmatmul.mubr.f32.gmra.mrb[0].mxu0 %v4634
  %v4636 = vpop.f32.mrb[0].mxu0
  %v4637 = vadd.f32 %v4432, %v4636
  %v4638 = vpop.f32.mrb[0].mxu0
  %v4639 = vand.u32 %v2842, 4294901760
  %v4640 = vsub.f32 %v2842, %v4639
  %v4641 = vand.u32 %v4640, 4294901760
  %v4642 = vsub.f32 %v4640, %v4641
  %v4643 = vand.u32 %v4642, 4294901760
  %4644 = vmatprep.mubr.f32.mxu0 %v4643
  %v4645 = vand.u32 %v2810, 4294901760
  %v4646 = vsub.f32 %v2810, %v4645
  %v4647 = vand.u32 %v4646, 4294901760
  %v4648 = vsub.f32 %v4646, %v4647
  %v4649 = vand.u32 %v4648, 4294901760
  %4650 = vmatmul.mubr.f32.gmra.mrb[0].mxu0 %v4649
  %v4651 = vpop.f32.mrb[0].mxu0
  %v4652 = vadd.f32 %v4439, %v4651
  %v4653 = vpop.f32.mrb[0].mxu0
  %v4654 = vand.u32 %v2843, 4294901760
  %v4655 = vsub.f32 %v2843, %v4654
  %v4656 = vand.u32 %v4655, 4294901760
  %v4657 = vsub.f32 %v4655, %v4656
  %v4658 = vand.u32 %v4657, 4294901760
  %4659 = vmatprep.mubr.f32.mxu0 %v4658
  %v4660 = vand.u32 %v2811, 4294901760
  %v4661 = vsub.f32 %v2811, %v4660
  %v4662 = vand.u32 %v4661, 4294901760
  %v4663 = vsub.f32 %v4661, %v4662
  %v4664 = vand.u32 %v4663, 4294901760
  %4665 = vmatmul.mubr.f32.gmra.mrb[0].mxu0 %v4664
  %v4666 = vpop.f32.mrb[0].mxu0
  %v4667 = vadd.f32 %v4446, %v4666
  %v4668 = vpop.f32.mrb[0].mxu0
  %v4669 = vand.u32 %v2844, 4294901760
  %v4670 = vsub.f32 %v2844, %v4669
  %v4671 = vand.u32 %v4670, 4294901760
  %v4672 = vsub.f32 %v4670, %v4671
  %v4673 = vand.u32 %v4672, 4294901760
  %4674 = vmatprep.mubr.f32.mxu0 %v4673
  %v4675 = vand.u32 %v2812, 4294901760
  %v4676 = vsub.f32 %v2812, %v4675
  %v4677 = vand.u32 %v4676, 4294901760
  %v4678 = vsub.f32 %v4676, %v4677
  %v4679 = vand.u32 %v4678, 4294901760
  %4680 = vmatmul.mubr.f32.gmra.mrb[0].mxu0 %v4679
  %v4681 = vpop.f32.mrb[0].mxu0
  %v4682 = vadd.f32 %v4453, %v4681
  %v4683 = vpop.f32.mrb[0].mxu0
  %v4684 = vand.u32 %v2845, 4294901760
  %v4685 = vsub.f32 %v2845, %v4684
  %v4686 = vand.u32 %v4685, 4294901760
  %v4687 = vsub.f32 %v4685, %v4686
  %v4688 = vand.u32 %v4687, 4294901760
  %4689 = vmatprep.mubr.f32.mxu0 %v4688
  %v4690 = vand.u32 %v2813, 4294901760
  %v4691 = vsub.f32 %v2813, %v4690
  %v4692 = vand.u32 %v4691, 4294901760
  %v4693 = vsub.f32 %v4691, %v4692
  %v4694 = vand.u32 %v4693, 4294901760
  %4695 = vmatmul.mubr.f32.gmra.mrb[0].mxu0 %v4694
  %v4696 = vpop.f32.mrb[0].mxu0
  %v4697 = vadd.f32 %v4460, %v4696
  %v4698 = vpop.f32.mrb[0].mxu0
  %v4699 = vand.u32 %v2846, 4294901760
  %v4700 = vsub.f32 %v2846, %v4699
  %v4701 = vand.u32 %v4700, 4294901760
  %v4702 = vsub.f32 %v4700, %v4701
  %v4703 = vand.u32 %v4702, 4294901760
  %4704 = vmatprep.mubr.f32.mxu0 %v4703
  %v4705 = vand.u32 %v2814, 4294901760
  %v4706 = vsub.f32 %v2814, %v4705
  %v4707 = vand.u32 %v4706, 4294901760
  %v4708 = vsub.f32 %v4706, %v4707
  %v4709 = vand.u32 %v4708, 4294901760
  %4710 = vmatmul.mubr.f32.gmra.mrb[0].mxu0 %v4709
  %v4711 = vpop.f32.mrb[0].mxu0
  %v4712 = vadd.f32 %v4467, %v4711
  %v4713 = vpop.f32.mrb[0].mxu0
  %v4714 = vand.u32 %v2847, 4294901760
  %v4715 = vsub.f32 %v2847, %v4714
  %v4716 = vand.u32 %v4715, 4294901760
  %v4717 = vsub.f32 %v4715, %v4716
  %v4718 = vand.u32 %v4717, 4294901760
  %4719 = vmatprep.mubr.f32.mxu0 %v4718
  %v4720 = vand.u32 %v2815, 4294901760
  %v4721 = vsub.f32 %v2815, %v4720
  %v4722 = vand.u32 %v4721, 4294901760
  %v4723 = vsub.f32 %v4721, %v4722
  %v4724 = vand.u32 %v4723, 4294901760
  %4725 = vmatmul.mubr.f32.gmra.mrb[0].mxu0 %v4724
  %v4726 = vpop.f32.mrb[0].mxu0
  %v4727 = vadd.f32 %v4474, %v4726
  %v4728 = vpop.f32.mrb[0].mxu0
  %v4729 = vand.u32 %v2848, 4294901760
  %v4730 = vsub.f32 %v2848, %v4729
  %v4731 = vand.u32 %v4730, 4294901760
  %v4732 = vsub.f32 %v4730, %v4731
  %v4733 = vand.u32 %v4732, 4294901760
  %4734 = vmatprep.mubr.f32.mxu0 %v4733
  %v4735 = vand.u32 %v2816, 4294901760
  %v4736 = vsub.f32 %v2816, %v4735
  %v4737 = vand.u32 %v4736, 4294901760
  %v4738 = vsub.f32 %v4736, %v4737
  %v4739 = vand.u32 %v4738, 4294901760
  %4740 = vmatmul.mubr.f32.gmra.mrb[0].mxu0 %v4739
  %v4741 = vpop.f32.mrb[0].mxu0
  %v4742 = vadd.f32 %v4481, %v4741
  %v4743 = vpop.f32.mrb[0].mxu0
  %v4744 = vand.u32 %v2849, 4294901760
  %v4745 = vsub.f32 %v2849, %v4744
  %v4746 = vand.u32 %v4745, 4294901760
  %v4747 = vsub.f32 %v4745, %v4746
  %v4748 = vand.u32 %v4747, 4294901760
  %4749 = vmatprep.mubr.f32.mxu0 %v4748
  %v4750 = vand.u32 %v2817, 4294901760
  %v4751 = vsub.f32 %v2817, %v4750
  %v4752 = vand.u32 %v4751, 4294901760
  %v4753 = vsub.f32 %v4751, %v4752
  %v4754 = vand.u32 %v4753, 4294901760
  %4755 = vmatmul.mubr.f32.gmra.mrb[0].mxu0 %v4754
  %v4756 = vpop.f32.mrb[0].mxu0
  %v4757 = vadd.f32 %v4488, %v4756
  %v4758 = vpop.f32.mrb[0].mxu0
  %v4759 = vand.u32 %v2850, 4294901760
  %v4760 = vsub.f32 %v2850, %v4759
  %v4761 = vand.u32 %v4760, 4294901760
  %v4762 = vsub.f32 %v4760, %v4761
  %v4763 = vand.u32 %v4762, 4294901760
  %4764 = vmatprep.mubr.f32.mxu0 %v4763
  %v4765 = vand.u32 %v2818, 4294901760
  %v4766 = vsub.f32 %v2818, %v4765
  %v4767 = vand.u32 %v4766, 4294901760
  %v4768 = vsub.f32 %v4766, %v4767
  %v4769 = vand.u32 %v4768, 4294901760
  %4770 = vmatmul.mubr.f32.gmra.mrb[0].mxu0 %v4769
  %v4771 = vpop.f32.mrb[0].mxu0
  %v4772 = vadd.f32 %v4495, %v4771
  %v4773 = vpop.f32.mrb[0].mxu0
  %4774 = vdwg.mxu0
  %4775 = vmatprep.subr.mxu0 0.0
  %v4776 = vand.u32 %v2634, 4294901760
  %v4777 = vsub.f32 %v2634, %v4776
  %v4778 = vand.u32 %v4777, 4294901760
  %v4779 = vsub.f32 %v4777, %v4778
  %v4780 = vand.u32 %v4779, 4294901760
  %4781 = vmatpush1.msra.mxu0 %v4780
  %4782 = vmatprep.subr.mxu0 0.0
  %v4783 = vand.u32 %v2635, 4294901760
  %v4784 = vsub.f32 %v2635, %v4783
  %v4785 = vand.u32 %v4784, 4294901760
  %v4786 = vsub.f32 %v4784, %v4785
  %v4787 = vand.u32 %v4786, 4294901760
  %4788 = vmatpush1.msra.mxu0 %v4787
  %4789 = vmatprep.subr.mxu0 0.0
  %v4790 = vand.u32 %v2636, 4294901760
  %v4791 = vsub.f32 %v2636, %v4790
  %v4792 = vand.u32 %v4791, 4294901760
  %v4793 = vsub.f32 %v4791, %v4792
  %v4794 = vand.u32 %v4793, 4294901760
  %4795 = vmatpush1.msra.mxu0 %v4794
  %4796 = vmatprep.subr.mxu0 0.0
  %v4797 = vand.u32 %v2637, 4294901760
  %v4798 = vsub.f32 %v2637, %v4797
  %v4799 = vand.u32 %v4798, 4294901760
  %v4800 = vsub.f32 %v4798, %v4799
  %v4801 = vand.u32 %v4800, 4294901760
  %4802 = vmatpush1.msra.mxu0 %v4801
  %4803 = vmatprep.subr.mxu0 0.0
  %v4804 = vand.u32 %v2638, 4294901760
  %v4805 = vsub.f32 %v2638, %v4804
  %v4806 = vand.u32 %v4805, 4294901760
  %v4807 = vsub.f32 %v4805, %v4806
  %v4808 = vand.u32 %v4807, 4294901760
  %4809 = vmatpush1.msra.mxu0 %v4808
  %4810 = vmatprep.subr.mxu0 0.0
  %v4811 = vand.u32 %v2639, 4294901760
  %v4812 = vsub.f32 %v2639, %v4811
  %v4813 = vand.u32 %v4812, 4294901760
  %v4814 = vsub.f32 %v4812, %v4813
  %v4815 = vand.u32 %v4814, 4294901760
  %4816 = vmatpush1.msra.mxu0 %v4815
  %4817 = vmatprep.subr.mxu0 0.0
  %v4818 = vand.u32 %v2640, 4294901760
  %v4819 = vsub.f32 %v2640, %v4818
  %v4820 = vand.u32 %v4819, 4294901760
  %v4821 = vsub.f32 %v4819, %v4820
  %v4822 = vand.u32 %v4821, 4294901760
  %4823 = vmatpush1.msra.mxu0 %v4822
  %4824 = vmatprep.subr.mxu0 0.0
  %v4825 = vand.u32 %v2641, 4294901760
  %v4826 = vsub.f32 %v2641, %v4825
  %v4827 = vand.u32 %v4826, 4294901760
  %v4828 = vsub.f32 %v4826, %v4827
  %v4829 = vand.u32 %v4828, 4294901760
  %4830 = vmatpush1.msra.mxu0 %v4829
  %4831 = vmatprep.subr.mxu0 0.0
  %v4832 = vand.u32 %v2642, 4294901760
  %v4833 = vsub.f32 %v2642, %v4832
  %v4834 = vand.u32 %v4833, 4294901760
  %v4835 = vsub.f32 %v4833, %v4834
  %v4836 = vand.u32 %v4835, 4294901760
  %4837 = vmatpush1.msra.mxu0 %v4836
  %4838 = vmatprep.subr.mxu0 0.0
  %v4839 = vand.u32 %v2643, 4294901760
  %v4840 = vsub.f32 %v2643, %v4839
  %v4841 = vand.u32 %v4840, 4294901760
  %v4842 = vsub.f32 %v4840, %v4841
  %v4843 = vand.u32 %v4842, 4294901760
  %4844 = vmatpush1.msra.mxu0 %v4843
  %4845 = vmatprep.subr.mxu0 0.0
  %v4846 = vand.u32 %v2644, 4294901760
  %v4847 = vsub.f32 %v2644, %v4846
  %v4848 = vand.u32 %v4847, 4294901760
  %v4849 = vsub.f32 %v4847, %v4848
  %v4850 = vand.u32 %v4849, 4294901760
  %4851 = vmatpush1.msra.mxu0 %v4850
  %4852 = vmatprep.subr.mxu0 0.0
  %v4853 = vand.u32 %v2645, 4294901760
  %v4854 = vsub.f32 %v2645, %v4853
  %v4855 = vand.u32 %v4854, 4294901760
  %v4856 = vsub.f32 %v4854, %v4855
  %v4857 = vand.u32 %v4856, 4294901760
  %4858 = vmatpush1.msra.mxu0 %v4857
  %4859 = vmatprep.subr.mxu0 0.0
  %v4860 = vand.u32 %v2646, 4294901760
  %v4861 = vsub.f32 %v2646, %v4860
  %v4862 = vand.u32 %v4861, 4294901760
  %v4863 = vsub.f32 %v4861, %v4862
  %v4864 = vand.u32 %v4863, 4294901760
  %4865 = vmatpush1.msra.mxu0 %v4864
  %4866 = vmatprep.subr.mxu0 0.0
  %v4867 = vand.u32 %v2647, 4294901760
  %v4868 = vsub.f32 %v2647, %v4867
  %v4869 = vand.u32 %v4868, 4294901760
  %v4870 = vsub.f32 %v4868, %v4869
  %v4871 = vand.u32 %v4870, 4294901760
  %4872 = vmatpush1.msra.mxu0 %v4871
  %4873 = vmatprep.subr.mxu0 0.0
  %v4874 = vand.u32 %v2648, 4294901760
  %v4875 = vsub.f32 %v2648, %v4874
  %v4876 = vand.u32 %v4875, 4294901760
  %v4877 = vsub.f32 %v4875, %v4876
  %v4878 = vand.u32 %v4877, 4294901760
  %4879 = vmatpush1.msra.mxu0 %v4878
  %4880 = vmatprep.subr.mxu0 0.0
  %v4881 = vand.u32 %v2649, 4294901760
  %v4882 = vsub.f32 %v2649, %v4881
  %v4883 = vand.u32 %v4882, 4294901760
  %v4884 = vsub.f32 %v4882, %v4883
  %v4885 = vand.u32 %v4884, 4294901760
  %4886 = vmatpush1.msra.mxu0 %v4885
  %4887 = vmatprep.subr.mxu0 0.0
  %v4888 = vand.u32 %v2650, 4294901760
  %v4889 = vsub.f32 %v2650, %v4888
  %v4890 = vand.u32 %v4889, 4294901760
  %v4891 = vsub.f32 %v4889, %v4890
  %v4892 = vand.u32 %v4891, 4294901760
  %4893 = vmatpush1.msra.mxu0 %v4892
  %4894 = vmatprep.subr.mxu0 0.0
  %v4895 = vand.u32 %v2651, 4294901760
  %v4896 = vsub.f32 %v2651, %v4895
  %v4897 = vand.u32 %v4896, 4294901760
  %v4898 = vsub.f32 %v4896, %v4897
  %v4899 = vand.u32 %v4898, 4294901760
  %4900 = vmatpush1.msra.mxu0 %v4899
  %4901 = vmatprep.subr.mxu0 0.0
  %v4902 = vand.u32 %v2652, 4294901760
  %v4903 = vsub.f32 %v2652, %v4902
  %v4904 = vand.u32 %v4903, 4294901760
  %v4905 = vsub.f32 %v4903, %v4904
  %v4906 = vand.u32 %v4905, 4294901760
  %4907 = vmatpush1.msra.mxu0 %v4906
  %4908 = vmatprep.subr.mxu0 0.0
  %v4909 = vand.u32 %v2653, 4294901760
  %v4910 = vsub.f32 %v2653, %v4909
  %v4911 = vand.u32 %v4910, 4294901760
  %v4912 = vsub.f32 %v4910, %v4911
  %v4913 = vand.u32 %v4912, 4294901760
  %4914 = vmatpush1.msra.mxu0 %v4913
  %4915 = vmatprep.subr.mxu0 0.0
  %v4916 = vand.u32 %v2654, 4294901760
  %v4917 = vsub.f32 %v2654, %v4916
  %v4918 = vand.u32 %v4917, 4294901760
  %v4919 = vsub.f32 %v4917, %v4918
  %v4920 = vand.u32 %v4919, 4294901760
  %4921 = vmatpush1.msra.mxu0 %v4920
  %4922 = vmatprep.subr.mxu0 0.0
  %v4923 = vand.u32 %v2655, 4294901760
  %v4924 = vsub.f32 %v2655, %v4923
  %v4925 = vand.u32 %v4924, 4294901760
  %v4926 = vsub.f32 %v4924, %v4925
  %v4927 = vand.u32 %v4926, 4294901760
  %4928 = vmatpush1.msra.mxu0 %v4927
  %4929 = vmatprep.subr.mxu0 0.0
  %v4930 = vand.u32 %v2656, 4294901760
  %v4931 = vsub.f32 %v2656, %v4930
  %v4932 = vand.u32 %v4931, 4294901760
  %v4933 = vsub.f32 %v4931, %v4932
  %v4934 = vand.u32 %v4933, 4294901760
  %4935 = vmatpush1.msra.mxu0 %v4934
  %4936 = vmatprep.subr.mxu0 0.0
  %v4937 = vand.u32 %v2657, 4294901760
  %v4938 = vsub.f32 %v2657, %v4937
  %v4939 = vand.u32 %v4938, 4294901760
  %v4940 = vsub.f32 %v4938, %v4939
  %v4941 = vand.u32 %v4940, 4294901760
  %4942 = vmatpush1.msra.mxu0 %v4941
  %4943 = vmatprep.subr.mxu0 0.0
  %v4944 = vand.u32 %v2658, 4294901760
  %v4945 = vsub.f32 %v2658, %v4944
  %v4946 = vand.u32 %v4945, 4294901760
  %v4947 = vsub.f32 %v4945, %v4946
  %v4948 = vand.u32 %v4947, 4294901760
  %4949 = vmatpush1.msra.mxu0 %v4948
  %4950 = vmatprep.subr.mxu0 0.0
  %v4951 = vand.u32 %v2659, 4294901760
  %v4952 = vsub.f32 %v2659, %v4951
  %v4953 = vand.u32 %v4952, 4294901760
  %v4954 = vsub.f32 %v4952, %v4953
  %v4955 = vand.u32 %v4954, 4294901760
  %4956 = vmatpush1.msra.mxu0 %v4955
  %4957 = vmatprep.subr.mxu0 0.0
  %v4958 = vand.u32 %v2660, 4294901760
  %v4959 = vsub.f32 %v2660, %v4958
  %v4960 = vand.u32 %v4959, 4294901760
  %v4961 = vsub.f32 %v4959, %v4960
  %v4962 = vand.u32 %v4961, 4294901760
  %4963 = vmatpush1.msra.mxu0 %v4962
  %4964 = vmatprep.subr.mxu0 0.0
  %v4965 = vand.u32 %v2661, 4294901760
  %v4966 = vsub.f32 %v2661, %v4965
  %v4967 = vand.u32 %v4966, 4294901760
  %v4968 = vsub.f32 %v4966, %v4967
  %v4969 = vand.u32 %v4968, 4294901760
  %4970 = vmatpush1.msra.mxu0 %v4969
  %4971 = vmatprep.subr.mxu0 0.0
  %v4972 = vand.u32 %v2662, 4294901760
  %v4973 = vsub.f32 %v2662, %v4972
  %v4974 = vand.u32 %v4973, 4294901760
  %v4975 = vsub.f32 %v4973, %v4974
  %v4976 = vand.u32 %v4975, 4294901760
  %4977 = vmatpush1.msra.mxu0 %v4976
  %4978 = vmatprep.subr.mxu0 0.0
  %v4979 = vand.u32 %v2663, 4294901760
  %v4980 = vsub.f32 %v2663, %v4979
  %v4981 = vand.u32 %v4980, 4294901760
  %v4982 = vsub.f32 %v4980, %v4981
  %v4983 = vand.u32 %v4982, 4294901760
  %4984 = vmatpush1.msra.mxu0 %v4983
  %4985 = vmatprep.subr.mxu0 0.0
  %v4986 = vand.u32 %v2664, 4294901760
  %v4987 = vsub.f32 %v2664, %v4986
  %v4988 = vand.u32 %v4987, 4294901760
  %v4989 = vsub.f32 %v4987, %v4988
  %v4990 = vand.u32 %v4989, 4294901760
  %4991 = vmatpush1.msra.mxu0 %v4990
  %4992 = vmatprep.subr.mxu0 0.0
  %v4993 = vand.u32 %v2665, 4294901760
  %v4994 = vsub.f32 %v2665, %v4993
  %v4995 = vand.u32 %v4994, 4294901760
  %v4996 = vsub.f32 %v4994, %v4995
  %v4997 = vand.u32 %v4996, 4294901760
  %4998 = vmatpush1.msra.mxu0 %v4997
  %v4999 = vand.u32 %v2839, 4294901760
  %5000 = vmatprep.mubr.f32.mxu0 %v4999
  %v5001 = vand.u32 %v2807, 4294901760
  %5002 = vmatmul.mubr.f32.gmra.mrb[0].mxu0 %v5001
  %v5003 = vpop.f32.mrb[0].mxu0
  %v5004 = vadd.f32 %v4607, %v5003
  %v5005 = vpop.f32.mrb[0].mxu0
  %v5006 = vand.u32 %v2840, 4294901760
  %5007 = vmatprep.mubr.f32.mxu0 %v5006
  %v5008 = vand.u32 %v2808, 4294901760
  %5009 = vmatmul.mubr.f32.gmra.mrb[0].mxu0 %v5008
  %v5010 = vpop.f32.mrb[0].mxu0
  %v5011 = vadd.f32 %v4622, %v5010
  %v5012 = vpop.f32.mrb[0].mxu0
  %v5013 = vand.u32 %v2841, 4294901760
  %5014 = vmatprep.mubr.f32.mxu0 %v5013
  %v5015 = vand.u32 %v2809, 4294901760
  %5016 = vmatmul.mubr.f32.gmra.mrb[0].mxu0 %v5015
  %v5017 = vpop.f32.mrb[0].mxu0
  %v5018 = vadd.f32 %v4637, %v5017
  %v5019 = vpop.f32.mrb[0].mxu0
  %v5020 = vand.u32 %v2842, 4294901760
  %5021 = vmatprep.mubr.f32.mxu0 %v5020
  %v5022 = vand.u32 %v2810, 4294901760
  %5023 = vmatmul.mubr.f32.gmra.mrb[0].mxu0 %v5022
  %v5024 = vpop.f32.mrb[0].mxu0
  %v5025 = vadd.f32 %v4652, %v5024
  %v5026 = vpop.f32.mrb[0].mxu0
  %v5027 = vand.u32 %v2843, 4294901760
  %5028 = vmatprep.mubr.f32.mxu0 %v5027
  %v5029 = vand.u32 %v2811, 4294901760
  %5030 = vmatmul.mubr.f32.gmra.mrb[0].mxu0 %v5029
  %v5031 = vpop.f32.mrb[0].mxu0
  %v5032 = vadd.f32 %v4667, %v5031
  %v5033 = vpop.f32.mrb[0].mxu0
  %v5034 = vand.u32 %v2844, 4294901760
  %5035 = vmatprep.mubr.f32.mxu0 %v5034
  %v5036 = vand.u32 %v2812, 4294901760
  %5037 = vmatmul.mubr.f32.gmra.mrb[0].mxu0 %v5036
  %v5038 = vpop.f32.mrb[0].mxu0
  %v5039 = vadd.f32 %v4682, %v5038
  %v5040 = vpop.f32.mrb[0].mxu0
  %v5041 = vand.u32 %v2845, 4294901760
  %5042 = vmatprep.mubr.f32.mxu0 %v5041
  %v5043 = vand.u32 %v2813, 4294901760
  %5044 = vmatmul.mubr.f32.gmra.mrb[0].mxu0 %v5043
  %v5045 = vpop.f32.mrb[0].mxu0
  %v5046 = vadd.f32 %v4697, %v5045
  %v5047 = vpop.f32.mrb[0].mxu0
  %v5048 = vand.u32 %v2846, 4294901760
  %5049 = vmatprep.mubr.f32.mxu0 %v5048
  %v5050 = vand.u32 %v2814, 4294901760
  %5051 = vmatmul.mubr.f32.gmra.mrb[0].mxu0 %v5050
  %v5052 = vpop.f32.mrb[0].mxu0
  %v5053 = vadd.f32 %v4712, %v5052
  %v5054 = vpop.f32.mrb[0].mxu0
  %v5055 = vand.u32 %v2847, 4294901760
  %5056 = vmatprep.mubr.f32.mxu0 %v5055
  %v5057 = vand.u32 %v2815, 4294901760
  %5058 = vmatmul.mubr.f32.gmra.mrb[0].mxu0 %v5057
  %v5059 = vpop.f32.mrb[0].mxu0
  %v5060 = vadd.f32 %v4727, %v5059
  %v5061 = vpop.f32.mrb[0].mxu0
  %v5062 = vand.u32 %v2848, 4294901760
  %5063 = vmatprep.mubr.f32.mxu0 %v5062
  %v5064 = vand.u32 %v2816, 4294901760
  %5065 = vmatmul.mubr.f32.gmra.mrb[0].mxu0 %v5064
  %v5066 = vpop.f32.mrb[0].mxu0
  %v5067 = vadd.f32 %v4742, %v5066
  %v5068 = vpop.f32.mrb[0].mxu0
  %v5069 = vand.u32 %v2849, 4294901760
  %5070 = vmatprep.mubr.f32.mxu0 %v5069
  %v5071 = vand.u32 %v2817, 4294901760
  %5072 = vmatmul.mubr.f32.gmra.mrb[0].mxu0 %v5071
  %v5073 = vpop.f32.mrb[0].mxu0
  %v5074 = vadd.f32 %v4757, %v5073
  %v5075 = vpop.f32.mrb[0].mxu0
  %v5076 = vand.u32 %v2850, 4294901760
  %5077 = vmatprep.mubr.f32.mxu0 %v5076
  %v5078 = vand.u32 %v2818, 4294901760
  %5079 = vmatmul.mubr.f32.gmra.mrb[0].mxu0 %v5078
  %v5080 = vpop.f32.mrb[0].mxu0
  %v5081 = vadd.f32 %v4772, %v5080
  %v5082 = vpop.f32.mrb[0].mxu0
  %5083 = vdwg.mxu0
  %5084 = vmatprep.subr.mxu0 0.0
  %v5085 = vand.u32 %v2634, 4294901760
  %v5086 = vsub.f32 %v2634, %v5085
  %5087 = vmatpush1.msra.mxu0 %v5086
  %5088 = vmatprep.subr.mxu0 0.0
  %v5089 = vand.u32 %v2635, 4294901760
  %v5090 = vsub.f32 %v2635, %v5089
  %5091 = vmatpush1.msra.mxu0 %v5090
  %5092 = vmatprep.subr.mxu0 0.0
  %v5093 = vand.u32 %v2636, 4294901760
  %v5094 = vsub.f32 %v2636, %v5093
  %5095 = vmatpush1.msra.mxu0 %v5094
  %5096 = vmatprep.subr.mxu0 0.0
  %v5097 = vand.u32 %v2637, 4294901760
  %v5098 = vsub.f32 %v2637, %v5097
  %5099 = vmatpush1.msra.mxu0 %v5098
  %5100 = vmatprep.subr.mxu0 0.0
  %v5101 = vand.u32 %v2638, 4294901760
  %v5102 = vsub.f32 %v2638, %v5101
  %5103 = vmatpush1.msra.mxu0 %v5102
  %5104 = vmatprep.subr.mxu0 0.0
  %v5105 = vand.u32 %v2639, 4294901760
  %v5106 = vsub.f32 %v2639, %v5105
  %5107 = vmatpush1.msra.mxu0 %v5106
  %5108 = vmatprep.subr.mxu0 0.0
  %v5109 = vand.u32 %v2640, 4294901760
  %v5110 = vsub.f32 %v2640, %v5109
  %5111 = vmatpush1.msra.mxu0 %v5110
  %5112 = vmatprep.subr.mxu0 0.0
  %v5113 = vand.u32 %v2641, 4294901760
  %v5114 = vsub.f32 %v2641, %v5113
  %5115 = vmatpush1.msra.mxu0 %v5114
  %5116 = vmatprep.subr.mxu0 0.0
  %v5117 = vand.u32 %v2642, 4294901760
  %v5118 = vsub.f32 %v2642, %v5117
  %5119 = vmatpush1.msra.mxu0 %v5118
  %5120 = vmatprep.subr.mxu0 0.0
  %v5121 = vand.u32 %v2643, 4294901760
  %v5122 = vsub.f32 %v2643, %v5121
  %5123 = vmatpush1.msra.mxu0 %v5122
  %5124 = vmatprep.subr.mxu0 0.0
  %v5125 = vand.u32 %v2644, 4294901760
  %v5126 = vsub.f32 %v2644, %v5125
  %5127 = vmatpush1.msra.mxu0 %v5126
  %5128 = vmatprep.subr.mxu0 0.0
  %v5129 = vand.u32 %v2645, 4294901760
  %v5130 = vsub.f32 %v2645, %v5129
  %5131 = vmatpush1.msra.mxu0 %v5130
  %5132 = vmatprep.subr.mxu0 0.0
  %v5133 = vand.u32 %v2646, 4294901760
  %v5134 = vsub.f32 %v2646, %v5133
  %5135 = vmatpush1.msra.mxu0 %v5134
  %5136 = vmatprep.subr.mxu0 0.0
  %v5137 = vand.u32 %v2647, 4294901760
  %v5138 = vsub.f32 %v2647, %v5137
  %5139 = vmatpush1.msra.mxu0 %v5138
  %5140 = vmatprep.subr.mxu0 0.0
  %v5141 = vand.u32 %v2648, 4294901760
  %v5142 = vsub.f32 %v2648, %v5141
  %5143 = vmatpush1.msra.mxu0 %v5142
  %5144 = vmatprep.subr.mxu0 0.0
  %v5145 = vand.u32 %v2649, 4294901760
  %v5146 = vsub.f32 %v2649, %v5145
  %5147 = vmatpush1.msra.mxu0 %v5146
  %5148 = vmatprep.subr.mxu0 0.0
  %v5149 = vand.u32 %v2650, 4294901760
  %v5150 = vsub.f32 %v2650, %v5149
  %5151 = vmatpush1.msra.mxu0 %v5150
  %5152 = vmatprep.subr.mxu0 0.0
  %v5153 = vand.u32 %v2651, 4294901760
  %v5154 = vsub.f32 %v2651, %v5153
  %5155 = vmatpush1.msra.mxu0 %v5154
  %5156 = vmatprep.subr.mxu0 0.0
  %v5157 = vand.u32 %v2652, 4294901760
  %v5158 = vsub.f32 %v2652, %v5157
  %5159 = vmatpush1.msra.mxu0 %v5158
  %5160 = vmatprep.subr.mxu0 0.0
  %v5161 = vand.u32 %v2653, 4294901760
  %v5162 = vsub.f32 %v2653, %v5161
  %5163 = vmatpush1.msra.mxu0 %v5162
  %5164 = vmatprep.subr.mxu0 0.0
  %v5165 = vand.u32 %v2654, 4294901760
  %v5166 = vsub.f32 %v2654, %v5165
  %5167 = vmatpush1.msra.mxu0 %v5166
  %5168 = vmatprep.subr.mxu0 0.0
  %v5169 = vand.u32 %v2655, 4294901760
  %v5170 = vsub.f32 %v2655, %v5169
  %5171 = vmatpush1.msra.mxu0 %v5170
  %5172 = vmatprep.subr.mxu0 0.0
  %v5173 = vand.u32 %v2656, 4294901760
  %v5174 = vsub.f32 %v2656, %v5173
  %5175 = vmatpush1.msra.mxu0 %v5174
  %5176 = vmatprep.subr.mxu0 0.0
  %v5177 = vand.u32 %v2657, 4294901760
  %v5178 = vsub.f32 %v2657, %v5177
  %5179 = vmatpush1.msra.mxu0 %v5178
  %5180 = vmatprep.subr.mxu0 0.0
  %v5181 = vand.u32 %v2658, 4294901760
  %v5182 = vsub.f32 %v2658, %v5181
  %5183 = vmatpush1.msra.mxu0 %v5182
  %5184 = vmatprep.subr.mxu0 0.0
  %v5185 = vand.u32 %v2659, 4294901760
  %v5186 = vsub.f32 %v2659, %v5185
  %5187 = vmatpush1.msra.mxu0 %v5186
  %5188 = vmatprep.subr.mxu0 0.0
  %v5189 = vand.u32 %v2660, 4294901760
  %v5190 = vsub.f32 %v2660, %v5189
  %5191 = vmatpush1.msra.mxu0 %v5190
  %5192 = vmatprep.subr.mxu0 0.0
  %v5193 = vand.u32 %v2661, 4294901760
  %v5194 = vsub.f32 %v2661, %v5193
  %5195 = vmatpush1.msra.mxu0 %v5194
  %5196 = vmatprep.subr.mxu0 0.0
  %v5197 = vand.u32 %v2662, 4294901760
  %v5198 = vsub.f32 %v2662, %v5197
  %5199 = vmatpush1.msra.mxu0 %v5198
  %5200 = vmatprep.subr.mxu0 0.0
  %v5201 = vand.u32 %v2663, 4294901760
  %v5202 = vsub.f32 %v2663, %v5201
  %5203 = vmatpush1.msra.mxu0 %v5202
  %5204 = vmatprep.subr.mxu0 0.0
  %v5205 = vand.u32 %v2664, 4294901760
  %v5206 = vsub.f32 %v2664, %v5205
  %5207 = vmatpush1.msra.mxu0 %v5206
  %5208 = vmatprep.subr.mxu0 0.0
  %v5209 = vand.u32 %v2665, 4294901760
  %v5210 = vsub.f32 %v2665, %v5209
  %5211 = vmatpush1.msra.mxu0 %v5210
  %v5212 = vand.u32 %v2839, 4294901760
  %v5213 = vsub.f32 %v2839, %v5212
  %5214 = vmatprep.mubr.f32.mxu0 %v5213
  %v5215 = vand.u32 %v2807, 4294901760
  %v5216 = vsub.f32 %v2807, %v5215
  %5217 = vmatmul.mubr.f32.gmra.mrb[0].mxu0 %v5216
  %v5218 = vpop.f32.mrb[0].mxu0
  %v5219 = vadd.f32 %v5004, %v5218
  %v5220 = vpop.f32.mrb[0].mxu0
  %v5221 = vand.u32 %v2840, 4294901760
  %v5222 = vsub.f32 %v2840, %v5221
  %5223 = vmatprep.mubr.f32.mxu0 %v5222
  %v5224 = vand.u32 %v2808, 4294901760
  %v5225 = vsub.f32 %v2808, %v5224
  %5226 = vmatmul.mubr.f32.gmra.mrb[0].mxu0 %v5225
  %v5227 = vpop.f32.mrb[0].mxu0
  %v5228 = vadd.f32 %v5011, %v5227
  %v5229 = vpop.f32.mrb[0].mxu0
  %v5230 = vand.u32 %v2841, 4294901760
  %v5231 = vsub.f32 %v2841, %v5230
  %5232 = vmatprep.mubr.f32.mxu0 %v5231
  %v5233 = vand.u32 %v2809, 4294901760
  %v5234 = vsub.f32 %v2809, %v5233
  %5235 = vmatmul.mubr.f32.gmra.mrb[0].mxu0 %v5234
  %v5236 = vpop.f32.mrb[0].mxu0
  %v5237 = vadd.f32 %v5018, %v5236
  %v5238 = vpop.f32.mrb[0].mxu0
  %v5239 = vand.u32 %v2842, 4294901760
  %v5240 = vsub.f32 %v2842, %v5239
  %5241 = vmatprep.mubr.f32.mxu0 %v5240
  %v5242 = vand.u32 %v2810, 4294901760
  %v5243 = vsub.f32 %v2810, %v5242
  %5244 = vmatmul.mubr.f32.gmra.mrb[0].mxu0 %v5243
  %v5245 = vpop.f32.mrb[0].mxu0
  %v5246 = vadd.f32 %v5025, %v5245
  %v5247 = vpop.f32.mrb[0].mxu0
  %v5248 = vand.u32 %v2843, 4294901760
  %v5249 = vsub.f32 %v2843, %v5248
  %5250 = vmatprep.mubr.f32.mxu0 %v5249
  %v5251 = vand.u32 %v2811, 4294901760
  %v5252 = vsub.f32 %v2811, %v5251
  %5253 = vmatmul.mubr.f32.gmra.mrb[0].mxu0 %v5252
  %v5254 = vpop.f32.mrb[0].mxu0
  %v5255 = vadd.f32 %v5032, %v5254
  %v5256 = vpop.f32.mrb[0].mxu0
  %v5257 = vand.u32 %v2844, 4294901760
  %v5258 = vsub.f32 %v2844, %v5257
  %5259 = vmatprep.mubr.f32.mxu0 %v5258
  %v5260 = vand.u32 %v2812, 4294901760
  %v5261 = vsub.f32 %v2812, %v5260
  %5262 = vmatmul.mubr.f32.gmra.mrb[0].mxu0 %v5261
  %v5263 = vpop.f32.mrb[0].mxu0
  %v5264 = vadd.f32 %v5039, %v5263
  %v5265 = vpop.f32.mrb[0].mxu0
  %v5266 = vand.u32 %v2845, 4294901760
  %v5267 = vsub.f32 %v2845, %v5266
  %5268 = vmatprep.mubr.f32.mxu0 %v5267
  %v5269 = vand.u32 %v2813, 4294901760
  %v5270 = vsub.f32 %v2813, %v5269
  %5271 = vmatmul.mubr.f32.gmra.mrb[0].mxu0 %v5270
  %v5272 = vpop.f32.mrb[0].mxu0
  %v5273 = vadd.f32 %v5046, %v5272
  %v5274 = vpop.f32.mrb[0].mxu0
  %v5275 = vand.u32 %v2846, 4294901760
  %v5276 = vsub.f32 %v2846, %v5275
  %5277 = vmatprep.mubr.f32.mxu0 %v5276
  %v5278 = vand.u32 %v2814, 4294901760
  %v5279 = vsub.f32 %v2814, %v5278
  %5280 = vmatmul.mubr.f32.gmra.mrb[0].mxu0 %v5279
  %v5281 = vpop.f32.mrb[0].mxu0
  %v5282 = vadd.f32 %v5053, %v5281
  %v5283 = vpop.f32.mrb[0].mxu0
  %v5284 = vand.u32 %v2847, 4294901760
  %v5285 = vsub.f32 %v2847, %v5284
  %5286 = vmatprep.mubr.f32.mxu0 %v5285
  %v5287 = vand.u32 %v2815, 4294901760
  %v5288 = vsub.f32 %v2815, %v5287
  %5289 = vmatmul.mubr.f32.gmra.mrb[0].mxu0 %v5288
  %v5290 = vpop.f32.mrb[0].mxu0
  %v5291 = vadd.f32 %v5060, %v5290
  %v5292 = vpop.f32.mrb[0].mxu0
  %v5293 = vand.u32 %v2848, 4294901760
  %v5294 = vsub.f32 %v2848, %v5293
  %5295 = vmatprep.mubr.f32.mxu0 %v5294
  %v5296 = vand.u32 %v2816, 4294901760
  %v5297 = vsub.f32 %v2816, %v5296
  %5298 = vmatmul.mubr.f32.gmra.mrb[0].mxu0 %v5297
  %v5299 = vpop.f32.mrb[0].mxu0
  %v5300 = vadd.f32 %v5067, %v5299
  %v5301 = vpop.f32.mrb[0].mxu0
  %v5302 = vand.u32 %v2849, 4294901760
  %v5303 = vsub.f32 %v2849, %v5302
  %5304 = vmatprep.mubr.f32.mxu0 %v5303
  %v5305 = vand.u32 %v2817, 4294901760
  %v5306 = vsub.f32 %v2817, %v5305
  %5307 = vmatmul.mubr.f32.gmra.mrb[0].mxu0 %v5306
  %v5308 = vpop.f32.mrb[0].mxu0
  %v5309 = vadd.f32 %v5074, %v5308
  %v5310 = vpop.f32.mrb[0].mxu0
  %v5311 = vand.u32 %v2850, 4294901760
  %v5312 = vsub.f32 %v2850, %v5311
  %5313 = vmatprep.mubr.f32.mxu0 %v5312
  %v5314 = vand.u32 %v2818, 4294901760
  %v5315 = vsub.f32 %v2818, %v5314
  %5316 = vmatmul.mubr.f32.gmra.mrb[0].mxu0 %v5315
  %v5317 = vpop.f32.mrb[0].mxu0
  %v5318 = vadd.f32 %v5081, %v5317
  %v5319 = vpop.f32.mrb[0].mxu0
  %5320 = vdwg.mxu0
  %5321 = vmatprep.subr.mxu0 0.0
  %v5322 = vand.u32 %v2634, 4294901760
  %5323 = vmatpush1.msra.mxu0 %v5322
  %5324 = vmatprep.subr.mxu0 0.0
  %v5325 = vand.u32 %v2635, 4294901760
  %5326 = vmatpush1.msra.mxu0 %v5325
  %5327 = vmatprep.subr.mxu0 0.0
  %v5328 = vand.u32 %v2636, 4294901760
  %5329 = vmatpush1.msra.mxu0 %v5328
  %5330 = vmatprep.subr.mxu0 0.0
  %v5331 = vand.u32 %v2637, 4294901760
  %5332 = vmatpush1.msra.mxu0 %v5331
  %5333 = vmatprep.subr.mxu0 0.0
  %v5334 = vand.u32 %v2638, 4294901760
  %5335 = vmatpush1.msra.mxu0 %v5334
  %5336 = vmatprep.subr.mxu0 0.0
  %v5337 = vand.u32 %v2639, 4294901760
  %5338 = vmatpush1.msra.mxu0 %v5337
  %5339 = vmatprep.subr.mxu0 0.0
  %v5340 = vand.u32 %v2640, 4294901760
  %5341 = vmatpush1.msra.mxu0 %v5340
  %5342 = vmatprep.subr.mxu0 0.0
  %v5343 = vand.u32 %v2641, 4294901760
  %5344 = vmatpush1.msra.mxu0 %v5343
  %5345 = vmatprep.subr.mxu0 0.0
  %v5346 = vand.u32 %v2642, 4294901760
  %5347 = vmatpush1.msra.mxu0 %v5346
  %5348 = vmatprep.subr.mxu0 0.0
  %v5349 = vand.u32 %v2643, 4294901760
  %5350 = vmatpush1.msra.mxu0 %v5349
  %5351 = vmatprep.subr.mxu0 0.0
  %v5352 = vand.u32 %v2644, 4294901760
  %5353 = vmatpush1.msra.mxu0 %v5352
  %5354 = vmatprep.subr.mxu0 0.0
  %v5355 = vand.u32 %v2645, 4294901760
  %5356 = vmatpush1.msra.mxu0 %v5355
  %5357 = vmatprep.subr.mxu0 0.0
  %v5358 = vand.u32 %v2646, 4294901760
  %5359 = vmatpush1.msra.mxu0 %v5358
  %5360 = vmatprep.subr.mxu0 0.0
  %v5361 = vand.u32 %v2647, 4294901760
  %5362 = vmatpush1.msra.mxu0 %v5361
  %5363 = vmatprep.subr.mxu0 0.0
  %v5364 = vand.u32 %v2648, 4294901760
  %5365 = vmatpush1.msra.mxu0 %v5364
  %5366 = vmatprep.subr.mxu0 0.0
  %v5367 = vand.u32 %v2649, 4294901760
  %5368 = vmatpush1.msra.mxu0 %v5367
  %5369 = vmatprep.subr.mxu0 0.0
  %v5370 = vand.u32 %v2650, 4294901760
  %5371 = vmatpush1.msra.mxu0 %v5370
  %5372 = vmatprep.subr.mxu0 0.0
  %v5373 = vand.u32 %v2651, 4294901760
  %5374 = vmatpush1.msra.mxu0 %v5373
  %5375 = vmatprep.subr.mxu0 0.0
  %v5376 = vand.u32 %v2652, 4294901760
  %5377 = vmatpush1.msra.mxu0 %v5376
  %5378 = vmatprep.subr.mxu0 0.0
  %v5379 = vand.u32 %v2653, 4294901760
  %5380 = vmatpush1.msra.mxu0 %v5379
  %5381 = vmatprep.subr.mxu0 0.0
  %v5382 = vand.u32 %v2654, 4294901760
  %5383 = vmatpush1.msra.mxu0 %v5382
  %5384 = vmatprep.subr.mxu0 0.0
  %v5385 = vand.u32 %v2655, 4294901760
  %5386 = vmatpush1.msra.mxu0 %v5385
  %5387 = vmatprep.subr.mxu0 0.0
  %v5388 = vand.u32 %v2656, 4294901760
  %5389 = vmatpush1.msra.mxu0 %v5388
  %5390 = vmatprep.subr.mxu0 0.0
  %v5391 = vand.u32 %v2657, 4294901760
  %5392 = vmatpush1.msra.mxu0 %v5391
  %5393 = vmatprep.subr.mxu0 0.0
  %v5394 = vand.u32 %v2658, 4294901760
  %5395 = vmatpush1.msra.mxu0 %v5394
  %5396 = vmatprep.subr.mxu0 0.0
  %v5397 = vand.u32 %v2659, 4294901760
  %5398 = vmatpush1.msra.mxu0 %v5397
  %5399 = vmatprep.subr.mxu0 0.0
  %v5400 = vand.u32 %v2660, 4294901760
  %5401 = vmatpush1.msra.mxu0 %v5400
  %5402 = vmatprep.subr.mxu0 0.0
  %v5403 = vand.u32 %v2661, 4294901760
  %5404 = vmatpush1.msra.mxu0 %v5403
  %5405 = vmatprep.subr.mxu0 0.0
  %v5406 = vand.u32 %v2662, 4294901760
  %5407 = vmatpush1.msra.mxu0 %v5406
  %5408 = vmatprep.subr.mxu0 0.0
  %v5409 = vand.u32 %v2663, 4294901760
  %5410 = vmatpush1.msra.mxu0 %v5409
  %5411 = vmatprep.subr.mxu0 0.0
  %v5412 = vand.u32 %v2664, 4294901760
  %5413 = vmatpush1.msra.mxu0 %v5412
  %5414 = vmatprep.subr.mxu0 0.0
  %v5415 = vand.u32 %v2665, 4294901760
  %5416 = vmatpush1.msra.mxu0 %v5415
  %v5417 = vand.u32 %v2839, 4294901760
  %v5418 = vsub.f32 %v2839, %v5417
  %v5419 = vand.u32 %v5418, 4294901760
  %5420 = vmatprep.mubr.f32.mxu0 %v5419
  %v5421 = vand.u32 %v2807, 4294901760
  %v5422 = vsub.f32 %v2807, %v5421
  %v5423 = vand.u32 %v5422, 4294901760
  %5424 = vmatmul.mubr.f32.gmra.mrb[0].mxu0 %v5423
  %v5425 = vpop.f32.mrb[0].mxu0
  %v5426 = vadd.f32 %v5219, %v5425
  %v5427 = vpop.f32.mrb[0].mxu0
  %v5428 = vand.u32 %v2840, 4294901760
  %v5429 = vsub.f32 %v2840, %v5428
  %v5430 = vand.u32 %v5429, 4294901760
  %5431 = vmatprep.mubr.f32.mxu0 %v5430
  %v5432 = vand.u32 %v2808, 4294901760
  %v5433 = vsub.f32 %v2808, %v5432
  %v5434 = vand.u32 %v5433, 4294901760
  %5435 = vmatmul.mubr.f32.gmra.mrb[0].mxu0 %v5434
  %v5436 = vpop.f32.mrb[0].mxu0
  %v5437 = vadd.f32 %v5228, %v5436
  %v5438 = vpop.f32.mrb[0].mxu0
  %v5439 = vand.u32 %v2841, 4294901760
  %v5440 = vsub.f32 %v2841, %v5439
  %v5441 = vand.u32 %v5440, 4294901760
  %5442 = vmatprep.mubr.f32.mxu0 %v5441
  %v5443 = vand.u32 %v2809, 4294901760
  %v5444 = vsub.f32 %v2809, %v5443
  %v5445 = vand.u32 %v5444, 4294901760
  %5446 = vmatmul.mubr.f32.gmra.mrb[0].mxu0 %v5445
  %v5447 = vpop.f32.mrb[0].mxu0
  %v5448 = vadd.f32 %v5237, %v5447
  %v5449 = vpop.f32.mrb[0].mxu0
  %v5450 = vand.u32 %v2842, 4294901760
  %v5451 = vsub.f32 %v2842, %v5450
  %v5452 = vand.u32 %v5451, 4294901760
  %5453 = vmatprep.mubr.f32.mxu0 %v5452
  %v5454 = vand.u32 %v2810, 4294901760
  %v5455 = vsub.f32 %v2810, %v5454
  %v5456 = vand.u32 %v5455, 4294901760
  %5457 = vmatmul.mubr.f32.gmra.mrb[0].mxu0 %v5456
  %v5458 = vpop.f32.mrb[0].mxu0
  %v5459 = vadd.f32 %v5246, %v5458
  %v5460 = vpop.f32.mrb[0].mxu0
  %v5461 = vand.u32 %v2843, 4294901760
  %v5462 = vsub.f32 %v2843, %v5461
  %v5463 = vand.u32 %v5462, 4294901760
  %5464 = vmatprep.mubr.f32.mxu0 %v5463
  %v5465 = vand.u32 %v2811, 4294901760
  %v5466 = vsub.f32 %v2811, %v5465
  %v5467 = vand.u32 %v5466, 4294901760
  %5468 = vmatmul.mubr.f32.gmra.mrb[0].mxu0 %v5467
  %v5469 = vpop.f32.mrb[0].mxu0
  %v5470 = vadd.f32 %v5255, %v5469
  %v5471 = vpop.f32.mrb[0].mxu0
  %v5472 = vand.u32 %v2844, 4294901760
  %v5473 = vsub.f32 %v2844, %v5472
  %v5474 = vand.u32 %v5473, 4294901760
  %5475 = vmatprep.mubr.f32.mxu0 %v5474
  %v5476 = vand.u32 %v2812, 4294901760
  %v5477 = vsub.f32 %v2812, %v5476
  %v5478 = vand.u32 %v5477, 4294901760
  %5479 = vmatmul.mubr.f32.gmra.mrb[0].mxu0 %v5478
  %v5480 = vpop.f32.mrb[0].mxu0
  %v5481 = vadd.f32 %v5264, %v5480
  %v5482 = vpop.f32.mrb[0].mxu0
  %v5483 = vand.u32 %v2845, 4294901760
  %v5484 = vsub.f32 %v2845, %v5483
  %v5485 = vand.u32 %v5484, 4294901760
  %5486 = vmatprep.mubr.f32.mxu0 %v5485
  %v5487 = vand.u32 %v2813, 4294901760
  %v5488 = vsub.f32 %v2813, %v5487
  %v5489 = vand.u32 %v5488, 4294901760
  %5490 = vmatmul.mubr.f32.gmra.mrb[0].mxu0 %v5489
  %v5491 = vpop.f32.mrb[0].mxu0
  %v5492 = vadd.f32 %v5273, %v5491
  %v5493 = vpop.f32.mrb[0].mxu0
  %v5494 = vand.u32 %v2846, 4294901760
  %v5495 = vsub.f32 %v2846, %v5494
  %v5496 = vand.u32 %v5495, 4294901760
  %5497 = vmatprep.mubr.f32.mxu0 %v5496
  %v5498 = vand.u32 %v2814, 4294901760
  %v5499 = vsub.f32 %v2814, %v5498
  %v5500 = vand.u32 %v5499, 4294901760
  %5501 = vmatmul.mubr.f32.gmra.mrb[0].mxu0 %v5500
  %v5502 = vpop.f32.mrb[0].mxu0
  %v5503 = vadd.f32 %v5282, %v5502
  %v5504 = vpop.f32.mrb[0].mxu0
  %v5505 = vand.u32 %v2847, 4294901760
  %v5506 = vsub.f32 %v2847, %v5505
  %v5507 = vand.u32 %v5506, 4294901760
  %5508 = vmatprep.mubr.f32.mxu0 %v5507
  %v5509 = vand.u32 %v2815, 4294901760
  %v5510 = vsub.f32 %v2815, %v5509
  %v5511 = vand.u32 %v5510, 4294901760
  %5512 = vmatmul.mubr.f32.gmra.mrb[0].mxu0 %v5511
  %v5513 = vpop.f32.mrb[0].mxu0
  %v5514 = vadd.f32 %v5291, %v5513
  %v5515 = vpop.f32.mrb[0].mxu0
  %v5516 = vand.u32 %v2848, 4294901760
  %v5517 = vsub.f32 %v2848, %v5516
  %v5518 = vand.u32 %v5517, 4294901760
  %5519 = vmatprep.mubr.f32.mxu0 %v5518
  %v5520 = vand.u32 %v2816, 4294901760
  %v5521 = vsub.f32 %v2816, %v5520
  %v5522 = vand.u32 %v5521, 4294901760
  %5523 = vmatmul.mubr.f32.gmra.mrb[0].mxu0 %v5522
  %v5524 = vpop.f32.mrb[0].mxu0
  %v5525 = vadd.f32 %v5300, %v5524
  %v5526 = vpop.f32.mrb[0].mxu0
  %v5527 = vand.u32 %v2849, 4294901760
  %v5528 = vsub.f32 %v2849, %v5527
  %v5529 = vand.u32 %v5528, 4294901760
  %5530 = vmatprep.mubr.f32.mxu0 %v5529
  %v5531 = vand.u32 %v2817, 4294901760
  %v5532 = vsub.f32 %v2817, %v5531
  %v5533 = vand.u32 %v5532, 4294901760
  %5534 = vmatmul.mubr.f32.gmra.mrb[0].mxu0 %v5533
  %v5535 = vpop.f32.mrb[0].mxu0
  %v5536 = vadd.f32 %v5309, %v5535
  %v5537 = vpop.f32.mrb[0].mxu0
  %v5538 = vand.u32 %v2850, 4294901760
  %v5539 = vsub.f32 %v2850, %v5538
  %v5540 = vand.u32 %v5539, 4294901760
  %5541 = vmatprep.mubr.f32.mxu0 %v5540
  %v5542 = vand.u32 %v2818, 4294901760
  %v5543 = vsub.f32 %v2818, %v5542
  %v5544 = vand.u32 %v5543, 4294901760
  %5545 = vmatmul.mubr.f32.gmra.mrb[0].mxu0 %v5544
  %v5546 = vpop.f32.mrb[0].mxu0
  %v5547 = vadd.f32 %v5318, %v5546
  %v5548 = vpop.f32.mrb[0].mxu0
  %5549 = vdwg.mxu0
  %5550 = vmatprep.subr.mxu0 0.0
  %v5551 = vand.u32 %v2634, 4294901760
  %v5552 = vsub.f32 %v2634, %v5551
  %v5553 = vand.u32 %v5552, 4294901760
  %5554 = vmatpush1.msra.mxu0 %v5553
  %5555 = vmatprep.subr.mxu0 0.0
  %v5556 = vand.u32 %v2635, 4294901760
  %v5557 = vsub.f32 %v2635, %v5556
  %v5558 = vand.u32 %v5557, 4294901760
  %5559 = vmatpush1.msra.mxu0 %v5558
  %5560 = vmatprep.subr.mxu0 0.0
  %v5561 = vand.u32 %v2636, 4294901760
  %v5562 = vsub.f32 %v2636, %v5561
  %v5563 = vand.u32 %v5562, 4294901760
  %5564 = vmatpush1.msra.mxu0 %v5563
  %5565 = vmatprep.subr.mxu0 0.0
  %v5566 = vand.u32 %v2637, 4294901760
  %v5567 = vsub.f32 %v2637, %v5566
  %v5568 = vand.u32 %v5567, 4294901760
  %5569 = vmatpush1.msra.mxu0 %v5568
  %5570 = vmatprep.subr.mxu0 0.0
  %v5571 = vand.u32 %v2638, 4294901760
  %v5572 = vsub.f32 %v2638, %v5571
  %v5573 = vand.u32 %v5572, 4294901760
  %5574 = vmatpush1.msra.mxu0 %v5573
  %5575 = vmatprep.subr.mxu0 0.0
  %v5576 = vand.u32 %v2639, 4294901760
  %v5577 = vsub.f32 %v2639, %v5576
  %v5578 = vand.u32 %v5577, 4294901760
  %5579 = vmatpush1.msra.mxu0 %v5578
  %5580 = vmatprep.subr.mxu0 0.0
  %v5581 = vand.u32 %v2640, 4294901760
  %v5582 = vsub.f32 %v2640, %v5581
  %v5583 = vand.u32 %v5582, 4294901760
  %5584 = vmatpush1.msra.mxu0 %v5583
  %5585 = vmatprep.subr.mxu0 0.0
  %v5586 = vand.u32 %v2641, 4294901760
  %v5587 = vsub.f32 %v2641, %v5586
  %v5588 = vand.u32 %v5587, 4294901760
  %5589 = vmatpush1.msra.mxu0 %v5588
  %5590 = vmatprep.subr.mxu0 0.0
  %v5591 = vand.u32 %v2642, 4294901760
  %v5592 = vsub.f32 %v2642, %v5591
  %v5593 = vand.u32 %v5592, 4294901760
  %5594 = vmatpush1.msra.mxu0 %v5593
  %5595 = vmatprep.subr.mxu0 0.0
  %v5596 = vand.u32 %v2643, 4294901760
  %v5597 = vsub.f32 %v2643, %v5596
  %v5598 = vand.u32 %v5597, 4294901760
  %5599 = vmatpush1.msra.mxu0 %v5598
  %5600 = vmatprep.subr.mxu0 0.0
  %v5601 = vand.u32 %v2644, 4294901760
  %v5602 = vsub.f32 %v2644, %v5601
  %v5603 = vand.u32 %v5602, 4294901760
  %5604 = vmatpush1.msra.mxu0 %v5603
  %5605 = vmatprep.subr.mxu0 0.0
  %v5606 = vand.u32 %v2645, 4294901760
  %v5607 = vsub.f32 %v2645, %v5606
  %v5608 = vand.u32 %v5607, 4294901760
  %5609 = vmatpush1.msra.mxu0 %v5608
  %5610 = vmatprep.subr.mxu0 0.0
  %v5611 = vand.u32 %v2646, 4294901760
  %v5612 = vsub.f32 %v2646, %v5611
  %v5613 = vand.u32 %v5612, 4294901760
  %5614 = vmatpush1.msra.mxu0 %v5613
  %5615 = vmatprep.subr.mxu0 0.0
  %v5616 = vand.u32 %v2647, 4294901760
  %v5617 = vsub.f32 %v2647, %v5616
  %v5618 = vand.u32 %v5617, 4294901760
  %5619 = vmatpush1.msra.mxu0 %v5618
  %5620 = vmatprep.subr.mxu0 0.0
  %v5621 = vand.u32 %v2648, 4294901760
  %v5622 = vsub.f32 %v2648, %v5621
  %v5623 = vand.u32 %v5622, 4294901760
  %5624 = vmatpush1.msra.mxu0 %v5623
  %5625 = vmatprep.subr.mxu0 0.0
  %v5626 = vand.u32 %v2649, 4294901760
  %v5627 = vsub.f32 %v2649, %v5626
  %v5628 = vand.u32 %v5627, 4294901760
  %5629 = vmatpush1.msra.mxu0 %v5628
  %5630 = vmatprep.subr.mxu0 0.0
  %v5631 = vand.u32 %v2650, 4294901760
  %v5632 = vsub.f32 %v2650, %v5631
  %v5633 = vand.u32 %v5632, 4294901760
  %5634 = vmatpush1.msra.mxu0 %v5633
  %5635 = vmatprep.subr.mxu0 0.0
  %v5636 = vand.u32 %v2651, 4294901760
  %v5637 = vsub.f32 %v2651, %v5636
  %v5638 = vand.u32 %v5637, 4294901760
  %5639 = vmatpush1.msra.mxu0 %v5638
  %5640 = vmatprep.subr.mxu0 0.0
  %v5641 = vand.u32 %v2652, 4294901760
  %v5642 = vsub.f32 %v2652, %v5641
  %v5643 = vand.u32 %v5642, 4294901760
  %5644 = vmatpush1.msra.mxu0 %v5643
  %5645 = vmatprep.subr.mxu0 0.0
  %v5646 = vand.u32 %v2653, 4294901760
  %v5647 = vsub.f32 %v2653, %v5646
  %v5648 = vand.u32 %v5647, 4294901760
  %5649 = vmatpush1.msra.mxu0 %v5648
  %5650 = vmatprep.subr.mxu0 0.0
  %v5651 = vand.u32 %v2654, 4294901760
  %v5652 = vsub.f32 %v2654, %v5651
  %v5653 = vand.u32 %v5652, 4294901760
  %5654 = vmatpush1.msra.mxu0 %v5653
  %5655 = vmatprep.subr.mxu0 0.0
  %v5656 = vand.u32 %v2655, 4294901760
  %v5657 = vsub.f32 %v2655, %v5656
  %v5658 = vand.u32 %v5657, 4294901760
  %5659 = vmatpush1.msra.mxu0 %v5658
  %5660 = vmatprep.subr.mxu0 0.0
  %v5661 = vand.u32 %v2656, 4294901760
  %v5662 = vsub.f32 %v2656, %v5661
  %v5663 = vand.u32 %v5662, 4294901760
  %5664 = vmatpush1.msra.mxu0 %v5663
  %5665 = vmatprep.subr.mxu0 0.0
  %v5666 = vand.u32 %v2657, 4294901760
  %v5667 = vsub.f32 %v2657, %v5666
  %v5668 = vand.u32 %v5667, 4294901760
  %5669 = vmatpush1.msra.mxu0 %v5668
  %5670 = vmatprep.subr.mxu0 0.0
  %v5671 = vand.u32 %v2658, 4294901760
  %v5672 = vsub.f32 %v2658, %v5671
  %v5673 = vand.u32 %v5672, 4294901760
  %5674 = vmatpush1.msra.mxu0 %v5673
  %5675 = vmatprep.subr.mxu0 0.0
  %v5676 = vand.u32 %v2659, 4294901760
  %v5677 = vsub.f32 %v2659, %v5676
  %v5678 = vand.u32 %v5677, 4294901760
  %5679 = vmatpush1.msra.mxu0 %v5678
  %5680 = vmatprep.subr.mxu0 0.0
  %v5681 = vand.u32 %v2660, 4294901760
  %v5682 = vsub.f32 %v2660, %v5681
  %v5683 = vand.u32 %v5682, 4294901760
  %5684 = vmatpush1.msra.mxu0 %v5683
  %5685 = vmatprep.subr.mxu0 0.0
  %v5686 = vand.u32 %v2661, 4294901760
  %v5687 = vsub.f32 %v2661, %v5686
  %v5688 = vand.u32 %v5687, 4294901760
  %5689 = vmatpush1.msra.mxu0 %v5688
  %5690 = vmatprep.subr.mxu0 0.0
  %v5691 = vand.u32 %v2662, 4294901760
  %v5692 = vsub.f32 %v2662, %v5691
  %v5693 = vand.u32 %v5692, 4294901760
  %5694 = vmatpush1.msra.mxu0 %v5693
  %5695 = vmatprep.subr.mxu0 0.0
  %v5696 = vand.u32 %v2663, 4294901760
  %v5697 = vsub.f32 %v2663, %v5696
  %v5698 = vand.u32 %v5697, 4294901760
  %5699 = vmatpush1.msra.mxu0 %v5698
  %5700 = vmatprep.subr.mxu0 0.0
  %v5701 = vand.u32 %v2664, 4294901760
  %v5702 = vsub.f32 %v2664, %v5701
  %v5703 = vand.u32 %v5702, 4294901760
  %5704 = vmatpush1.msra.mxu0 %v5703
  %5705 = vmatprep.subr.mxu0 0.0
  %v5706 = vand.u32 %v2665, 4294901760
  %v5707 = vsub.f32 %v2665, %v5706
  %v5708 = vand.u32 %v5707, 4294901760
  %5709 = vmatpush1.msra.mxu0 %v5708
  %v5710 = vand.u32 %v2839, 4294901760
  %5711 = vmatprep.mubr.f32.mxu0 %v5710
  %v5712 = vand.u32 %v2807, 4294901760
  %5713 = vmatmul.mubr.f32.gmra.mrb[0].mxu0 %v5712
  %v5714 = vpop.f32.mrb[0].mxu0
  %v5715 = vadd.f32 %v5426, %v5714
  %v5716 = vpop.f32.mrb[0].mxu0
  %v5717 = vand.u32 %v2840, 4294901760
  %5718 = vmatprep.mubr.f32.mxu0 %v5717
  %v5719 = vand.u32 %v2808, 4294901760
  %5720 = vmatmul.mubr.f32.gmra.mrb[0].mxu0 %v5719
  %v5721 = vpop.f32.mrb[0].mxu0
  %v5722 = vadd.f32 %v5437, %v5721
  %v5723 = vpop.f32.mrb[0].mxu0
  %v5724 = vand.u32 %v2841, 4294901760
  %5725 = vmatprep.mubr.f32.mxu0 %v5724
  %v5726 = vand.u32 %v2809, 4294901760
  %5727 = vmatmul.mubr.f32.gmra.mrb[0].mxu0 %v5726
  %v5728 = vpop.f32.mrb[0].mxu0
  %v5729 = vadd.f32 %v5448, %v5728
  %v5730 = vpop.f32.mrb[0].mxu0
  %v5731 = vand.u32 %v2842, 4294901760
  %5732 = vmatprep.mubr.f32.mxu0 %v5731
  %v5733 = vand.u32 %v2810, 4294901760
  %5734 = vmatmul.mubr.f32.gmra.mrb[0].mxu0 %v5733
  %v5735 = vpop.f32.mrb[0].mxu0
  %v5736 = vadd.f32 %v5459, %v5735
  %v5737 = vpop.f32.mrb[0].mxu0
  %v5738 = vand.u32 %v2843, 4294901760
  %5739 = vmatprep.mubr.f32.mxu0 %v5738
  %v5740 = vand.u32 %v2811, 4294901760
  %5741 = vmatmul.mubr.f32.gmra.mrb[0].mxu0 %v5740
  %v5742 = vpop.f32.mrb[0].mxu0
  %v5743 = vadd.f32 %v5470, %v5742
  %v5744 = vpop.f32.mrb[0].mxu0
  %v5745 = vand.u32 %v2844, 4294901760
  %5746 = vmatprep.mubr.f32.mxu0 %v5745
  %v5747 = vand.u32 %v2812, 4294901760
  %5748 = vmatmul.mubr.f32.gmra.mrb[0].mxu0 %v5747
  %v5749 = vpop.f32.mrb[0].mxu0
  %v5750 = vadd.f32 %v5481, %v5749
  %v5751 = vpop.f32.mrb[0].mxu0
  %v5752 = vand.u32 %v2845, 4294901760
  %5753 = vmatprep.mubr.f32.mxu0 %v5752
  %v5754 = vand.u32 %v2813, 4294901760
  %5755 = vmatmul.mubr.f32.gmra.mrb[0].mxu0 %v5754
  %v5756 = vpop.f32.mrb[0].mxu0
  %v5757 = vadd.f32 %v5492, %v5756
  %v5758 = vpop.f32.mrb[0].mxu0
  %v5759 = vand.u32 %v2846, 4294901760
  %5760 = vmatprep.mubr.f32.mxu0 %v5759
  %v5761 = vand.u32 %v2814, 4294901760
  %5762 = vmatmul.mubr.f32.gmra.mrb[0].mxu0 %v5761
  %v5763 = vpop.f32.mrb[0].mxu0
  %v5764 = vadd.f32 %v5503, %v5763
  %v5765 = vpop.f32.mrb[0].mxu0
  %v5766 = vand.u32 %v2847, 4294901760
  %5767 = vmatprep.mubr.f32.mxu0 %v5766
  %v5768 = vand.u32 %v2815, 4294901760
  %5769 = vmatmul.mubr.f32.gmra.mrb[0].mxu0 %v5768
  %v5770 = vpop.f32.mrb[0].mxu0
  %v5771 = vadd.f32 %v5514, %v5770
  %v5772 = vpop.f32.mrb[0].mxu0
  %v5773 = vand.u32 %v2848, 4294901760
  %5774 = vmatprep.mubr.f32.mxu0 %v5773
  %v5775 = vand.u32 %v2816, 4294901760
  %5776 = vmatmul.mubr.f32.gmra.mrb[0].mxu0 %v5775
  %v5777 = vpop.f32.mrb[0].mxu0
  %v5778 = vadd.f32 %v5525, %v5777
  %v5779 = vpop.f32.mrb[0].mxu0
  %v5780 = vand.u32 %v2849, 4294901760
  %5781 = vmatprep.mubr.f32.mxu0 %v5780
  %v5782 = vand.u32 %v2817, 4294901760
  %5783 = vmatmul.mubr.f32.gmra.mrb[0].mxu0 %v5782
  %v5784 = vpop.f32.mrb[0].mxu0
  %v5785 = vadd.f32 %v5536, %v5784
  %v5786 = vpop.f32.mrb[0].mxu0
  %v5787 = vand.u32 %v2850, 4294901760
  %5788 = vmatprep.mubr.f32.mxu0 %v5787
  %v5789 = vand.u32 %v2818, 4294901760
  %5790 = vmatmul.mubr.f32.gmra.mrb[0].mxu0 %v5789
  %v5791 = vpop.f32.mrb[0].mxu0
  %v5792 = vadd.f32 %v5547, %v5791
  %v5793 = vpop.f32.mrb[0].mxu0
  %5794 = vdwg.mxu0
  %5795 = vmatprep.subr.mxu0 0.0
  %v5796 = vand.u32 %v2634, 4294901760
  %5797 = vmatpush1.msra.mxu0 %v5796
  %5798 = vmatprep.subr.mxu0 0.0
  %v5799 = vand.u32 %v2635, 4294901760
  %5800 = vmatpush1.msra.mxu0 %v5799
  %5801 = vmatprep.subr.mxu0 0.0
  %v5802 = vand.u32 %v2636, 4294901760
  %5803 = vmatpush1.msra.mxu0 %v5802
  %5804 = vmatprep.subr.mxu0 0.0
  %v5805 = vand.u32 %v2637, 4294901760
  %5806 = vmatpush1.msra.mxu0 %v5805
  %5807 = vmatprep.subr.mxu0 0.0
  %v5808 = vand.u32 %v2638, 4294901760
  %5809 = vmatpush1.msra.mxu0 %v5808
  %5810 = vmatprep.subr.mxu0 0.0
  %v5811 = vand.u32 %v2639, 4294901760
  %5812 = vmatpush1.msra.mxu0 %v5811
  %5813 = vmatprep.subr.mxu0 0.0
  %v5814 = vand.u32 %v2640, 4294901760
  %5815 = vmatpush1.msra.mxu0 %v5814
  %5816 = vmatprep.subr.mxu0 0.0
  %v5817 = vand.u32 %v2641, 4294901760
  %5818 = vmatpush1.msra.mxu0 %v5817
  %5819 = vmatprep.subr.mxu0 0.0
  %v5820 = vand.u32 %v2642, 4294901760
  %5821 = vmatpush1.msra.mxu0 %v5820
  %5822 = vmatprep.subr.mxu0 0.0
  %v5823 = vand.u32 %v2643, 4294901760
  %5824 = vmatpush1.msra.mxu0 %v5823
  %5825 = vmatprep.subr.mxu0 0.0
  %v5826 = vand.u32 %v2644, 4294901760
  %5827 = vmatpush1.msra.mxu0 %v5826
  %5828 = vmatprep.subr.mxu0 0.0
  %v5829 = vand.u32 %v2645, 4294901760
  %5830 = vmatpush1.msra.mxu0 %v5829
  %5831 = vmatprep.subr.mxu0 0.0
  %v5832 = vand.u32 %v2646, 4294901760
  %5833 = vmatpush1.msra.mxu0 %v5832
  %5834 = vmatprep.subr.mxu0 0.0
  %v5835 = vand.u32 %v2647, 4294901760
  %5836 = vmatpush1.msra.mxu0 %v5835
  %5837 = vmatprep.subr.mxu0 0.0
  %v5838 = vand.u32 %v2648, 4294901760
  %5839 = vmatpush1.msra.mxu0 %v5838
  %5840 = vmatprep.subr.mxu0 0.0
  %v5841 = vand.u32 %v2649, 4294901760
  %5842 = vmatpush1.msra.mxu0 %v5841
  %5843 = vmatprep.subr.mxu0 0.0
  %v5844 = vand.u32 %v2650, 4294901760
  %5845 = vmatpush1.msra.mxu0 %v5844
  %5846 = vmatprep.subr.mxu0 0.0
  %v5847 = vand.u32 %v2651, 4294901760
  %5848 = vmatpush1.msra.mxu0 %v5847
  %5849 = vmatprep.subr.mxu0 0.0
  %v5850 = vand.u32 %v2652, 4294901760
  %5851 = vmatpush1.msra.mxu0 %v5850
  %5852 = vmatprep.subr.mxu0 0.0
  %v5853 = vand.u32 %v2653, 4294901760
  %5854 = vmatpush1.msra.mxu0 %v5853
  %5855 = vmatprep.subr.mxu0 0.0
  %v5856 = vand.u32 %v2654, 4294901760
  %5857 = vmatpush1.msra.mxu0 %v5856
  %5858 = vmatprep.subr.mxu0 0.0
  %v5859 = vand.u32 %v2655, 4294901760
  %5860 = vmatpush1.msra.mxu0 %v5859
  %5861 = vmatprep.subr.mxu0 0.0
  %v5862 = vand.u32 %v2656, 4294901760
  %5863 = vmatpush1.msra.mxu0 %v5862
  %5864 = vmatprep.subr.mxu0 0.0
  %v5865 = vand.u32 %v2657, 4294901760
  %5866 = vmatpush1.msra.mxu0 %v5865
  %5867 = vmatprep.subr.mxu0 0.0
  %v5868 = vand.u32 %v2658, 4294901760
  %5869 = vmatpush1.msra.mxu0 %v5868
  %5870 = vmatprep.subr.mxu0 0.0
  %v5871 = vand.u32 %v2659, 4294901760
  %5872 = vmatpush1.msra.mxu0 %v5871
  %5873 = vmatprep.subr.mxu0 0.0
  %v5874 = vand.u32 %v2660, 4294901760
  %5875 = vmatpush1.msra.mxu0 %v5874
  %5876 = vmatprep.subr.mxu0 0.0
  %v5877 = vand.u32 %v2661, 4294901760
  %5878 = vmatpush1.msra.mxu0 %v5877
  %5879 = vmatprep.subr.mxu0 0.0
  %v5880 = vand.u32 %v2662, 4294901760
  %5881 = vmatpush1.msra.mxu0 %v5880
  %5882 = vmatprep.subr.mxu0 0.0
  %v5883 = vand.u32 %v2663, 4294901760
  %5884 = vmatpush1.msra.mxu0 %v5883
  %5885 = vmatprep.subr.mxu0 0.0
  %v5886 = vand.u32 %v2664, 4294901760
  %5887 = vmatpush1.msra.mxu0 %v5886
  %5888 = vmatprep.subr.mxu0 0.0
  %v5889 = vand.u32 %v2665, 4294901760
  %5890 = vmatpush1.msra.mxu0 %v5889
  %v5891 = vand.u32 %v2839, 4294901760
  %5892 = vmatprep.mubr.f32.mxu0 %v5891
  %v5893 = vand.u32 %v2807, 4294901760
  %5894 = vmatmul.mubr.f32.gmra.mrb[0].mxu0 %v5893
  %v5895 = vpop.f32.mrb[0].mxu0
  %v5896 = vadd.f32 %v5715, %v5895
  %v5897 = vpop.f32.mrb[0].mxu0
  %v5898 = vand.u32 %v2840, 4294901760
  %5899 = vmatprep.mubr.f32.mxu0 %v5898
  %v5900 = vand.u32 %v2808, 4294901760
  %5901 = vmatmul.mubr.f32.gmra.mrb[0].mxu0 %v5900
  %v5902 = vpop.f32.mrb[0].mxu0
  %v5903 = vadd.f32 %v5722, %v5902
  %v5904 = vpop.f32.mrb[0].mxu0
  %v5905 = vand.u32 %v2841, 4294901760
  %5906 = vmatprep.mubr.f32.mxu0 %v5905
  %v5907 = vand.u32 %v2809, 4294901760
  %5908 = vmatmul.mubr.f32.gmra.mrb[0].mxu0 %v5907
  %v5909 = vpop.f32.mrb[0].mxu0
  %v5910 = vadd.f32 %v5729, %v5909
  %v5911 = vpop.f32.mrb[0].mxu0
  %v5912 = vand.u32 %v2842, 4294901760
  %5913 = vmatprep.mubr.f32.mxu0 %v5912
  %v5914 = vand.u32 %v2810, 4294901760
  %5915 = vmatmul.mubr.f32.gmra.mrb[0].mxu0 %v5914
  %v5916 = vpop.f32.mrb[0].mxu0
  %v5917 = vadd.f32 %v5736, %v5916
  %v5918 = vpop.f32.mrb[0].mxu0
  %v5919 = vand.u32 %v2843, 4294901760
  %5920 = vmatprep.mubr.f32.mxu0 %v5919
  %v5921 = vand.u32 %v2811, 4294901760
  %5922 = vmatmul.mubr.f32.gmra.mrb[0].mxu0 %v5921
  %v5923 = vpop.f32.mrb[0].mxu0
  %v5924 = vadd.f32 %v5743, %v5923
  %v5925 = vpop.f32.mrb[0].mxu0
  %v5926 = vand.u32 %v2844, 4294901760
  %5927 = vmatprep.mubr.f32.mxu0 %v5926
  %v5928 = vand.u32 %v2812, 4294901760
  %5929 = vmatmul.mubr.f32.gmra.mrb[0].mxu0 %v5928
  %v5930 = vpop.f32.mrb[0].mxu0
  %v5931 = vadd.f32 %v5750, %v5930
  %v5932 = vpop.f32.mrb[0].mxu0
  %v5933 = vand.u32 %v2845, 4294901760
  %5934 = vmatprep.mubr.f32.mxu0 %v5933
  %v5935 = vand.u32 %v2813, 4294901760
  %5936 = vmatmul.mubr.f32.gmra.mrb[0].mxu0 %v5935
  %v5937 = vpop.f32.mrb[0].mxu0
  %v5938 = vadd.f32 %v5757, %v5937
  %v5939 = vpop.f32.mrb[0].mxu0
  %v5940 = vand.u32 %v2846, 4294901760
  %5941 = vmatprep.mubr.f32.mxu0 %v5940
  %v5942 = vand.u32 %v2814, 4294901760
  %5943 = vmatmul.mubr.f32.gmra.mrb[0].mxu0 %v5942
  %v5944 = vpop.f32.mrb[0].mxu0
  %v5945 = vadd.f32 %v5764, %v5944
  %v5946 = vpop.f32.mrb[0].mxu0
  %v5947 = vand.u32 %v2847, 4294901760
  %5948 = vmatprep.mubr.f32.mxu0 %v5947
  %v5949 = vand.u32 %v2815, 4294901760
  %5950 = vmatmul.mubr.f32.gmra.mrb[0].mxu0 %v5949
  %v5951 = vpop.f32.mrb[0].mxu0
  %v5952 = vadd.f32 %v5771, %v5951
  %v5953 = vpop.f32.mrb[0].mxu0
  %v5954 = vand.u32 %v2848, 4294901760
  %5955 = vmatprep.mubr.f32.mxu0 %v5954
  %v5956 = vand.u32 %v2816, 4294901760
  %5957 = vmatmul.mubr.f32.gmra.mrb[0].mxu0 %v5956
  %v5958 = vpop.f32.mrb[0].mxu0
  %v5959 = vadd.f32 %v5778, %v5958
  %v5960 = vpop.f32.mrb[0].mxu0
  %v5961 = vand.u32 %v2849, 4294901760
  %5962 = vmatprep.mubr.f32.mxu0 %v5961
  %v5963 = vand.u32 %v2817, 4294901760
  %5964 = vmatmul.mubr.f32.gmra.mrb[0].mxu0 %v5963
  %v5965 = vpop.f32.mrb[0].mxu0
  %v5966 = vadd.f32 %v5785, %v5965
  %v5967 = vpop.f32.mrb[0].mxu0
  %v5968 = vand.u32 %v2850, 4294901760
  %5969 = vmatprep.mubr.f32.mxu0 %v5968
  %v5970 = vand.u32 %v2818, 4294901760
  %5971 = vmatmul.mubr.f32.gmra.mrb[0].mxu0 %v5970
  %v5972 = vpop.f32.mrb[0].mxu0
  %v5973 = vadd.f32 %v5792, %v5972
  %v5974 = vpop.f32.mrb[0].mxu0
  %5975 = vdwg.mxu0
  %5976 = vmatprep.subr.mxu0 0.0
  %v5977 = vand.u32 %v2666, 4294901760
  %5978 = vmatpush1.msra.mxu0 %v5977
  %5979 = vmatprep.subr.mxu0 0.0
  %v5980 = vand.u32 %v2667, 4294901760
  %5981 = vmatpush1.msra.mxu0 %v5980
  %5982 = vmatprep.subr.mxu0 0.0
  %v5983 = vand.u32 %v2668, 4294901760
  %5984 = vmatpush1.msra.mxu0 %v5983
  %5985 = vmatprep.subr.mxu0 0.0
  %v5986 = vand.u32 %v2669, 4294901760
  %5987 = vmatpush1.msra.mxu0 %v5986
  %5988 = vmatprep.subr.mxu0 0.0
  %v5989 = vand.u32 %v2670, 4294901760
  %5990 = vmatpush1.msra.mxu0 %v5989
  %5991 = vmatprep.subr.mxu0 0.0
  %v5992 = vand.u32 %v2671, 4294901760
  %5993 = vmatpush1.msra.mxu0 %v5992
  %5994 = vmatprep.subr.mxu0 0.0
  %v5995 = vand.u32 %v2672, 4294901760
  %5996 = vmatpush1.msra.mxu0 %v5995
  %5997 = vmatprep.subr.mxu0 0.0
  %v5998 = vand.u32 %v2673, 4294901760
  %5999 = vmatpush1.msra.mxu0 %v5998
  %6000 = vmatprep.subr.mxu0 0.0
  %v6001 = vand.u32 %v2674, 4294901760
  %6002 = vmatpush1.msra.mxu0 %v6001
  %6003 = vmatprep.subr.mxu0 0.0
  %v6004 = vand.u32 %v2675, 4294901760
  %6005 = vmatpush1.msra.mxu0 %v6004
  %6006 = vmatprep.subr.mxu0 0.0
  %v6007 = vand.u32 %v2676, 4294901760
  %6008 = vmatpush1.msra.mxu0 %v6007
  %6009 = vmatprep.subr.mxu0 0.0
  %v6010 = vand.u32 %v2677, 4294901760
  %6011 = vmatpush1.msra.mxu0 %v6010
  %6012 = vmatprep.subr.mxu0 0.0
  %v6013 = vand.u32 %v2678, 4294901760
  %6014 = vmatpush1.msra.mxu0 %v6013
  %6015 = vmatprep.subr.mxu0 0.0
  %v6016 = vand.u32 %v2679, 4294901760
  %6017 = vmatpush1.msra.mxu0 %v6016
  %6018 = vmatprep.subr.mxu0 0.0
  %v6019 = vand.u32 %v2680, 4294901760
  %6020 = vmatpush1.msra.mxu0 %v6019
  %6021 = vmatprep.subr.mxu0 0.0
  %v6022 = vand.u32 %v2681, 4294901760
  %6023 = vmatpush1.msra.mxu0 %v6022
  %6024 = vmatprep.subr.mxu0 0.0
  %v6025 = vand.u32 %v2682, 4294901760
  %6026 = vmatpush1.msra.mxu0 %v6025
  %6027 = vmatprep.subr.mxu0 0.0
  %v6028 = vand.u32 %v2683, 4294901760
  %6029 = vmatpush1.msra.mxu0 %v6028
  %6030 = vmatprep.subr.mxu0 0.0
  %v6031 = vand.u32 %v2684, 4294901760
  %6032 = vmatpush1.msra.mxu0 %v6031
  %6033 = vmatprep.subr.mxu0 0.0
  %v6034 = vand.u32 %v2685, 4294901760
  %6035 = vmatpush1.msra.mxu0 %v6034
  %6036 = vmatprep.subr.mxu0 0.0
  %v6037 = vand.u32 %v2686, 4294901760
  %6038 = vmatpush1.msra.mxu0 %v6037
  %6039 = vmatprep.subr.mxu0 0.0
  %v6040 = vand.u32 %v2687, 4294901760
  %6041 = vmatpush1.msra.mxu0 %v6040
  %6042 = vmatprep.subr.mxu0 0.0
  %v6043 = vand.u32 %v2688, 4294901760
  %6044 = vmatpush1.msra.mxu0 %v6043
  %6045 = vmatprep.subr.mxu0 0.0
  %v6046 = vand.u32 %v2689, 4294901760
  %6047 = vmatpush1.msra.mxu0 %v6046
  %6048 = vmatprep.subr.mxu0 0.0
  %v6049 = vand.u32 %v2690, 4294901760
  %6050 = vmatpush1.msra.mxu0 %v6049
  %6051 = vmatprep.subr.mxu0 0.0
  %v6052 = vand.u32 %v2691, 4294901760
  %6053 = vmatpush1.msra.mxu0 %v6052
  %6054 = vmatprep.subr.mxu0 0.0
  %v6055 = vand.u32 %v2692, 4294901760
  %6056 = vmatpush1.msra.mxu0 %v6055
  %6057 = vmatprep.subr.mxu0 0.0
  %v6058 = vand.u32 %v2693, 4294901760
  %6059 = vmatpush1.msra.mxu0 %v6058
  %6060 = vmatprep.subr.mxu0 0.0
  %v6061 = vand.u32 %v2694, 4294901760
  %6062 = vmatpush1.msra.mxu0 %v6061
  %6063 = vmatprep.subr.mxu0 0.0
  %v6064 = vand.u32 %v2695, 4294901760
  %6065 = vmatpush1.msra.mxu0 %v6064
  %6066 = vmatprep.subr.mxu0 0.0
  %v6067 = vand.u32 %v2696, 4294901760
  %6068 = vmatpush1.msra.mxu0 %v6067
  %6069 = vmatprep.subr.mxu0 0.0
  %v6070 = vand.u32 %v2697, 4294901760
  %6071 = vmatpush1.msra.mxu0 %v6070
  %v6072 = vand.u32 %v2903, 4294901760
  %v6073 = vsub.f32 %v2903, %v6072
  %v6074 = vand.u32 %v6073, 4294901760
  %v6075 = vsub.f32 %v6073, %v6074
  %v6076 = vand.u32 %v6075, 4294901760
  %6077 = vmatprep.mubr.f32.mxu0 %v6076
  %v6078 = vand.u32 %v2871, 4294901760
  %v6079 = vsub.f32 %v2871, %v6078
  %v6080 = vand.u32 %v6079, 4294901760
  %v6081 = vsub.f32 %v6079, %v6080
  %v6082 = vand.u32 %v6081, 4294901760
  %6083 = vmatmul.mubr.f32.gmra.mrb[0].mxu0 %v6082
  %v6084 = vpop.f32.mrb[0].mxu0
  %v6085 = vadd.f32 %v5896, %v6084
  %v6086 = vpop.f32.mrb[0].mxu0
  %v6087 = vand.u32 %v2904, 4294901760
  %v6088 = vsub.f32 %v2904, %v6087
  %v6089 = vand.u32 %v6088, 4294901760
  %v6090 = vsub.f32 %v6088, %v6089
  %v6091 = vand.u32 %v6090, 4294901760
  %6092 = vmatprep.mubr.f32.mxu0 %v6091
  %v6093 = vand.u32 %v2872, 4294901760
  %v6094 = vsub.f32 %v2872, %v6093
  %v6095 = vand.u32 %v6094, 4294901760
  %v6096 = vsub.f32 %v6094, %v6095
  %v6097 = vand.u32 %v6096, 4294901760
  %6098 = vmatmul.mubr.f32.gmra.mrb[0].mxu0 %v6097
  %v6099 = vpop.f32.mrb[0].mxu0
  %v6100 = vadd.f32 %v5903, %v6099
  %v6101 = vpop.f32.mrb[0].mxu0
  %v6102 = vand.u32 %v2905, 4294901760
  %v6103 = vsub.f32 %v2905, %v6102
  %v6104 = vand.u32 %v6103, 4294901760
  %v6105 = vsub.f32 %v6103, %v6104
  %v6106 = vand.u32 %v6105, 4294901760
  %6107 = vmatprep.mubr.f32.mxu0 %v6106
  %v6108 = vand.u32 %v2873, 4294901760
  %v6109 = vsub.f32 %v2873, %v6108
  %v6110 = vand.u32 %v6109, 4294901760
  %v6111 = vsub.f32 %v6109, %v6110
  %v6112 = vand.u32 %v6111, 4294901760
  %6113 = vmatmul.mubr.f32.gmra.mrb[0].mxu0 %v6112
  %v6114 = vpop.f32.mrb[0].mxu0
  %v6115 = vadd.f32 %v5910, %v6114
  %v6116 = vpop.f32.mrb[0].mxu0
  %v6117 = vand.u32 %v2906, 4294901760
  %v6118 = vsub.f32 %v2906, %v6117
  %v6119 = vand.u32 %v6118, 4294901760
  %v6120 = vsub.f32 %v6118, %v6119
  %v6121 = vand.u32 %v6120, 4294901760
  %6122 = vmatprep.mubr.f32.mxu0 %v6121
  %v6123 = vand.u32 %v2874, 4294901760
  %v6124 = vsub.f32 %v2874, %v6123
  %v6125 = vand.u32 %v6124, 4294901760
  %v6126 = vsub.f32 %v6124, %v6125
  %v6127 = vand.u32 %v6126, 4294901760
  %6128 = vmatmul.mubr.f32.gmra.mrb[0].mxu0 %v6127
  %v6129 = vpop.f32.mrb[0].mxu0
  %v6130 = vadd.f32 %v5917, %v6129
  %v6131 = vpop.f32.mrb[0].mxu0
  %v6132 = vand.u32 %v2907, 4294901760
  %v6133 = vsub.f32 %v2907, %v6132
  %v6134 = vand.u32 %v6133, 4294901760
  %v6135 = vsub.f32 %v6133, %v6134
  %v6136 = vand.u32 %v6135, 4294901760
  %6137 = vmatprep.mubr.f32.mxu0 %v6136
  %v6138 = vand.u32 %v2875, 4294901760
  %v6139 = vsub.f32 %v2875, %v6138
  %v6140 = vand.u32 %v6139, 4294901760
  %v6141 = vsub.f32 %v6139, %v6140
  %v6142 = vand.u32 %v6141, 4294901760
  %6143 = vmatmul.mubr.f32.gmra.mrb[0].mxu0 %v6142
  %v6144 = vpop.f32.mrb[0].mxu0
  %v6145 = vadd.f32 %v5924, %v6144
  %v6146 = vpop.f32.mrb[0].mxu0
  %v6147 = vand.u32 %v2908, 4294901760
  %v6148 = vsub.f32 %v2908, %v6147
  %v6149 = vand.u32 %v6148, 4294901760
  %v6150 = vsub.f32 %v6148, %v6149
  %v6151 = vand.u32 %v6150, 4294901760
  %6152 = vmatprep.mubr.f32.mxu0 %v6151
  %v6153 = vand.u32 %v2876, 4294901760
  %v6154 = vsub.f32 %v2876, %v6153
  %v6155 = vand.u32 %v6154, 4294901760
  %v6156 = vsub.f32 %v6154, %v6155
  %v6157 = vand.u32 %v6156, 4294901760
  %6158 = vmatmul.mubr.f32.gmra.mrb[0].mxu0 %v6157
  %v6159 = vpop.f32.mrb[0].mxu0
  %v6160 = vadd.f32 %v5931, %v6159
  %v6161 = vpop.f32.mrb[0].mxu0
  %v6162 = vand.u32 %v2909, 4294901760
  %v6163 = vsub.f32 %v2909, %v6162
  %v6164 = vand.u32 %v6163, 4294901760
  %v6165 = vsub.f32 %v6163, %v6164
  %v6166 = vand.u32 %v6165, 4294901760
  %6167 = vmatprep.mubr.f32.mxu0 %v6166
  %v6168 = vand.u32 %v2877, 4294901760
  %v6169 = vsub.f32 %v2877, %v6168
  %v6170 = vand.u32 %v6169, 4294901760
  %v6171 = vsub.f32 %v6169, %v6170
  %v6172 = vand.u32 %v6171, 4294901760
  %6173 = vmatmul.mubr.f32.gmra.mrb[0].mxu0 %v6172
  %v6174 = vpop.f32.mrb[0].mxu0
  %v6175 = vadd.f32 %v5938, %v6174
  %v6176 = vpop.f32.mrb[0].mxu0
  %v6177 = vand.u32 %v2910, 4294901760
  %v6178 = vsub.f32 %v2910, %v6177
  %v6179 = vand.u32 %v6178, 4294901760
  %v6180 = vsub.f32 %v6178, %v6179
  %v6181 = vand.u32 %v6180, 4294901760
  %6182 = vmatprep.mubr.f32.mxu0 %v6181
  %v6183 = vand.u32 %v2878, 4294901760
  %v6184 = vsub.f32 %v2878, %v6183
  %v6185 = vand.u32 %v6184, 4294901760
  %v6186 = vsub.f32 %v6184, %v6185
  %v6187 = vand.u32 %v6186, 4294901760
  %6188 = vmatmul.mubr.f32.gmra.mrb[0].mxu0 %v6187
  %v6189 = vpop.f32.mrb[0].mxu0
  %v6190 = vadd.f32 %v5945, %v6189
  %v6191 = vpop.f32.mrb[0].mxu0
  %v6192 = vand.u32 %v2911, 4294901760
  %v6193 = vsub.f32 %v2911, %v6192
  %v6194 = vand.u32 %v6193, 4294901760
  %v6195 = vsub.f32 %v6193, %v6194
  %v6196 = vand.u32 %v6195, 4294901760
  %6197 = vmatprep.mubr.f32.mxu0 %v6196
  %v6198 = vand.u32 %v2879, 4294901760
  %v6199 = vsub.f32 %v2879, %v6198
  %v6200 = vand.u32 %v6199, 4294901760
  %v6201 = vsub.f32 %v6199, %v6200
  %v6202 = vand.u32 %v6201, 4294901760
  %6203 = vmatmul.mubr.f32.gmra.mrb[0].mxu0 %v6202
  %v6204 = vpop.f32.mrb[0].mxu0
  %v6205 = vadd.f32 %v5952, %v6204
  %v6206 = vpop.f32.mrb[0].mxu0
  %v6207 = vand.u32 %v2912, 4294901760
  %v6208 = vsub.f32 %v2912, %v6207
  %v6209 = vand.u32 %v6208, 4294901760
  %v6210 = vsub.f32 %v6208, %v6209
  %v6211 = vand.u32 %v6210, 4294901760
  %6212 = vmatprep.mubr.f32.mxu0 %v6211
  %v6213 = vand.u32 %v2880, 4294901760
  %v6214 = vsub.f32 %v2880, %v6213
  %v6215 = vand.u32 %v6214, 4294901760
  %v6216 = vsub.f32 %v6214, %v6215
  %v6217 = vand.u32 %v6216, 4294901760
  %6218 = vmatmul.mubr.f32.gmra.mrb[0].mxu0 %v6217
  %v6219 = vpop.f32.mrb[0].mxu0
  %v6220 = vadd.f32 %v5959, %v6219
  %v6221 = vpop.f32.mrb[0].mxu0
  %v6222 = vand.u32 %v2913, 4294901760
  %v6223 = vsub.f32 %v2913, %v6222
  %v6224 = vand.u32 %v6223, 4294901760
  %v6225 = vsub.f32 %v6223, %v6224
  %v6226 = vand.u32 %v6225, 4294901760
  %6227 = vmatprep.mubr.f32.mxu0 %v6226
  %v6228 = vand.u32 %v2881, 4294901760
  %v6229 = vsub.f32 %v2881, %v6228
  %v6230 = vand.u32 %v6229, 4294901760
  %v6231 = vsub.f32 %v6229, %v6230
  %v6232 = vand.u32 %v6231, 4294901760
  %6233 = vmatmul.mubr.f32.gmra.mrb[0].mxu0 %v6232
  %v6234 = vpop.f32.mrb[0].mxu0
  %v6235 = vadd.f32 %v5966, %v6234
  %v6236 = vpop.f32.mrb[0].mxu0
  %v6237 = vand.u32 %v2914, 4294901760
  %v6238 = vsub.f32 %v2914, %v6237
  %v6239 = vand.u32 %v6238, 4294901760
  %v6240 = vsub.f32 %v6238, %v6239
  %v6241 = vand.u32 %v6240, 4294901760
  %6242 = vmatprep.mubr.f32.mxu0 %v6241
  %v6243 = vand.u32 %v2882, 4294901760
  %v6244 = vsub.f32 %v2882, %v6243
  %v6245 = vand.u32 %v6244, 4294901760
  %v6246 = vsub.f32 %v6244, %v6245
  %v6247 = vand.u32 %v6246, 4294901760
  %6248 = vmatmul.mubr.f32.gmra.mrb[0].mxu0 %v6247
  %v6249 = vpop.f32.mrb[0].mxu0
  %v6250 = vadd.f32 %v5973, %v6249
  %v6251 = vpop.f32.mrb[0].mxu0
  %6252 = vdwg.mxu0
  %6253 = vmatprep.subr.mxu0 0.0
  %v6254 = vand.u32 %v2666, 4294901760
  %v6255 = vsub.f32 %v2666, %v6254
  %v6256 = vand.u32 %v6255, 4294901760
  %v6257 = vsub.f32 %v6255, %v6256
  %v6258 = vand.u32 %v6257, 4294901760
  %6259 = vmatpush1.msra.mxu0 %v6258
  %6260 = vmatprep.subr.mxu0 0.0
  %v6261 = vand.u32 %v2667, 4294901760
  %v6262 = vsub.f32 %v2667, %v6261
  %v6263 = vand.u32 %v6262, 4294901760
  %v6264 = vsub.f32 %v6262, %v6263
  %v6265 = vand.u32 %v6264, 4294901760
  %6266 = vmatpush1.msra.mxu0 %v6265
  %6267 = vmatprep.subr.mxu0 0.0
  %v6268 = vand.u32 %v2668, 4294901760
  %v6269 = vsub.f32 %v2668, %v6268
  %v6270 = vand.u32 %v6269, 4294901760
  %v6271 = vsub.f32 %v6269, %v6270
  %v6272 = vand.u32 %v6271, 4294901760
  %6273 = vmatpush1.msra.mxu0 %v6272
  %6274 = vmatprep.subr.mxu0 0.0
  %v6275 = vand.u32 %v2669, 4294901760
  %v6276 = vsub.f32 %v2669, %v6275
  %v6277 = vand.u32 %v6276, 4294901760
  %v6278 = vsub.f32 %v6276, %v6277
  %v6279 = vand.u32 %v6278, 4294901760
  %6280 = vmatpush1.msra.mxu0 %v6279
  %6281 = vmatprep.subr.mxu0 0.0
  %v6282 = vand.u32 %v2670, 4294901760
  %v6283 = vsub.f32 %v2670, %v6282
  %v6284 = vand.u32 %v6283, 4294901760
  %v6285 = vsub.f32 %v6283, %v6284
  %v6286 = vand.u32 %v6285, 4294901760
  %6287 = vmatpush1.msra.mxu0 %v6286
  %6288 = vmatprep.subr.mxu0 0.0
  %v6289 = vand.u32 %v2671, 4294901760
  %v6290 = vsub.f32 %v2671, %v6289
  %v6291 = vand.u32 %v6290, 4294901760
  %v6292 = vsub.f32 %v6290, %v6291
  %v6293 = vand.u32 %v6292, 4294901760
  %6294 = vmatpush1.msra.mxu0 %v6293
  %6295 = vmatprep.subr.mxu0 0.0
  %v6296 = vand.u32 %v2672, 4294901760
  %v6297 = vsub.f32 %v2672, %v6296
  %v6298 = vand.u32 %v6297, 4294901760
  %v6299 = vsub.f32 %v6297, %v6298
  %v6300 = vand.u32 %v6299, 4294901760
  %6301 = vmatpush1.msra.mxu0 %v6300
  %6302 = vmatprep.subr.mxu0 0.0
  %v6303 = vand.u32 %v2673, 4294901760
  %v6304 = vsub.f32 %v2673, %v6303
  %v6305 = vand.u32 %v6304, 4294901760
  %v6306 = vsub.f32 %v6304, %v6305
  %v6307 = vand.u32 %v6306, 4294901760
  %6308 = vmatpush1.msra.mxu0 %v6307
  %6309 = vmatprep.subr.mxu0 0.0
  %v6310 = vand.u32 %v2674, 4294901760
  %v6311 = vsub.f32 %v2674, %v6310
  %v6312 = vand.u32 %v6311, 4294901760
  %v6313 = vsub.f32 %v6311, %v6312
  %v6314 = vand.u32 %v6313, 4294901760
  %6315 = vmatpush1.msra.mxu0 %v6314
  %6316 = vmatprep.subr.mxu0 0.0
  %v6317 = vand.u32 %v2675, 4294901760
  %v6318 = vsub.f32 %v2675, %v6317
  %v6319 = vand.u32 %v6318, 4294901760
  %v6320 = vsub.f32 %v6318, %v6319
  %v6321 = vand.u32 %v6320, 4294901760
  %6322 = vmatpush1.msra.mxu0 %v6321
  %6323 = vmatprep.subr.mxu0 0.0
  %v6324 = vand.u32 %v2676, 4294901760
  %v6325 = vsub.f32 %v2676, %v6324
  %v6326 = vand.u32 %v6325, 4294901760
  %v6327 = vsub.f32 %v6325, %v6326
  %v6328 = vand.u32 %v6327, 4294901760
  %6329 = vmatpush1.msra.mxu0 %v6328
  %6330 = vmatprep.subr.mxu0 0.0
  %v6331 = vand.u32 %v2677, 4294901760
  %v6332 = vsub.f32 %v2677, %v6331
  %v6333 = vand.u32 %v6332, 4294901760
  %v6334 = vsub.f32 %v6332, %v6333
  %v6335 = vand.u32 %v6334, 4294901760
  %6336 = vmatpush1.msra.mxu0 %v6335
  %6337 = vmatprep.subr.mxu0 0.0
  %v6338 = vand.u32 %v2678, 4294901760
  %v6339 = vsub.f32 %v2678, %v6338
  %v6340 = vand.u32 %v6339, 4294901760
  %v6341 = vsub.f32 %v6339, %v6340
  %v6342 = vand.u32 %v6341, 4294901760
  %6343 = vmatpush1.msra.mxu0 %v6342
  %6344 = vmatprep.subr.mxu0 0.0
  %v6345 = vand.u32 %v2679, 4294901760
  %v6346 = vsub.f32 %v2679, %v6345
  %v6347 = vand.u32 %v6346, 4294901760
  %v6348 = vsub.f32 %v6346, %v6347
  %v6349 = vand.u32 %v6348, 4294901760
  %6350 = vmatpush1.msra.mxu0 %v6349
  %6351 = vmatprep.subr.mxu0 0.0
  %v6352 = vand.u32 %v2680, 4294901760
  %v6353 = vsub.f32 %v2680, %v6352
  %v6354 = vand.u32 %v6353, 4294901760
  %v6355 = vsub.f32 %v6353, %v6354
  %v6356 = vand.u32 %v6355, 4294901760
  %6357 = vmatpush1.msra.mxu0 %v6356
  %6358 = vmatprep.subr.mxu0 0.0
  %v6359 = vand.u32 %v2681, 4294901760
  %v6360 = vsub.f32 %v2681, %v6359
  %v6361 = vand.u32 %v6360, 4294901760
  %v6362 = vsub.f32 %v6360, %v6361
  %v6363 = vand.u32 %v6362, 4294901760
  %6364 = vmatpush1.msra.mxu0 %v6363
  %6365 = vmatprep.subr.mxu0 0.0
  %v6366 = vand.u32 %v2682, 4294901760
  %v6367 = vsub.f32 %v2682, %v6366
  %v6368 = vand.u32 %v6367, 4294901760
  %v6369 = vsub.f32 %v6367, %v6368
  %v6370 = vand.u32 %v6369, 4294901760
  %6371 = vmatpush1.msra.mxu0 %v6370
  %6372 = vmatprep.subr.mxu0 0.0
  %v6373 = vand.u32 %v2683, 4294901760
  %v6374 = vsub.f32 %v2683, %v6373
  %v6375 = vand.u32 %v6374, 4294901760
  %v6376 = vsub.f32 %v6374, %v6375
  %v6377 = vand.u32 %v6376, 4294901760
  %6378 = vmatpush1.msra.mxu0 %v6377
  %6379 = vmatprep.subr.mxu0 0.0
  %v6380 = vand.u32 %v2684, 4294901760
  %v6381 = vsub.f32 %v2684, %v6380
  %v6382 = vand.u32 %v6381, 4294901760
  %v6383 = vsub.f32 %v6381, %v6382
  %v6384 = vand.u32 %v6383, 4294901760
  %6385 = vmatpush1.msra.mxu0 %v6384
  %6386 = vmatprep.subr.mxu0 0.0
  %v6387 = vand.u32 %v2685, 4294901760
  %v6388 = vsub.f32 %v2685, %v6387
  %v6389 = vand.u32 %v6388, 4294901760
  %v6390 = vsub.f32 %v6388, %v6389
  %v6391 = vand.u32 %v6390, 4294901760
  %6392 = vmatpush1.msra.mxu0 %v6391
  %6393 = vmatprep.subr.mxu0 0.0
  %v6394 = vand.u32 %v2686, 4294901760
  %v6395 = vsub.f32 %v2686, %v6394
  %v6396 = vand.u32 %v6395, 4294901760
  %v6397 = vsub.f32 %v6395, %v6396
  %v6398 = vand.u32 %v6397, 4294901760
  %6399 = vmatpush1.msra.mxu0 %v6398
  %6400 = vmatprep.subr.mxu0 0.0
  %v6401 = vand.u32 %v2687, 4294901760
  %v6402 = vsub.f32 %v2687, %v6401
  %v6403 = vand.u32 %v6402, 4294901760
  %v6404 = vsub.f32 %v6402, %v6403
  %v6405 = vand.u32 %v6404, 4294901760
  %6406 = vmatpush1.msra.mxu0 %v6405
  %6407 = vmatprep.subr.mxu0 0.0
  %v6408 = vand.u32 %v2688, 4294901760
  %v6409 = vsub.f32 %v2688, %v6408
  %v6410 = vand.u32 %v6409, 4294901760
  %v6411 = vsub.f32 %v6409, %v6410
  %v6412 = vand.u32 %v6411, 4294901760
  %6413 = vmatpush1.msra.mxu0 %v6412
  %6414 = vmatprep.subr.mxu0 0.0
  %v6415 = vand.u32 %v2689, 4294901760
  %v6416 = vsub.f32 %v2689, %v6415
  %v6417 = vand.u32 %v6416, 4294901760
  %v6418 = vsub.f32 %v6416, %v6417
  %v6419 = vand.u32 %v6418, 4294901760
  %6420 = vmatpush1.msra.mxu0 %v6419
  %6421 = vmatprep.subr.mxu0 0.0
  %v6422 = vand.u32 %v2690, 4294901760
  %v6423 = vsub.f32 %v2690, %v6422
  %v6424 = vand.u32 %v6423, 4294901760
  %v6425 = vsub.f32 %v6423, %v6424
  %v6426 = vand.u32 %v6425, 4294901760
  %6427 = vmatpush1.msra.mxu0 %v6426
  %6428 = vmatprep.subr.mxu0 0.0
  %v6429 = vand.u32 %v2691, 4294901760
  %v6430 = vsub.f32 %v2691, %v6429
  %v6431 = vand.u32 %v6430, 4294901760
  %v6432 = vsub.f32 %v6430, %v6431
  %v6433 = vand.u32 %v6432, 4294901760
  %6434 = vmatpush1.msra.mxu0 %v6433
  %6435 = vmatprep.subr.mxu0 0.0
  %v6436 = vand.u32 %v2692, 4294901760
  %v6437 = vsub.f32 %v2692, %v6436
  %v6438 = vand.u32 %v6437, 4294901760
  %v6439 = vsub.f32 %v6437, %v6438
  %v6440 = vand.u32 %v6439, 4294901760
  %6441 = vmatpush1.msra.mxu0 %v6440
  %6442 = vmatprep.subr.mxu0 0.0
  %v6443 = vand.u32 %v2693, 4294901760
  %v6444 = vsub.f32 %v2693, %v6443
  %v6445 = vand.u32 %v6444, 4294901760
  %v6446 = vsub.f32 %v6444, %v6445
  %v6447 = vand.u32 %v6446, 4294901760
  %6448 = vmatpush1.msra.mxu0 %v6447
  %6449 = vmatprep.subr.mxu0 0.0
  %v6450 = vand.u32 %v2694, 4294901760
  %v6451 = vsub.f32 %v2694, %v6450
  %v6452 = vand.u32 %v6451, 4294901760
  %v6453 = vsub.f32 %v6451, %v6452
  %v6454 = vand.u32 %v6453, 4294901760
  %6455 = vmatpush1.msra.mxu0 %v6454
  %6456 = vmatprep.subr.mxu0 0.0
  %v6457 = vand.u32 %v2695, 4294901760
  %v6458 = vsub.f32 %v2695, %v6457
  %v6459 = vand.u32 %v6458, 4294901760
  %v6460 = vsub.f32 %v6458, %v6459
  %v6461 = vand.u32 %v6460, 4294901760
  %6462 = vmatpush1.msra.mxu0 %v6461
  %6463 = vmatprep.subr.mxu0 0.0
  %v6464 = vand.u32 %v2696, 4294901760
  %v6465 = vsub.f32 %v2696, %v6464
  %v6466 = vand.u32 %v6465, 4294901760
  %v6467 = vsub.f32 %v6465, %v6466
  %v6468 = vand.u32 %v6467, 4294901760
  %6469 = vmatpush1.msra.mxu0 %v6468
  %6470 = vmatprep.subr.mxu0 0.0
  %v6471 = vand.u32 %v2697, 4294901760
  %v6472 = vsub.f32 %v2697, %v6471
  %v6473 = vand.u32 %v6472, 4294901760
  %v6474 = vsub.f32 %v6472, %v6473
  %v6475 = vand.u32 %v6474, 4294901760
  %6476 = vmatpush1.msra.mxu0 %v6475
  %v6477 = vand.u32 %v2903, 4294901760
  %6478 = vmatprep.mubr.f32.mxu0 %v6477
  %v6479 = vand.u32 %v2871, 4294901760
  %6480 = vmatmul.mubr.f32.gmra.mrb[0].mxu0 %v6479
  %v6481 = vpop.f32.mrb[0].mxu0
  %v6482 = vadd.f32 %v6085, %v6481
  %v6483 = vpop.f32.mrb[0].mxu0
  %v6484 = vand.u32 %v2904, 4294901760
  %6485 = vmatprep.mubr.f32.mxu0 %v6484
  %v6486 = vand.u32 %v2872, 4294901760
  %6487 = vmatmul.mubr.f32.gmra.mrb[0].mxu0 %v6486
  %v6488 = vpop.f32.mrb[0].mxu0
  %v6489 = vadd.f32 %v6100, %v6488
  %v6490 = vpop.f32.mrb[0].mxu0
  %v6491 = vand.u32 %v2905, 4294901760
  %6492 = vmatprep.mubr.f32.mxu0 %v6491
  %v6493 = vand.u32 %v2873, 4294901760
  %6494 = vmatmul.mubr.f32.gmra.mrb[0].mxu0 %v6493
  %v6495 = vpop.f32.mrb[0].mxu0
  %v6496 = vadd.f32 %v6115, %v6495
  %v6497 = vpop.f32.mrb[0].mxu0
  %v6498 = vand.u32 %v2906, 4294901760
  %6499 = vmatprep.mubr.f32.mxu0 %v6498
  %v6500 = vand.u32 %v2874, 4294901760
  %6501 = vmatmul.mubr.f32.gmra.mrb[0].mxu0 %v6500
  %v6502 = vpop.f32.mrb[0].mxu0
  %v6503 = vadd.f32 %v6130, %v6502
  %v6504 = vpop.f32.mrb[0].mxu0
  %v6505 = vand.u32 %v2907, 4294901760
  %6506 = vmatprep.mubr.f32.mxu0 %v6505
  %v6507 = vand.u32 %v2875, 4294901760
  %6508 = vmatmul.mubr.f32.gmra.mrb[0].mxu0 %v6507
  %v6509 = vpop.f32.mrb[0].mxu0
  %v6510 = vadd.f32 %v6145, %v6509
  %v6511 = vpop.f32.mrb[0].mxu0
  %v6512 = vand.u32 %v2908, 4294901760
  %6513 = vmatprep.mubr.f32.mxu0 %v6512
  %v6514 = vand.u32 %v2876, 4294901760
  %6515 = vmatmul.mubr.f32.gmra.mrb[0].mxu0 %v6514
  %v6516 = vpop.f32.mrb[0].mxu0
  %v6517 = vadd.f32 %v6160, %v6516
  %v6518 = vpop.f32.mrb[0].mxu0
  %v6519 = vand.u32 %v2909, 4294901760
  %6520 = vmatprep.mubr.f32.mxu0 %v6519
  %v6521 = vand.u32 %v2877, 4294901760
  %6522 = vmatmul.mubr.f32.gmra.mrb[0].mxu0 %v6521
  %v6523 = vpop.f32.mrb[0].mxu0
  %v6524 = vadd.f32 %v6175, %v6523
  %v6525 = vpop.f32.mrb[0].mxu0
  %v6526 = vand.u32 %v2910, 4294901760
  %6527 = vmatprep.mubr.f32.mxu0 %v6526
  %v6528 = vand.u32 %v2878, 4294901760
  %6529 = vmatmul.mubr.f32.gmra.mrb[0].mxu0 %v6528
  %v6530 = vpop.f32.mrb[0].mxu0
  %v6531 = vadd.f32 %v6190, %v6530
  %v6532 = vpop.f32.mrb[0].mxu0
  %v6533 = vand.u32 %v2911, 4294901760
  %6534 = vmatprep.mubr.f32.mxu0 %v6533
  %v6535 = vand.u32 %v2879, 4294901760
  %6536 = vmatmul.mubr.f32.gmra.mrb[0].mxu0 %v6535
  %v6537 = vpop.f32.mrb[0].mxu0
  %v6538 = vadd.f32 %v6205, %v6537
  %v6539 = vpop.f32.mrb[0].mxu0
  %v6540 = vand.u32 %v2912, 4294901760
  %6541 = vmatprep.mubr.f32.mxu0 %v6540
  %v6542 = vand.u32 %v2880, 4294901760
  %6543 = vmatmul.mubr.f32.gmra.mrb[0].mxu0 %v6542
  %v6544 = vpop.f32.mrb[0].mxu0
  %v6545 = vadd.f32 %v6220, %v6544
  %v6546 = vpop.f32.mrb[0].mxu0
  %v6547 = vand.u32 %v2913, 4294901760
  %6548 = vmatprep.mubr.f32.mxu0 %v6547
  %v6549 = vand.u32 %v2881, 4294901760
  %6550 = vmatmul.mubr.f32.gmra.mrb[0].mxu0 %v6549
  %v6551 = vpop.f32.mrb[0].mxu0
  %v6552 = vadd.f32 %v6235, %v6551
  %v6553 = vpop.f32.mrb[0].mxu0
  %v6554 = vand.u32 %v2914, 4294901760
  %6555 = vmatprep.mubr.f32.mxu0 %v6554
  %v6556 = vand.u32 %v2882, 4294901760
  %6557 = vmatmul.mubr.f32.gmra.mrb[0].mxu0 %v6556
  %v6558 = vpop.f32.mrb[0].mxu0
  %v6559 = vadd.f32 %v6250, %v6558
  %v6560 = vpop.f32.mrb[0].mxu0
  %6561 = vdwg.mxu0
  %6562 = vmatprep.subr.mxu0 0.0
  %v6563 = vand.u32 %v2666, 4294901760
  %v6564 = vsub.f32 %v2666, %v6563
  %6565 = vmatpush1.msra.mxu0 %v6564
  %6566 = vmatprep.subr.mxu0 0.0
  %v6567 = vand.u32 %v2667, 4294901760
  %v6568 = vsub.f32 %v2667, %v6567
  %6569 = vmatpush1.msra.mxu0 %v6568
  %6570 = vmatprep.subr.mxu0 0.0
  %v6571 = vand.u32 %v2668, 4294901760
  %v6572 = vsub.f32 %v2668, %v6571
  %6573 = vmatpush1.msra.mxu0 %v6572
  %6574 = vmatprep.subr.mxu0 0.0
  %v6575 = vand.u32 %v2669, 4294901760
  %v6576 = vsub.f32 %v2669, %v6575
  %6577 = vmatpush1.msra.mxu0 %v6576
  %6578 = vmatprep.subr.mxu0 0.0
  %v6579 = vand.u32 %v2670, 4294901760
  %v6580 = vsub.f32 %v2670, %v6579
  %6581 = vmatpush1.msra.mxu0 %v6580
  %6582 = vmatprep.subr.mxu0 0.0
  %v6583 = vand.u32 %v2671, 4294901760
  %v6584 = vsub.f32 %v2671, %v6583
  %6585 = vmatpush1.msra.mxu0 %v6584
  %6586 = vmatprep.subr.mxu0 0.0
  %v6587 = vand.u32 %v2672, 4294901760
  %v6588 = vsub.f32 %v2672, %v6587
  %6589 = vmatpush1.msra.mxu0 %v6588
  %6590 = vmatprep.subr.mxu0 0.0
  %v6591 = vand.u32 %v2673, 4294901760
  %v6592 = vsub.f32 %v2673, %v6591
  %6593 = vmatpush1.msra.mxu0 %v6592
  %6594 = vmatprep.subr.mxu0 0.0
  %v6595 = vand.u32 %v2674, 4294901760
  %v6596 = vsub.f32 %v2674, %v6595
  %6597 = vmatpush1.msra.mxu0 %v6596
  %6598 = vmatprep.subr.mxu0 0.0
  %v6599 = vand.u32 %v2675, 4294901760
  %v6600 = vsub.f32 %v2675, %v6599
  %6601 = vmatpush1.msra.mxu0 %v6600
  %6602 = vmatprep.subr.mxu0 0.0
  %v6603 = vand.u32 %v2676, 4294901760
  %v6604 = vsub.f32 %v2676, %v6603
  %6605 = vmatpush1.msra.mxu0 %v6604
  %6606 = vmatprep.subr.mxu0 0.0
  %v6607 = vand.u32 %v2677, 4294901760
  %v6608 = vsub.f32 %v2677, %v6607
  %6609 = vmatpush1.msra.mxu0 %v6608
  %6610 = vmatprep.subr.mxu0 0.0
  %v6611 = vand.u32 %v2678, 4294901760
  %v6612 = vsub.f32 %v2678, %v6611
  %6613 = vmatpush1.msra.mxu0 %v6612
  %6614 = vmatprep.subr.mxu0 0.0
  %v6615 = vand.u32 %v2679, 4294901760
  %v6616 = vsub.f32 %v2679, %v6615
  %6617 = vmatpush1.msra.mxu0 %v6616
  %6618 = vmatprep.subr.mxu0 0.0
  %v6619 = vand.u32 %v2680, 4294901760
  %v6620 = vsub.f32 %v2680, %v6619
  %6621 = vmatpush1.msra.mxu0 %v6620
  %6622 = vmatprep.subr.mxu0 0.0
  %v6623 = vand.u32 %v2681, 4294901760
  %v6624 = vsub.f32 %v2681, %v6623
  %6625 = vmatpush1.msra.mxu0 %v6624
  %6626 = vmatprep.subr.mxu0 0.0
  %v6627 = vand.u32 %v2682, 4294901760
  %v6628 = vsub.f32 %v2682, %v6627
  %6629 = vmatpush1.msra.mxu0 %v6628
  %6630 = vmatprep.subr.mxu0 0.0
  %v6631 = vand.u32 %v2683, 4294901760
  %v6632 = vsub.f32 %v2683, %v6631
  %6633 = vmatpush1.msra.mxu0 %v6632
  %6634 = vmatprep.subr.mxu0 0.0
  %v6635 = vand.u32 %v2684, 4294901760
  %v6636 = vsub.f32 %v2684, %v6635
  %6637 = vmatpush1.msra.mxu0 %v6636
  %6638 = vmatprep.subr.mxu0 0.0
  %v6639 = vand.u32 %v2685, 4294901760
  %v6640 = vsub.f32 %v2685, %v6639
  %6641 = vmatpush1.msra.mxu0 %v6640
  %6642 = vmatprep.subr.mxu0 0.0
  %v6643 = vand.u32 %v2686, 4294901760
  %v6644 = vsub.f32 %v2686, %v6643
  %6645 = vmatpush1.msra.mxu0 %v6644
  %6646 = vmatprep.subr.mxu0 0.0
  %v6647 = vand.u32 %v2687, 4294901760
  %v6648 = vsub.f32 %v2687, %v6647
  %6649 = vmatpush1.msra.mxu0 %v6648
  %6650 = vmatprep.subr.mxu0 0.0
  %v6651 = vand.u32 %v2688, 4294901760
  %v6652 = vsub.f32 %v2688, %v6651
  %6653 = vmatpush1.msra.mxu0 %v6652
  %6654 = vmatprep.subr.mxu0 0.0
  %v6655 = vand.u32 %v2689, 4294901760
  %v6656 = vsub.f32 %v2689, %v6655
  %6657 = vmatpush1.msra.mxu0 %v6656
  %6658 = vmatprep.subr.mxu0 0.0
  %v6659 = vand.u32 %v2690, 4294901760
  %v6660 = vsub.f32 %v2690, %v6659
  %6661 = vmatpush1.msra.mxu0 %v6660
  %6662 = vmatprep.subr.mxu0 0.0
  %v6663 = vand.u32 %v2691, 4294901760
  %v6664 = vsub.f32 %v2691, %v6663
  %6665 = vmatpush1.msra.mxu0 %v6664
  %6666 = vmatprep.subr.mxu0 0.0
  %v6667 = vand.u32 %v2692, 4294901760
  %v6668 = vsub.f32 %v2692, %v6667
  %6669 = vmatpush1.msra.mxu0 %v6668
  %6670 = vmatprep.subr.mxu0 0.0
  %v6671 = vand.u32 %v2693, 4294901760
  %v6672 = vsub.f32 %v2693, %v6671
  %6673 = vmatpush1.msra.mxu0 %v6672
  %6674 = vmatprep.subr.mxu0 0.0
  %v6675 = vand.u32 %v2694, 4294901760
  %v6676 = vsub.f32 %v2694, %v6675
  %6677 = vmatpush1.msra.mxu0 %v6676
  %6678 = vmatprep.subr.mxu0 0.0
  %v6679 = vand.u32 %v2695, 4294901760
  %v6680 = vsub.f32 %v2695, %v6679
  %6681 = vmatpush1.msra.mxu0 %v6680
  %6682 = vmatprep.subr.mxu0 0.0
  %v6683 = vand.u32 %v2696, 4294901760
  %v6684 = vsub.f32 %v2696, %v6683
  %6685 = vmatpush1.msra.mxu0 %v6684
  %6686 = vmatprep.subr.mxu0 0.0
  %v6687 = vand.u32 %v2697, 4294901760
  %v6688 = vsub.f32 %v2697, %v6687
  %6689 = vmatpush1.msra.mxu0 %v6688
  %v6690 = vand.u32 %v2903, 4294901760
  %v6691 = vsub.f32 %v2903, %v6690
  %6692 = vmatprep.mubr.f32.mxu0 %v6691
  %v6693 = vand.u32 %v2871, 4294901760
  %v6694 = vsub.f32 %v2871, %v6693
  %6695 = vmatmul.mubr.f32.gmra.mrb[0].mxu0 %v6694
  %v6696 = vpop.f32.mrb[0].mxu0
  %v6697 = vadd.f32 %v6482, %v6696
  %v6698 = vpop.f32.mrb[0].mxu0
  %v6699 = vand.u32 %v2904, 4294901760
  %v6700 = vsub.f32 %v2904, %v6699
  %6701 = vmatprep.mubr.f32.mxu0 %v6700
  %v6702 = vand.u32 %v2872, 4294901760
  %v6703 = vsub.f32 %v2872, %v6702
  %6704 = vmatmul.mubr.f32.gmra.mrb[0].mxu0 %v6703
  %v6705 = vpop.f32.mrb[0].mxu0
  %v6706 = vadd.f32 %v6489, %v6705
  %v6707 = vpop.f32.mrb[0].mxu0
  %v6708 = vand.u32 %v2905, 4294901760
  %v6709 = vsub.f32 %v2905, %v6708
  %6710 = vmatprep.mubr.f32.mxu0 %v6709
  %v6711 = vand.u32 %v2873, 4294901760
  %v6712 = vsub.f32 %v2873, %v6711
  %6713 = vmatmul.mubr.f32.gmra.mrb[0].mxu0 %v6712
  %v6714 = vpop.f32.mrb[0].mxu0
  %v6715 = vadd.f32 %v6496, %v6714
  %v6716 = vpop.f32.mrb[0].mxu0
  %v6717 = vand.u32 %v2906, 4294901760
  %v6718 = vsub.f32 %v2906, %v6717
  %6719 = vmatprep.mubr.f32.mxu0 %v6718
  %v6720 = vand.u32 %v2874, 4294901760
  %v6721 = vsub.f32 %v2874, %v6720
  %6722 = vmatmul.mubr.f32.gmra.mrb[0].mxu0 %v6721
  %v6723 = vpop.f32.mrb[0].mxu0
  %v6724 = vadd.f32 %v6503, %v6723
  %v6725 = vpop.f32.mrb[0].mxu0
  %v6726 = vand.u32 %v2907, 4294901760
  %v6727 = vsub.f32 %v2907, %v6726
  %6728 = vmatprep.mubr.f32.mxu0 %v6727
  %v6729 = vand.u32 %v2875, 4294901760
  %v6730 = vsub.f32 %v2875, %v6729
  %6731 = vmatmul.mubr.f32.gmra.mrb[0].mxu0 %v6730
  %v6732 = vpop.f32.mrb[0].mxu0
  %v6733 = vadd.f32 %v6510, %v6732
  %v6734 = vpop.f32.mrb[0].mxu0
  %v6735 = vand.u32 %v2908, 4294901760
  %v6736 = vsub.f32 %v2908, %v6735
  %6737 = vmatprep.mubr.f32.mxu0 %v6736
  %v6738 = vand.u32 %v2876, 4294901760
  %v6739 = vsub.f32 %v2876, %v6738
  %6740 = vmatmul.mubr.f32.gmra.mrb[0].mxu0 %v6739
  %v6741 = vpop.f32.mrb[0].mxu0
  %v6742 = vadd.f32 %v6517, %v6741
  %v6743 = vpop.f32.mrb[0].mxu0
  %v6744 = vand.u32 %v2909, 4294901760
  %v6745 = vsub.f32 %v2909, %v6744
  %6746 = vmatprep.mubr.f32.mxu0 %v6745
  %v6747 = vand.u32 %v2877, 4294901760
  %v6748 = vsub.f32 %v2877, %v6747
  %6749 = vmatmul.mubr.f32.gmra.mrb[0].mxu0 %v6748
  %v6750 = vpop.f32.mrb[0].mxu0
  %v6751 = vadd.f32 %v6524, %v6750
  %v6752 = vpop.f32.mrb[0].mxu0
  %v6753 = vand.u32 %v2910, 4294901760
  %v6754 = vsub.f32 %v2910, %v6753
  %6755 = vmatprep.mubr.f32.mxu0 %v6754
  %v6756 = vand.u32 %v2878, 4294901760
  %v6757 = vsub.f32 %v2878, %v6756
  %6758 = vmatmul.mubr.f32.gmra.mrb[0].mxu0 %v6757
  %v6759 = vpop.f32.mrb[0].mxu0
  %v6760 = vadd.f32 %v6531, %v6759
  %v6761 = vpop.f32.mrb[0].mxu0
  %v6762 = vand.u32 %v2911, 4294901760
  %v6763 = vsub.f32 %v2911, %v6762
  %6764 = vmatprep.mubr.f32.mxu0 %v6763
  %v6765 = vand.u32 %v2879, 4294901760
  %v6766 = vsub.f32 %v2879, %v6765
  %6767 = vmatmul.mubr.f32.gmra.mrb[0].mxu0 %v6766
  %v6768 = vpop.f32.mrb[0].mxu0
  %v6769 = vadd.f32 %v6538, %v6768
  %v6770 = vpop.f32.mrb[0].mxu0
  %v6771 = vand.u32 %v2912, 4294901760
  %v6772 = vsub.f32 %v2912, %v6771
  %6773 = vmatprep.mubr.f32.mxu0 %v6772
  %v6774 = vand.u32 %v2880, 4294901760
  %v6775 = vsub.f32 %v2880, %v6774
  %6776 = vmatmul.mubr.f32.gmra.mrb[0].mxu0 %v6775
  %v6777 = vpop.f32.mrb[0].mxu0
  %v6778 = vadd.f32 %v6545, %v6777
  %v6779 = vpop.f32.mrb[0].mxu0
  %v6780 = vand.u32 %v2913, 4294901760
  %v6781 = vsub.f32 %v2913, %v6780
  %6782 = vmatprep.mubr.f32.mxu0 %v6781
  %v6783 = vand.u32 %v2881, 4294901760
  %v6784 = vsub.f32 %v2881, %v6783
  %6785 = vmatmul.mubr.f32.gmra.mrb[0].mxu0 %v6784
  %v6786 = vpop.f32.mrb[0].mxu0
  %v6787 = vadd.f32 %v6552, %v6786
  %v6788 = vpop.f32.mrb[0].mxu0
  %v6789 = vand.u32 %v2914, 4294901760
  %v6790 = vsub.f32 %v2914, %v6789
  %6791 = vmatprep.mubr.f32.mxu0 %v6790
  %v6792 = vand.u32 %v2882, 4294901760
  %v6793 = vsub.f32 %v2882, %v6792
  %6794 = vmatmul.mubr.f32.gmra.mrb[0].mxu0 %v6793
  %v6795 = vpop.f32.mrb[0].mxu0
  %v6796 = vadd.f32 %v6559, %v6795
  %v6797 = vpop.f32.mrb[0].mxu0
  %6798 = vdwg.mxu0
  %6799 = vmatprep.subr.mxu0 0.0
  %v6800 = vand.u32 %v2666, 4294901760
  %6801 = vmatpush1.msra.mxu0 %v6800
  %6802 = vmatprep.subr.mxu0 0.0
  %v6803 = vand.u32 %v2667, 4294901760
  %6804 = vmatpush1.msra.mxu0 %v6803
  %6805 = vmatprep.subr.mxu0 0.0
  %v6806 = vand.u32 %v2668, 4294901760
  %6807 = vmatpush1.msra.mxu0 %v6806
  %6808 = vmatprep.subr.mxu0 0.0
  %v6809 = vand.u32 %v2669, 4294901760
  %6810 = vmatpush1.msra.mxu0 %v6809
  %6811 = vmatprep.subr.mxu0 0.0
  %v6812 = vand.u32 %v2670, 4294901760
  %6813 = vmatpush1.msra.mxu0 %v6812
  %6814 = vmatprep.subr.mxu0 0.0
  %v6815 = vand.u32 %v2671, 4294901760
  %6816 = vmatpush1.msra.mxu0 %v6815
  %6817 = vmatprep.subr.mxu0 0.0
  %v6818 = vand.u32 %v2672, 4294901760
  %6819 = vmatpush1.msra.mxu0 %v6818
  %6820 = vmatprep.subr.mxu0 0.0
  %v6821 = vand.u32 %v2673, 4294901760
  %6822 = vmatpush1.msra.mxu0 %v6821
  %6823 = vmatprep.subr.mxu0 0.0
  %v6824 = vand.u32 %v2674, 4294901760
  %6825 = vmatpush1.msra.mxu0 %v6824
  %6826 = vmatprep.subr.mxu0 0.0
  %v6827 = vand.u32 %v2675, 4294901760
  %6828 = vmatpush1.msra.mxu0 %v6827
  %6829 = vmatprep.subr.mxu0 0.0
  %v6830 = vand.u32 %v2676, 4294901760
  %6831 = vmatpush1.msra.mxu0 %v6830
  %6832 = vmatprep.subr.mxu0 0.0
  %v6833 = vand.u32 %v2677, 4294901760
  %6834 = vmatpush1.msra.mxu0 %v6833
  %6835 = vmatprep.subr.mxu0 0.0
  %v6836 = vand.u32 %v2678, 4294901760
  %6837 = vmatpush1.msra.mxu0 %v6836
  %6838 = vmatprep.subr.mxu0 0.0
  %v6839 = vand.u32 %v2679, 4294901760
  %6840 = vmatpush1.msra.mxu0 %v6839
  %6841 = vmatprep.subr.mxu0 0.0
  %v6842 = vand.u32 %v2680, 4294901760
  %6843 = vmatpush1.msra.mxu0 %v6842
  %6844 = vmatprep.subr.mxu0 0.0
  %v6845 = vand.u32 %v2681, 4294901760
  %6846 = vmatpush1.msra.mxu0 %v6845
  %6847 = vmatprep.subr.mxu0 0.0
  %v6848 = vand.u32 %v2682, 4294901760
  %6849 = vmatpush1.msra.mxu0 %v6848
  %6850 = vmatprep.subr.mxu0 0.0
  %v6851 = vand.u32 %v2683, 4294901760
  %6852 = vmatpush1.msra.mxu0 %v6851
  %6853 = vmatprep.subr.mxu0 0.0
  %v6854 = vand.u32 %v2684, 4294901760
  %6855 = vmatpush1.msra.mxu0 %v6854
  %6856 = vmatprep.subr.mxu0 0.0
  %v6857 = vand.u32 %v2685, 4294901760
  %6858 = vmatpush1.msra.mxu0 %v6857
  %6859 = vmatprep.subr.mxu0 0.0
  %v6860 = vand.u32 %v2686, 4294901760
  %6861 = vmatpush1.msra.mxu0 %v6860
  %6862 = vmatprep.subr.mxu0 0.0
  %v6863 = vand.u32 %v2687, 4294901760
  %6864 = vmatpush1.msra.mxu0 %v6863
  %6865 = vmatprep.subr.mxu0 0.0
  %v6866 = vand.u32 %v2688, 4294901760
  %6867 = vmatpush1.msra.mxu0 %v6866
  %6868 = vmatprep.subr.mxu0 0.0
  %v6869 = vand.u32 %v2689, 4294901760
  %6870 = vmatpush1.msra.mxu0 %v6869
  %6871 = vmatprep.subr.mxu0 0.0
  %v6872 = vand.u32 %v2690, 4294901760
  %6873 = vmatpush1.msra.mxu0 %v6872
  %6874 = vmatprep.subr.mxu0 0.0
  %v6875 = vand.u32 %v2691, 4294901760
  %6876 = vmatpush1.msra.mxu0 %v6875
  %6877 = vmatprep.subr.mxu0 0.0
  %v6878 = vand.u32 %v2692, 4294901760
  %6879 = vmatpush1.msra.mxu0 %v6878
  %6880 = vmatprep.subr.mxu0 0.0
  %v6881 = vand.u32 %v2693, 4294901760
  %6882 = vmatpush1.msra.mxu0 %v6881
  %6883 = vmatprep.subr.mxu0 0.0
  %v6884 = vand.u32 %v2694, 4294901760
  %6885 = vmatpush1.msra.mxu0 %v6884
  %6886 = vmatprep.subr.mxu0 0.0
  %v6887 = vand.u32 %v2695, 4294901760
  %6888 = vmatpush1.msra.mxu0 %v6887
  %6889 = vmatprep.subr.mxu0 0.0
  %v6890 = vand.u32 %v2696, 4294901760
  %6891 = vmatpush1.msra.mxu0 %v6890
  %6892 = vmatprep.subr.mxu0 0.0
  %v6893 = vand.u32 %v2697, 4294901760
  %6894 = vmatpush1.msra.mxu0 %v6893
  %v6895 = vand.u32 %v2903, 4294901760
  %v6896 = vsub.f32 %v2903, %v6895
  %v6897 = vand.u32 %v6896, 4294901760
  %6898 = vmatprep.mubr.f32.mxu0 %v6897
  %v6899 = vand.u32 %v2871, 4294901760
  %v6900 = vsub.f32 %v2871, %v6899
  %v6901 = vand.u32 %v6900, 4294901760
  %6902 = vmatmul.mubr.f32.gmra.mrb[0].mxu0 %v6901
  %v6903 = vpop.f32.mrb[0].mxu0
  %v6904 = vadd.f32 %v6697, %v6903
  %v6905 = vpop.f32.mrb[0].mxu0
  %v6906 = vand.u32 %v2904, 4294901760
  %v6907 = vsub.f32 %v2904, %v6906
  %v6908 = vand.u32 %v6907, 4294901760
  %6909 = vmatprep.mubr.f32.mxu0 %v6908
  %v6910 = vand.u32 %v2872, 4294901760
  %v6911 = vsub.f32 %v2872, %v6910
  %v6912 = vand.u32 %v6911, 4294901760
  %6913 = vmatmul.mubr.f32.gmra.mrb[0].mxu0 %v6912
  %v6914 = vpop.f32.mrb[0].mxu0
  %v6915 = vadd.f32 %v6706, %v6914
  %v6916 = vpop.f32.mrb[0].mxu0
  %v6917 = vand.u32 %v2905, 4294901760
  %v6918 = vsub.f32 %v2905, %v6917
  %v6919 = vand.u32 %v6918, 4294901760
  %6920 = vmatprep.mubr.f32.mxu0 %v6919
  %v6921 = vand.u32 %v2873, 4294901760
  %v6922 = vsub.f32 %v2873, %v6921
  %v6923 = vand.u32 %v6922, 4294901760
  %6924 = vmatmul.mubr.f32.gmra.mrb[0].mxu0 %v6923
  %v6925 = vpop.f32.mrb[0].mxu0
  %v6926 = vadd.f32 %v6715, %v6925
  %v6927 = vpop.f32.mrb[0].mxu0
  %v6928 = vand.u32 %v2906, 4294901760
  %v6929 = vsub.f32 %v2906, %v6928
  %v6930 = vand.u32 %v6929, 4294901760
  %6931 = vmatprep.mubr.f32.mxu0 %v6930
  %v6932 = vand.u32 %v2874, 4294901760
  %v6933 = vsub.f32 %v2874, %v6932
  %v6934 = vand.u32 %v6933, 4294901760
  %6935 = vmatmul.mubr.f32.gmra.mrb[0].mxu0 %v6934
  %v6936 = vpop.f32.mrb[0].mxu0
  %v6937 = vadd.f32 %v6724, %v6936
  %v6938 = vpop.f32.mrb[0].mxu0
  %v6939 = vand.u32 %v2907, 4294901760
  %v6940 = vsub.f32 %v2907, %v6939
  %v6941 = vand.u32 %v6940, 4294901760
  %6942 = vmatprep.mubr.f32.mxu0 %v6941
  %v6943 = vand.u32 %v2875, 4294901760
  %v6944 = vsub.f32 %v2875, %v6943
  %v6945 = vand.u32 %v6944, 4294901760
  %6946 = vmatmul.mubr.f32.gmra.mrb[0].mxu0 %v6945
  %v6947 = vpop.f32.mrb[0].mxu0
  %v6948 = vadd.f32 %v6733, %v6947
  %v6949 = vpop.f32.mrb[0].mxu0
  %v6950 = vand.u32 %v2908, 4294901760
  %v6951 = vsub.f32 %v2908, %v6950
  %v6952 = vand.u32 %v6951, 4294901760
  %6953 = vmatprep.mubr.f32.mxu0 %v6952
  %v6954 = vand.u32 %v2876, 4294901760
  %v6955 = vsub.f32 %v2876, %v6954
  %v6956 = vand.u32 %v6955, 4294901760
  %6957 = vmatmul.mubr.f32.gmra.mrb[0].mxu0 %v6956
  %v6958 = vpop.f32.mrb[0].mxu0
  %v6959 = vadd.f32 %v6742, %v6958
  %v6960 = vpop.f32.mrb[0].mxu0
  %v6961 = vand.u32 %v2909, 4294901760
  %v6962 = vsub.f32 %v2909, %v6961
  %v6963 = vand.u32 %v6962, 4294901760
  %6964 = vmatprep.mubr.f32.mxu0 %v6963
  %v6965 = vand.u32 %v2877, 4294901760
  %v6966 = vsub.f32 %v2877, %v6965
  %v6967 = vand.u32 %v6966, 4294901760
  %6968 = vmatmul.mubr.f32.gmra.mrb[0].mxu0 %v6967
  %v6969 = vpop.f32.mrb[0].mxu0
  %v6970 = vadd.f32 %v6751, %v6969
  %v6971 = vpop.f32.mrb[0].mxu0
  %v6972 = vand.u32 %v2910, 4294901760
  %v6973 = vsub.f32 %v2910, %v6972
  %v6974 = vand.u32 %v6973, 4294901760
  %6975 = vmatprep.mubr.f32.mxu0 %v6974
  %v6976 = vand.u32 %v2878, 4294901760
  %v6977 = vsub.f32 %v2878, %v6976
  %v6978 = vand.u32 %v6977, 4294901760
  %6979 = vmatmul.mubr.f32.gmra.mrb[0].mxu0 %v6978
  %v6980 = vpop.f32.mrb[0].mxu0
  %v6981 = vadd.f32 %v6760, %v6980
  %v6982 = vpop.f32.mrb[0].mxu0
  %v6983 = vand.u32 %v2911, 4294901760
  %v6984 = vsub.f32 %v2911, %v6983
  %v6985 = vand.u32 %v6984, 4294901760
  %6986 = vmatprep.mubr.f32.mxu0 %v6985
  %v6987 = vand.u32 %v2879, 4294901760
  %v6988 = vsub.f32 %v2879, %v6987
  %v6989 = vand.u32 %v6988, 4294901760
  %6990 = vmatmul.mubr.f32.gmra.mrb[0].mxu0 %v6989
  %v6991 = vpop.f32.mrb[0].mxu0
  %v6992 = vadd.f32 %v6769, %v6991
  %v6993 = vpop.f32.mrb[0].mxu0
  %v6994 = vand.u32 %v2912, 4294901760
  %v6995 = vsub.f32 %v2912, %v6994
  %v6996 = vand.u32 %v6995, 4294901760
  %6997 = vmatprep.mubr.f32.mxu0 %v6996
  %v6998 = vand.u32 %v2880, 4294901760
  %v6999 = vsub.f32 %v2880, %v6998
  %v7000 = vand.u32 %v6999, 4294901760
  %7001 = vmatmul.mubr.f32.gmra.mrb[0].mxu0 %v7000
  %v7002 = vpop.f32.mrb[0].mxu0
  %v7003 = vadd.f32 %v6778, %v7002
  %v7004 = vpop.f32.mrb[0].mxu0
  %v7005 = vand.u32 %v2913, 4294901760
  %v7006 = vsub.f32 %v2913, %v7005
  %v7007 = vand.u32 %v7006, 4294901760
  %7008 = vmatprep.mubr.f32.mxu0 %v7007
  %v7009 = vand.u32 %v2881, 4294901760
  %v7010 = vsub.f32 %v2881, %v7009
  %v7011 = vand.u32 %v7010, 4294901760
  %7012 = vmatmul.mubr.f32.gmra.mrb[0].mxu0 %v7011
  %v7013 = vpop.f32.mrb[0].mxu0
  %v7014 = vadd.f32 %v6787, %v7013
  %v7015 = vpop.f32.mrb[0].mxu0
  %v7016 = vand.u32 %v2914, 4294901760
  %v7017 = vsub.f32 %v2914, %v7016
  %v7018 = vand.u32 %v7017, 4294901760
  %7019 = vmatprep.mubr.f32.mxu0 %v7018
  %v7020 = vand.u32 %v2882, 4294901760
  %v7021 = vsub.f32 %v2882, %v7020
  %v7022 = vand.u32 %v7021, 4294901760
  %7023 = vmatmul.mubr.f32.gmra.mrb[0].mxu0 %v7022
  %v7024 = vpop.f32.mrb[0].mxu0
  %v7025 = vadd.f32 %v6796, %v7024
  %v7026 = vpop.f32.mrb[0].mxu0
  %7027 = vdwg.mxu0
  %7028 = vmatprep.subr.mxu0 0.0
  %v7029 = vand.u32 %v2666, 4294901760
  %v7030 = vsub.f32 %v2666, %v7029
  %v7031 = vand.u32 %v7030, 4294901760
  %7032 = vmatpush1.msra.mxu0 %v7031
  %7033 = vmatprep.subr.mxu0 0.0
  %v7034 = vand.u32 %v2667, 4294901760
  %v7035 = vsub.f32 %v2667, %v7034
  %v7036 = vand.u32 %v7035, 4294901760
  %7037 = vmatpush1.msra.mxu0 %v7036
  %7038 = vmatprep.subr.mxu0 0.0
  %v7039 = vand.u32 %v2668, 4294901760
  %v7040 = vsub.f32 %v2668, %v7039
  %v7041 = vand.u32 %v7040, 4294901760
  %7042 = vmatpush1.msra.mxu0 %v7041
  %7043 = vmatprep.subr.mxu0 0.0
  %v7044 = vand.u32 %v2669, 4294901760
  %v7045 = vsub.f32 %v2669, %v7044
  %v7046 = vand.u32 %v7045, 4294901760
  %7047 = vmatpush1.msra.mxu0 %v7046
  %7048 = vmatprep.subr.mxu0 0.0
  %v7049 = vand.u32 %v2670, 4294901760
  %v7050 = vsub.f32 %v2670, %v7049
  %v7051 = vand.u32 %v7050, 4294901760
  %7052 = vmatpush1.msra.mxu0 %v7051
  %7053 = vmatprep.subr.mxu0 0.0
  %v7054 = vand.u32 %v2671, 4294901760
  %v7055 = vsub.f32 %v2671, %v7054
  %v7056 = vand.u32 %v7055, 4294901760
  %7057 = vmatpush1.msra.mxu0 %v7056
  %7058 = vmatprep.subr.mxu0 0.0
  %v7059 = vand.u32 %v2672, 4294901760
  %v7060 = vsub.f32 %v2672, %v7059
  %v7061 = vand.u32 %v7060, 4294901760
  %7062 = vmatpush1.msra.mxu0 %v7061
  %7063 = vmatprep.subr.mxu0 0.0
  %v7064 = vand.u32 %v2673, 4294901760
  %v7065 = vsub.f32 %v2673, %v7064
  %v7066 = vand.u32 %v7065, 4294901760
  %7067 = vmatpush1.msra.mxu0 %v7066
  %7068 = vmatprep.subr.mxu0 0.0
  %v7069 = vand.u32 %v2674, 4294901760
  %v7070 = vsub.f32 %v2674, %v7069
  %v7071 = vand.u32 %v7070, 4294901760
  %7072 = vmatpush1.msra.mxu0 %v7071
  %7073 = vmatprep.subr.mxu0 0.0
  %v7074 = vand.u32 %v2675, 4294901760
  %v7075 = vsub.f32 %v2675, %v7074
  %v7076 = vand.u32 %v7075, 4294901760
  %7077 = vmatpush1.msra.mxu0 %v7076
  %7078 = vmatprep.subr.mxu0 0.0
  %v7079 = vand.u32 %v2676, 4294901760
  %v7080 = vsub.f32 %v2676, %v7079
  %v7081 = vand.u32 %v7080, 4294901760
  %7082 = vmatpush1.msra.mxu0 %v7081
  %7083 = vmatprep.subr.mxu0 0.0
  %v7084 = vand.u32 %v2677, 4294901760
  %v7085 = vsub.f32 %v2677, %v7084
  %v7086 = vand.u32 %v7085, 4294901760
  %7087 = vmatpush1.msra.mxu0 %v7086
  %7088 = vmatprep.subr.mxu0 0.0
  %v7089 = vand.u32 %v2678, 4294901760
  %v7090 = vsub.f32 %v2678, %v7089
  %v7091 = vand.u32 %v7090, 4294901760
  %7092 = vmatpush1.msra.mxu0 %v7091
  %7093 = vmatprep.subr.mxu0 0.0
  %v7094 = vand.u32 %v2679, 4294901760
  %v7095 = vsub.f32 %v2679, %v7094
  %v7096 = vand.u32 %v7095, 4294901760
  %7097 = vmatpush1.msra.mxu0 %v7096
  %7098 = vmatprep.subr.mxu0 0.0
  %v7099 = vand.u32 %v2680, 4294901760
  %v7100 = vsub.f32 %v2680, %v7099
  %v7101 = vand.u32 %v7100, 4294901760
  %7102 = vmatpush1.msra.mxu0 %v7101
  %7103 = vmatprep.subr.mxu0 0.0
  %v7104 = vand.u32 %v2681, 4294901760
  %v7105 = vsub.f32 %v2681, %v7104
  %v7106 = vand.u32 %v7105, 4294901760
  %7107 = vmatpush1.msra.mxu0 %v7106
  %7108 = vmatprep.subr.mxu0 0.0
  %v7109 = vand.u32 %v2682, 4294901760
  %v7110 = vsub.f32 %v2682, %v7109
  %v7111 = vand.u32 %v7110, 4294901760
  %7112 = vmatpush1.msra.mxu0 %v7111
  %7113 = vmatprep.subr.mxu0 0.0
  %v7114 = vand.u32 %v2683, 4294901760
  %v7115 = vsub.f32 %v2683, %v7114
  %v7116 = vand.u32 %v7115, 4294901760
  %7117 = vmatpush1.msra.mxu0 %v7116
  %7118 = vmatprep.subr.mxu0 0.0
  %v7119 = vand.u32 %v2684, 4294901760
  %v7120 = vsub.f32 %v2684, %v7119
  %v7121 = vand.u32 %v7120, 4294901760
  %7122 = vmatpush1.msra.mxu0 %v7121
  %7123 = vmatprep.subr.mxu0 0.0
  %v7124 = vand.u32 %v2685, 4294901760
  %v7125 = vsub.f32 %v2685, %v7124
  %v7126 = vand.u32 %v7125, 4294901760
  %7127 = vmatpush1.msra.mxu0 %v7126
  %7128 = vmatprep.subr.mxu0 0.0
  %v7129 = vand.u32 %v2686, 4294901760
  %v7130 = vsub.f32 %v2686, %v7129
  %v7131 = vand.u32 %v7130, 4294901760
  %7132 = vmatpush1.msra.mxu0 %v7131
  %7133 = vmatprep.subr.mxu0 0.0
  %v7134 = vand.u32 %v2687, 4294901760
  %v7135 = vsub.f32 %v2687, %v7134
  %v7136 = vand.u32 %v7135, 4294901760
  %7137 = vmatpush1.msra.mxu0 %v7136
  %7138 = vmatprep.subr.mxu0 0.0
  %v7139 = vand.u32 %v2688, 4294901760
  %v7140 = vsub.f32 %v2688, %v7139
  %v7141 = vand.u32 %v7140, 4294901760
  %7142 = vmatpush1.msra.mxu0 %v7141
  %7143 = vmatprep.subr.mxu0 0.0
  %v7144 = vand.u32 %v2689, 4294901760
  %v7145 = vsub.f32 %v2689, %v7144
  %v7146 = vand.u32 %v7145, 4294901760
  %7147 = vmatpush1.msra.mxu0 %v7146
  %7148 = vmatprep.subr.mxu0 0.0
  %v7149 = vand.u32 %v2690, 4294901760
  %v7150 = vsub.f32 %v2690, %v7149
  %v7151 = vand.u32 %v7150, 4294901760
  %7152 = vmatpush1.msra.mxu0 %v7151
  %7153 = vmatprep.subr.mxu0 0.0
  %v7154 = vand.u32 %v2691, 4294901760
  %v7155 = vsub.f32 %v2691, %v7154
  %v7156 = vand.u32 %v7155, 4294901760
  %7157 = vmatpush1.msra.mxu0 %v7156
  %7158 = vmatprep.subr.mxu0 0.0
  %v7159 = vand.u32 %v2692, 4294901760
  %v7160 = vsub.f32 %v2692, %v7159
  %v7161 = vand.u32 %v7160, 4294901760
  %7162 = vmatpush1.msra.mxu0 %v7161
  %7163 = vmatprep.subr.mxu0 0.0
  %v7164 = vand.u32 %v2693, 4294901760
  %v7165 = vsub.f32 %v2693, %v7164
  %v7166 = vand.u32 %v7165, 4294901760
  %7167 = vmatpush1.msra.mxu0 %v7166
  %7168 = vmatprep.subr.mxu0 0.0
  %v7169 = vand.u32 %v2694, 4294901760
  %v7170 = vsub.f32 %v2694, %v7169
  %v7171 = vand.u32 %v7170, 4294901760
  %7172 = vmatpush1.msra.mxu0 %v7171
  %7173 = vmatprep.subr.mxu0 0.0
  %v7174 = vand.u32 %v2695, 4294901760
  %v7175 = vsub.f32 %v2695, %v7174
  %v7176 = vand.u32 %v7175, 4294901760
  %7177 = vmatpush1.msra.mxu0 %v7176
  %7178 = vmatprep.subr.mxu0 0.0
  %v7179 = vand.u32 %v2696, 4294901760
  %v7180 = vsub.f32 %v2696, %v7179
  %v7181 = vand.u32 %v7180, 4294901760
  %7182 = vmatpush1.msra.mxu0 %v7181
  %7183 = vmatprep.subr.mxu0 0.0
  %v7184 = vand.u32 %v2697, 4294901760
  %v7185 = vsub.f32 %v2697, %v7184
  %v7186 = vand.u32 %v7185, 4294901760
  %7187 = vmatpush1.msra.mxu0 %v7186
  %v7188 = vand.u32 %v2903, 4294901760
  %7189 = vmatprep.mubr.f32.mxu0 %v7188
  %v7190 = vand.u32 %v2871, 4294901760
  %7191 = vmatmul.mubr.f32.gmra.mrb[0].mxu0 %v7190
  %v7192 = vpop.f32.mrb[0].mxu0
  %v7193 = vadd.f32 %v6904, %v7192
  %v7194 = vpop.f32.mrb[0].mxu0
  %v7195 = vand.u32 %v2904, 4294901760
  %7196 = vmatprep.mubr.f32.mxu0 %v7195
  %v7197 = vand.u32 %v2872, 4294901760
  %7198 = vmatmul.mubr.f32.gmra.mrb[0].mxu0 %v7197
  %v7199 = vpop.f32.mrb[0].mxu0
  %v7200 = vadd.f32 %v6915, %v7199
  %v7201 = vpop.f32.mrb[0].mxu0
  %v7202 = vand.u32 %v2905, 4294901760
  %7203 = vmatprep.mubr.f32.mxu0 %v7202
  %v7204 = vand.u32 %v2873, 4294901760
  %7205 = vmatmul.mubr.f32.gmra.mrb[0].mxu0 %v7204
  %v7206 = vpop.f32.mrb[0].mxu0
  %v7207 = vadd.f32 %v6926, %v7206
  %v7208 = vpop.f32.mrb[0].mxu0
  %v7209 = vand.u32 %v2906, 4294901760
  %7210 = vmatprep.mubr.f32.mxu0 %v7209
  %v7211 = vand.u32 %v2874, 4294901760
  %7212 = vmatmul.mubr.f32.gmra.mrb[0].mxu0 %v7211
  %v7213 = vpop.f32.mrb[0].mxu0
  %v7214 = vadd.f32 %v6937, %v7213
  %v7215 = vpop.f32.mrb[0].mxu0
  %v7216 = vand.u32 %v2907, 4294901760
  %7217 = vmatprep.mubr.f32.mxu0 %v7216
  %v7218 = vand.u32 %v2875, 4294901760
  %7219 = vmatmul.mubr.f32.gmra.mrb[0].mxu0 %v7218
  %v7220 = vpop.f32.mrb[0].mxu0
  %v7221 = vadd.f32 %v6948, %v7220
  %v7222 = vpop.f32.mrb[0].mxu0
  %v7223 = vand.u32 %v2908, 4294901760
  %7224 = vmatprep.mubr.f32.mxu0 %v7223
  %v7225 = vand.u32 %v2876, 4294901760
  %7226 = vmatmul.mubr.f32.gmra.mrb[0].mxu0 %v7225
  %v7227 = vpop.f32.mrb[0].mxu0
  %v7228 = vadd.f32 %v6959, %v7227
  %v7229 = vpop.f32.mrb[0].mxu0
  %v7230 = vand.u32 %v2909, 4294901760
  %7231 = vmatprep.mubr.f32.mxu0 %v7230
  %v7232 = vand.u32 %v2877, 4294901760
  %7233 = vmatmul.mubr.f32.gmra.mrb[0].mxu0 %v7232
  %v7234 = vpop.f32.mrb[0].mxu0
  %v7235 = vadd.f32 %v6970, %v7234
  %v7236 = vpop.f32.mrb[0].mxu0
  %v7237 = vand.u32 %v2910, 4294901760
  %7238 = vmatprep.mubr.f32.mxu0 %v7237
  %v7239 = vand.u32 %v2878, 4294901760
  %7240 = vmatmul.mubr.f32.gmra.mrb[0].mxu0 %v7239
  %v7241 = vpop.f32.mrb[0].mxu0
  %v7242 = vadd.f32 %v6981, %v7241
  %v7243 = vpop.f32.mrb[0].mxu0
  %v7244 = vand.u32 %v2911, 4294901760
  %7245 = vmatprep.mubr.f32.mxu0 %v7244
  %v7246 = vand.u32 %v2879, 4294901760
  %7247 = vmatmul.mubr.f32.gmra.mrb[0].mxu0 %v7246
  %v7248 = vpop.f32.mrb[0].mxu0
  %v7249 = vadd.f32 %v6992, %v7248
  %v7250 = vpop.f32.mrb[0].mxu0
  %v7251 = vand.u32 %v2912, 4294901760
  %7252 = vmatprep.mubr.f32.mxu0 %v7251
  %v7253 = vand.u32 %v2880, 4294901760
  %7254 = vmatmul.mubr.f32.gmra.mrb[0].mxu0 %v7253
  %v7255 = vpop.f32.mrb[0].mxu0
  %v7256 = vadd.f32 %v7003, %v7255
  %v7257 = vpop.f32.mrb[0].mxu0
  %v7258 = vand.u32 %v2913, 4294901760
  %7259 = vmatprep.mubr.f32.mxu0 %v7258
  %v7260 = vand.u32 %v2881, 4294901760
  %7261 = vmatmul.mubr.f32.gmra.mrb[0].mxu0 %v7260
  %v7262 = vpop.f32.mrb[0].mxu0
  %v7263 = vadd.f32 %v7014, %v7262
  %v7264 = vpop.f32.mrb[0].mxu0
  %v7265 = vand.u32 %v2914, 4294901760
  %7266 = vmatprep.mubr.f32.mxu0 %v7265
  %v7267 = vand.u32 %v2882, 4294901760
  %7268 = vmatmul.mubr.f32.gmra.mrb[0].mxu0 %v7267
  %v7269 = vpop.f32.mrb[0].mxu0
  %v7270 = vadd.f32 %v7025, %v7269
  %v7271 = vpop.f32.mrb[0].mxu0
  %7272 = vdwg.mxu0
  %7273 = vmatprep.subr.mxu0 0.0
  %v7274 = vand.u32 %v2666, 4294901760
  %7275 = vmatpush1.msra.mxu0 %v7274
  %7276 = vmatprep.subr.mxu0 0.0
  %v7277 = vand.u32 %v2667, 4294901760
  %7278 = vmatpush1.msra.mxu0 %v7277
  %7279 = vmatprep.subr.mxu0 0.0
  %v7280 = vand.u32 %v2668, 4294901760
  %7281 = vmatpush1.msra.mxu0 %v7280
  %7282 = vmatprep.subr.mxu0 0.0
  %v7283 = vand.u32 %v2669, 4294901760
  %7284 = vmatpush1.msra.mxu0 %v7283
  %7285 = vmatprep.subr.mxu0 0.0
  %v7286 = vand.u32 %v2670, 4294901760
  %7287 = vmatpush1.msra.mxu0 %v7286
  %7288 = vmatprep.subr.mxu0 0.0
  %v7289 = vand.u32 %v2671, 4294901760
  %7290 = vmatpush1.msra.mxu0 %v7289
  %7291 = vmatprep.subr.mxu0 0.0
  %v7292 = vand.u32 %v2672, 4294901760
  %7293 = vmatpush1.msra.mxu0 %v7292
  %7294 = vmatprep.subr.mxu0 0.0
  %v7295 = vand.u32 %v2673, 4294901760
  %7296 = vmatpush1.msra.mxu0 %v7295
  %7297 = vmatprep.subr.mxu0 0.0
  %v7298 = vand.u32 %v2674, 4294901760
  %7299 = vmatpush1.msra.mxu0 %v7298
  %7300 = vmatprep.subr.mxu0 0.0
  %v7301 = vand.u32 %v2675, 4294901760
  %7302 = vmatpush1.msra.mxu0 %v7301
  %7303 = vmatprep.subr.mxu0 0.0
  %v7304 = vand.u32 %v2676, 4294901760
  %7305 = vmatpush1.msra.mxu0 %v7304
  %7306 = vmatprep.subr.mxu0 0.0
  %v7307 = vand.u32 %v2677, 4294901760
  %7308 = vmatpush1.msra.mxu0 %v7307
  %7309 = vmatprep.subr.mxu0 0.0
  %v7310 = vand.u32 %v2678, 4294901760
  %7311 = vmatpush1.msra.mxu0 %v7310
  %7312 = vmatprep.subr.mxu0 0.0
  %v7313 = vand.u32 %v2679, 4294901760
  %7314 = vmatpush1.msra.mxu0 %v7313
  %7315 = vmatprep.subr.mxu0 0.0
  %v7316 = vand.u32 %v2680, 4294901760
  %7317 = vmatpush1.msra.mxu0 %v7316
  %7318 = vmatprep.subr.mxu0 0.0
  %v7319 = vand.u32 %v2681, 4294901760
  %7320 = vmatpush1.msra.mxu0 %v7319
  %7321 = vmatprep.subr.mxu0 0.0
  %v7322 = vand.u32 %v2682, 4294901760
  %7323 = vmatpush1.msra.mxu0 %v7322
  %7324 = vmatprep.subr.mxu0 0.0
  %v7325 = vand.u32 %v2683, 4294901760
  %7326 = vmatpush1.msra.mxu0 %v7325
  %7327 = vmatprep.subr.mxu0 0.0
  %v7328 = vand.u32 %v2684, 4294901760
  %7329 = vmatpush1.msra.mxu0 %v7328
  %7330 = vmatprep.subr.mxu0 0.0
  %v7331 = vand.u32 %v2685, 4294901760
  %7332 = vmatpush1.msra.mxu0 %v7331
  %7333 = vmatprep.subr.mxu0 0.0
  %v7334 = vand.u32 %v2686, 4294901760
  %7335 = vmatpush1.msra.mxu0 %v7334
  %7336 = vmatprep.subr.mxu0 0.0
  %v7337 = vand.u32 %v2687, 4294901760
  %7338 = vmatpush1.msra.mxu0 %v7337
  %7339 = vmatprep.subr.mxu0 0.0
  %v7340 = vand.u32 %v2688, 4294901760
  %7341 = vmatpush1.msra.mxu0 %v7340
  %7342 = vmatprep.subr.mxu0 0.0
  %v7343 = vand.u32 %v2689, 4294901760
  %7344 = vmatpush1.msra.mxu0 %v7343
  %7345 = vmatprep.subr.mxu0 0.0
  %v7346 = vand.u32 %v2690, 4294901760
  %7347 = vmatpush1.msra.mxu0 %v7346
  %7348 = vmatprep.subr.mxu0 0.0
  %v7349 = vand.u32 %v2691, 4294901760
  %7350 = vmatpush1.msra.mxu0 %v7349
  %7351 = vmatprep.subr.mxu0 0.0
  %v7352 = vand.u32 %v2692, 4294901760
  %7353 = vmatpush1.msra.mxu0 %v7352
  %7354 = vmatprep.subr.mxu0 0.0
  %v7355 = vand.u32 %v2693, 4294901760
  %7356 = vmatpush1.msra.mxu0 %v7355
  %7357 = vmatprep.subr.mxu0 0.0
  %v7358 = vand.u32 %v2694, 4294901760
  %7359 = vmatpush1.msra.mxu0 %v7358
  %7360 = vmatprep.subr.mxu0 0.0
  %v7361 = vand.u32 %v2695, 4294901760
  %7362 = vmatpush1.msra.mxu0 %v7361
  %7363 = vmatprep.subr.mxu0 0.0
  %v7364 = vand.u32 %v2696, 4294901760
  %7365 = vmatpush1.msra.mxu0 %v7364
  %7366 = vmatprep.subr.mxu0 0.0
  %v7367 = vand.u32 %v2697, 4294901760
  %7368 = vmatpush1.msra.mxu0 %v7367
  %v7369 = vand.u32 %v2903, 4294901760
  %7370 = vmatprep.mubr.f32.mxu0 %v7369
  %v7371 = vand.u32 %v2871, 4294901760
  %7372 = vmatmul.mubr.f32.gmra.mrb[0].mxu0 %v7371
  %v7373 = vpop.f32.mrb[0].mxu0
  %v7374 = vadd.f32 %v7193, %v7373
  %v7375 = vpop.f32.mrb[0].mxu0
  %v7376 = vand.u32 %v2904, 4294901760
  %7377 = vmatprep.mubr.f32.mxu0 %v7376
  %v7378 = vand.u32 %v2872, 4294901760
  %7379 = vmatmul.mubr.f32.gmra.mrb[0].mxu0 %v7378
  %v7380 = vpop.f32.mrb[0].mxu0
  %v7381 = vadd.f32 %v7200, %v7380
  %v7382 = vpop.f32.mrb[0].mxu0
  %v7383 = vand.u32 %v2905, 4294901760
  %7384 = vmatprep.mubr.f32.mxu0 %v7383
  %v7385 = vand.u32 %v2873, 4294901760
  %7386 = vmatmul.mubr.f32.gmra.mrb[0].mxu0 %v7385
  %v7387 = vpop.f32.mrb[0].mxu0
  %v7388 = vadd.f32 %v7207, %v7387
  %v7389 = vpop.f32.mrb[0].mxu0
  %v7390 = vand.u32 %v2906, 4294901760
  %7391 = vmatprep.mubr.f32.mxu0 %v7390
  %v7392 = vand.u32 %v2874, 4294901760
  %7393 = vmatmul.mubr.f32.gmra.mrb[0].mxu0 %v7392
  %v7394 = vpop.f32.mrb[0].mxu0
  %v7395 = vadd.f32 %v7214, %v7394
  %v7396 = vpop.f32.mrb[0].mxu0
  %v7397 = vand.u32 %v2907, 4294901760
  %7398 = vmatprep.mubr.f32.mxu0 %v7397
  %v7399 = vand.u32 %v2875, 4294901760
  %7400 = vmatmul.mubr.f32.gmra.mrb[0].mxu0 %v7399
  %v7401 = vpop.f32.mrb[0].mxu0
  %v7402 = vadd.f32 %v7221, %v7401
  %v7403 = vpop.f32.mrb[0].mxu0
  %v7404 = vand.u32 %v2908, 4294901760
  %7405 = vmatprep.mubr.f32.mxu0 %v7404
  %v7406 = vand.u32 %v2876, 4294901760
  %7407 = vmatmul.mubr.f32.gmra.mrb[0].mxu0 %v7406
  %v7408 = vpop.f32.mrb[0].mxu0
  %v7409 = vadd.f32 %v7228, %v7408
  %v7410 = vpop.f32.mrb[0].mxu0
  %v7411 = vand.u32 %v2909, 4294901760
  %7412 = vmatprep.mubr.f32.mxu0 %v7411
  %v7413 = vand.u32 %v2877, 4294901760
  %7414 = vmatmul.mubr.f32.gmra.mrb[0].mxu0 %v7413
  %v7415 = vpop.f32.mrb[0].mxu0
  %v7416 = vadd.f32 %v7235, %v7415
  %v7417 = vpop.f32.mrb[0].mxu0
  %v7418 = vand.u32 %v2910, 4294901760
  %7419 = vmatprep.mubr.f32.mxu0 %v7418
  %v7420 = vand.u32 %v2878, 4294901760
  %7421 = vmatmul.mubr.f32.gmra.mrb[0].mxu0 %v7420
  %v7422 = vpop.f32.mrb[0].mxu0
  %v7423 = vadd.f32 %v7242, %v7422
  %v7424 = vpop.f32.mrb[0].mxu0
  %v7425 = vand.u32 %v2911, 4294901760
  %7426 = vmatprep.mubr.f32.mxu0 %v7425
  %v7427 = vand.u32 %v2879, 4294901760
  %7428 = vmatmul.mubr.f32.gmra.mrb[0].mxu0 %v7427
  %v7429 = vpop.f32.mrb[0].mxu0
  %v7430 = vadd.f32 %v7249, %v7429
  %v7431 = vpop.f32.mrb[0].mxu0
  %v7432 = vand.u32 %v2912, 4294901760
  %7433 = vmatprep.mubr.f32.mxu0 %v7432
  %v7434 = vand.u32 %v2880, 4294901760
  %7435 = vmatmul.mubr.f32.gmra.mrb[0].mxu0 %v7434
  %v7436 = vpop.f32.mrb[0].mxu0
  %v7437 = vadd.f32 %v7256, %v7436
  %v7438 = vpop.f32.mrb[0].mxu0
  %v7439 = vand.u32 %v2913, 4294901760
  %7440 = vmatprep.mubr.f32.mxu0 %v7439
  %v7441 = vand.u32 %v2881, 4294901760
  %7442 = vmatmul.mubr.f32.gmra.mrb[0].mxu0 %v7441
  %v7443 = vpop.f32.mrb[0].mxu0
  %v7444 = vadd.f32 %v7263, %v7443
  %v7445 = vpop.f32.mrb[0].mxu0
  %v7446 = vand.u32 %v2914, 4294901760
  %7447 = vmatprep.mubr.f32.mxu0 %v7446
  %v7448 = vand.u32 %v2882, 4294901760
  %7449 = vmatmul.mubr.f32.gmra.mrb[0].mxu0 %v7448
  %v7450 = vpop.f32.mrb[0].mxu0
  %v7451 = vadd.f32 %v7270, %v7450
  %v7452 = vpop.f32.mrb[0].mxu0
  %7453 = vdwg.mxu0
  %7454 = vmatprep.subr.mxu0 0.0
  %v7455 = vand.u32 %v2698, 4294901760
  %7456 = vmatpush1.msra.mxu0 %v7455
  %7457 = vmatprep.subr.mxu0 0.0
  %v7458 = vand.u32 %v2699, 4294901760
  %7459 = vmatpush1.msra.mxu0 %v7458
  %7460 = vmatprep.subr.mxu0 0.0
  %v7461 = vand.u32 %v2700, 4294901760
  %7462 = vmatpush1.msra.mxu0 %v7461
  %7463 = vmatprep.subr.mxu0 0.0
  %v7464 = vand.u32 %v2701, 4294901760
  %7465 = vmatpush1.msra.mxu0 %v7464
  %7466 = vmatprep.subr.mxu0 0.0
  %v7467 = vand.u32 %v2702, 4294901760
  %7468 = vmatpush1.msra.mxu0 %v7467
  %7469 = vmatprep.subr.mxu0 0.0
  %v7470 = vand.u32 %v2703, 4294901760
  %7471 = vmatpush1.msra.mxu0 %v7470
  %7472 = vmatprep.subr.mxu0 0.0
  %v7473 = vand.u32 %v2704, 4294901760
  %7474 = vmatpush1.msra.mxu0 %v7473
  %7475 = vmatprep.subr.mxu0 0.0
  %v7476 = vand.u32 %v2705, 4294901760
  %7477 = vmatpush1.msra.mxu0 %v7476
  %7478 = vmatprep.subr.mxu0 0.0
  %v7479 = vand.u32 %v2706, 4294901760
  %7480 = vmatpush1.msra.mxu0 %v7479
  %7481 = vmatprep.subr.mxu0 0.0
  %v7482 = vand.u32 %v2707, 4294901760
  %7483 = vmatpush1.msra.mxu0 %v7482
  %7484 = vmatprep.subr.mxu0 0.0
  %v7485 = vand.u32 %v2708, 4294901760
  %7486 = vmatpush1.msra.mxu0 %v7485
  %7487 = vmatprep.subr.mxu0 0.0
  %v7488 = vand.u32 %v2709, 4294901760
  %7489 = vmatpush1.msra.mxu0 %v7488
  %7490 = vmatprep.subr.mxu0 0.0
  %v7491 = vand.u32 %v2710, 4294901760
  %7492 = vmatpush1.msra.mxu0 %v7491
  %7493 = vmatprep.subr.mxu0 0.0
  %v7494 = vand.u32 %v2711, 4294901760
  %7495 = vmatpush1.msra.mxu0 %v7494
  %7496 = vmatprep.subr.mxu0 0.0
  %v7497 = vand.u32 %v2712, 4294901760
  %7498 = vmatpush1.msra.mxu0 %v7497
  %7499 = vmatprep.subr.mxu0 0.0
  %v7500 = vand.u32 %v2713, 4294901760
  %7501 = vmatpush1.msra.mxu0 %v7500
  %7502 = vmatprep.subr.mxu0 0.0
  %v7503 = vand.u32 %v2714, 4294901760
  %7504 = vmatpush1.msra.mxu0 %v7503
  %7505 = vmatprep.subr.mxu0 0.0
  %v7506 = vand.u32 %v2715, 4294901760
  %7507 = vmatpush1.msra.mxu0 %v7506
  %7508 = vmatprep.subr.mxu0 0.0
  %v7509 = vand.u32 %v2716, 4294901760
  %7510 = vmatpush1.msra.mxu0 %v7509
  %7511 = vmatprep.subr.mxu0 0.0
  %v7512 = vand.u32 %v2717, 4294901760
  %7513 = vmatpush1.msra.mxu0 %v7512
  %7514 = vmatprep.subr.mxu0 0.0
  %v7515 = vand.u32 %v2718, 4294901760
  %7516 = vmatpush1.msra.mxu0 %v7515
  %7517 = vmatprep.subr.mxu0 0.0
  %v7518 = vand.u32 %v2719, 4294901760
  %7519 = vmatpush1.msra.mxu0 %v7518
  %7520 = vmatprep.subr.mxu0 0.0
  %v7521 = vand.u32 %v2720, 4294901760
  %7522 = vmatpush1.msra.mxu0 %v7521
  %7523 = vmatprep.subr.mxu0 0.0
  %v7524 = vand.u32 %v2721, 4294901760
  %7525 = vmatpush1.msra.mxu0 %v7524
  %7526 = vmatprep.subr.mxu0 0.0
  %v7527 = vand.u32 %v2722, 4294901760
  %7528 = vmatpush1.msra.mxu0 %v7527
  %7529 = vmatprep.subr.mxu0 0.0
  %v7530 = vand.u32 %v2723, 4294901760
  %7531 = vmatpush1.msra.mxu0 %v7530
  %7532 = vmatprep.subr.mxu0 0.0
  %v7533 = vand.u32 %v2724, 4294901760
  %7534 = vmatpush1.msra.mxu0 %v7533
  %7535 = vmatprep.subr.mxu0 0.0
  %v7536 = vand.u32 %v2725, 4294901760
  %7537 = vmatpush1.msra.mxu0 %v7536
  %7538 = vmatprep.subr.mxu0 0.0
  %v7539 = vand.u32 %v2726, 4294901760
  %7540 = vmatpush1.msra.mxu0 %v7539
  %7541 = vmatprep.subr.mxu0 0.0
  %7542 = vmatpush1.msra.mxu0 0.0
  %7543 = vmatprep.subr.mxu0 0.0
  %7544 = vmatpush1.msra.mxu0 0.0
  %7545 = vmatprep.subr.mxu0 0.0
  %7546 = vmatpush1.msra.mxu0 0.0
  %v7547 = vand.u32 %v2985, 4294901760
  %v7548 = vsub.f32 %v2985, %v7547
  %v7549 = vand.u32 %v7548, 4294901760
  %v7550 = vsub.f32 %v7548, %v7549
  %v7551 = vand.u32 %v7550, 4294901760
  %7552 = vmatprep.mubr.f32.mxu0 %v7551
  %v7553 = vand.u32 %v2935, 4294901760
  %v7554 = vsub.f32 %v2935, %v7553
  %v7555 = vand.u32 %v7554, 4294901760
  %v7556 = vsub.f32 %v7554, %v7555
  %v7557 = vand.u32 %v7556, 4294901760
  %7558 = vmatmul.mubr.f32.gmra.mrb[0].mxu0 %v7557
  %v7559 = vpop.f32.mrb[0].mxu0
  %v7560 = vadd.f32 %v7374, %v7559
  %v7561 = vpop.f32.mrb[0].mxu0
  %v7562 = vand.u32 %v2988, 4294901760
  %v7563 = vsub.f32 %v2988, %v7562
  %v7564 = vand.u32 %v7563, 4294901760
  %v7565 = vsub.f32 %v7563, %v7564
  %v7566 = vand.u32 %v7565, 4294901760
  %7567 = vmatprep.mubr.f32.mxu0 %v7566
  %v7568 = vand.u32 %v2936, 4294901760
  %v7569 = vsub.f32 %v2936, %v7568
  %v7570 = vand.u32 %v7569, 4294901760
  %v7571 = vsub.f32 %v7569, %v7570
  %v7572 = vand.u32 %v7571, 4294901760
  %7573 = vmatmul.mubr.f32.gmra.mrb[0].mxu0 %v7572
  %v7574 = vpop.f32.mrb[0].mxu0
  %v7575 = vadd.f32 %v7381, %v7574
  %v7576 = vpop.f32.mrb[0].mxu0
  %v7577 = vand.u32 %v2991, 4294901760
  %v7578 = vsub.f32 %v2991, %v7577
  %v7579 = vand.u32 %v7578, 4294901760
  %v7580 = vsub.f32 %v7578, %v7579
  %v7581 = vand.u32 %v7580, 4294901760
  %7582 = vmatprep.mubr.f32.mxu0 %v7581
  %v7583 = vand.u32 %v2937, 4294901760
  %v7584 = vsub.f32 %v2937, %v7583
  %v7585 = vand.u32 %v7584, 4294901760
  %v7586 = vsub.f32 %v7584, %v7585
  %v7587 = vand.u32 %v7586, 4294901760
  %7588 = vmatmul.mubr.f32.gmra.mrb[0].mxu0 %v7587
  %v7589 = vpop.f32.mrb[0].mxu0
  %v7590 = vadd.f32 %v7388, %v7589
  %v7591 = vpop.f32.mrb[0].mxu0
  %v7592 = vand.u32 %v2994, 4294901760
  %v7593 = vsub.f32 %v2994, %v7592
  %v7594 = vand.u32 %v7593, 4294901760
  %v7595 = vsub.f32 %v7593, %v7594
  %v7596 = vand.u32 %v7595, 4294901760
  %7597 = vmatprep.mubr.f32.mxu0 %v7596
  %v7598 = vand.u32 %v2938, 4294901760
  %v7599 = vsub.f32 %v2938, %v7598
  %v7600 = vand.u32 %v7599, 4294901760
  %v7601 = vsub.f32 %v7599, %v7600
  %v7602 = vand.u32 %v7601, 4294901760
  %7603 = vmatmul.mubr.f32.gmra.mrb[0].mxu0 %v7602
  %v7604 = vpop.f32.mrb[0].mxu0
  %v7605 = vadd.f32 %v7395, %v7604
  %v7606 = vpop.f32.mrb[0].mxu0
  %v7607 = vand.u32 %v2997, 4294901760
  %v7608 = vsub.f32 %v2997, %v7607
  %v7609 = vand.u32 %v7608, 4294901760
  %v7610 = vsub.f32 %v7608, %v7609
  %v7611 = vand.u32 %v7610, 4294901760
  %7612 = vmatprep.mubr.f32.mxu0 %v7611
  %v7613 = vand.u32 %v2939, 4294901760
  %v7614 = vsub.f32 %v2939, %v7613
  %v7615 = vand.u32 %v7614, 4294901760
  %v7616 = vsub.f32 %v7614, %v7615
  %v7617 = vand.u32 %v7616, 4294901760
  %7618 = vmatmul.mubr.f32.gmra.mrb[0].mxu0 %v7617
  %v7619 = vpop.f32.mrb[0].mxu0
  %v7620 = vadd.f32 %v7402, %v7619
  %v7621 = vpop.f32.mrb[0].mxu0
  %v7622 = vand.u32 %v3000, 4294901760
  %v7623 = vsub.f32 %v3000, %v7622
  %v7624 = vand.u32 %v7623, 4294901760
  %v7625 = vsub.f32 %v7623, %v7624
  %v7626 = vand.u32 %v7625, 4294901760
  %7627 = vmatprep.mubr.f32.mxu0 %v7626
  %v7628 = vand.u32 %v2940, 4294901760
  %v7629 = vsub.f32 %v2940, %v7628
  %v7630 = vand.u32 %v7629, 4294901760
  %v7631 = vsub.f32 %v7629, %v7630
  %v7632 = vand.u32 %v7631, 4294901760
  %7633 = vmatmul.mubr.f32.gmra.mrb[0].mxu0 %v7632
  %v7634 = vpop.f32.mrb[0].mxu0
  %v7635 = vadd.f32 %v7409, %v7634
  %v7636 = vpop.f32.mrb[0].mxu0
  %v7637 = vand.u32 %v3003, 4294901760
  %v7638 = vsub.f32 %v3003, %v7637
  %v7639 = vand.u32 %v7638, 4294901760
  %v7640 = vsub.f32 %v7638, %v7639
  %v7641 = vand.u32 %v7640, 4294901760
  %7642 = vmatprep.mubr.f32.mxu0 %v7641
  %v7643 = vand.u32 %v2941, 4294901760
  %v7644 = vsub.f32 %v2941, %v7643
  %v7645 = vand.u32 %v7644, 4294901760
  %v7646 = vsub.f32 %v7644, %v7645
  %v7647 = vand.u32 %v7646, 4294901760
  %7648 = vmatmul.mubr.f32.gmra.mrb[0].mxu0 %v7647
  %v7649 = vpop.f32.mrb[0].mxu0
  %v7650 = vadd.f32 %v7416, %v7649
  %v7651 = vpop.f32.mrb[0].mxu0
  %v7652 = vand.u32 %v3006, 4294901760
  %v7653 = vsub.f32 %v3006, %v7652
  %v7654 = vand.u32 %v7653, 4294901760
  %v7655 = vsub.f32 %v7653, %v7654
  %v7656 = vand.u32 %v7655, 4294901760
  %7657 = vmatprep.mubr.f32.mxu0 %v7656
  %v7658 = vand.u32 %v2942, 4294901760
  %v7659 = vsub.f32 %v2942, %v7658
  %v7660 = vand.u32 %v7659, 4294901760
  %v7661 = vsub.f32 %v7659, %v7660
  %v7662 = vand.u32 %v7661, 4294901760
  %7663 = vmatmul.mubr.f32.gmra.mrb[0].mxu0 %v7662
  %v7664 = vpop.f32.mrb[0].mxu0
  %v7665 = vadd.f32 %v7423, %v7664
  %v7666 = vpop.f32.mrb[0].mxu0
  %v7667 = vand.u32 %v3009, 4294901760
  %v7668 = vsub.f32 %v3009, %v7667
  %v7669 = vand.u32 %v7668, 4294901760
  %v7670 = vsub.f32 %v7668, %v7669
  %v7671 = vand.u32 %v7670, 4294901760
  %7672 = vmatprep.mubr.f32.mxu0 %v7671
  %v7673 = vand.u32 %v2943, 4294901760
  %v7674 = vsub.f32 %v2943, %v7673
  %v7675 = vand.u32 %v7674, 4294901760
  %v7676 = vsub.f32 %v7674, %v7675
  %v7677 = vand.u32 %v7676, 4294901760
  %7678 = vmatmul.mubr.f32.gmra.mrb[0].mxu0 %v7677
  %v7679 = vpop.f32.mrb[0].mxu0
  %v7680 = vadd.f32 %v7430, %v7679
  %v7681 = vpop.f32.mrb[0].mxu0
  %v7682 = vand.u32 %v3012, 4294901760
  %v7683 = vsub.f32 %v3012, %v7682
  %v7684 = vand.u32 %v7683, 4294901760
  %v7685 = vsub.f32 %v7683, %v7684
  %v7686 = vand.u32 %v7685, 4294901760
  %7687 = vmatprep.mubr.f32.mxu0 %v7686
  %v7688 = vand.u32 %v2944, 4294901760
  %v7689 = vsub.f32 %v2944, %v7688
  %v7690 = vand.u32 %v7689, 4294901760
  %v7691 = vsub.f32 %v7689, %v7690
  %v7692 = vand.u32 %v7691, 4294901760
  %7693 = vmatmul.mubr.f32.gmra.mrb[0].mxu0 %v7692
  %v7694 = vpop.f32.mrb[0].mxu0
  %v7695 = vadd.f32 %v7437, %v7694
  %v7696 = vpop.f32.mrb[0].mxu0
  %v7697 = vand.u32 %v3015, 4294901760
  %v7698 = vsub.f32 %v3015, %v7697
  %v7699 = vand.u32 %v7698, 4294901760
  %v7700 = vsub.f32 %v7698, %v7699
  %v7701 = vand.u32 %v7700, 4294901760
  %7702 = vmatprep.mubr.f32.mxu0 %v7701
  %v7703 = vand.u32 %v2945, 4294901760
  %v7704 = vsub.f32 %v2945, %v7703
  %v7705 = vand.u32 %v7704, 4294901760
  %v7706 = vsub.f32 %v7704, %v7705
  %v7707 = vand.u32 %v7706, 4294901760
  %7708 = vmatmul.mubr.f32.gmra.mrb[0].mxu0 %v7707
  %v7709 = vpop.f32.mrb[0].mxu0
  %v7710 = vadd.f32 %v7444, %v7709
  %v7711 = vpop.f32.mrb[0].mxu0
  %v7712 = vand.u32 %v3018, 4294901760
  %v7713 = vsub.f32 %v3018, %v7712
  %v7714 = vand.u32 %v7713, 4294901760
  %v7715 = vsub.f32 %v7713, %v7714
  %v7716 = vand.u32 %v7715, 4294901760
  %7717 = vmatprep.mubr.f32.mxu0 %v7716
  %v7718 = vand.u32 %v2946, 4294901760
  %v7719 = vsub.f32 %v2946, %v7718
  %v7720 = vand.u32 %v7719, 4294901760
  %v7721 = vsub.f32 %v7719, %v7720
  %v7722 = vand.u32 %v7721, 4294901760
  %7723 = vmatmul.mubr.f32.gmra.mrb[0].mxu0 %v7722
  %v7724 = vpop.f32.mrb[0].mxu0
  %v7725 = vadd.f32 %v7451, %v7724
  %v7726 = vpop.f32.mrb[0].mxu0
  %7727 = vdwg.mxu0
  %7728 = vmatprep.subr.mxu0 0.0
  %v7729 = vand.u32 %v2698, 4294901760
  %v7730 = vsub.f32 %v2698, %v7729
  %v7731 = vand.u32 %v7730, 4294901760
  %v7732 = vsub.f32 %v7730, %v7731
  %v7733 = vand.u32 %v7732, 4294901760
  %7734 = vmatpush1.msra.mxu0 %v7733
  %7735 = vmatprep.subr.mxu0 0.0
  %v7736 = vand.u32 %v2699, 4294901760
  %v7737 = vsub.f32 %v2699, %v7736
  %v7738 = vand.u32 %v7737, 4294901760
  %v7739 = vsub.f32 %v7737, %v7738
  %v7740 = vand.u32 %v7739, 4294901760
  %7741 = vmatpush1.msra.mxu0 %v7740
  %7742 = vmatprep.subr.mxu0 0.0
  %v7743 = vand.u32 %v2700, 4294901760
  %v7744 = vsub.f32 %v2700, %v7743
  %v7745 = vand.u32 %v7744, 4294901760
  %v7746 = vsub.f32 %v7744, %v7745
  %v7747 = vand.u32 %v7746, 4294901760
  %7748 = vmatpush1.msra.mxu0 %v7747
  %7749 = vmatprep.subr.mxu0 0.0
  %v7750 = vand.u32 %v2701, 4294901760
  %v7751 = vsub.f32 %v2701, %v7750
  %v7752 = vand.u32 %v7751, 4294901760
  %v7753 = vsub.f32 %v7751, %v7752
  %v7754 = vand.u32 %v7753, 4294901760
  %7755 = vmatpush1.msra.mxu0 %v7754
  %7756 = vmatprep.subr.mxu0 0.0
  %v7757 = vand.u32 %v2702, 4294901760
  %v7758 = vsub.f32 %v2702, %v7757
  %v7759 = vand.u32 %v7758, 4294901760
  %v7760 = vsub.f32 %v7758, %v7759
  %v7761 = vand.u32 %v7760, 4294901760
  %7762 = vmatpush1.msra.mxu0 %v7761
  %7763 = vmatprep.subr.mxu0 0.0
  %v7764 = vand.u32 %v2703, 4294901760
  %v7765 = vsub.f32 %v2703, %v7764
  %v7766 = vand.u32 %v7765, 4294901760
  %v7767 = vsub.f32 %v7765, %v7766
  %v7768 = vand.u32 %v7767, 4294901760
  %7769 = vmatpush1.msra.mxu0 %v7768
  %7770 = vmatprep.subr.mxu0 0.0
  %v7771 = vand.u32 %v2704, 4294901760
  %v7772 = vsub.f32 %v2704, %v7771
  %v7773 = vand.u32 %v7772, 4294901760
  %v7774 = vsub.f32 %v7772, %v7773
  %v7775 = vand.u32 %v7774, 4294901760
  %7776 = vmatpush1.msra.mxu0 %v7775
  %7777 = vmatprep.subr.mxu0 0.0
  %v7778 = vand.u32 %v2705, 4294901760
  %v7779 = vsub.f32 %v2705, %v7778
  %v7780 = vand.u32 %v7779, 4294901760
  %v7781 = vsub.f32 %v7779, %v7780
  %v7782 = vand.u32 %v7781, 4294901760
  %7783 = vmatpush1.msra.mxu0 %v7782
  %7784 = vmatprep.subr.mxu0 0.0
  %v7785 = vand.u32 %v2706, 4294901760
  %v7786 = vsub.f32 %v2706, %v7785
  %v7787 = vand.u32 %v7786, 4294901760
  %v7788 = vsub.f32 %v7786, %v7787
  %v7789 = vand.u32 %v7788, 4294901760
  %7790 = vmatpush1.msra.mxu0 %v7789
  %7791 = vmatprep.subr.mxu0 0.0
  %v7792 = vand.u32 %v2707, 4294901760
  %v7793 = vsub.f32 %v2707, %v7792
  %v7794 = vand.u32 %v7793, 4294901760
  %v7795 = vsub.f32 %v7793, %v7794
  %v7796 = vand.u32 %v7795, 4294901760
  %7797 = vmatpush1.msra.mxu0 %v7796
  %7798 = vmatprep.subr.mxu0 0.0
  %v7799 = vand.u32 %v2708, 4294901760
  %v7800 = vsub.f32 %v2708, %v7799
  %v7801 = vand.u32 %v7800, 4294901760
  %v7802 = vsub.f32 %v7800, %v7801
  %v7803 = vand.u32 %v7802, 4294901760
  %7804 = vmatpush1.msra.mxu0 %v7803
  %7805 = vmatprep.subr.mxu0 0.0
  %v7806 = vand.u32 %v2709, 4294901760
  %v7807 = vsub.f32 %v2709, %v7806
  %v7808 = vand.u32 %v7807, 4294901760
  %v7809 = vsub.f32 %v7807, %v7808
  %v7810 = vand.u32 %v7809, 4294901760
  %7811 = vmatpush1.msra.mxu0 %v7810
  %7812 = vmatprep.subr.mxu0 0.0
  %v7813 = vand.u32 %v2710, 4294901760
  %v7814 = vsub.f32 %v2710, %v7813
  %v7815 = vand.u32 %v7814, 4294901760
  %v7816 = vsub.f32 %v7814, %v7815
  %v7817 = vand.u32 %v7816, 4294901760
  %7818 = vmatpush1.msra.mxu0 %v7817
  %7819 = vmatprep.subr.mxu0 0.0
  %v7820 = vand.u32 %v2711, 4294901760
  %v7821 = vsub.f32 %v2711, %v7820
  %v7822 = vand.u32 %v7821, 4294901760
  %v7823 = vsub.f32 %v7821, %v7822
  %v7824 = vand.u32 %v7823, 4294901760
  %7825 = vmatpush1.msra.mxu0 %v7824
  %7826 = vmatprep.subr.mxu0 0.0
  %v7827 = vand.u32 %v2712, 4294901760
  %v7828 = vsub.f32 %v2712, %v7827
  %v7829 = vand.u32 %v7828, 4294901760
  %v7830 = vsub.f32 %v7828, %v7829
  %v7831 = vand.u32 %v7830, 4294901760
  %7832 = vmatpush1.msra.mxu0 %v7831
  %7833 = vmatprep.subr.mxu0 0.0
  %v7834 = vand.u32 %v2713, 4294901760
  %v7835 = vsub.f32 %v2713, %v7834
  %v7836 = vand.u32 %v7835, 4294901760
  %v7837 = vsub.f32 %v7835, %v7836
  %v7838 = vand.u32 %v7837, 4294901760
  %7839 = vmatpush1.msra.mxu0 %v7838
  %7840 = vmatprep.subr.mxu0 0.0
  %v7841 = vand.u32 %v2714, 4294901760
  %v7842 = vsub.f32 %v2714, %v7841
  %v7843 = vand.u32 %v7842, 4294901760
  %v7844 = vsub.f32 %v7842, %v7843
  %v7845 = vand.u32 %v7844, 4294901760
  %7846 = vmatpush1.msra.mxu0 %v7845
  %7847 = vmatprep.subr.mxu0 0.0
  %v7848 = vand.u32 %v2715, 4294901760
  %v7849 = vsub.f32 %v2715, %v7848
  %v7850 = vand.u32 %v7849, 4294901760
  %v7851 = vsub.f32 %v7849, %v7850
  %v7852 = vand.u32 %v7851, 4294901760
  %7853 = vmatpush1.msra.mxu0 %v7852
  %7854 = vmatprep.subr.mxu0 0.0
  %v7855 = vand.u32 %v2716, 4294901760
  %v7856 = vsub.f32 %v2716, %v7855
  %v7857 = vand.u32 %v7856, 4294901760
  %v7858 = vsub.f32 %v7856, %v7857
  %v7859 = vand.u32 %v7858, 4294901760
  %7860 = vmatpush1.msra.mxu0 %v7859
  %7861 = vmatprep.subr.mxu0 0.0
  %v7862 = vand.u32 %v2717, 4294901760
  %v7863 = vsub.f32 %v2717, %v7862
  %v7864 = vand.u32 %v7863, 4294901760
  %v7865 = vsub.f32 %v7863, %v7864
  %v7866 = vand.u32 %v7865, 4294901760
  %7867 = vmatpush1.msra.mxu0 %v7866
  %7868 = vmatprep.subr.mxu0 0.0
  %v7869 = vand.u32 %v2718, 4294901760
  %v7870 = vsub.f32 %v2718, %v7869
  %v7871 = vand.u32 %v7870, 4294901760
  %v7872 = vsub.f32 %v7870, %v7871
  %v7873 = vand.u32 %v7872, 4294901760
  %7874 = vmatpush1.msra.mxu0 %v7873
  %7875 = vmatprep.subr.mxu0 0.0
  %v7876 = vand.u32 %v2719, 4294901760
  %v7877 = vsub.f32 %v2719, %v7876
  %v7878 = vand.u32 %v7877, 4294901760
  %v7879 = vsub.f32 %v7877, %v7878
  %v7880 = vand.u32 %v7879, 4294901760
  %7881 = vmatpush1.msra.mxu0 %v7880
  %7882 = vmatprep.subr.mxu0 0.0
  %v7883 = vand.u32 %v2720, 4294901760
  %v7884 = vsub.f32 %v2720, %v7883
  %v7885 = vand.u32 %v7884, 4294901760
  %v7886 = vsub.f32 %v7884, %v7885
  %v7887 = vand.u32 %v7886, 4294901760
  %7888 = vmatpush1.msra.mxu0 %v7887
  %7889 = vmatprep.subr.mxu0 0.0
  %v7890 = vand.u32 %v2721, 4294901760
  %v7891 = vsub.f32 %v2721, %v7890
  %v7892 = vand.u32 %v7891, 4294901760
  %v7893 = vsub.f32 %v7891, %v7892
  %v7894 = vand.u32 %v7893, 4294901760
  %7895 = vmatpush1.msra.mxu0 %v7894
  %7896 = vmatprep.subr.mxu0 0.0
  %v7897 = vand.u32 %v2722, 4294901760
  %v7898 = vsub.f32 %v2722, %v7897
  %v7899 = vand.u32 %v7898, 4294901760
  %v7900 = vsub.f32 %v7898, %v7899
  %v7901 = vand.u32 %v7900, 4294901760
  %7902 = vmatpush1.msra.mxu0 %v7901
  %7903 = vmatprep.subr.mxu0 0.0
  %v7904 = vand.u32 %v2723, 4294901760
  %v7905 = vsub.f32 %v2723, %v7904
  %v7906 = vand.u32 %v7905, 4294901760
  %v7907 = vsub.f32 %v7905, %v7906
  %v7908 = vand.u32 %v7907, 4294901760
  %7909 = vmatpush1.msra.mxu0 %v7908
  %7910 = vmatprep.subr.mxu0 0.0
  %v7911 = vand.u32 %v2724, 4294901760
  %v7912 = vsub.f32 %v2724, %v7911
  %v7913 = vand.u32 %v7912, 4294901760
  %v7914 = vsub.f32 %v7912, %v7913
  %v7915 = vand.u32 %v7914, 4294901760
  %7916 = vmatpush1.msra.mxu0 %v7915
  %7917 = vmatprep.subr.mxu0 0.0
  %v7918 = vand.u32 %v2725, 4294901760
  %v7919 = vsub.f32 %v2725, %v7918
  %v7920 = vand.u32 %v7919, 4294901760
  %v7921 = vsub.f32 %v7919, %v7920
  %v7922 = vand.u32 %v7921, 4294901760
  %7923 = vmatpush1.msra.mxu0 %v7922
  %7924 = vmatprep.subr.mxu0 0.0
  %v7925 = vand.u32 %v2726, 4294901760
  %v7926 = vsub.f32 %v2726, %v7925
  %v7927 = vand.u32 %v7926, 4294901760
  %v7928 = vsub.f32 %v7926, %v7927
  %v7929 = vand.u32 %v7928, 4294901760
  %7930 = vmatpush1.msra.mxu0 %v7929
  %7931 = vmatprep.subr.mxu0 0.0
  %7932 = vmatpush1.msra.mxu0 0.0
  %7933 = vmatprep.subr.mxu0 0.0
  %7934 = vmatpush1.msra.mxu0 0.0
  %7935 = vmatprep.subr.mxu0 0.0
  %7936 = vmatpush1.msra.mxu0 0.0
  %v7937 = vand.u32 %v2985, 4294901760
  %7938 = vmatprep.mubr.f32.mxu0 %v7937
  %v7939 = vand.u32 %v2935, 4294901760
  %7940 = vmatmul.mubr.f32.gmra.mrb[0].mxu0 %v7939
  %v7941 = vpop.f32.mrb[0].mxu0
  %v7942 = vadd.f32 %v7560, %v7941
  %v7943 = vpop.f32.mrb[0].mxu0
  %v7944 = vand.u32 %v2988, 4294901760
  %7945 = vmatprep.mubr.f32.mxu0 %v7944
  %v7946 = vand.u32 %v2936, 4294901760
  %7947 = vmatmul.mubr.f32.gmra.mrb[0].mxu0 %v7946
  %v7948 = vpop.f32.mrb[0].mxu0
  %v7949 = vadd.f32 %v7575, %v7948
  %v7950 = vpop.f32.mrb[0].mxu0
  %v7951 = vand.u32 %v2991, 4294901760
  %7952 = vmatprep.mubr.f32.mxu0 %v7951
  %v7953 = vand.u32 %v2937, 4294901760
  %7954 = vmatmul.mubr.f32.gmra.mrb[0].mxu0 %v7953
  %v7955 = vpop.f32.mrb[0].mxu0
  %v7956 = vadd.f32 %v7590, %v7955
  %v7957 = vpop.f32.mrb[0].mxu0
  %v7958 = vand.u32 %v2994, 4294901760
  %7959 = vmatprep.mubr.f32.mxu0 %v7958
  %v7960 = vand.u32 %v2938, 4294901760
  %7961 = vmatmul.mubr.f32.gmra.mrb[0].mxu0 %v7960
  %v7962 = vpop.f32.mrb[0].mxu0
  %v7963 = vadd.f32 %v7605, %v7962
  %v7964 = vpop.f32.mrb[0].mxu0
  %v7965 = vand.u32 %v2997, 4294901760
  %7966 = vmatprep.mubr.f32.mxu0 %v7965
  %v7967 = vand.u32 %v2939, 4294901760
  %7968 = vmatmul.mubr.f32.gmra.mrb[0].mxu0 %v7967
  %v7969 = vpop.f32.mrb[0].mxu0
  %v7970 = vadd.f32 %v7620, %v7969
  %v7971 = vpop.f32.mrb[0].mxu0
  %v7972 = vand.u32 %v3000, 4294901760
  %7973 = vmatprep.mubr.f32.mxu0 %v7972
  %v7974 = vand.u32 %v2940, 4294901760
  %7975 = vmatmul.mubr.f32.gmra.mrb[0].mxu0 %v7974
  %v7976 = vpop.f32.mrb[0].mxu0
  %v7977 = vadd.f32 %v7635, %v7976
  %v7978 = vpop.f32.mrb[0].mxu0
  %v7979 = vand.u32 %v3003, 4294901760
  %7980 = vmatprep.mubr.f32.mxu0 %v7979
  %v7981 = vand.u32 %v2941, 4294901760
  %7982 = vmatmul.mubr.f32.gmra.mrb[0].mxu0 %v7981
  %v7983 = vpop.f32.mrb[0].mxu0
  %v7984 = vadd.f32 %v7650, %v7983
  %v7985 = vpop.f32.mrb[0].mxu0
  %v7986 = vand.u32 %v3006, 4294901760
  %7987 = vmatprep.mubr.f32.mxu0 %v7986
  %v7988 = vand.u32 %v2942, 4294901760
  %7989 = vmatmul.mubr.f32.gmra.mrb[0].mxu0 %v7988
  %v7990 = vpop.f32.mrb[0].mxu0
  %v7991 = vadd.f32 %v7665, %v7990
  %v7992 = vpop.f32.mrb[0].mxu0
  %v7993 = vand.u32 %v3009, 4294901760
  %7994 = vmatprep.mubr.f32.mxu0 %v7993
  %v7995 = vand.u32 %v2943, 4294901760
  %7996 = vmatmul.mubr.f32.gmra.mrb[0].mxu0 %v7995
  %v7997 = vpop.f32.mrb[0].mxu0
  %v7998 = vadd.f32 %v7680, %v7997
  %v7999 = vpop.f32.mrb[0].mxu0
  %v8000 = vand.u32 %v3012, 4294901760
  %8001 = vmatprep.mubr.f32.mxu0 %v8000
  %v8002 = vand.u32 %v2944, 4294901760
  %8003 = vmatmul.mubr.f32.gmra.mrb[0].mxu0 %v8002
  %v8004 = vpop.f32.mrb[0].mxu0
  %v8005 = vadd.f32 %v7695, %v8004
  %v8006 = vpop.f32.mrb[0].mxu0
  %v8007 = vand.u32 %v3015, 4294901760
  %8008 = vmatprep.mubr.f32.mxu0 %v8007
  %v8009 = vand.u32 %v2945, 4294901760
  %8010 = vmatmul.mubr.f32.gmra.mrb[0].mxu0 %v8009
  %v8011 = vpop.f32.mrb[0].mxu0
  %v8012 = vadd.f32 %v7710, %v8011
  %v8013 = vpop.f32.mrb[0].mxu0
  %v8014 = vand.u32 %v3018, 4294901760
  %8015 = vmatprep.mubr.f32.mxu0 %v8014
  %v8016 = vand.u32 %v2946, 4294901760
  %8017 = vmatmul.mubr.f32.gmra.mrb[0].mxu0 %v8016
  %v8018 = vpop.f32.mrb[0].mxu0
  %v8019 = vadd.f32 %v7725, %v8018
  %v8020 = vpop.f32.mrb[0].mxu0
  %8021 = vdwg.mxu0
  %8022 = vmatprep.subr.mxu0 0.0
  %v8023 = vand.u32 %v2698, 4294901760
  %v8024 = vsub.f32 %v2698, %v8023
  %8025 = vmatpush1.msra.mxu0 %v8024
  %8026 = vmatprep.subr.mxu0 0.0
  %v8027 = vand.u32 %v2699, 4294901760
  %v8028 = vsub.f32 %v2699, %v8027
  %8029 = vmatpush1.msra.mxu0 %v8028
  %8030 = vmatprep.subr.mxu0 0.0
  %v8031 = vand.u32 %v2700, 4294901760
  %v8032 = vsub.f32 %v2700, %v8031
  %8033 = vmatpush1.msra.mxu0 %v8032
  %8034 = vmatprep.subr.mxu0 0.0
  %v8035 = vand.u32 %v2701, 4294901760
  %v8036 = vsub.f32 %v2701, %v8035
  %8037 = vmatpush1.msra.mxu0 %v8036
  %8038 = vmatprep.subr.mxu0 0.0
  %v8039 = vand.u32 %v2702, 4294901760
  %v8040 = vsub.f32 %v2702, %v8039
  %8041 = vmatpush1.msra.mxu0 %v8040
  %8042 = vmatprep.subr.mxu0 0.0
  %v8043 = vand.u32 %v2703, 4294901760
  %v8044 = vsub.f32 %v2703, %v8043
  %8045 = vmatpush1.msra.mxu0 %v8044
  %8046 = vmatprep.subr.mxu0 0.0
  %v8047 = vand.u32 %v2704, 4294901760
  %v8048 = vsub.f32 %v2704, %v8047
  %8049 = vmatpush1.msra.mxu0 %v8048
  %8050 = vmatprep.subr.mxu0 0.0
  %v8051 = vand.u32 %v2705, 4294901760
  %v8052 = vsub.f32 %v2705, %v8051
  %8053 = vmatpush1.msra.mxu0 %v8052
  %8054 = vmatprep.subr.mxu0 0.0
  %v8055 = vand.u32 %v2706, 4294901760
  %v8056 = vsub.f32 %v2706, %v8055
  %8057 = vmatpush1.msra.mxu0 %v8056
  %8058 = vmatprep.subr.mxu0 0.0
  %v8059 = vand.u32 %v2707, 4294901760
  %v8060 = vsub.f32 %v2707, %v8059
  %8061 = vmatpush1.msra.mxu0 %v8060
  %8062 = vmatprep.subr.mxu0 0.0
  %v8063 = vand.u32 %v2708, 4294901760
  %v8064 = vsub.f32 %v2708, %v8063
  %8065 = vmatpush1.msra.mxu0 %v8064
  %8066 = vmatprep.subr.mxu0 0.0
  %v8067 = vand.u32 %v2709, 4294901760
  %v8068 = vsub.f32 %v2709, %v8067
  %8069 = vmatpush1.msra.mxu0 %v8068
  %8070 = vmatprep.subr.mxu0 0.0
  %v8071 = vand.u32 %v2710, 4294901760
  %v8072 = vsub.f32 %v2710, %v8071
  %8073 = vmatpush1.msra.mxu0 %v8072
  %8074 = vmatprep.subr.mxu0 0.0
  %v8075 = vand.u32 %v2711, 4294901760
  %v8076 = vsub.f32 %v2711, %v8075
  %8077 = vmatpush1.msra.mxu0 %v8076
  %8078 = vmatprep.subr.mxu0 0.0
  %v8079 = vand.u32 %v2712, 4294901760
  %v8080 = vsub.f32 %v2712, %v8079
  %8081 = vmatpush1.msra.mxu0 %v8080
  %8082 = vmatprep.subr.mxu0 0.0
  %v8083 = vand.u32 %v2713, 4294901760
  %v8084 = vsub.f32 %v2713, %v8083
  %8085 = vmatpush1.msra.mxu0 %v8084
  %8086 = vmatprep.subr.mxu0 0.0
  %v8087 = vand.u32 %v2714, 4294901760
  %v8088 = vsub.f32 %v2714, %v8087
  %8089 = vmatpush1.msra.mxu0 %v8088
  %8090 = vmatprep.subr.mxu0 0.0
  %v8091 = vand.u32 %v2715, 4294901760
  %v8092 = vsub.f32 %v2715, %v8091
  %8093 = vmatpush1.msra.mxu0 %v8092
  %8094 = vmatprep.subr.mxu0 0.0
  %v8095 = vand.u32 %v2716, 4294901760
  %v8096 = vsub.f32 %v2716, %v8095
  %8097 = vmatpush1.msra.mxu0 %v8096
  %8098 = vmatprep.subr.mxu0 0.0
  %v8099 = vand.u32 %v2717, 4294901760
  %v8100 = vsub.f32 %v2717, %v8099
  %8101 = vmatpush1.msra.mxu0 %v8100
  %8102 = vmatprep.subr.mxu0 0.0
  %v8103 = vand.u32 %v2718, 4294901760
  %v8104 = vsub.f32 %v2718, %v8103
  %8105 = vmatpush1.msra.mxu0 %v8104
  %8106 = vmatprep.subr.mxu0 0.0
  %v8107 = vand.u32 %v2719, 4294901760
  %v8108 = vsub.f32 %v2719, %v8107
  %8109 = vmatpush1.msra.mxu0 %v8108
  %8110 = vmatprep.subr.mxu0 0.0
  %v8111 = vand.u32 %v2720, 4294901760
  %v8112 = vsub.f32 %v2720, %v8111
  %8113 = vmatpush1.msra.mxu0 %v8112
  %8114 = vmatprep.subr.mxu0 0.0
  %v8115 = vand.u32 %v2721, 4294901760
  %v8116 = vsub.f32 %v2721, %v8115
  %8117 = vmatpush1.msra.mxu0 %v8116
  %8118 = vmatprep.subr.mxu0 0.0
  %v8119 = vand.u32 %v2722, 4294901760
  %v8120 = vsub.f32 %v2722, %v8119
  %8121 = vmatpush1.msra.mxu0 %v8120
  %8122 = vmatprep.subr.mxu0 0.0
  %v8123 = vand.u32 %v2723, 4294901760
  %v8124 = vsub.f32 %v2723, %v8123
  %8125 = vmatpush1.msra.mxu0 %v8124
  %8126 = vmatprep.subr.mxu0 0.0
  %v8127 = vand.u32 %v2724, 4294901760
  %v8128 = vsub.f32 %v2724, %v8127
  %8129 = vmatpush1.msra.mxu0 %v8128
  %8130 = vmatprep.subr.mxu0 0.0
  %v8131 = vand.u32 %v2725, 4294901760
  %v8132 = vsub.f32 %v2725, %v8131
  %8133 = vmatpush1.msra.mxu0 %v8132
  %8134 = vmatprep.subr.mxu0 0.0
  %v8135 = vand.u32 %v2726, 4294901760
  %v8136 = vsub.f32 %v2726, %v8135
  %8137 = vmatpush1.msra.mxu0 %v8136
  %8138 = vmatprep.subr.mxu0 0.0
  %8139 = vmatpush1.msra.mxu0 0.0
  %8140 = vmatprep.subr.mxu0 0.0
  %8141 = vmatpush1.msra.mxu0 0.0
  %8142 = vmatprep.subr.mxu0 0.0
  %8143 = vmatpush1.msra.mxu0 0.0
  %v8144 = vand.u32 %v2985, 4294901760
  %v8145 = vsub.f32 %v2985, %v8144
  %8146 = vmatprep.mubr.f32.mxu0 %v8145
  %v8147 = vand.u32 %v2935, 4294901760
  %v8148 = vsub.f32 %v2935, %v8147
  %8149 = vmatmul.mubr.f32.gmra.mrb[0].mxu0 %v8148
  %v8150 = vpop.f32.mrb[0].mxu0
  %v8151 = vadd.f32 %v7942, %v8150
  %v8152 = vpop.f32.mrb[0].mxu0
  %v8153 = vand.u32 %v2988, 4294901760
  %v8154 = vsub.f32 %v2988, %v8153
  %8155 = vmatprep.mubr.f32.mxu0 %v8154
  %v8156 = vand.u32 %v2936, 4294901760
  %v8157 = vsub.f32 %v2936, %v8156
  %8158 = vmatmul.mubr.f32.gmra.mrb[0].mxu0 %v8157
  %v8159 = vpop.f32.mrb[0].mxu0
  %v8160 = vadd.f32 %v7949, %v8159
  %v8161 = vpop.f32.mrb[0].mxu0
  %v8162 = vand.u32 %v2991, 4294901760
  %v8163 = vsub.f32 %v2991, %v8162
  %8164 = vmatprep.mubr.f32.mxu0 %v8163
  %v8165 = vand.u32 %v2937, 4294901760
  %v8166 = vsub.f32 %v2937, %v8165
  %8167 = vmatmul.mubr.f32.gmra.mrb[0].mxu0 %v8166
  %v8168 = vpop.f32.mrb[0].mxu0
  %v8169 = vadd.f32 %v7956, %v8168
  %v8170 = vpop.f32.mrb[0].mxu0
  %v8171 = vand.u32 %v2994, 4294901760
  %v8172 = vsub.f32 %v2994, %v8171
  %8173 = vmatprep.mubr.f32.mxu0 %v8172
  %v8174 = vand.u32 %v2938, 4294901760
  %v8175 = vsub.f32 %v2938, %v8174
  %8176 = vmatmul.mubr.f32.gmra.mrb[0].mxu0 %v8175
  %v8177 = vpop.f32.mrb[0].mxu0
  %v8178 = vadd.f32 %v7963, %v8177
  %v8179 = vpop.f32.mrb[0].mxu0
  %v8180 = vand.u32 %v2997, 4294901760
  %v8181 = vsub.f32 %v2997, %v8180
  %8182 = vmatprep.mubr.f32.mxu0 %v8181
  %v8183 = vand.u32 %v2939, 4294901760
  %v8184 = vsub.f32 %v2939, %v8183
  %8185 = vmatmul.mubr.f32.gmra.mrb[0].mxu0 %v8184
  %v8186 = vpop.f32.mrb[0].mxu0
  %v8187 = vadd.f32 %v7970, %v8186
  %v8188 = vpop.f32.mrb[0].mxu0
  %v8189 = vand.u32 %v3000, 4294901760
  %v8190 = vsub.f32 %v3000, %v8189
  %8191 = vmatprep.mubr.f32.mxu0 %v8190
  %v8192 = vand.u32 %v2940, 4294901760
  %v8193 = vsub.f32 %v2940, %v8192
  %8194 = vmatmul.mubr.f32.gmra.mrb[0].mxu0 %v8193
  %v8195 = vpop.f32.mrb[0].mxu0
  %v8196 = vadd.f32 %v7977, %v8195
  %v8197 = vpop.f32.mrb[0].mxu0
  %v8198 = vand.u32 %v3003, 4294901760
  %v8199 = vsub.f32 %v3003, %v8198
  %8200 = vmatprep.mubr.f32.mxu0 %v8199
  %v8201 = vand.u32 %v2941, 4294901760
  %v8202 = vsub.f32 %v2941, %v8201
  %8203 = vmatmul.mubr.f32.gmra.mrb[0].mxu0 %v8202
  %v8204 = vpop.f32.mrb[0].mxu0
  %v8205 = vadd.f32 %v7984, %v8204
  %v8206 = vpop.f32.mrb[0].mxu0
  %v8207 = vand.u32 %v3006, 4294901760
  %v8208 = vsub.f32 %v3006, %v8207
  %8209 = vmatprep.mubr.f32.mxu0 %v8208
  %v8210 = vand.u32 %v2942, 4294901760
  %v8211 = vsub.f32 %v2942, %v8210
  %8212 = vmatmul.mubr.f32.gmra.mrb[0].mxu0 %v8211
  %v8213 = vpop.f32.mrb[0].mxu0
  %v8214 = vadd.f32 %v7991, %v8213
  %v8215 = vpop.f32.mrb[0].mxu0
  %v8216 = vand.u32 %v3009, 4294901760
  %v8217 = vsub.f32 %v3009, %v8216
  %8218 = vmatprep.mubr.f32.mxu0 %v8217
  %v8219 = vand.u32 %v2943, 4294901760
  %v8220 = vsub.f32 %v2943, %v8219
  %8221 = vmatmul.mubr.f32.gmra.mrb[0].mxu0 %v8220
  %v8222 = vpop.f32.mrb[0].mxu0
  %v8223 = vadd.f32 %v7998, %v8222
  %v8224 = vpop.f32.mrb[0].mxu0
  %v8225 = vand.u32 %v3012, 4294901760
  %v8226 = vsub.f32 %v3012, %v8225
  %8227 = vmatprep.mubr.f32.mxu0 %v8226
  %v8228 = vand.u32 %v2944, 4294901760
  %v8229 = vsub.f32 %v2944, %v8228
  %8230 = vmatmul.mubr.f32.gmra.mrb[0].mxu0 %v8229
  %v8231 = vpop.f32.mrb[0].mxu0
  %v8232 = vadd.f32 %v8005, %v8231
  %v8233 = vpop.f32.mrb[0].mxu0
  %v8234 = vand.u32 %v3015, 4294901760
  %v8235 = vsub.f32 %v3015, %v8234
  %8236 = vmatprep.mubr.f32.mxu0 %v8235
  %v8237 = vand.u32 %v2945, 4294901760
  %v8238 = vsub.f32 %v2945, %v8237
  %8239 = vmatmul.mubr.f32.gmra.mrb[0].mxu0 %v8238
  %v8240 = vpop.f32.mrb[0].mxu0
  %v8241 = vadd.f32 %v8012, %v8240
  %v8242 = vpop.f32.mrb[0].mxu0
  %v8243 = vand.u32 %v3018, 4294901760
  %v8244 = vsub.f32 %v3018, %v8243
  %8245 = vmatprep.mubr.f32.mxu0 %v8244
  %v8246 = vand.u32 %v2946, 4294901760
  %v8247 = vsub.f32 %v2946, %v8246
  %8248 = vmatmul.mubr.f32.gmra.mrb[0].mxu0 %v8247
  %v8249 = vpop.f32.mrb[0].mxu0
  %v8250 = vadd.f32 %v8019, %v8249
  %v8251 = vpop.f32.mrb[0].mxu0
  %8252 = vdwg.mxu0
  %8253 = vmatprep.subr.mxu0 0.0
  %v8254 = vand.u32 %v2698, 4294901760
  %8255 = vmatpush1.msra.mxu0 %v8254
  %8256 = vmatprep.subr.mxu0 0.0
  %v8257 = vand.u32 %v2699, 4294901760
  %8258 = vmatpush1.msra.mxu0 %v8257
  %8259 = vmatprep.subr.mxu0 0.0
  %v8260 = vand.u32 %v2700, 4294901760
  %8261 = vmatpush1.msra.mxu0 %v8260
  %8262 = vmatprep.subr.mxu0 0.0
  %v8263 = vand.u32 %v2701, 4294901760
  %8264 = vmatpush1.msra.mxu0 %v8263
  %8265 = vmatprep.subr.mxu0 0.0
  %v8266 = vand.u32 %v2702, 4294901760
  %8267 = vmatpush1.msra.mxu0 %v8266
  %8268 = vmatprep.subr.mxu0 0.0
  %v8269 = vand.u32 %v2703, 4294901760
  %8270 = vmatpush1.msra.mxu0 %v8269
  %8271 = vmatprep.subr.mxu0 0.0
  %v8272 = vand.u32 %v2704, 4294901760
  %8273 = vmatpush1.msra.mxu0 %v8272
  %8274 = vmatprep.subr.mxu0 0.0
  %v8275 = vand.u32 %v2705, 4294901760
  %8276 = vmatpush1.msra.mxu0 %v8275
  %8277 = vmatprep.subr.mxu0 0.0
  %v8278 = vand.u32 %v2706, 4294901760
  %8279 = vmatpush1.msra.mxu0 %v8278
  %8280 = vmatprep.subr.mxu0 0.0
  %v8281 = vand.u32 %v2707, 4294901760
  %8282 = vmatpush1.msra.mxu0 %v8281
  %8283 = vmatprep.subr.mxu0 0.0
  %v8284 = vand.u32 %v2708, 4294901760
  %8285 = vmatpush1.msra.mxu0 %v8284
  %8286 = vmatprep.subr.mxu0 0.0
  %v8287 = vand.u32 %v2709, 4294901760
  %8288 = vmatpush1.msra.mxu0 %v8287
  %8289 = vmatprep.subr.mxu0 0.0
  %v8290 = vand.u32 %v2710, 4294901760
  %8291 = vmatpush1.msra.mxu0 %v8290
  %8292 = vmatprep.subr.mxu0 0.0
  %v8293 = vand.u32 %v2711, 4294901760
  %8294 = vmatpush1.msra.mxu0 %v8293
  %8295 = vmatprep.subr.mxu0 0.0
  %v8296 = vand.u32 %v2712, 4294901760
  %8297 = vmatpush1.msra.mxu0 %v8296
  %8298 = vmatprep.subr.mxu0 0.0
  %v8299 = vand.u32 %v2713, 4294901760
  %8300 = vmatpush1.msra.mxu0 %v8299
  %8301 = vmatprep.subr.mxu0 0.0
  %v8302 = vand.u32 %v2714, 4294901760
  %8303 = vmatpush1.msra.mxu0 %v8302
  %8304 = vmatprep.subr.mxu0 0.0
  %v8305 = vand.u32 %v2715, 4294901760
  %8306 = vmatpush1.msra.mxu0 %v8305
  %8307 = vmatprep.subr.mxu0 0.0
  %v8308 = vand.u32 %v2716, 4294901760
  %8309 = vmatpush1.msra.mxu0 %v8308
  %8310 = vmatprep.subr.mxu0 0.0
  %v8311 = vand.u32 %v2717, 4294901760
  %8312 = vmatpush1.msra.mxu0 %v8311
  %8313 = vmatprep.subr.mxu0 0.0
  %v8314 = vand.u32 %v2718, 4294901760
  %8315 = vmatpush1.msra.mxu0 %v8314
  %8316 = vmatprep.subr.mxu0 0.0
  %v8317 = vand.u32 %v2719, 4294901760
  %8318 = vmatpush1.msra.mxu0 %v8317
  %8319 = vmatprep.subr.mxu0 0.0
  %v8320 = vand.u32 %v2720, 4294901760
  %8321 = vmatpush1.msra.mxu0 %v8320
  %8322 = vmatprep.subr.mxu0 0.0
  %v8323 = vand.u32 %v2721, 4294901760
  %8324 = vmatpush1.msra.mxu0 %v8323
  %8325 = vmatprep.subr.mxu0 0.0
  %v8326 = vand.u32 %v2722, 4294901760
  %8327 = vmatpush1.msra.mxu0 %v8326
  %8328 = vmatprep.subr.mxu0 0.0
  %v8329 = vand.u32 %v2723, 4294901760
  %8330 = vmatpush1.msra.mxu0 %v8329
  %8331 = vmatprep.subr.mxu0 0.0
  %v8332 = vand.u32 %v2724, 4294901760
  %8333 = vmatpush1.msra.mxu0 %v8332
  %8334 = vmatprep.subr.mxu0 0.0
  %v8335 = vand.u32 %v2725, 4294901760
  %8336 = vmatpush1.msra.mxu0 %v8335
  %8337 = vmatprep.subr.mxu0 0.0
  %v8338 = vand.u32 %v2726, 4294901760
  %8339 = vmatpush1.msra.mxu0 %v8338
  %8340 = vmatprep.subr.mxu0 0.0
  %8341 = vmatpush1.msra.mxu0 0.0
  %8342 = vmatprep.subr.mxu0 0.0
  %8343 = vmatpush1.msra.mxu0 0.0
  %8344 = vmatprep.subr.mxu0 0.0
  %8345 = vmatpush1.msra.mxu0 0.0
  %v8346 = vand.u32 %v2985, 4294901760
  %v8347 = vsub.f32 %v2985, %v8346
  %v8348 = vand.u32 %v8347, 4294901760
  %8349 = vmatprep.mubr.f32.mxu0 %v8348
  %v8350 = vand.u32 %v2935, 4294901760
  %v8351 = vsub.f32 %v2935, %v8350
  %v8352 = vand.u32 %v8351, 4294901760
  %8353 = vmatmul.mubr.f32.gmra.mrb[0].mxu0 %v8352
  %v8354 = vpop.f32.mrb[0].mxu0
  %v8355 = vadd.f32 %v8151, %v8354
  %v8356 = vpop.f32.mrb[0].mxu0
  %v8357 = vand.u32 %v2988, 4294901760
  %v8358 = vsub.f32 %v2988, %v8357
  %v8359 = vand.u32 %v8358, 4294901760
  %8360 = vmatprep.mubr.f32.mxu0 %v8359
  %v8361 = vand.u32 %v2936, 4294901760
  %v8362 = vsub.f32 %v2936, %v8361
  %v8363 = vand.u32 %v8362, 4294901760
  %8364 = vmatmul.mubr.f32.gmra.mrb[0].mxu0 %v8363
  %v8365 = vpop.f32.mrb[0].mxu0
  %v8366 = vadd.f32 %v8160, %v8365
  %v8367 = vpop.f32.mrb[0].mxu0
  %v8368 = vand.u32 %v2991, 4294901760
  %v8369 = vsub.f32 %v2991, %v8368
  %v8370 = vand.u32 %v8369, 4294901760
  %8371 = vmatprep.mubr.f32.mxu0 %v8370
  %v8372 = vand.u32 %v2937, 4294901760
  %v8373 = vsub.f32 %v2937, %v8372
  %v8374 = vand.u32 %v8373, 4294901760
  %8375 = vmatmul.mubr.f32.gmra.mrb[0].mxu0 %v8374
  %v8376 = vpop.f32.mrb[0].mxu0
  %v8377 = vadd.f32 %v8169, %v8376
  %v8378 = vpop.f32.mrb[0].mxu0
  %v8379 = vand.u32 %v2994, 4294901760
  %v8380 = vsub.f32 %v2994, %v8379
  %v8381 = vand.u32 %v8380, 4294901760
  %8382 = vmatprep.mubr.f32.mxu0 %v8381
  %v8383 = vand.u32 %v2938, 4294901760
  %v8384 = vsub.f32 %v2938, %v8383
  %v8385 = vand.u32 %v8384, 4294901760
  %8386 = vmatmul.mubr.f32.gmra.mrb[0].mxu0 %v8385
  %v8387 = vpop.f32.mrb[0].mxu0
  %v8388 = vadd.f32 %v8178, %v8387
  %v8389 = vpop.f32.mrb[0].mxu0
  %v8390 = vand.u32 %v2997, 4294901760
  %v8391 = vsub.f32 %v2997, %v8390
  %v8392 = vand.u32 %v8391, 4294901760
  %8393 = vmatprep.mubr.f32.mxu0 %v8392
  %v8394 = vand.u32 %v2939, 4294901760
  %v8395 = vsub.f32 %v2939, %v8394
  %v8396 = vand.u32 %v8395, 4294901760
  %8397 = vmatmul.mubr.f32.gmra.mrb[0].mxu0 %v8396
  %v8398 = vpop.f32.mrb[0].mxu0
  %v8399 = vadd.f32 %v8187, %v8398
  %v8400 = vpop.f32.mrb[0].mxu0
  %v8401 = vand.u32 %v3000, 4294901760
  %v8402 = vsub.f32 %v3000, %v8401
  %v8403 = vand.u32 %v8402, 4294901760
  %8404 = vmatprep.mubr.f32.mxu0 %v8403
  %v8405 = vand.u32 %v2940, 4294901760
  %v8406 = vsub.f32 %v2940, %v8405
  %v8407 = vand.u32 %v8406, 4294901760
  %8408 = vmatmul.mubr.f32.gmra.mrb[0].mxu0 %v8407
  %v8409 = vpop.f32.mrb[0].mxu0
  %v8410 = vadd.f32 %v8196, %v8409
  %v8411 = vpop.f32.mrb[0].mxu0
  %v8412 = vand.u32 %v3003, 4294901760
  %v8413 = vsub.f32 %v3003, %v8412
  %v8414 = vand.u32 %v8413, 4294901760
  %8415 = vmatprep.mubr.f32.mxu0 %v8414
  %v8416 = vand.u32 %v2941, 4294901760
  %v8417 = vsub.f32 %v2941, %v8416
  %v8418 = vand.u32 %v8417, 4294901760
  %8419 = vmatmul.mubr.f32.gmra.mrb[0].mxu0 %v8418
  %v8420 = vpop.f32.mrb[0].mxu0
  %v8421 = vadd.f32 %v8205, %v8420
  %v8422 = vpop.f32.mrb[0].mxu0
  %v8423 = vand.u32 %v3006, 4294901760
  %v8424 = vsub.f32 %v3006, %v8423
  %v8425 = vand.u32 %v8424, 4294901760
  %8426 = vmatprep.mubr.f32.mxu0 %v8425
  %v8427 = vand.u32 %v2942, 4294901760
  %v8428 = vsub.f32 %v2942, %v8427
  %v8429 = vand.u32 %v8428, 4294901760
  %8430 = vmatmul.mubr.f32.gmra.mrb[0].mxu0 %v8429
  %v8431 = vpop.f32.mrb[0].mxu0
  %v8432 = vadd.f32 %v8214, %v8431
  %v8433 = vpop.f32.mrb[0].mxu0
  %v8434 = vand.u32 %v3009, 4294901760
  %v8435 = vsub.f32 %v3009, %v8434
  %v8436 = vand.u32 %v8435, 4294901760
  %8437 = vmatprep.mubr.f32.mxu0 %v8436
  %v8438 = vand.u32 %v2943, 4294901760
  %v8439 = vsub.f32 %v2943, %v8438
  %v8440 = vand.u32 %v8439, 4294901760
  %8441 = vmatmul.mubr.f32.gmra.mrb[0].mxu0 %v8440
  %v8442 = vpop.f32.mrb[0].mxu0
  %v8443 = vadd.f32 %v8223, %v8442
  %v8444 = vpop.f32.mrb[0].mxu0
  %v8445 = vand.u32 %v3012, 4294901760
  %v8446 = vsub.f32 %v3012, %v8445
  %v8447 = vand.u32 %v8446, 4294901760
  %8448 = vmatprep.mubr.f32.mxu0 %v8447
  %v8449 = vand.u32 %v2944, 4294901760
  %v8450 = vsub.f32 %v2944, %v8449
  %v8451 = vand.u32 %v8450, 4294901760
  %8452 = vmatmul.mubr.f32.gmra.mrb[0].mxu0 %v8451
  %v8453 = vpop.f32.mrb[0].mxu0
  %v8454 = vadd.f32 %v8232, %v8453
  %v8455 = vpop.f32.mrb[0].mxu0
  %v8456 = vand.u32 %v3015, 4294901760
  %v8457 = vsub.f32 %v3015, %v8456
  %v8458 = vand.u32 %v8457, 4294901760
  %8459 = vmatprep.mubr.f32.mxu0 %v8458
  %v8460 = vand.u32 %v2945, 4294901760
  %v8461 = vsub.f32 %v2945, %v8460
  %v8462 = vand.u32 %v8461, 4294901760
  %8463 = vmatmul.mubr.f32.gmra.mrb[0].mxu0 %v8462
  %v8464 = vpop.f32.mrb[0].mxu0
  %v8465 = vadd.f32 %v8241, %v8464
  %v8466 = vpop.f32.mrb[0].mxu0
  %v8467 = vand.u32 %v3018, 4294901760
  %v8468 = vsub.f32 %v3018, %v8467
  %v8469 = vand.u32 %v8468, 4294901760
  %8470 = vmatprep.mubr.f32.mxu0 %v8469
  %v8471 = vand.u32 %v2946, 4294901760
  %v8472 = vsub.f32 %v2946, %v8471
  %v8473 = vand.u32 %v8472, 4294901760
  %8474 = vmatmul.mubr.f32.gmra.mrb[0].mxu0 %v8473
  %v8475 = vpop.f32.mrb[0].mxu0
  %v8476 = vadd.f32 %v8250, %v8475
  %v8477 = vpop.f32.mrb[0].mxu0
  %8478 = vdwg.mxu0
  %8479 = vmatprep.subr.mxu0 0.0
  %v8480 = vand.u32 %v2698, 4294901760
  %v8481 = vsub.f32 %v2698, %v8480
  %v8482 = vand.u32 %v8481, 4294901760
  %8483 = vmatpush1.msra.mxu0 %v8482
  %8484 = vmatprep.subr.mxu0 0.0
  %v8485 = vand.u32 %v2699, 4294901760
  %v8486 = vsub.f32 %v2699, %v8485
  %v8487 = vand.u32 %v8486, 4294901760
  %8488 = vmatpush1.msra.mxu0 %v8487
  %8489 = vmatprep.subr.mxu0 0.0
  %v8490 = vand.u32 %v2700, 4294901760
  %v8491 = vsub.f32 %v2700, %v8490
  %v8492 = vand.u32 %v8491, 4294901760
  %8493 = vmatpush1.msra.mxu0 %v8492
  %8494 = vmatprep.subr.mxu0 0.0
  %v8495 = vand.u32 %v2701, 4294901760
  %v8496 = vsub.f32 %v2701, %v8495
  %v8497 = vand.u32 %v8496, 4294901760
  %8498 = vmatpush1.msra.mxu0 %v8497
  %8499 = vmatprep.subr.mxu0 0.0
  %v8500 = vand.u32 %v2702, 4294901760
  %v8501 = vsub.f32 %v2702, %v8500
  %v8502 = vand.u32 %v8501, 4294901760
  %8503 = vmatpush1.msra.mxu0 %v8502
  %8504 = vmatprep.subr.mxu0 0.0
  %v8505 = vand.u32 %v2703, 4294901760
  %v8506 = vsub.f32 %v2703, %v8505
  %v8507 = vand.u32 %v8506, 4294901760
  %8508 = vmatpush1.msra.mxu0 %v8507
  %8509 = vmatprep.subr.mxu0 0.0
  %v8510 = vand.u32 %v2704, 4294901760
  %v8511 = vsub.f32 %v2704, %v8510
  %v8512 = vand.u32 %v8511, 4294901760
  %8513 = vmatpush1.msra.mxu0 %v8512
  %8514 = vmatprep.subr.mxu0 0.0
  %v8515 = vand.u32 %v2705, 4294901760
  %v8516 = vsub.f32 %v2705, %v8515
  %v8517 = vand.u32 %v8516, 4294901760
  %8518 = vmatpush1.msra.mxu0 %v8517
  %8519 = vmatprep.subr.mxu0 0.0
  %v8520 = vand.u32 %v2706, 4294901760
  %v8521 = vsub.f32 %v2706, %v8520
  %v8522 = vand.u32 %v8521, 4294901760
  %8523 = vmatpush1.msra.mxu0 %v8522
  %8524 = vmatprep.subr.mxu0 0.0
  %v8525 = vand.u32 %v2707, 4294901760
  %v8526 = vsub.f32 %v2707, %v8525
  %v8527 = vand.u32 %v8526, 4294901760
  %8528 = vmatpush1.msra.mxu0 %v8527
  %8529 = vmatprep.subr.mxu0 0.0
  %v8530 = vand.u32 %v2708, 4294901760
  %v8531 = vsub.f32 %v2708, %v8530
  %v8532 = vand.u32 %v8531, 4294901760
  %8533 = vmatpush1.msra.mxu0 %v8532
  %8534 = vmatprep.subr.mxu0 0.0
  %v8535 = vand.u32 %v2709, 4294901760
  %v8536 = vsub.f32 %v2709, %v8535
  %v8537 = vand.u32 %v8536, 4294901760
  %8538 = vmatpush1.msra.mxu0 %v8537
  %8539 = vmatprep.subr.mxu0 0.0
  %v8540 = vand.u32 %v2710, 4294901760
  %v8541 = vsub.f32 %v2710, %v8540
  %v8542 = vand.u32 %v8541, 4294901760
  %8543 = vmatpush1.msra.mxu0 %v8542
  %8544 = vmatprep.subr.mxu0 0.0
  %v8545 = vand.u32 %v2711, 4294901760
  %v8546 = vsub.f32 %v2711, %v8545
  %v8547 = vand.u32 %v8546, 4294901760
  %8548 = vmatpush1.msra.mxu0 %v8547
  %8549 = vmatprep.subr.mxu0 0.0
  %v8550 = vand.u32 %v2712, 4294901760
  %v8551 = vsub.f32 %v2712, %v8550
  %v8552 = vand.u32 %v8551, 4294901760
  %8553 = vmatpush1.msra.mxu0 %v8552
  %8554 = vmatprep.subr.mxu0 0.0
  %v8555 = vand.u32 %v2713, 4294901760
  %v8556 = vsub.f32 %v2713, %v8555
  %v8557 = vand.u32 %v8556, 4294901760
  %8558 = vmatpush1.msra.mxu0 %v8557
  %8559 = vmatprep.subr.mxu0 0.0
  %v8560 = vand.u32 %v2714, 4294901760
  %v8561 = vsub.f32 %v2714, %v8560
  %v8562 = vand.u32 %v8561, 4294901760
  %8563 = vmatpush1.msra.mxu0 %v8562
  %8564 = vmatprep.subr.mxu0 0.0
  %v8565 = vand.u32 %v2715, 4294901760
  %v8566 = vsub.f32 %v2715, %v8565
  %v8567 = vand.u32 %v8566, 4294901760
  %8568 = vmatpush1.msra.mxu0 %v8567
  %8569 = vmatprep.subr.mxu0 0.0
  %v8570 = vand.u32 %v2716, 4294901760
  %v8571 = vsub.f32 %v2716, %v8570
  %v8572 = vand.u32 %v8571, 4294901760
  %8573 = vmatpush1.msra.mxu0 %v8572
  %8574 = vmatprep.subr.mxu0 0.0
  %v8575 = vand.u32 %v2717, 4294901760
  %v8576 = vsub.f32 %v2717, %v8575
  %v8577 = vand.u32 %v8576, 4294901760
  %8578 = vmatpush1.msra.mxu0 %v8577
  %8579 = vmatprep.subr.mxu0 0.0
  %v8580 = vand.u32 %v2718, 4294901760
  %v8581 = vsub.f32 %v2718, %v8580
  %v8582 = vand.u32 %v8581, 4294901760
  %8583 = vmatpush1.msra.mxu0 %v8582
  %8584 = vmatprep.subr.mxu0 0.0
  %v8585 = vand.u32 %v2719, 4294901760
  %v8586 = vsub.f32 %v2719, %v8585
  %v8587 = vand.u32 %v8586, 4294901760
  %8588 = vmatpush1.msra.mxu0 %v8587
  %8589 = vmatprep.subr.mxu0 0.0
  %v8590 = vand.u32 %v2720, 4294901760
  %v8591 = vsub.f32 %v2720, %v8590
  %v8592 = vand.u32 %v8591, 4294901760
  %8593 = vmatpush1.msra.mxu0 %v8592
  %8594 = vmatprep.subr.mxu0 0.0
  %v8595 = vand.u32 %v2721, 4294901760
  %v8596 = vsub.f32 %v2721, %v8595
  %v8597 = vand.u32 %v8596, 4294901760
  %8598 = vmatpush1.msra.mxu0 %v8597
  %8599 = vmatprep.subr.mxu0 0.0
  %v8600 = vand.u32 %v2722, 4294901760
  %v8601 = vsub.f32 %v2722, %v8600
  %v8602 = vand.u32 %v8601, 4294901760
  %8603 = vmatpush1.msra.mxu0 %v8602
  %8604 = vmatprep.subr.mxu0 0.0
  %v8605 = vand.u32 %v2723, 4294901760
  %v8606 = vsub.f32 %v2723, %v8605
  %v8607 = vand.u32 %v8606, 4294901760
  %8608 = vmatpush1.msra.mxu0 %v8607
  %8609 = vmatprep.subr.mxu0 0.0
  %v8610 = vand.u32 %v2724, 4294901760
  %v8611 = vsub.f32 %v2724, %v8610
  %v8612 = vand.u32 %v8611, 4294901760
  %8613 = vmatpush1.msra.mxu0 %v8612
  %8614 = vmatprep.subr.mxu0 0.0
  %v8615 = vand.u32 %v2725, 4294901760
  %v8616 = vsub.f32 %v2725, %v8615
  %v8617 = vand.u32 %v8616, 4294901760
  %8618 = vmatpush1.msra.mxu0 %v8617
  %8619 = vmatprep.subr.mxu0 0.0
  %v8620 = vand.u32 %v2726, 4294901760
  %v8621 = vsub.f32 %v2726, %v8620
  %v8622 = vand.u32 %v8621, 4294901760
  %8623 = vmatpush1.msra.mxu0 %v8622
  %8624 = vmatprep.subr.mxu0 0.0
  %8625 = vmatpush1.msra.mxu0 0.0
  %8626 = vmatprep.subr.mxu0 0.0
  %8627 = vmatpush1.msra.mxu0 0.0
  %8628 = vmatprep.subr.mxu0 0.0
  %8629 = vmatpush1.msra.mxu0 0.0
  %v8630 = vand.u32 %v2985, 4294901760
  %8631 = vmatprep.mubr.f32.mxu0 %v8630
  %v8632 = vand.u32 %v2935, 4294901760
  %8633 = vmatmul.mubr.f32.gmra.mrb[0].mxu0 %v8632
  %v8634 = vpop.f32.mrb[0].mxu0
  %v8635 = vadd.f32 %v8355, %v8634
  %v8636 = vpop.f32.mrb[0].mxu0
  %v8637 = vand.u32 %v2988, 4294901760
  %8638 = vmatprep.mubr.f32.mxu0 %v8637
  %v8639 = vand.u32 %v2936, 4294901760
  %8640 = vmatmul.mubr.f32.gmra.mrb[0].mxu0 %v8639
  %v8641 = vpop.f32.mrb[0].mxu0
  %v8642 = vadd.f32 %v8366, %v8641
  %v8643 = vpop.f32.mrb[0].mxu0
  %v8644 = vand.u32 %v2991, 4294901760
  %8645 = vmatprep.mubr.f32.mxu0 %v8644
  %v8646 = vand.u32 %v2937, 4294901760
  %8647 = vmatmul.mubr.f32.gmra.mrb[0].mxu0 %v8646
  %v8648 = vpop.f32.mrb[0].mxu0
  %v8649 = vadd.f32 %v8377, %v8648
  %v8650 = vpop.f32.mrb[0].mxu0
  %v8651 = vand.u32 %v2994, 4294901760
  %8652 = vmatprep.mubr.f32.mxu0 %v8651
  %v8653 = vand.u32 %v2938, 4294901760
  %8654 = vmatmul.mubr.f32.gmra.mrb[0].mxu0 %v8653
  %v8655 = vpop.f32.mrb[0].mxu0
  %v8656 = vadd.f32 %v8388, %v8655
  %v8657 = vpop.f32.mrb[0].mxu0
  %v8658 = vand.u32 %v2997, 4294901760
  %8659 = vmatprep.mubr.f32.mxu0 %v8658
  %v8660 = vand.u32 %v2939, 4294901760
  %8661 = vmatmul.mubr.f32.gmra.mrb[0].mxu0 %v8660
  %v8662 = vpop.f32.mrb[0].mxu0
  %v8663 = vadd.f32 %v8399, %v8662
  %v8664 = vpop.f32.mrb[0].mxu0
  %v8665 = vand.u32 %v3000, 4294901760
  %8666 = vmatprep.mubr.f32.mxu0 %v8665
  %v8667 = vand.u32 %v2940, 4294901760
  %8668 = vmatmul.mubr.f32.gmra.mrb[0].mxu0 %v8667
  %v8669 = vpop.f32.mrb[0].mxu0
  %v8670 = vadd.f32 %v8410, %v8669
  %v8671 = vpop.f32.mrb[0].mxu0
  %v8672 = vand.u32 %v3003, 4294901760
  %8673 = vmatprep.mubr.f32.mxu0 %v8672
  %v8674 = vand.u32 %v2941, 4294901760
  %8675 = vmatmul.mubr.f32.gmra.mrb[0].mxu0 %v8674
  %v8676 = vpop.f32.mrb[0].mxu0
  %v8677 = vadd.f32 %v8421, %v8676
  %v8678 = vpop.f32.mrb[0].mxu0
  %v8679 = vand.u32 %v3006, 4294901760
  %8680 = vmatprep.mubr.f32.mxu0 %v8679
  %v8681 = vand.u32 %v2942, 4294901760
  %8682 = vmatmul.mubr.f32.gmra.mrb[0].mxu0 %v8681
  %v8683 = vpop.f32.mrb[0].mxu0
  %v8684 = vadd.f32 %v8432, %v8683
  %v8685 = vpop.f32.mrb[0].mxu0
  %v8686 = vand.u32 %v3009, 4294901760
  %8687 = vmatprep.mubr.f32.mxu0 %v8686
  %v8688 = vand.u32 %v2943, 4294901760
  %8689 = vmatmul.mubr.f32.gmra.mrb[0].mxu0 %v8688
  %v8690 = vpop.f32.mrb[0].mxu0
  %v8691 = vadd.f32 %v8443, %v8690
  %v8692 = vpop.f32.mrb[0].mxu0
  %v8693 = vand.u32 %v3012, 4294901760
  %8694 = vmatprep.mubr.f32.mxu0 %v8693
  %v8695 = vand.u32 %v2944, 4294901760
  %8696 = vmatmul.mubr.f32.gmra.mrb[0].mxu0 %v8695
  %v8697 = vpop.f32.mrb[0].mxu0
  %v8698 = vadd.f32 %v8454, %v8697
  %v8699 = vpop.f32.mrb[0].mxu0
  %v8700 = vand.u32 %v3015, 4294901760
  %8701 = vmatprep.mubr.f32.mxu0 %v8700
  %v8702 = vand.u32 %v2945, 4294901760
  %8703 = vmatmul.mubr.f32.gmra.mrb[0].mxu0 %v8702
  %v8704 = vpop.f32.mrb[0].mxu0
  %v8705 = vadd.f32 %v8465, %v8704
  %v8706 = vpop.f32.mrb[0].mxu0
  %v8707 = vand.u32 %v3018, 4294901760
  %8708 = vmatprep.mubr.f32.mxu0 %v8707
  %v8709 = vand.u32 %v2946, 4294901760
  %8710 = vmatmul.mubr.f32.gmra.mrb[0].mxu0 %v8709
  %v8711 = vpop.f32.mrb[0].mxu0
  %v8712 = vadd.f32 %v8476, %v8711
  %v8713 = vpop.f32.mrb[0].mxu0
  %8714 = vdwg.mxu0
  %8715 = vmatprep.subr.mxu0 0.0
  %v8716 = vand.u32 %v2698, 4294901760
  %8717 = vmatpush1.msra.mxu0 %v8716
  %8718 = vmatprep.subr.mxu0 0.0
  %v8719 = vand.u32 %v2699, 4294901760
  %8720 = vmatpush1.msra.mxu0 %v8719
  %8721 = vmatprep.subr.mxu0 0.0
  %v8722 = vand.u32 %v2700, 4294901760
  %8723 = vmatpush1.msra.mxu0 %v8722
  %8724 = vmatprep.subr.mxu0 0.0
  %v8725 = vand.u32 %v2701, 4294901760
  %8726 = vmatpush1.msra.mxu0 %v8725
  %8727 = vmatprep.subr.mxu0 0.0
  %v8728 = vand.u32 %v2702, 4294901760
  %8729 = vmatpush1.msra.mxu0 %v8728
  %8730 = vmatprep.subr.mxu0 0.0
  %v8731 = vand.u32 %v2703, 4294901760
  %8732 = vmatpush1.msra.mxu0 %v8731
  %8733 = vmatprep.subr.mxu0 0.0
  %v8734 = vand.u32 %v2704, 4294901760
  %8735 = vmatpush1.msra.mxu0 %v8734
  %8736 = vmatprep.subr.mxu0 0.0
  %v8737 = vand.u32 %v2705, 4294901760
  %8738 = vmatpush1.msra.mxu0 %v8737
  %8739 = vmatprep.subr.mxu0 0.0
  %v8740 = vand.u32 %v2706, 4294901760
  %8741 = vmatpush1.msra.mxu0 %v8740
  %8742 = vmatprep.subr.mxu0 0.0
  %v8743 = vand.u32 %v2707, 4294901760
  %8744 = vmatpush1.msra.mxu0 %v8743
  %8745 = vmatprep.subr.mxu0 0.0
  %v8746 = vand.u32 %v2708, 4294901760
  %8747 = vmatpush1.msra.mxu0 %v8746
  %8748 = vmatprep.subr.mxu0 0.0
  %v8749 = vand.u32 %v2709, 4294901760
  %8750 = vmatpush1.msra.mxu0 %v8749
  %8751 = vmatprep.subr.mxu0 0.0
  %v8752 = vand.u32 %v2710, 4294901760
  %8753 = vmatpush1.msra.mxu0 %v8752
  %8754 = vmatprep.subr.mxu0 0.0
  %v8755 = vand.u32 %v2711, 4294901760
  %8756 = vmatpush1.msra.mxu0 %v8755
  %8757 = vmatprep.subr.mxu0 0.0
  %v8758 = vand.u32 %v2712, 4294901760
  %8759 = vmatpush1.msra.mxu0 %v8758
  %8760 = vmatprep.subr.mxu0 0.0
  %v8761 = vand.u32 %v2713, 4294901760
  %8762 = vmatpush1.msra.mxu0 %v8761
  %8763 = vmatprep.subr.mxu0 0.0
  %v8764 = vand.u32 %v2714, 4294901760
  %8765 = vmatpush1.msra.mxu0 %v8764
  %8766 = vmatprep.subr.mxu0 0.0
  %v8767 = vand.u32 %v2715, 4294901760
  %8768 = vmatpush1.msra.mxu0 %v8767
  %8769 = vmatprep.subr.mxu0 0.0
  %v8770 = vand.u32 %v2716, 4294901760
  %8771 = vmatpush1.msra.mxu0 %v8770
  %8772 = vmatprep.subr.mxu0 0.0
  %v8773 = vand.u32 %v2717, 4294901760
  %8774 = vmatpush1.msra.mxu0 %v8773
  %8775 = vmatprep.subr.mxu0 0.0
  %v8776 = vand.u32 %v2718, 4294901760
  %8777 = vmatpush1.msra.mxu0 %v8776
  %8778 = vmatprep.subr.mxu0 0.0
  %v8779 = vand.u32 %v2719, 4294901760
  %8780 = vmatpush1.msra.mxu0 %v8779
  %8781 = vmatprep.subr.mxu0 0.0
  %v8782 = vand.u32 %v2720, 4294901760
  %8783 = vmatpush1.msra.mxu0 %v8782
  %8784 = vmatprep.subr.mxu0 0.0
  %v8785 = vand.u32 %v2721, 4294901760
  %8786 = vmatpush1.msra.mxu0 %v8785
  %8787 = vmatprep.subr.mxu0 0.0
  %v8788 = vand.u32 %v2722, 4294901760
  %8789 = vmatpush1.msra.mxu0 %v8788
  %8790 = vmatprep.subr.mxu0 0.0
  %v8791 = vand.u32 %v2723, 4294901760
  %8792 = vmatpush1.msra.mxu0 %v8791
  %8793 = vmatprep.subr.mxu0 0.0
  %v8794 = vand.u32 %v2724, 4294901760
  %8795 = vmatpush1.msra.mxu0 %v8794
  %8796 = vmatprep.subr.mxu0 0.0
  %v8797 = vand.u32 %v2725, 4294901760
  %8798 = vmatpush1.msra.mxu0 %v8797
  %8799 = vmatprep.subr.mxu0 0.0
  %v8800 = vand.u32 %v2726, 4294901760
  %8801 = vmatpush1.msra.mxu0 %v8800
  %8802 = vmatprep.subr.mxu0 0.0
  %8803 = vmatpush1.msra.mxu0 0.0
  %8804 = vmatprep.subr.mxu0 0.0
  %8805 = vmatpush1.msra.mxu0 0.0
  %8806 = vmatprep.subr.mxu0 0.0
  %8807 = vmatpush1.msra.mxu0 0.0
  %v8808 = vand.u32 %v2985, 4294901760
  %8809 = vmatprep.mubr.f32.mxu0 %v8808
  %v8810 = vand.u32 %v2935, 4294901760
  %8811 = vmatmul.mubr.f32.gmra.mrb[0].mxu0 %v8810
  %v8812 = vpop.f32.mrb[0].mxu0
  %v8813 = vadd.f32 %v8635, %v8812
  %v8814 = vpop.f32.mrb[0].mxu0
  %v8815 = vand.u32 %v2988, 4294901760
  %8816 = vmatprep.mubr.f32.mxu0 %v8815
  %v8817 = vand.u32 %v2936, 4294901760
  %8818 = vmatmul.mubr.f32.gmra.mrb[0].mxu0 %v8817
  %v8819 = vpop.f32.mrb[0].mxu0
  %v8820 = vadd.f32 %v8642, %v8819
  %v8821 = vpop.f32.mrb[0].mxu0
  %v8822 = vand.u32 %v2991, 4294901760
  %8823 = vmatprep.mubr.f32.mxu0 %v8822
  %v8824 = vand.u32 %v2937, 4294901760
  %8825 = vmatmul.mubr.f32.gmra.mrb[0].mxu0 %v8824
  %v8826 = vpop.f32.mrb[0].mxu0
  %v8827 = vadd.f32 %v8649, %v8826
  %v8828 = vpop.f32.mrb[0].mxu0
  %v8829 = vand.u32 %v2994, 4294901760
  %8830 = vmatprep.mubr.f32.mxu0 %v8829
  %v8831 = vand.u32 %v2938, 4294901760
  %8832 = vmatmul.mubr.f32.gmra.mrb[0].mxu0 %v8831
  %v8833 = vpop.f32.mrb[0].mxu0
  %v8834 = vadd.f32 %v8656, %v8833
  %v8835 = vpop.f32.mrb[0].mxu0
  %v8836 = vand.u32 %v2997, 4294901760
  %8837 = vmatprep.mubr.f32.mxu0 %v8836
  %v8838 = vand.u32 %v2939, 4294901760
  %8839 = vmatmul.mubr.f32.gmra.mrb[0].mxu0 %v8838
  %v8840 = vpop.f32.mrb[0].mxu0
  %v8841 = vadd.f32 %v8663, %v8840
  %v8842 = vpop.f32.mrb[0].mxu0
  %v8843 = vand.u32 %v3000, 4294901760
  %8844 = vmatprep.mubr.f32.mxu0 %v8843
  %v8845 = vand.u32 %v2940, 4294901760
  %8846 = vmatmul.mubr.f32.gmra.mrb[0].mxu0 %v8845
  %v8847 = vpop.f32.mrb[0].mxu0
  %v8848 = vadd.f32 %v8670, %v8847
  %v8849 = vpop.f32.mrb[0].mxu0
  %v8850 = vand.u32 %v3003, 4294901760
  %8851 = vmatprep.mubr.f32.mxu0 %v8850
  %v8852 = vand.u32 %v2941, 4294901760
  %8853 = vmatmul.mubr.f32.gmra.mrb[0].mxu0 %v8852
  %v8854 = vpop.f32.mrb[0].mxu0
  %v8855 = vadd.f32 %v8677, %v8854
  %v8856 = vpop.f32.mrb[0].mxu0
  %v8857 = vand.u32 %v3006, 4294901760
  %8858 = vmatprep.mubr.f32.mxu0 %v8857
  %v8859 = vand.u32 %v2942, 4294901760
  %8860 = vmatmul.mubr.f32.gmra.mrb[0].mxu0 %v8859
  %v8861 = vpop.f32.mrb[0].mxu0
  %v8862 = vadd.f32 %v8684, %v8861
  %v8863 = vpop.f32.mrb[0].mxu0
  %v8864 = vand.u32 %v3009, 4294901760
  %8865 = vmatprep.mubr.f32.mxu0 %v8864
  %v8866 = vand.u32 %v2943, 4294901760
  %8867 = vmatmul.mubr.f32.gmra.mrb[0].mxu0 %v8866
  %v8868 = vpop.f32.mrb[0].mxu0
  %v8869 = vadd.f32 %v8691, %v8868
  %v8870 = vpop.f32.mrb[0].mxu0
  %v8871 = vand.u32 %v3012, 4294901760
  %8872 = vmatprep.mubr.f32.mxu0 %v8871
  %v8873 = vand.u32 %v2944, 4294901760
  %8874 = vmatmul.mubr.f32.gmra.mrb[0].mxu0 %v8873
  %v8875 = vpop.f32.mrb[0].mxu0
  %v8876 = vadd.f32 %v8698, %v8875
  %v8877 = vpop.f32.mrb[0].mxu0
  %v8878 = vand.u32 %v3015, 4294901760
  %8879 = vmatprep.mubr.f32.mxu0 %v8878
  %v8880 = vand.u32 %v2945, 4294901760
  %8881 = vmatmul.mubr.f32.gmra.mrb[0].mxu0 %v8880
  %v8882 = vpop.f32.mrb[0].mxu0
  %v8883 = vadd.f32 %v8705, %v8882
  %v8884 = vpop.f32.mrb[0].mxu0
  %v8885 = vand.u32 %v3018, 4294901760
  %8886 = vmatprep.mubr.f32.mxu0 %v8885
  %v8887 = vand.u32 %v2946, 4294901760
  %8888 = vmatmul.mubr.f32.gmra.mrb[0].mxu0 %v8887
  %v8889 = vpop.f32.mrb[0].mxu0
  %v8890 = vadd.f32 %v8712, %v8889
  %v8891 = vpop.f32.mrb[0].mxu0
  %8892 = vdwg.mxu0
  %v8893 = vld [vmem:[%s3] sm:$0xff]
  %v8894 = vld [vmem:[%s3 + $0x8] sm:$0xff]
  %v8895 = vld [vmem:[%s3 + $0x10] sm:$0xff]
  %v8896 = vld [vmem:[%s3 + $0x18] sm:$0xff]
  %v8897 = vld [vmem:[%s3 + $0x20] sm:$0xff]
  %v8898 = vld [vmem:[%s3 + $0x28] sm:$0xff]
  %v8899 = vld [vmem:[%s3 + $0x30] sm:$0xff]
  %v8900 = vld [vmem:[%s3 + $0x38] sm:$0xff]
  %v8901 = vld [vmem:[%s3 + $0x40] sm:$0xff]
  %v8902 = vld [vmem:[%s3 + $0x48] sm:$0xff]
  %v8903 = vld [vmem:[%s3 + $0x50] sm:$0xff]
  %v8904 = vld [vmem:[%s3 + $0x58] sm:$0xff]
  %v8905 = vadd.f32 %v8893, %v8813
  %v8906 = vadd.f32 %v8894, %v8820
  %v8907 = vadd.f32 %v8895, %v8827
  %v8908 = vadd.f32 %v8896, %v8834
  %v8909 = vadd.f32 %v8897, %v8841
  %v8910 = vadd.f32 %v8898, %v8848
  %v8911 = vadd.f32 %v8899, %v8855
  %v8912 = vadd.f32 %v8900, %v8862
  %v8913 = vadd.f32 %v8901, %v8869
  %v8914 = vadd.f32 %v8902, %v8876
  %v8915 = vadd.f32 %v8903, %v8883
  %v8916 = vadd.f32 %v8904, %v8890
  %vm8917 = vcmask 785408
  %8918 = vst.msk [vmem:[%s3] sm:$0xff] %vm8917, %v8905
  %8919 = vst.msk [vmem:[%s3 + $0x8] sm:$0xff] %vm8917, %v8906
  %8920 = vst.msk [vmem:[%s3 + $0x10] sm:$0xff] %vm8917, %v8907
  %8921 = vst.msk [vmem:[%s3 + $0x18] sm:$0xff] %vm8917, %v8908
  %8922 = vst.msk [vmem:[%s3 + $0x20] sm:$0xff] %vm8917, %v8909
  %8923 = vst.msk [vmem:[%s3 + $0x28] sm:$0xff] %vm8917, %v8910
  %8924 = vst.msk [vmem:[%s3 + $0x30] sm:$0xff] %vm8917, %v8911
  %8925 = vst.msk [vmem:[%s3 + $0x38] sm:$0xff] %vm8917, %v8912
  %8926 = vst.msk [vmem:[%s3 + $0x40] sm:$0xff] %vm8917, %v8913
  %8927 = vst.msk [vmem:[%s3 + $0x48] sm:$0xff] %vm8917, %v8914
  %8928 = vst.msk [vmem:[%s3 + $0x50] sm:$0xff] %vm8917, %v8915
  %8929 = vst.msk [vmem:[%s3 + $0x58] sm:$0xff] %vm8917, %v8916
  %s8930 = sadd.s32 0, 0
  %s8931 = smul.u32 125, %s8930
  %p8932 = scmp.lt.s32.totalorder %s8931, 124
  %s8933 = scalar_select %p8932, %s8931, 124
  %s8934 = smul.addr %s8933, 8
  %s8935 = scalar_lea.vmem %s4, %s8934
  // Predicated region
  $region18: #{vamp_u_forward_packed.1} parent=0 // pred_check
    _
  $region19: #{vamp_u_forward_packed.1} parent=0 // pred_check_branch
    %8937 = sbr.rel (0) target = $region21
  $region20: #{vamp_u_forward_packed.1} parent=0 // pred_region
    _
  $region21: #{vamp_u_forward_packed.1} parent=0 // pred_fallthru
    _
  // Predicated region
  $region22: #{vamp_u_forward_packed.1} parent=0 // pred_check
    _
  $region23: #{vamp_u_forward_packed.1} parent=0 // pred_check_branch
    %8939 = sbr.rel (0) target = $region25
  $region24: #{vamp_u_forward_packed.1} parent=0 // pred_region
    %s8940 = sadd.s32 0, 0
    %s8941 = smul.u32 125, %s8940
  $region25: #{vamp_u_forward_packed.1} parent=0 // pred_fallthru
    _
  // Predicated region
  $region26: #{vamp_u_forward_packed.1} parent=0 // pred_check
    _
  $region27: #{vamp_u_forward_packed.1} parent=0 // pred_check_branch
    %8943 = sbr.rel (0) target = $region29
  $region28: #{vamp_u_forward_packed.1} parent=0 // pred_region
    _
  $region29: #{vamp_u_forward_packed.1} parent=0 // pred_fallthru
    _
  // Predicated region
  $region30: #{vamp_u_forward_packed.1} parent=0 // pred_check
    _
  $region31: #{vamp_u_forward_packed.1} parent=0 // pred_check_branch
    %8945 = sbr.rel (0) target = $region33
  $region32: #{vamp_u_forward_packed.1} parent=0 // pred_region
    %s8946 = sadd.s32 0, 0
    %s8947 = smul.u32 125, %s8946
    %p8948 = scmp.lt.s32.totalorder %s8947, 124
    %s8949 = scalar_select %p8948, %s8947, 124
    %s8950 = smul.addr %s8949, 8
    %s8951 = scalar_lea.vmem %s4, %s8950
  $region33: #{vamp_u_forward_packed.1} parent=0 // pred_fallthru
    _

</llo_original>
